<compile_context>
chip_gen: v6e
topology: v6e:2x2x1
jax: 0.10.0
libtpu: 0.0.40
codegen_flags: <defaults>
</compile_context>

<pallas_src>
import functools
import math

import numpy as np

import jax
import jax.numpy as jnp
from jax.experimental import pallas as pl
from jax.experimental.pallas import tpu as pltpu


_LANE = 128
_VMEM_LIMIT = 48 * 1024 * 1024


def _round_up(x, m):
    return (x + m - 1) // m * m


def _pick_tile(dim, prefs):
    # Largest preferred tile that exactly divides `dim` (feature dims are padded to 128 multiples
    # at init, so N/K never hit the full-dim fallback; M falls back only if B*T isn't 16-aligned).
    for p in prefs:
        if dim % p == 0:
            return p
    return dim


# ---------------------------------------------------------------------------
# In-kernel helpers (f32 norm/softmax math, bf16 MXU operands, f32 accumulation)
# ---------------------------------------------------------------------------

def _mm(x_f32, w_bf16, b_f32):
    return jnp.dot(x_f32.astype(jnp.bfloat16), w_bf16,
                   preferred_element_type=jnp.float32) + b_f32


def _lane_mask(d_real, d_pad):
    return (jax.lax.broadcasted_iota(jnp.int32, (1, d_pad), 1) < d_real).astype(jnp.float32)


def _ln(x, g, b, d_real, dmask):
    # LayerNorm over the real feature count; padded lanes are structurally zero and gamma/beta
    # are zero there, so padded outputs stay zero (invariant maintained layer to layer).
    inv_d = 1.0 / d_real
    mean = jnp.sum(x, axis=-1, keepdims=True) * inv_d
    diff = (x - mean) * dmask
    var = jnp.sum(diff * diff, axis=-1, keepdims=True) * inv_d
    return diff * jax.lax.rsqrt(var + 1e-5) * g + b


def _slab_reader(slab_ref):
    off = [0]

    def take(n):
        v = slab_ref[:, off[0]:off[0] + n]
        off[0] += n
        return v

    return take


def _mha_into(scr_ref, rows, q, k, v, bias, nhead, hdp, hd_real):
    """Multi-head attention; each head's output is written directly into scr_ref[rows, head cols]
    (no per-head concat / relayout). `bias` is broadcastable to (Sq, Sk) f32, or None."""
    scale = 1.0 / math.sqrt(hd_real)
    for h in range(nhead):
        cs = slice(h * hdp, (h + 1) * hdp)
        qh = (q[:, cs] * scale).astype(jnp.bfloat16)     # scale folded into q, not the scores
        kh = k[:, cs].astype(jnp.bfloat16)
        vh = v[:, cs].astype(jnp.bfloat16)
        s = jax.lax.dot_general(qh, kh, (((1,), (1,)), ((), ())),
                                preferred_element_type=jnp.float32)
        if bias is not None:
            s = s + bias
        m = jnp.max(s, axis=-1, keepdims=True)
        p = jnp.exp(s - m)
        p = p * pl.reciprocal(jnp.sum(p, axis=-1, keepdims=True), approx=True)
        scr_ref[rows, cs] = jnp.dot(p.astype(jnp.bfloat16), vh,
                                    preferred_element_type=jnp.float32)


# ---------------------------------------------------------------------------
# Fused encoder layer kernel (QKV GEMM + MHA + out-proj + LN + FFN + LN), whole batch per step
# ---------------------------------------------------------------------------

def _enc_layer_kernel(x_ref, pad_ref, wqkv_ref, wo_ref, w1_ref, w2_ref, slab_ref,
                      o_ref, attn_scr, *, nhead, d_real):
    B, S, Dp = x_ref.shape
    FFp = w1_ref.shape[1]
    hdp = Dp // nhead
    dmask = _lane_mask(d_real, Dp)

    # single packed slab of small params (one DMA): bqkv | bo | ln1_g | ln1_b | b1 | b2 | ln2_g | ln2_b
    take = _slab_reader(slab_ref)
    bqkv = take(3 * Dp); bo = take(Dp)
    ln1g = take(Dp); ln1b = take(Dp)
    b1 = take(FFp); b2 = take(Dp)
    ln2g = take(Dp); ln2b = take(Dp)

    x = x_ref[...].reshape(B * S, Dp)
    qkv = _mm(x, wqkv_ref[...], bqkv)                       # fused QKV GEMM: (B*S, 3*Dp)
    for b in range(B):
        rows = slice(b * S, (b + 1) * S)
        bias = pad_ref[b]                                   # (1, S) additive key-padding bias
        _mha_into(attn_scr, rows,
                  qkv[rows, 0:Dp], qkv[rows, Dp:2 * Dp], qkv[rows, 2 * Dp:3 * Dp],
                  bias, nhead, hdp, d_real // nhead)

    x = _ln(x + _mm(attn_scr[...], wo_ref[...], bo), ln1g, ln1b, d_real, dmask)
    h = jnp.maximum(_mm(x, w1_ref[...], b1), 0.0)
    x = _ln(x + _mm(h, w2_ref[...], b2), ln2g, ln2b, d_real, dmask)
    o_ref[...] = x.reshape(B, S, Dp)


def encoder_layer(x, pad_bias, p, nhead, d_real):
    B, S, Dp = x.shape
    full = lambda a: pl.BlockSpec(a.shape, lambda i: (0,) * a.ndim)
    return pl.pallas_call(
        functools.partial(_enc_layer_kernel, nhead=nhead, d_real=d_real),
        out_shape=jax.ShapeDtypeStruct((B, S, Dp), jnp.float32),
        grid=(1,),
        in_specs=[full(x), full(pad_bias), full(p["wqkv"]), full(p["wo"]),
                  full(p["w1"]), full(p["w2"]), full(p["slab"])],
        out_specs=pl.BlockSpec((B, S, Dp), lambda i: (0, 0, 0)),
        scratch_shapes=[pltpu.VMEM((B * S, Dp), jnp.float32)],
        compiler_params=pltpu.CompilerParams(
            dimension_semantics=("arbitrary",), vmem_limit_bytes=_VMEM_LIMIT),
    )(x, pad_bias, p["wqkv"], p["wo"], p["w1"], p["w2"], p["slab"])


# ---------------------------------------------------------------------------
# Fused decoder layer kernel (masked self-attn + cross-attn over latent memory + FFN)
# ---------------------------------------------------------------------------

def _dec_layer_kernel(x_ref, mem_ref, pad_ref, causal_ref,
                      wqkv_ref, wo_ref, cwq_ref, cwkv_ref, cwo_ref, w1_ref, w2_ref, slab_ref,
                      o_ref, attn_scr, *, nhead, d_real):
    B, T, Dp = x_ref.shape
    M = mem_ref.shape[1]
    FFp = w1_ref.shape[1]
    hdp = Dp // nhead
    hd_real = d_real // nhead
    dmask = _lane_mask(d_real, Dp)

    # slab: bqkv | bo | ln1_g | ln1_b | cbq | cbkv | cbo | ln2_g | ln2_b | b1 | b2 | ln3_g | ln3_b
    take = _slab_reader(slab_ref)
    bqkv = take(3 * Dp); bo = take(Dp)
    ln1g = take(Dp); ln1b = take(Dp)
    cbq = take(Dp); cbkv = take(2 * Dp); cbo = take(Dp)
    ln2g = take(Dp); ln2b = take(Dp)
    b1 = take(FFp); b2 = take(Dp)
    ln3g = take(Dp); ln3b = take(Dp)

    x = x_ref[...].reshape(B * T, Dp)
    causal = causal_ref[...]                                # (T, T) additive causal bias

    # masked self-attention
    qkv = _mm(x, wqkv_ref[...], bqkv)
    for b in range(B):
        rows = slice(b * T, (b + 1) * T)
        bias = pad_ref[b] + causal                          # (1,T) + (T,T) -> (T,T), f32
        _mha_into(attn_scr, rows,
                  qkv[rows, 0:Dp], qkv[rows, Dp:2 * Dp], qkv[rows, 2 * Dp:3 * Dp],
                  bias, nhead, hdp, hd_real)
    x = _ln(x + _mm(attn_scr[...], wo_ref[...], bo), ln1g, ln1b, d_real, dmask)

    # cross-attention over the latent memory (its key-padding mask is all-False -> no bias)
    q = _mm(x, cwq_ref[...], cbq)
    kv = _mm(mem_ref[...].reshape(B * M, Dp), cwkv_ref[...], cbkv)   # fused K/V: (B*M, 2*Dp)
    for b in range(B):
        rows = slice(b * T, (b + 1) * T)
        krows = slice(b * M, (b + 1) * M)
        _mha_into(attn_scr, rows,
                  q[rows], kv[krows, 0:Dp], kv[krows, Dp:2 * Dp],
                  None, nhead, hdp, hd_real)
    x = _ln(x + _mm(attn_scr[...], cwo_ref[...], cbo), ln2g, ln2b, d_real, dmask)

    # FFN
    h = jnp.maximum(_mm(x, w1_ref[...], b1), 0.0)
    x = _ln(x + _mm(h, w2_ref[...], b2), ln3g, ln3b, d_real, dmask)
    o_ref[...] = x.reshape(B, T, Dp)


def decoder_layer(x, memory, pad_bias, causal, p, nhead, d_real):
    B, T, Dp = x.shape
    full = lambda a: pl.BlockSpec(a.shape, lambda i: (0,) * a.ndim)
    return pl.pallas_call(
        functools.partial(_dec_layer_kernel, nhead=nhead, d_real=d_real),
        out_shape=jax.ShapeDtypeStruct((B, T, Dp), jnp.float32),
        grid=(1,),
        in_specs=[full(x), full(memory), full(pad_bias), full(causal),
                  full(p["wqkv"]), full(p["wo"]), full(p["cwq"]), full(p["cwkv"]),
                  full(p["cwo"]), full(p["w1"]), full(p["w2"]), full(p["slab"])],
        out_specs=pl.BlockSpec((B, T, Dp), lambda i: (0, 0, 0)),
        scratch_shapes=[pltpu.VMEM((B * T, Dp), jnp.float32)],
        compiler_params=pltpu.CompilerParams(
            dimension_semantics=("arbitrary",), vmem_limit_bytes=_VMEM_LIMIT),
    )(x, memory, pad_bias, causal, p["wqkv"], p["wo"], p["cwq"], p["cwkv"],
      p["cwo"], p["w1"], p["w2"], p["slab"])


# ---------------------------------------------------------------------------
# Tiled linear (K-reduction accumulator) — vocab projection (bf16 operands, padded N/K)
# ---------------------------------------------------------------------------

def _tiled_linear_kernel(x_ref, w_ref, b_ref, o_ref, acc_ref):
    @pl.when(pl.program_id(2) == 0)
    def _():
        acc_ref[...] = jnp.zeros_like(acc_ref)

    acc_ref[...] += jnp.dot(x_ref[...], w_ref[...], preferred_element_type=jnp.float32)

    @pl.when(pl.program_id(2) == pl.num_programs(2) - 1)
    def _():
        o_ref[...] = acc_ref[...] + b_ref[...]


def tiled_linear(x_bf16, w_bf16, b_f32):
    """x: (M, K) bf16, w: (K, N) bf16 (K, N are 128 multiples by construction), b: (1, N) f32."""
    M, K = x_bf16.shape
    N = w_bf16.shape[1]
    tm = _pick_tile(M, (512, 256, 128, 64, 32, 16))
    tn = _pick_tile(N, (1024, 512, 256, 128))
    tk = _pick_tile(K, (512, 256, 128))
    return pl.pallas_call(
        _tiled_linear_kernel,
        out_shape=jax.ShapeDtypeStruct((M, N), jnp.float32),
        grid=(M // tm, N // tn, K // tk),
        in_specs=[
            pl.BlockSpec((tm, tk), lambda i, j, k: (i, k)),
            pl.BlockSpec((tk, tn), lambda i, j, k: (k, j)),
            pl.BlockSpec((1, tn), lambda i, j, k: (0, j)),
        ],
        out_specs=pl.BlockSpec((tm, tn), lambda i, j, k: (i, j)),
        scratch_shapes=[pltpu.VMEM((tm, tn), jnp.float32)],
        compiler_params=pltpu.CompilerParams(
            dimension_semantics=("parallel", "parallel", "arbitrary"),
            vmem_limit_bytes=_VMEM_LIMIT),
    )(x_bf16, w_bf16, b_f32)


# ---------------------------------------------------------------------------
# Fused VAE head (mu / logvar / reparameterize / latent extrapolator)
# ---------------------------------------------------------------------------

def _vae_head_kernel(cls_ref, eps_ref, wmu_ref, wlv_ref, wex_ref, slab_ref,
                     mu_ref, lv_ref, zext_ref):
    Lp = wmu_ref.shape[1]
    E = wex_ref.shape[1]
    take = _slab_reader(slab_ref)                           # bmu | blv | bex
    bmu = take(Lp); blv = take(Lp); bex = take(E)

    cls = cls_ref[...].astype(jnp.bfloat16)
    mu = jnp.dot(cls, wmu_ref[...], preferred_element_type=jnp.float32) + bmu
    lv = jnp.dot(cls, wlv_ref[...], preferred_element_type=jnp.float32) + blv
    z = mu + eps_ref[...] * jnp.exp(0.5 * lv)               # reparameterize (eps padded with 0s)
    zext = jnp.dot(z.astype(jnp.bfloat16), wex_ref[...],
                   preferred_element_type=jnp.float32) + bex
    mu_ref[...] = mu
    lv_ref[...] = lv
    zext_ref[...] = zext


def vae_head(cls_token, eps_pad, p):
    B, _ = cls_token.shape
    Lp = p["wmu"].shape[1]
    E = p["wex"].shape[1]
    full = lambda a: pl.BlockSpec(a.shape, lambda i: (0,) * a.ndim)
    return pl.pallas_call(
        _vae_head_kernel,
        out_shape=(jax.ShapeDtypeStruct((B, Lp), jnp.float32),
                   jax.ShapeDtypeStruct((B, Lp), jnp.float32),
                   jax.ShapeDtypeStruct((B, E), jnp.float32)),
        grid=(1,),
        in_specs=[full(cls_token), full(eps_pad), full(p["wmu"]), full(p["wlv"]),
                  full(p["wex"]), full(p["slab"])],
        out_specs=(pl.BlockSpec((B, Lp), lambda i: (0, 0)),
                   pl.BlockSpec((B, Lp), lambda i: (0, 0)),
                   pl.BlockSpec((B, E), lambda i: (0, 0))),
        compiler_params=pltpu.CompilerParams(
            dimension_semantics=("arbitrary",), vmem_limit_bytes=_VMEM_LIMIT),
    )(cls_token, eps_pad, p["wmu"], p["wlv"], p["wex"], p["slab"])


# ---------------------------------------------------------------------------
# Glue (embedding gather, mask-to-bias, positional encodings)
# ---------------------------------------------------------------------------

@functools.lru_cache(maxsize=None)
def sinusoidal_pe(S, D, Dp):
    # Host-side numpy -> baked-in constant, zero-padded to the lane-dense width.
    pos = np.arange(S, dtype=np.float32)[:, None]
    i = np.arange(D, dtype=np.float32)[None, :]
    angle = pos / np.power(10000.0, (2.0 * np.floor(i / 2.0)) / D)
    pe = np.where((np.arange(D) % 2) == 0, np.sin(angle), np.cos(angle)).astype(np.float32)
    return jnp.asarray(np.pad(pe, ((0, 0), (0, Dp - D))))


def encoder_forward(tokens, src_key_padding_mask, p, cfg):
    B, S = tokens.shape
    D, H = cfg["d_model"], cfg["nhead"]
    Dp = p["embed"].shape[1]
    x = jnp.take(p["embed"], tokens, axis=0) * math.sqrt(D) + sinusoidal_pe(S, D, Dp)
    pad_bias = jnp.where(src_key_padding_mask, -1e9, 0.0).astype(jnp.float32).reshape(B, 1, S)
    return encoder_layer(x, pad_bias, p["layer"], H, D)


def decoder_forward(tokens, memory, tgt_key_padding_mask, attn_mask, p, cfg, vocab_size):
    B, T = tokens.shape
    D, H = cfg["d_model"], cfg["nhead"]
    Dp = p["embed"].shape[1]
    x = jnp.take(p["embed"], tokens, axis=0) * math.sqrt(D) + sinusoidal_pe(T, D, Dp)
    pad_bias = jnp.where(tgt_key_padding_mask, -1e9, 0.0).astype(jnp.float32).reshape(B, 1, T)
    if attn_mask is not None:
        causal = jnp.where(attn_mask, -1e9, 0.0).astype(jnp.float32)
    else:
        causal = jnp.zeros((T, T), jnp.float32)
    x = decoder_layer(x, memory, pad_bias, causal, p["layer"], H, D)
    logits = tiled_linear(x.reshape(B * T, Dp).astype(jnp.bfloat16), p["w_out"], p["b_out"])
    return logits.reshape(B, T, -1)[:, :, :vocab_size]


def vae_transformer_forward(params, cfg, vocab_size,
                            encoder_sequences, decoder_sequences,
                            encoder_sequence_lengths, decoder_sequence_lengths,
                            src_key_padding_mask, tgt_key_padding_mask, eps,
                            attn_mask=None):
    del encoder_sequence_lengths, decoder_sequence_lengths  # masks already encode lengths
    enc_out = encoder_forward(encoder_sequences, src_key_padding_mask, params["encoder"], cfg)
    cls_token = enc_out[:, 0, :]                            # (B, Dp)

    head = params["head"]
    B = cls_token.shape[0]
    L = cfg["latent_size"]
    Lp = head["wmu"].shape[1]
    eps_pad = jnp.pad(eps, ((0, 0), (0, Lp - L)))
    mu_p, lv_p, zext = vae_head(cls_token, eps_pad, head)
    mu, logvar = mu_p[:, :L], lv_p[:, :L]

    Dp = params["encoder"]["embed"].shape[1]
    z_mem = zext.reshape(B, cfg["latent_seq_len"], Dp)
    # The reference always passes an all-False memory key-padding mask for the latent memory,
    # so the (all-zero) cross-attention bias operand is dropped entirely.
    dec_out = decoder_forward(decoder_sequences, z_mem, tgt_key_padding_mask, attn_mask,
                              params["decoder"], cfg, vocab_size)
    return dec_out, mu, logvar


# ---------------------------------------------------------------------------
# Deterministic parameter init, built directly in the padded lane-dense layout
# (matmul weights bf16 with structural zeros in padded slots; biases/LN params packed into slabs)
# ---------------------------------------------------------------------------

def init_params(key, cfg, vocab_size):
    D, H, FF = cfg["d_model"], cfg["nhead"], cfg["dim_ff"]
    L, LS = cfg["latent_size"], cfg["latent_seq_len"]
    Dp = _round_up(D, _LANE)
    FFp = _round_up(FF, _LANE)
    Lp = _round_up(L, _LANE)
    Vp = _round_up(vocab_size, _LANE)
    assert D % H == 0 and Dp % H == 0
    hd, hdp = D // H, Dp // H

    keys = iter(jax.random.split(key, 64))

    def nrm(shape, scale=0.02):
        return scale * jax.random.normal(next(keys), shape, dtype=jnp.float32)

    def bf(x):
        return x.astype(jnp.bfloat16)

    def dense_mask(rr, rp, cr, cp):
        m = np.zeros((rp, cp), np.float32)
        m[:rr, :cr] = 1.0
        return jnp.asarray(m)

    def head_cols_mask(rr, rp):       # per-head padded output columns (head_dim hd -> hdp)
        m = np.zeros((rp, H * hdp), np.float32)
        for h in range(H):
            m[:rr, h * hdp:h * hdp + hd] = 1.0
        return jnp.asarray(m)

    def head_rows_mask(cr, cp):       # per-head padded input rows (out-projection)
        m = np.zeros((H * hdp, cp), np.float32)
        for h in range(H):
            m[h * hdp:h * hdp + hd, :cr] = 1.0
        return jnp.asarray(m)

    qkv_mask = jnp.concatenate([head_cols_mask(D, Dp)] * 3, axis=1)     # (Dp, 3Dp)
    kv_mask = jnp.concatenate([head_cols_mask(D, Dp)] * 2, axis=1)      # (Dp, 2Dp)

    ones_d = jnp.concatenate([jnp.ones((D,), jnp.float32), jnp.zeros((Dp - D,), jnp.float32)])
    zeros = lambda n: jnp.zeros((n,), jnp.float32)
    slab = lambda parts: jnp.concatenate(parts).reshape(1, -1)

    def enc_layer_p():
        return {
            "wqkv": bf(nrm((Dp, 3 * Dp)) * qkv_mask),
            "wo": bf(nrm((Dp, Dp)) * head_rows_mask(D, Dp)),
            "w1": bf(nrm((Dp, FFp)) * dense_mask(D, Dp, FF, FFp)),
            "w2": bf(nrm((FFp, Dp)) * dense_mask(FF, FFp, D, Dp)),
            # slab layout: bqkv | bo | ln1_g | ln1_b | b1 | b2 | ln2_g | ln2_b
            "slab": slab([zeros(3 * Dp), zeros(Dp), ones_d, zeros(Dp),
                          zeros(FFp), zeros(Dp), ones_d, zeros(Dp)]),
        }

    def dec_layer_p():
        return {
            "wqkv": bf(nrm((Dp, 3 * Dp)) * qkv_mask),
            "wo": bf(nrm((Dp, Dp)) * head_rows_mask(D, Dp)),
            "cwq": bf(nrm((Dp, Dp)) * head_cols_mask(D, Dp)),
            "cwkv": bf(nrm((Dp, 2 * Dp)) * kv_mask),
            "cwo": bf(nrm((Dp, Dp)) * head_rows_mask(D, Dp)),
            "w1": bf(nrm((Dp, FFp)) * dense_mask(D, Dp, FF, FFp)),
            "w2": bf(nrm((FFp, Dp)) * dense_mask(FF, FFp, D, Dp)),
            # slab: bqkv | bo | ln1_g | ln1_b | cbq | cbkv | cbo | ln2_g | ln2_b | b1 | b2 | ln3_g | ln3_b
            "slab": slab([zeros(3 * Dp), zeros(Dp), ones_d, zeros(Dp),
                          zeros(Dp), zeros(2 * Dp), zeros(Dp), ones_d, zeros(Dp),
                          zeros(FFp), zeros(Dp), ones_d, zeros(Dp)]),
        }

    # latent extrapolator: (Lp, LS*Dp): real rows [:L]; per latent position, real cols [:D] of Dp
    ex_col_mask = jnp.asarray(
        np.tile(np.concatenate([np.ones(D, np.float32), np.zeros(Dp - D, np.float32)]), LS))
    wex_mask = dense_mask(L, Lp, LS * Dp, LS * Dp) * ex_col_mask[None, :]

    emb_mask = dense_mask(vocab_size, vocab_size, D, Dp)
    return {
        "encoder": {"embed": nrm((vocab_size, Dp), 1.0) * emb_mask, "layer": enc_layer_p()},
        "decoder": {"embed": nrm((vocab_size, Dp), 1.0) * emb_mask, "layer": dec_layer_p(),
                    "w_out": bf(nrm((Dp, Vp)) * dense_mask(D, Dp, vocab_size, Vp)),
                    "b_out": jnp.zeros((1, Vp), jnp.float32)},
        "head": {"wmu": bf(nrm((Dp, Lp)) * dense_mask(D, Dp, L, Lp)),
                 "wlv": bf(nrm((Dp, Lp)) * dense_mask(D, Dp, L, Lp)),
                 "wex": bf(nrm((Lp, LS * Dp)) * wex_mask),
                 # slab: bmu | blv | bex
                 "slab": slab([zeros(Lp), zeros(Lp), zeros(LS * Dp)])},
    }


if __name__ == "__main__":
    cfg = dict(d_model=32, nhead=4, dim_ff=64, latent_size=16, latent_seq_len=4)
    vocab_size = 50
    B, S_enc, S_dec = 2, 8, 8

    root = jax.random.PRNGKey(0)
    k_param, k_enc, k_dec, k_eps = jax.random.split(root, 4)
    params = init_params(k_param, cfg, vocab_size)

    encoder_sequences = jax.random.randint(k_enc, (B, S_enc), 0, vocab_size, dtype=jnp.int32)
    decoder_sequences = jax.random.randint(k_dec, (B, S_dec), 0, vocab_size, dtype=jnp.int32)
    encoder_sequence_lengths = jnp.array([S_enc, S_enc - 2], dtype=jnp.int32)
    decoder_sequence_lengths = jnp.array([S_dec, S_dec - 3], dtype=jnp.int32)
    src_key_padding_mask = jnp.arange(S_enc)[None, :] >= encoder_sequence_lengths[:, None]
    tgt_key_padding_mask = jnp.arange(S_dec)[None, :] >= decoder_sequence_lengths[:, None]
    attn_mask = jnp.triu(jnp.ones((S_dec, S_dec), dtype=bool), k=1)  # causal: True = masked
    # torch.randn_like(std) -> deterministic normal noise for the reparameterization
    eps = jax.random.normal(k_eps, (B, cfg["latent_size"]), dtype=jnp.float32)

    fwd = jax.jit(functools.partial(vae_transformer_forward, params, cfg, vocab_size))
    dec_out, mu, logvar = fwd(encoder_sequences, decoder_sequences,
                              encoder_sequence_lengths, decoder_sequence_lengths,
                              src_key_padding_mask, tgt_key_padding_mask, eps, attn_mask)
    jax.block_until_ready((dec_out, mu, logvar))

    assert dec_out.shape == (B, S_dec, vocab_size)
    assert mu.shape == (B, cfg["latent_size"])
    assert logvar.shape == (B, cfg["latent_size"])
    assert bool(jnp.all(jnp.isfinite(dec_out)))
    assert bool(jnp.all(jnp.isfinite(mu))) and bool(jnp.all(jnp.isfinite(logvar)))
    print("KERNEL_OK")
</pallas_src>

<mosaic_0001>
module attributes {stable_mosaic.version = 11 : i64} {
  func.func @_vae_head_kernel(%arg0: i32, %arg1: memref<2x128xf32, #tpu.memory_space<vmem>>, %arg2: memref<2x128xf32, #tpu.memory_space<vmem>>, %arg3: memref<128x128xbf16, #tpu.memory_space<vmem>>, %arg4: memref<128x128xbf16, #tpu.memory_space<vmem>>, %arg5: memref<128x512xbf16, #tpu.memory_space<vmem>>, %arg6: memref<1x768xf32, #tpu.memory_space<vmem>>, %arg7: memref<2x128xf32, #tpu.memory_space<vmem>>, %arg8: memref<2x128xf32, #tpu.memory_space<vmem>>, %arg9: memref<2x512xf32, #tpu.memory_space<vmem>>) attributes {dimension_semantics = [#tpu.dimension_semantics<arbitrary>], iteration_bounds = array<i64: 1>, scalar_prefetch = 0 : i64, scratch_operands = 0 : i64, tpu.core_type = #tpu.core_type<tc>, window_params = [{pipeline_mode = #tpu.pipeline_mode<synchronous>, transform_indices = @transform_0, window_bounds = array<i64: 2, 128>}, {pipeline_mode = #tpu.pipeline_mode<synchronous>, transform_indices = @transform_1, window_bounds = array<i64: 2, 128>}, {pipeline_mode = #tpu.pipeline_mode<synchronous>, transform_indices = @transform_2, window_bounds = array<i64: 128, 128>}, {pipeline_mode = #tpu.pipeline_mode<synchronous>, transform_indices = @transform_3, window_bounds = array<i64: 128, 128>}, {pipeline_mode = #tpu.pipeline_mode<synchronous>, transform_indices = @transform_4, window_bounds = array<i64: 128, 512>}, {pipeline_mode = #tpu.pipeline_mode<synchronous>, transform_indices = @transform_5, window_bounds = array<i64: 1, 768>}, {pipeline_mode = #tpu.pipeline_mode<synchronous>, transform_indices = @transform_6, window_bounds = array<i64: 2, 128>}, {pipeline_mode = #tpu.pipeline_mode<synchronous>, transform_indices = @transform_7, window_bounds = array<i64: 2, 128>}, {pipeline_mode = #tpu.pipeline_mode<synchronous>, transform_indices = @transform_8, window_bounds = array<i64: 2, 512>}]} {
    %c0 = arith.constant 0 : index
    %c0_0 = arith.constant 0 : index
    %0 = vector.load %arg6[%c0, %c0_0] : memref<1x768xf32, #tpu.memory_space<vmem>>, vector<1x128xf32>
    %c0_1 = arith.constant 0 : index
    %c128 = arith.constant 128 : index
    %1 = vector.load %arg6[%c0_1, %c128] : memref<1x768xf32, #tpu.memory_space<vmem>>, vector<1x128xf32>
    %c0_2 = arith.constant 0 : index
    %c256 = arith.constant 256 : index
    %2 = vector.load %arg6[%c0_2, %c256] : memref<1x768xf32, #tpu.memory_space<vmem>>, vector<1x512xf32>
    %c0_3 = arith.constant 0 : index
    %c0_4 = arith.constant 0 : index
    %3 = vector.load %arg1[%c0_3, %c0_4] : memref<2x128xf32, #tpu.memory_space<vmem>>, vector<2x128xf32>
    %4 = arith.truncf %3 : vector<2x128xf32> to vector<2x128xbf16>
    %c0_5 = arith.constant 0 : index
    %c0_6 = arith.constant 0 : index
    %5 = vector.load %arg3[%c0_5, %c0_6] : memref<128x128xbf16, #tpu.memory_space<vmem>>, vector<128x128xbf16>
    %cst = arith.constant dense<0.000000e+00> : vector<2x128xf32>
    %6 = tpu.matmul %4, %5, %cst {dimension_numbers = #tpu.dot_dimension_numbers<[1], [0], [0], [1], [0, 0, 1, 1], [], []>} : vector<2x128xbf16>, vector<128x128xbf16>, vector<2x128xf32> -> vector<2x128xf32>
    %7 = vector.broadcast %0 : vector<1x128xf32> to vector<2x128xf32>
    %8 = arith.addf %6, %7 : vector<2x128xf32>
    %c0_7 = arith.constant 0 : index
    %c0_8 = arith.constant 0 : index
    %9 = vector.load %arg4[%c0_7, %c0_8] : memref<128x128xbf16, #tpu.memory_space<vmem>>, vector<128x128xbf16>
    %cst_9 = arith.constant dense<0.000000e+00> : vector<2x128xf32>
    %10 = tpu.matmul %4, %9, %cst_9 {dimension_numbers = #tpu.dot_dimension_numbers<[1], [0], [0], [1], [0, 0, 1, 1], [], []>} : vector<2x128xbf16>, vector<128x128xbf16>, vector<2x128xf32> -> vector<2x128xf32>
    %11 = vector.broadcast %1 : vector<1x128xf32> to vector<2x128xf32>
    %12 = arith.addf %10, %11 : vector<2x128xf32>
    %c0_10 = arith.constant 0 : index
    %c0_11 = arith.constant 0 : index
    %13 = vector.load %arg2[%c0_10, %c0_11] : memref<2x128xf32, #tpu.memory_space<vmem>>, vector<2x128xf32>
    %cst_12 = arith.constant 5.000000e-01 : f32
    %14 = vector.broadcast %cst_12 : f32 to vector<2x128xf32>
    %15 = arith.mulf %14, %12 : vector<2x128xf32>
    %16 = math.exp %15 : vector<2x128xf32>
    %17 = arith.mulf %13, %16 : vector<2x128xf32>
    %18 = arith.addf %8, %17 : vector<2x128xf32>
    %19 = arith.truncf %18 : vector<2x128xf32> to vector<2x128xbf16>
    %c0_13 = arith.constant 0 : index
    %c0_14 = arith.constant 0 : index
    %20 = vector.load %arg5[%c0_13, %c0_14] : memref<128x512xbf16, #tpu.memory_space<vmem>>, vector<128x512xbf16>
    %cst_15 = arith.constant dense<0.000000e+00> : vector<2x512xf32>
    %21 = tpu.matmul %19, %20, %cst_15 {dimension_numbers = #tpu.dot_dimension_numbers<[1], [0], [0], [1], [0, 0, 1, 1], [], []>} : vector<2x128xbf16>, vector<128x512xbf16>, vector<2x512xf32> -> vector<2x512xf32>
    %22 = vector.broadcast %2 : vector<1x512xf32> to vector<2x512xf32>
    %23 = arith.addf %21, %22 : vector<2x512xf32>
    %c0_16 = arith.constant 0 : index
    %c0_17 = arith.constant 0 : index
    %24 = vector.load %arg7[%c0_16, %c0_17] : memref<2x128xf32, #tpu.memory_space<vmem>>, vector<2x128xf32>
    tpu.vector_store %arg7[%c0_16, %c0_17], %8 {strides = array<i32>} : memref<2x128xf32, #tpu.memory_space<vmem>>, vector<2x128xf32>,
    %c0_18 = arith.constant 0 : index
    %c0_19 = arith.constant 0 : index
    %25 = vector.load %arg8[%c0_18, %c0_19] : memref<2x128xf32, #tpu.memory_space<vmem>>, vector<2x128xf32>
    tpu.vector_store %arg8[%c0_18, %c0_19], %12 {strides = array<i32>} : memref<2x128xf32, #tpu.memory_space<vmem>>, vector<2x128xf32>,
    %c0_20 = arith.constant 0 : index
    %c0_21 = arith.constant 0 : index
    %26 = vector.load %arg9[%c0_20, %c0_21] : memref<2x512xf32, #tpu.memory_space<vmem>>, vector<2x512xf32>
    tpu.vector_store %arg9[%c0_20, %c0_21], %23 {strides = array<i32>} : memref<2x512xf32, #tpu.memory_space<vmem>>, vector<2x512xf32>,
    return
  }
  func.func @transform_0(%arg0: i32) -> (i32, i32) {
    %c0_i32 = arith.constant 0 : i32
    %c0_i32_0 = arith.constant 0 : i32
    %c0_i32_1 = arith.constant 0 : i32
    return %c0_i32, %c0_i32_0 : i32, i32
  }
  func.func @transform_1(%arg0: i32) -> (i32, i32) {
    %c0_i32 = arith.constant 0 : i32
    %c0_i32_0 = arith.constant 0 : i32
    %c0_i32_1 = arith.constant 0 : i32
    return %c0_i32, %c0_i32_0 : i32, i32
  }
  func.func @transform_2(%arg0: i32) -> (i32, i32) {
    %c0_i32 = arith.constant 0 : i32
    %c0_i32_0 = arith.constant 0 : i32
    %c0_i32_1 = arith.constant 0 : i32
    return %c0_i32, %c0_i32_0 : i32, i32
  }
  func.func @transform_3(%arg0: i32) -> (i32, i32) {
    %c0_i32 = arith.constant 0 : i32
    %c0_i32_0 = arith.constant 0 : i32
    %c0_i32_1 = arith.constant 0 : i32
    return %c0_i32, %c0_i32_0 : i32, i32
  }
  func.func @transform_4(%arg0: i32) -> (i32, i32) {
    %c0_i32 = arith.constant 0 : i32
    %c0_i32_0 = arith.constant 0 : i32
    %c0_i32_1 = arith.constant 0 : i32
    return %c0_i32, %c0_i32_0 : i32, i32
  }
  func.func @transform_5(%arg0: i32) -> (i32, i32) {
    %c0_i32 = arith.constant 0 : i32
    %c0_i32_0 = arith.constant 0 : i32
    %c0_i32_1 = arith.constant 0 : i32
    return %c0_i32, %c0_i32_0 : i32, i32
  }
  func.func @transform_6(%arg0: i32) -> (i32, i32) {
    %c0_i32 = arith.constant 0 : i32
    %c0_i32_0 = arith.constant 0 : i32
    %c0_i32_1 = arith.constant 0 : i32
    return %c0_i32, %c0_i32_0 : i32, i32
  }
  func.func @transform_7(%arg0: i32) -> (i32, i32) {
    %c0_i32 = arith.constant 0 : i32
    %c0_i32_0 = arith.constant 0 : i32
    %c0_i32_1 = arith.constant 0 : i32
    return %c0_i32, %c0_i32_0 : i32, i32
  }
  func.func @transform_8(%arg0: i32) -> (i32, i32) {
    %c0_i32 = arith.constant 0 : i32
    %c0_i32_0 = arith.constant 0 : i32
    %c0_i32_1 = arith.constant 0 : i32
    return %c0_i32, %c0_i32_0 : i32, i32
  }
}

module attributes {stable_mosaic.version = 11 : i64} {
  func.func @_enc_layer_kernel(%arg0: i32, %arg1: memref<2x8x128xf32, #tpu.memory_space<vmem>>, %arg2: memref<2x1x8xf32, #tpu.memory_space<vmem>>, %arg3: memref<128x384xbf16, #tpu.memory_space<vmem>>, %arg4: memref<128x128xbf16, #tpu.memory_space<vmem>>, %arg5: memref<128x128xbf16, #tpu.memory_space<vmem>>, %arg6: memref<128x128xbf16, #tpu.memory_space<vmem>>, %arg7: memref<1x1280xf32, #tpu.memory_space<vmem>>, %arg8: memref<2x8x128xf32, #tpu.memory_space<vmem>>, %arg9: memref<16x128xf32, #tpu.memory_space<vmem>>) attributes {dimension_semantics = [#tpu.dimension_semantics<arbitrary>], iteration_bounds = array<i64: 1>, scalar_prefetch = 0 : i64, scratch_operands = 1 : i64, tpu.core_type = #tpu.core_type<tc>, window_params = [{pipeline_mode = #tpu.pipeline_mode<synchronous>, transform_indices = @transform_0, window_bounds = array<i64: 2, 8, 128>}, {pipeline_mode = #tpu.pipeline_mode<synchronous>, transform_indices = @transform_1, window_bounds = array<i64: 2, 1, 8>}, {pipeline_mode = #tpu.pipeline_mode<synchronous>, transform_indices = @transform_2, window_bounds = array<i64: 128, 384>}, {pipeline_mode = #tpu.pipeline_mode<synchronous>, transform_indices = @transform_3, window_bounds = array<i64: 128, 128>}, {pipeline_mode = #tpu.pipeline_mode<synchronous>, transform_indices = @transform_4, window_bounds = array<i64: 128, 128>}, {pipeline_mode = #tpu.pipeline_mode<synchronous>, transform_indices = @transform_5, window_bounds = array<i64: 128, 128>}, {pipeline_mode = #tpu.pipeline_mode<synchronous>, transform_indices = @transform_6, window_bounds = array<i64: 1, 1280>}, {pipeline_mode = #tpu.pipeline_mode<synchronous>, transform_indices = @transform_7, window_bounds = array<i64: 2, 8, 128>}]} {
    %0 = tpu.iota {dimensions = array<i32: 1>} : vector<1x128xi32>
    %c32_i32 = arith.constant 32 : i32
    %1 = vector.broadcast %c32_i32 : i32 to vector<1x128xi32>
    %2 = arith.cmpi slt, %0, %1 : vector<1x128xi32>
    %3 = arith.extui %2 : vector<1x128xi1> to vector<1x128xi32>
    %4 = arith.sitofp %3 : vector<1x128xi32> to vector<1x128xf32>
    %c0 = arith.constant 0 : index
    %c0_0 = arith.constant 0 : index
    %5 = vector.load %arg7[%c0, %c0_0] : memref<1x1280xf32, #tpu.memory_space<vmem>>, vector<1x384xf32>
    %c0_1 = arith.constant 0 : index
    %c384 = arith.constant 384 : index
    %6 = vector.load %arg7[%c0_1, %c384] : memref<1x1280xf32, #tpu.memory_space<vmem>>, vector<1x128xf32>
    %c0_2 = arith.constant 0 : index
    %c512 = arith.constant 512 : index
    %7 = vector.load %arg7[%c0_2, %c512] : memref<1x1280xf32, #tpu.memory_space<vmem>>, vector<1x128xf32>
    %c0_3 = arith.constant 0 : index
    %c640 = arith.constant 640 : index
    %8 = vector.load %arg7[%c0_3, %c640] : memref<1x1280xf32, #tpu.memory_space<vmem>>, vector<1x128xf32>
    %c0_4 = arith.constant 0 : index
    %c768 = arith.constant 768 : index
    %9 = vector.load %arg7[%c0_4, %c768] : memref<1x1280xf32, #tpu.memory_space<vmem>>, vector<1x128xf32>
    %c0_5 = arith.constant 0 : index
    %c896 = arith.constant 896 : index
    %10 = vector.load %arg7[%c0_5, %c896] : memref<1x1280xf32, #tpu.memory_space<vmem>>, vector<1x128xf32>
    %c0_6 = arith.constant 0 : index
    %c1024 = arith.constant 1024 : index
    %11 = vector.load %arg7[%c0_6, %c1024] : memref<1x1280xf32, #tpu.memory_space<vmem>>, vector<1x128xf32>
    %c0_7 = arith.constant 0 : index
    %c1152 = arith.constant 1152 : index
    %12 = vector.load %arg7[%c0_7, %c1152] : memref<1x1280xf32, #tpu.memory_space<vmem>>, vector<1x128xf32>
    %c0_8 = arith.constant 0 : index
    %c0_9 = arith.constant 0 : index
    %c0_10 = arith.constant 0 : index
    %13 = vector.load %arg1[%c0_8, %c0_9, %c0_10] : memref<2x8x128xf32, #tpu.memory_space<vmem>>, vector<2x8x128xf32>
    %14 = vector.shape_cast %13 : vector<2x8x128xf32> to vector<16x128xf32>
    %c0_11 = arith.constant 0 : index
    %c0_12 = arith.constant 0 : index
    %15 = vector.load %arg3[%c0_11, %c0_12] : memref<128x384xbf16, #tpu.memory_space<vmem>>, vector<128x384xbf16>
    %16 = arith.truncf %14 : vector<16x128xf32> to vector<16x128xbf16>
    %cst = arith.constant dense<0.000000e+00> : vector<16x384xf32>
    %17 = tpu.matmul %16, %15, %cst {dimension_numbers = #tpu.dot_dimension_numbers<[1], [0], [0], [1], [0, 0, 1, 1], [], []>} : vector<16x128xbf16>, vector<128x384xbf16>, vector<16x384xf32> -> vector<16x384xf32>
    %18 = vector.broadcast %5 : vector<1x384xf32> to vector<16x384xf32>
    %19 = arith.addf %17, %18 : vector<16x384xf32>
    %c0_13 = arith.constant 0 : index
    %c0_14 = arith.constant 0 : index
    %c0_15 = arith.constant 0 : index
    %20 = vector.load %arg2[%c0_13, %c0_14, %c0_15] : memref<2x1x8xf32, #tpu.memory_space<vmem>>, vector<1x1x8xf32>
    %21 = vector.shape_cast %20 : vector<1x1x8xf32> to vector<1x8xf32>
    %22 = vector.extract_strided_slice %19 {offsets = [0, 0], sizes = [8, 128], strides = [1, 1]} : vector<16x384xf32> to vector<8x128xf32>
    %23 = vector.extract_strided_slice %19 {offsets = [0, 128], sizes = [8, 128], strides = [1, 1]} : vector<16x384xf32> to vector<8x128xf32>
    %24 = vector.extract_strided_slice %19 {offsets = [0, 256], sizes = [8, 128], strides = [1, 1]} : vector<16x384xf32> to vector<8x128xf32>
    %25 = vector.extract_strided_slice %22 {offsets = [0, 0], sizes = [8, 32], strides = [1, 1]} : vector<8x128xf32> to vector<8x32xf32>
    %cst_16 = arith.constant 0.353553385 : f32
    %26 = vector.broadcast %cst_16 : f32 to vector<8x32xf32>
    %27 = arith.mulf %25, %26 : vector<8x32xf32>
    %28 = arith.truncf %27 : vector<8x32xf32> to vector<8x32xbf16>
    %29 = vector.extract_strided_slice %23 {offsets = [0, 0], sizes = [8, 32], strides = [1, 1]} : vector<8x128xf32> to vector<8x32xf32>
    %30 = arith.truncf %29 : vector<8x32xf32> to vector<8x32xbf16>
    %31 = vector.extract_strided_slice %24 {offsets = [0, 0], sizes = [8, 32], strides = [1, 1]} : vector<8x128xf32> to vector<8x32xf32>
    %32 = arith.truncf %31 : vector<8x32xf32> to vector<8x32xbf16>
    %cst_17 = arith.constant dense<0.000000e+00> : vector<8x8xf32>
    %33 = tpu.matmul %28, %30, %cst_17 {dimension_numbers = #tpu.dot_dimension_numbers<[1], [1], [0], [0], [0, 0, 1, 0], [], []>} : vector<8x32xbf16>, vector<8x32xbf16>, vector<8x8xf32> -> vector<8x8xf32>
    %34 = vector.broadcast %21 : vector<1x8xf32> to vector<8x8xf32>
    %35 = arith.addf %33, %34 : vector<8x8xf32>
    %cst_18 = arith.constant dense<0xFF800000> : vector<8xf32>
    %36 = vector.multi_reduction <maximumf>, %35, %cst_18 [1] : vector<8x8xf32> to vector<8xf32>
    %37 = vector.shape_cast %36 : vector<8xf32> to vector<8x1xf32>
    %38 = vector.broadcast %37 : vector<8x1xf32> to vector<8x8xf32>
    %39 = arith.subf %35, %38 : vector<8x8xf32>
    %40 = math.exp %39 : vector<8x8xf32>
    %cst_19 = arith.constant dense<0.000000e+00> : vector<8xf32>
    %41 = vector.multi_reduction <add>, %40, %cst_19 [1] : vector<8x8xf32> to vector<8xf32>
    %42 = vector.shape_cast %41 : vector<8xf32> to vector<8x1xf32>
    %43 = tpu.reciprocal %42 {approx = true} : vector<8x1xf32> -> vector<8x1xf32>
    %44 = vector.broadcast %43 : vector<8x1xf32> to vector<8x8xf32>
    %45 = arith.mulf %40, %44 : vector<8x8xf32>
    %46 = arith.truncf %45 : vector<8x8xf32> to vector<8x8xbf16>
    %cst_20 = arith.constant dense<0.000000e+00> : vector<8x32xf32>
    %47 = tpu.matmul %46, %32, %cst_20 {dimension_numbers = #tpu.dot_dimension_numbers<[1], [0], [0], [1], [0, 0, 1, 1], [], []>} : vector<8x8xbf16>, vector<8x32xbf16>, vector<8x32xf32> -> vector<8x32xf32>
    %c0_21 = arith.constant 0 : index
    %c0_22 = arith.constant 0 : index
    %48 = vector.load %arg9[%c0_21, %c0_22] : memref<16x128xf32, #tpu.memory_space<vmem>>, vector<8x32xf32>
    tpu.vector_store %arg9[%c0_21, %c0_22], %47 {strides = array<i32>} : memref<16x128xf32, #tpu.memory_space<vmem>>, vector<8x32xf32>,
    %49 = vector.extract_strided_slice %22 {offsets = [0, 32], sizes = [8, 32], strides = [1, 1]} : vector<8x128xf32> to vector<8x32xf32>
    %cst_23 = arith.constant 0.353553385 : f32
    %50 = vector.broadcast %cst_23 : f32 to vector<8x32xf32>
    %51 = arith.mulf %49, %50 : vector<8x32xf32>
    %52 = arith.truncf %51 : vector<8x32xf32> to vector<8x32xbf16>
    %53 = vector.extract_strided_slice %23 {offsets = [0, 32], sizes = [8, 32], strides = [1, 1]} : vector<8x128xf32> to vector<8x32xf32>
    %54 = arith.truncf %53 : vector<8x32xf32> to vector<8x32xbf16>
    %55 = vector.extract_strided_slice %24 {offsets = [0, 32], sizes = [8, 32], strides = [1, 1]} : vector<8x128xf32> to vector<8x32xf32>
    %56 = arith.truncf %55 : vector<8x32xf32> to vector<8x32xbf16>
    %cst_24 = arith.constant dense<0.000000e+00> : vector<8x8xf32>
    %57 = tpu.matmul %52, %54, %cst_24 {dimension_numbers = #tpu.dot_dimension_numbers<[1], [1], [0], [0], [0, 0, 1, 0], [], []>} : vector<8x32xbf16>, vector<8x32xbf16>, vector<8x8xf32> -> vector<8x8xf32>
    %58 = vector.broadcast %21 : vector<1x8xf32> to vector<8x8xf32>
    %59 = arith.addf %57, %58 : vector<8x8xf32>
    %cst_25 = arith.constant dense<0xFF800000> : vector<8xf32>
    %60 = vector.multi_reduction <maximumf>, %59, %cst_25 [1] : vector<8x8xf32> to vector<8xf32>
    %61 = vector.shape_cast %60 : vector<8xf32> to vector<8x1xf32>
    %62 = vector.broadcast %61 : vector<8x1xf32> to vector<8x8xf32>
    %63 = arith.subf %59, %62 : vector<8x8xf32>
    %64 = math.exp %63 : vector<8x8xf32>
    %cst_26 = arith.constant dense<0.000000e+00> : vector<8xf32>
    %65 = vector.multi_reduction <add>, %64, %cst_26 [1] : vector<8x8xf32> to vector<8xf32>
    %66 = vector.shape_cast %65 : vector<8xf32> to vector<8x1xf32>
    %67 = tpu.reciprocal %66 {approx = true} : vector<8x1xf32> -> vector<8x1xf32>
    %68 = vector.broadcast %67 : vector<8x1xf32> to vector<8x8xf32>
    %69 = arith.mulf %64, %68 : vector<8x8xf32>
    %70 = arith.truncf %69 : vector<8x8xf32> to vector<8x8xbf16>
    %cst_27 = arith.constant dense<0.000000e+00> : vector<8x32xf32>
    %71 = tpu.matmul %70, %56, %cst_27 {dimension_numbers = #tpu.dot_dimension_numbers<[1], [0], [0], [1], [0, 0, 1, 1], [], []>} : vector<8x8xbf16>, vector<8x32xbf16>, vector<8x32xf32> -> vector<8x32xf32>
    %c0_28 = arith.constant 0 : index
    %c32 = arith.constant 32 : index
    %72 = vector.load %arg9[%c0_28, %c32] : memref<16x128xf32, #tpu.memory_space<vmem>>, vector<8x32xf32>
    tpu.vector_store %arg9[%c0_28, %c32], %71 {strides = array<i32>} : memref<16x128xf32, #tpu.memory_space<vmem>>, vector<8x32xf32>,
    %73 = vector.extract_strided_slice %22 {offsets = [0, 64], sizes = [8, 32], strides = [1, 1]} : vector<8x128xf32> to vector<8x32xf32>
    %cst_29 = arith.constant 0.353553385 : f32
    %74 = vector.broadcast %cst_29 : f32 to vector<8x32xf32>
    %75 = arith.mulf %73, %74 : vector<8x32xf32>
    %76 = arith.truncf %75 : vector<8x32xf32> to vector<8x32xbf16>
    %77 = vector.extract_strided_slice %23 {offsets = [0, 64], sizes = [8, 32], strides = [1, 1]} : vector<8x128xf32> to vector<8x32xf32>
    %78 = arith.truncf %77 : vector<8x32xf32> to vector<8x32xbf16>
    %79 = vector.extract_strided_slice %24 {offsets = [0, 64], sizes = [8, 32], strides = [1, 1]} : vector<8x128xf32> to vector<8x32xf32>
    %80 = arith.truncf %79 : vector<8x32xf32> to vector<8x32xbf16>
    %cst_30 = arith.constant dense<0.000000e+00> : vector<8x8xf32>
    %81 = tpu.matmul %76, %78, %cst_30 {dimension_numbers = #tpu.dot_dimension_numbers<[1], [1], [0], [0], [0, 0, 1, 0], [], []>} : vector<8x32xbf16>, vector<8x32xbf16>, vector<8x8xf32> -> vector<8x8xf32>
    %82 = vector.broadcast %21 : vector<1x8xf32> to vector<8x8xf32>
    %83 = arith.addf %81, %82 : vector<8x8xf32>
    %cst_31 = arith.constant dense<0xFF800000> : vector<8xf32>
    %84 = vector.multi_reduction <maximumf>, %83, %cst_31 [1] : vector<8x8xf32> to vector<8xf32>
    %85 = vector.shape_cast %84 : vector<8xf32> to vector<8x1xf32>
    %86 = vector.broadcast %85 : vector<8x1xf32> to vector<8x8xf32>
    %87 = arith.subf %83, %86 : vector<8x8xf32>
    %88 = math.exp %87 : vector<8x8xf32>
    %cst_32 = arith.constant dense<0.000000e+00> : vector<8xf32>
    %89 = vector.multi_reduction <add>, %88, %cst_32 [1] : vector<8x8xf32> to vector<8xf32>
    %90 = vector.shape_cast %89 : vector<8xf32> to vector<8x1xf32>
    %91 = tpu.reciprocal %90 {approx = true} : vector<8x1xf32> -> vector<8x1xf32>
    %92 = vector.broadcast %91 : vector<8x1xf32> to vector<8x8xf32>
    %93 = arith.mulf %88, %92 : vector<8x8xf32>
    %94 = arith.truncf %93 : vector<8x8xf32> to vector<8x8xbf16>
    %cst_33 = arith.constant dense<0.000000e+00> : vector<8x32xf32>
    %95 = tpu.matmul %94, %80, %cst_33 {dimension_numbers = #tpu.dot_dimension_numbers<[1], [0], [0], [1], [0, 0, 1, 1], [], []>} : vector<8x8xbf16>, vector<8x32xbf16>, vector<8x32xf32> -> vector<8x32xf32>
    %c0_34 = arith.constant 0 : index
    %c64 = arith.constant 64 : index
    %96 = vector.load %arg9[%c0_34, %c64] : memref<16x128xf32, #tpu.memory_space<vmem>>, vector<8x32xf32>
    tpu.vector_store %arg9[%c0_34, %c64], %95 {strides = array<i32>} : memref<16x128xf32, #tpu.memory_space<vmem>>, vector<8x32xf32>,
    %97 = vector.extract_strided_slice %22 {offsets = [0, 96], sizes = [8, 32], strides = [1, 1]} : vector<8x128xf32> to vector<8x32xf32>
    %cst_35 = arith.constant 0.353553385 : f32
    %98 = vector.broadcast %cst_35 : f32 to vector<8x32xf32>
    %99 = arith.mulf %97, %98 : vector<8x32xf32>
    %100 = arith.truncf %99 : vector<8x32xf32> to vector<8x32xbf16>
    %101 = vector.extract_strided_slice %23 {offsets = [0, 96], sizes = [8, 32], strides = [1, 1]} : vector<8x128xf32> to vector<8x32xf32>
    %102 = arith.truncf %101 : vector<8x32xf32> to vector<8x32xbf16>
    %103 = vector.extract_strided_slice %24 {offsets = [0, 96], sizes = [8, 32], strides = [1, 1]} : vector<8x128xf32> to vector<8x32xf32>
    %104 = arith.truncf %103 : vector<8x32xf32> to vector<8x32xbf16>
    %cst_36 = arith.constant dense<0.000000e+00> : vector<8x8xf32>
    %105 = tpu.matmul %100, %102, %cst_36 {dimension_numbers = #tpu.dot_dimension_numbers<[1], [1], [0], [0], [0, 0, 1, 0], [], []>} : vector<8x32xbf16>, vector<8x32xbf16>, vector<8x8xf32> -> vector<8x8xf32>
    %106 = vector.broadcast %21 : vector<1x8xf32> to vector<8x8xf32>
    %107 = arith.addf %105, %106 : vector<8x8xf32>
    %cst_37 = arith.constant dense<0xFF800000> : vector<8xf32>
    %108 = vector.multi_reduction <maximumf>, %107, %cst_37 [1] : vector<8x8xf32> to vector<8xf32>
    %109 = vector.shape_cast %108 : vector<8xf32> to vector<8x1xf32>
    %110 = vector.broadcast %109 : vector<8x1xf32> to vector<8x8xf32>
    %111 = arith.subf %107, %110 : vector<8x8xf32>
    %112 = math.exp %111 : vector<8x8xf32>
    %cst_38 = arith.constant dense<0.000000e+00> : vector<8xf32>
    %113 = vector.multi_reduction <add>, %112, %cst_38 [1] : vector<8x8xf32> to vector<8xf32>
    %114 = vector.shape_cast %113 : vector<8xf32> to vector<8x1xf32>
    %115 = tpu.reciprocal %114 {approx = true} : vector<8x1xf32> -> vector<8x1xf32>
    %116 = vector.broadcast %115 : vector<8x1xf32> to vector<8x8xf32>
    %117 = arith.mulf %112, %116 : vector<8x8xf32>
    %118 = arith.truncf %117 : vector<8x8xf32> to vector<8x8xbf16>
    %cst_39 = arith.constant dense<0.000000e+00> : vector<8x32xf32>
    %119 = tpu.matmul %118, %104, %cst_39 {dimension_numbers = #tpu.dot_dimension_numbers<[1], [0], [0], [1], [0, 0, 1, 1], [], []>} : vector<8x8xbf16>, vector<8x32xbf16>, vector<8x32xf32> -> vector<8x32xf32>
    %c0_40 = arith.constant 0 : index
    %c96 = arith.constant 96 : index
    %120 = vector.load %arg9[%c0_40, %c96] : memref<16x128xf32, #tpu.memory_space<vmem>>, vector<8x32xf32>
    tpu.vector_store %arg9[%c0_40, %c96], %119 {strides = array<i32>} : memref<16x128xf32, #tpu.memory_space<vmem>>, vector<8x32xf32>,
    %c1 = arith.constant 1 : index
    %c0_41 = arith.constant 0 : index
    %c0_42 = arith.constant 0 : index
    %121 = vector.load %arg2[%c1, %c0_41, %c0_42] : memref<2x1x8xf32, #tpu.memory_space<vmem>>, vector<1x1x8xf32>
    %122 = vector.shape_cast %121 : vector<1x1x8xf32> to vector<1x8xf32>
    %123 = vector.extract_strided_slice %19 {offsets = [8, 0], sizes = [8, 128], strides = [1, 1]} : vector<16x384xf32> to vector<8x128xf32>
    %124 = vector.extract_strided_slice %19 {offsets = [8, 128], sizes = [8, 128], strides = [1, 1]} : vector<16x384xf32> to vector<8x128xf32>
    %125 = vector.extract_strided_slice %19 {offsets = [8, 256], sizes = [8, 128], strides = [1, 1]} : vector<16x384xf32> to vector<8x128xf32>
    %126 = vector.extract_strided_slice %123 {offsets = [0, 0], sizes = [8, 32], strides = [1, 1]} : vector<8x128xf32> to vector<8x32xf32>
    %cst_43 = arith.constant 0.353553385 : f32
    %127 = vector.broadcast %cst_43 : f32 to vector<8x32xf32>
    %128 = arith.mulf %126, %127 : vector<8x32xf32>
    %129 = arith.truncf %128 : vector<8x32xf32> to vector<8x32xbf16>
    %130 = vector.extract_strided_slice %124 {offsets = [0, 0], sizes = [8, 32], strides = [1, 1]} : vector<8x128xf32> to vector<8x32xf32>
    %131 = arith.truncf %130 : vector<8x32xf32> to vector<8x32xbf16>
    %132 = vector.extract_strided_slice %125 {offsets = [0, 0], sizes = [8, 32], strides = [1, 1]} : vector<8x128xf32> to vector<8x32xf32>
    %133 = arith.truncf %132 : vector<8x32xf32> to vector<8x32xbf16>
    %cst_44 = arith.constant dense<0.000000e+00> : vector<8x8xf32>
    %134 = tpu.matmul %129, %131, %cst_44 {dimension_numbers = #tpu.dot_dimension_numbers<[1], [1], [0], [0], [0, 0, 1, 0], [], []>} : vector<8x32xbf16>, vector<8x32xbf16>, vector<8x8xf32> -> vector<8x8xf32>
    %135 = vector.broadcast %122 : vector<1x8xf32> to vector<8x8xf32>
    %136 = arith.addf %134, %135 : vector<8x8xf32>
    %cst_45 = arith.constant dense<0xFF800000> : vector<8xf32>
    %137 = vector.multi_reduction <maximumf>, %136, %cst_45 [1] : vector<8x8xf32> to vector<8xf32>
    %138 = vector.shape_cast %137 : vector<8xf32> to vector<8x1xf32>
    %139 = vector.broadcast %138 : vector<8x1xf32> to vector<8x8xf32>
    %140 = arith.subf %136, %139 : vector<8x8xf32>
    %141 = math.exp %140 : vector<8x8xf32>
    %cst_46 = arith.constant dense<0.000000e+00> : vector<8xf32>
    %142 = vector.multi_reduction <add>, %141, %cst_46 [1] : vector<8x8xf32> to vector<8xf32>
    %143 = vector.shape_cast %142 : vector<8xf32> to vector<8x1xf32>
    %144 = tpu.reciprocal %143 {approx = true} : vector<8x1xf32> -> vector<8x1xf32>
    %145 = vector.broadcast %144 : vector<8x1xf32> to vector<8x8xf32>
    %146 = arith.mulf %141, %145 : vector<8x8xf32>
    %147 = arith.truncf %146 : vector<8x8xf32> to vector<8x8xbf16>
    %cst_47 = arith.constant dense<0.000000e+00> : vector<8x32xf32>
    %148 = tpu.matmul %147, %133, %cst_47 {dimension_numbers = #tpu.dot_dimension_numbers<[1], [0], [0], [1], [0, 0, 1, 1], [], []>} : vector<8x8xbf16>, vector<8x32xbf16>, vector<8x32xf32> -> vector<8x32xf32>
    %c8 = arith.constant 8 : index
    %c0_48 = arith.constant 0 : index
    %149 = vector.load %arg9[%c8, %c0_48] : memref<16x128xf32, #tpu.memory_space<vmem>>, vector<8x32xf32>
    tpu.vector_store %arg9[%c8, %c0_48], %148 {strides = array<i32>} : memref<16x128xf32, #tpu.memory_space<vmem>>, vector<8x32xf32>,
    %150 = vector.extract_strided_slice %123 {offsets = [0, 32], sizes = [8, 32], strides = [1, 1]} : vector<8x128xf32> to vector<8x32xf32>
    %cst_49 = arith.constant 0.353553385 : f32
    %151 = vector.broadcast %cst_49 : f32 to vector<8x32xf32>
    %152 = arith.mulf %150, %151 : vector<8x32xf32>
    %153 = arith.truncf %152 : vector<8x32xf32> to vector<8x32xbf16>
    %154 = vector.extract_strided_slice %124 {offsets = [0, 32], sizes = [8, 32], strides = [1, 1]} : vector<8x128xf32> to vector<8x32xf32>
    %155 = arith.truncf %154 : vector<8x32xf32> to vector<8x32xbf16>
    %156 = vector.extract_strided_slice %125 {offsets = [0, 32], sizes = [8, 32], strides = [1, 1]} : vector<8x128xf32> to vector<8x32xf32>
    %157 = arith.truncf %156 : vector<8x32xf32> to vector<8x32xbf16>
    %cst_50 = arith.constant dense<0.000000e+00> : vector<8x8xf32>
    %158 = tpu.matmul %153, %155, %cst_50 {dimension_numbers = #tpu.dot_dimension_numbers<[1], [1], [0], [0], [0, 0, 1, 0], [], []>} : vector<8x32xbf16>, vector<8x32xbf16>, vector<8x8xf32> -> vector<8x8xf32>
    %159 = vector.broadcast %122 : vector<1x8xf32> to vector<8x8xf32>
    %160 = arith.addf %158, %159 : vector<8x8xf32>
    %cst_51 = arith.constant dense<0xFF800000> : vector<8xf32>
    %161 = vector.multi_reduction <maximumf>, %160, %cst_51 [1] : vector<8x8xf32> to vector<8xf32>
    %162 = vector.shape_cast %161 : vector<8xf32> to vector<8x1xf32>
    %163 = vector.broadcast %162 : vector<8x1xf32> to vector<8x8xf32>
    %164 = arith.subf %160, %163 : vector<8x8xf32>
    %165 = math.exp %164 : vector<8x8xf32>
    %cst_52 = arith.constant dense<0.000000e+00> : vector<8xf32>
    %166 = vector.multi_reduction <add>, %165, %cst_52 [1] : vector<8x8xf32> to vector<8xf32>
    %167 = vector.shape_cast %166 : vector<8xf32> to vector<8x1xf32>
    %168 = tpu.reciprocal %167 {approx = true} : vector<8x1xf32> -> vector<8x1xf32>
    %169 = vector.broadcast %168 : vector<8x1xf32> to vector<8x8xf32>
    %170 = arith.mulf %165, %169 : vector<8x8xf32>
    %171 = arith.truncf %170 : vector<8x8xf32> to vector<8x8xbf16>
    %cst_53 = arith.constant dense<0.000000e+00> : vector<8x32xf32>
    %172 = tpu.matmul %171, %157, %cst_53 {dimension_numbers = #tpu.dot_dimension_numbers<[1], [0], [0], [1], [0, 0, 1, 1], [], []>} : vector<8x8xbf16>, vector<8x32xbf16>, vector<8x32xf32> -> vector<8x32xf32>
    %c8_54 = arith.constant 8 : index
    %c32_55 = arith.constant 32 : index
    %173 = vector.load %arg9[%c8_54, %c32_55] : memref<16x128xf32, #tpu.memory_space<vmem>>, vector<8x32xf32>
    tpu.vector_store %arg9[%c8_54, %c32_55], %172 {strides = array<i32>} : memref<16x128xf32, #tpu.memory_space<vmem>>, vector<8x32xf32>,
    %174 = vector.extract_strided_slice %123 {offsets = [0, 64], sizes = [8, 32], strides = [1, 1]} : vector<8x128xf32> to vector<8x32xf32>
    %cst_56 = arith.constant 0.353553385 : f32
    %175 = vector.broadcast %cst_56 : f32 to vector<8x32xf32>
    %176 = arith.mulf %174, %175 : vector<8x32xf32>
    %177 = arith.truncf %176 : vector<8x32xf32> to vector<8x32xbf16>
    %178 = vector.extract_strided_slice %124 {offsets = [0, 64], sizes = [8, 32], strides = [1, 1]} : vector<8x128xf32> to vector<8x32xf32>
    %179 = arith.truncf %178 : vector<8x32xf32> to vector<8x32xbf16>
    %180 = vector.extract_strided_slice %125 {offsets = [0, 64], sizes = [8, 32], strides = [1, 1]} : vector<8x128xf32> to vector<8x32xf32>
    %181 = arith.truncf %180 : vector<8x32xf32> to vector<8x32xbf16>
    %cst_57 = arith.constant dense<0.000000e+00> : vector<8x8xf32>
    %182 = tpu.matmul %177, %179, %cst_57 {dimension_numbers = #tpu.dot_dimension_numbers<[1], [1], [0], [0], [0, 0, 1, 0], [], []>} : vector<8x32xbf16>, vector<8x32xbf16>, vector<8x8xf32> -> vector<8x8xf32>
    %183 = vector.broadcast %122 : vector<1x8xf32> to vector<8x8xf32>
    %184 = arith.addf %182, %183 : vector<8x8xf32>
    %cst_58 = arith.constant dense<0xFF800000> : vector<8xf32>
    %185 = vector.multi_reduction <maximumf>, %184, %cst_58 [1] : vector<8x8xf32> to vector<8xf32>
    %186 = vector.shape_cast %185 : vector<8xf32> to vector<8x1xf32>
    %187 = vector.broadcast %186 : vector<8x1xf32> to vector<8x8xf32>
    %188 = arith.subf %184, %187 : vector<8x8xf32>
    %189 = math.exp %188 : vector<8x8xf32>
    %cst_59 = arith.constant dense<0.000000e+00> : vector<8xf32>
    %190 = vector.multi_reduction <add>, %189, %cst_59 [1] : vector<8x8xf32> to vector<8xf32>
    %191 = vector.shape_cast %190 : vector<8xf32> to vector<8x1xf32>
    %192 = tpu.reciprocal %191 {approx = true} : vector<8x1xf32> -> vector<8x1xf32>
    %193 = vector.broadcast %192 : vector<8x1xf32> to vector<8x8xf32>
    %194 = arith.mulf %189, %193 : vector<8x8xf32>
    %195 = arith.truncf %194 : vector<8x8xf32> to vector<8x8xbf16>
    %cst_60 = arith.constant dense<0.000000e+00> : vector<8x32xf32>
    %196 = tpu.matmul %195, %181, %cst_60 {dimension_numbers = #tpu.dot_dimension_numbers<[1], [0], [0], [1], [0, 0, 1, 1], [], []>} : vector<8x8xbf16>, vector<8x32xbf16>, vector<8x32xf32> -> vector<8x32xf32>
    %c8_61 = arith.constant 8 : index
    %c64_62 = arith.constant 64 : index
    %197 = vector.load %arg9[%c8_61, %c64_62] : memref<16x128xf32, #tpu.memory_space<vmem>>, vector<8x32xf32>
    tpu.vector_store %arg9[%c8_61, %c64_62], %196 {strides = array<i32>} : memref<16x128xf32, #tpu.memory_space<vmem>>, vector<8x32xf32>,
    %198 = vector.extract_strided_slice %123 {offsets = [0, 96], sizes = [8, 32], strides = [1, 1]} : vector<8x128xf32> to vector<8x32xf32>
    %cst_63 = arith.constant 0.353553385 : f32
    %199 = vector.broadcast %cst_63 : f32 to vector<8x32xf32>
    %200 = arith.mulf %198, %199 : vector<8x32xf32>
    %201 = arith.truncf %200 : vector<8x32xf32> to vector<8x32xbf16>
    %202 = vector.extract_strided_slice %124 {offsets = [0, 96], sizes = [8, 32], strides = [1, 1]} : vector<8x128xf32> to vector<8x32xf32>
    %203 = arith.truncf %202 : vector<8x32xf32> to vector<8x32xbf16>
    %204 = vector.extract_strided_slice %125 {offsets = [0, 96], sizes = [8, 32], strides = [1, 1]} : vector<8x128xf32> to vector<8x32xf32>
    %205 = arith.truncf %204 : vector<8x32xf32> to vector<8x32xbf16>
    %cst_64 = arith.constant dense<0.000000e+00> : vector<8x8xf32>
    %206 = tpu.matmul %201, %203, %cst_64 {dimension_numbers = #tpu.dot_dimension_numbers<[1], [1], [0], [0], [0, 0, 1, 0], [], []>} : vector<8x32xbf16>, vector<8x32xbf16>, vector<8x8xf32> -> vector<8x8xf32>
    %207 = vector.broadcast %122 : vector<1x8xf32> to vector<8x8xf32>
    %208 = arith.addf %206, %207 : vector<8x8xf32>
    %cst_65 = arith.constant dense<0xFF800000> : vector<8xf32>
    %209 = vector.multi_reduction <maximumf>, %208, %cst_65 [1] : vector<8x8xf32> to vector<8xf32>
    %210 = vector.shape_cast %209 : vector<8xf32> to vector<8x1xf32>
    %211 = vector.broadcast %210 : vector<8x1xf32> to vector<8x8xf32>
    %212 = arith.subf %208, %211 : vector<8x8xf32>
    %213 = math.exp %212 : vector<8x8xf32>
    %cst_66 = arith.constant dense<0.000000e+00> : vector<8xf32>
    %214 = vector.multi_reduction <add>, %213, %cst_66 [1] : vector<8x8xf32> to vector<8xf32>
    %215 = vector.shape_cast %214 : vector<8xf32> to vector<8x1xf32>
    %216 = tpu.reciprocal %215 {approx = true} : vector<8x1xf32> -> vector<8x1xf32>
    %217 = vector.broadcast %216 : vector<8x1xf32> to vector<8x8xf32>
    %218 = arith.mulf %213, %217 : vector<8x8xf32>
    %219 = arith.truncf %218 : vector<8x8xf32> to vector<8x8xbf16>
    %cst_67 = arith.constant dense<0.000000e+00> : vector<8x32xf32>
    %220 = tpu.matmul %219, %205, %cst_67 {dimension_numbers = #tpu.dot_dimension_numbers<[1], [0], [0], [1], [0, 0, 1, 1], [], []>} : vector<8x8xbf16>, vector<8x32xbf16>, vector<8x32xf32> -> vector<8x32xf32>
    %c8_68 = arith.constant 8 : index
    %c96_69 = arith.constant 96 : index
    %221 = vector.load %arg9[%c8_68, %c96_69] : memref<16x128xf32, #tpu.memory_space<vmem>>, vector<8x32xf32>
    tpu.vector_store %arg9[%c8_68, %c96_69], %220 {strides = array<i32>} : memref<16x128xf32, #tpu.memory_space<vmem>>, vector<8x32xf32>,
    %c0_70 = arith.constant 0 : index
    %c0_71 = arith.constant 0 : index
    %222 = vector.load %arg9[%c0_70, %c0_71] : memref<16x128xf32, #tpu.memory_space<vmem>>, vector<16x128xf32>
    %c0_72 = arith.constant 0 : index
    %c0_73 = arith.constant 0 : index
    %223 = vector.load %arg4[%c0_72, %c0_73] : memref<128x128xbf16, #tpu.memory_space<vmem>>, vector<128x128xbf16>
    %224 = arith.truncf %222 : vector<16x128xf32> to vector<16x128xbf16>
    %cst_74 = arith.constant dense<0.000000e+00> : vector<16x128xf32>
    %225 = tpu.matmul %224, %223, %cst_74 {dimension_numbers = #tpu.dot_dimension_numbers<[1], [0], [0], [1], [0, 0, 1, 1], [], []>} : vector<16x128xbf16>, vector<128x128xbf16>, vector<16x128xf32> -> vector<16x128xf32>
    %226 = vector.broadcast %6 : vector<1x128xf32> to vector<16x128xf32>
    %227 = arith.addf %225, %226 : vector<16x128xf32>
    %228 = arith.addf %14, %227 : vector<16x128xf32>
    %cst_75 = arith.constant dense<0.000000e+00> : vector<16xf32>
    %229 = vector.multi_reduction <add>, %228, %cst_75 [1] : vector<16x128xf32> to vector<16xf32>
    %230 = vector.shape_cast %229 : vector<16xf32> to vector<16x1xf32>
    %cst_76 = arith.constant 3.125000e-02 : f32
    %231 = vector.broadcast %cst_76 : f32 to vector<16x1xf32>
    %232 = arith.mulf %230, %231 : vector<16x1xf32>
    %233 = vector.broadcast %232 : vector<16x1xf32> to vector<16x128xf32>
    %234 = arith.subf %228, %233 : vector<16x128xf32>
    %235 = vector.broadcast %4 : vector<1x128xf32> to vector<16x128xf32>
    %236 = arith.mulf %234, %235 : vector<16x128xf32>
    %237 = arith.mulf %236, %236 : vector<16x128xf32>
    %cst_77 = arith.constant dense<0.000000e+00> : vector<16xf32>
    %238 = vector.multi_reduction <add>, %237, %cst_77 [1] : vector<16x128xf32> to vector<16xf32>
    %239 = vector.shape_cast %238 : vector<16xf32> to vector<16x1xf32>
    %cst_78 = arith.constant 3.125000e-02 : f32
    %240 = vector.broadcast %cst_78 : f32 to vector<16x1xf32>
    %241 = arith.mulf %239, %240 : vector<16x1xf32>
    %cst_79 = arith.constant 9.99999974E-6 : f32
    %242 = vector.broadcast %cst_79 : f32 to vector<16x1xf32>
    %243 = arith.addf %241, %242 : vector<16x1xf32>
    %244 = math.rsqrt %243 : vector<16x1xf32>
    %245 = vector.broadcast %244 : vector<16x1xf32> to vector<16x128xf32>
    %246 = arith.mulf %236, %245 : vector<16x128xf32>
    %247 = vector.broadcast %7 : vector<1x128xf32> to vector<16x128xf32>
    %248 = arith.mulf %246, %247 : vector<16x128xf32>
    %249 = vector.broadcast %8 : vector<1x128xf32> to vector<16x128xf32>
    %250 = arith.addf %248, %249 : vector<16x128xf32>
    %c0_80 = arith.constant 0 : index
    %c0_81 = arith.constant 0 : index
    %251 = vector.load %arg5[%c0_80, %c0_81] : memref<128x128xbf16, #tpu.memory_space<vmem>>, vector<128x128xbf16>
    %252 = arith.truncf %250 : vector<16x128xf32> to vector<16x128xbf16>
    %cst_82 = arith.constant dense<0.000000e+00> : vector<16x128xf32>
    %253 = tpu.matmul %252, %251, %cst_82 {dimension_numbers = #tpu.dot_dimension_numbers<[1], [0], [0], [1], [0, 0, 1, 1], [], []>} : vector<16x128xbf16>, vector<128x128xbf16>, vector<16x128xf32> -> vector<16x128xf32>
    %254 = vector.broadcast %9 : vector<1x128xf32> to vector<16x128xf32>
    %255 = arith.addf %253, %254 : vector<16x128xf32>
    %cst_83 = arith.constant 0.000000e+00 : f32
    %256 = vector.broadcast %cst_83 : f32 to vector<16x128xf32>
    %257 = arith.maximumf %255, %256 : vector<16x128xf32>
    %c0_84 = arith.constant 0 : index
    %c0_85 = arith.constant 0 : index
    %258 = vector.load %arg6[%c0_84, %c0_85] : memref<128x128xbf16, #tpu.memory_space<vmem>>, vector<128x128xbf16>
    %259 = arith.truncf %257 : vector<16x128xf32> to vector<16x128xbf16>
    %cst_86 = arith.constant dense<0.000000e+00> : vector<16x128xf32>
    %260 = tpu.matmul %259, %258, %cst_86 {dimension_numbers = #tpu.dot_dimension_numbers<[1], [0], [0], [1], [0, 0, 1, 1], [], []>} : vector<16x128xbf16>, vector<128x128xbf16>, vector<16x128xf32> -> vector<16x128xf32>
    %261 = vector.broadcast %10 : vector<1x128xf32> to vector<16x128xf32>
    %262 = arith.addf %260, %261 : vector<16x128xf32>
    %263 = arith.addf %250, %262 : vector<16x128xf32>
    %cst_87 = arith.constant dense<0.000000e+00> : vector<16xf32>
    %264 = vector.multi_reduction <add>, %263, %cst_87 [1] : vector<16x128xf32> to vector<16xf32>
    %265 = vector.shape_cast %264 : vector<16xf32> to vector<16x1xf32>
    %cst_88 = arith.constant 3.125000e-02 : f32
    %266 = vector.broadcast %cst_88 : f32 to vector<16x1xf32>
    %267 = arith.mulf %265, %266 : vector<16x1xf32>
    %268 = vector.broadcast %267 : vector<16x1xf32> to vector<16x128xf32>
    %269 = arith.subf %263, %268 : vector<16x128xf32>
    %270 = vector.broadcast %4 : vector<1x128xf32> to vector<16x128xf32>
    %271 = arith.mulf %269, %270 : vector<16x128xf32>
    %272 = arith.mulf %271, %271 : vector<16x128xf32>
    %cst_89 = arith.constant dense<0.000000e+00> : vector<16xf32>
    %273 = vector.multi_reduction <add>, %272, %cst_89 [1] : vector<16x128xf32> to vector<16xf32>
    %274 = vector.shape_cast %273 : vector<16xf32> to vector<16x1xf32>
    %cst_90 = arith.constant 3.125000e-02 : f32
    %275 = vector.broadcast %cst_90 : f32 to vector<16x1xf32>
    %276 = arith.mulf %274, %275 : vector<16x1xf32>
    %cst_91 = arith.constant 9.99999974E-6 : f32
    %277 = vector.broadcast %cst_91 : f32 to vector<16x1xf32>
    %278 = arith.addf %276, %277 : vector<16x1xf32>
    %279 = math.rsqrt %278 : vector<16x1xf32>
    %280 = vector.broadcast %279 : vector<16x1xf32> to vector<16x128xf32>
    %281 = arith.mulf %271, %280 : vector<16x128xf32>
    %282 = vector.broadcast %11 : vector<1x128xf32> to vector<16x128xf32>
    %283 = arith.mulf %281, %282 : vector<16x128xf32>
    %284 = vector.broadcast %12 : vector<1x128xf32> to vector<16x128xf32>
    %285 = arith.addf %283, %284 : vector<16x128xf32>
    %286 = vector.shape_cast %285 : vector<16x128xf32> to vector<2x8x128xf32>
    %c0_92 = arith.constant 0 : index
    %c0_93 = arith.constant 0 : index
    %c0_94 = arith.constant 0 : index
    %287 = vector.load %arg8[%c0_92, %c0_93, %c0_94] : memref<2x8x128xf32, #tpu.memory_space<vmem>>, vector<2x8x128xf32>
    tpu.vector_store %arg8[%c0_92, %c0_93, %c0_94], %286 {strides = array<i32>} : memref<2x8x128xf32, #tpu.memory_space<vmem>>, vector<2x8x128xf32>,
    return
  }
  func.func @transform_0(%arg0: i32) -> (i32, i32, i32) {
    %c0_i32 = arith.constant 0 : i32
    %c0_i32_0 = arith.constant 0 : i32
    %c0_i32_1 = arith.constant 0 : i32
    %c0_i32_2 = arith.constant 0 : i32
    return %c0_i32, %c0_i32_0, %c0_i32_1 : i32, i32, i32
  }
  func.func @transform_1(%arg0: i32) -> (i32, i32, i32) {
    %c0_i32 = arith.constant 0 : i32
    %c0_i32_0 = arith.constant 0 : i32
    %c0_i32_1 = arith.constant 0 : i32
    %c0_i32_2 = arith.constant 0 : i32
    return %c0_i32, %c0_i32_0, %c0_i32_1 : i32, i32, i32
  }
  func.func @transform_2(%arg0: i32) -> (i32, i32) {
    %c0_i32 = arith.constant 0 : i32
    %c0_i32_0 = arith.constant 0 : i32
    %c0_i32_1 = arith.constant 0 : i32
    return %c0_i32, %c0_i32_0 : i32, i32
  }
  func.func @transform_3(%arg0: i32) -> (i32, i32) {
    %c0_i32 = arith.constant 0 : i32
    %c0_i32_0 = arith.constant 0 : i32
    %c0_i32_1 = arith.constant 0 : i32
    return %c0_i32, %c0_i32_0 : i32, i32
  }
  func.func @transform_4(%arg0: i32) -> (i32, i32) {
    %c0_i32 = arith.constant 0 : i32
    %c0_i32_0 = arith.constant 0 : i32
    %c0_i32_1 = arith.constant 0 : i32
    return %c0_i32, %c0_i32_0 : i32, i32
  }
  func.func @transform_5(%arg0: i32) -> (i32, i32) {
    %c0_i32 = arith.constant 0 : i32
    %c0_i32_0 = arith.constant 0 : i32
    %c0_i32_1 = arith.constant 0 : i32
    return %c0_i32, %c0_i32_0 : i32, i32
  }
  func.func @transform_6(%arg0: i32) -> (i32, i32) {
    %c0_i32 = arith.constant 0 : i32
    %c0_i32_0 = arith.constant 0 : i32
    %c0_i32_1 = arith.constant 0 : i32
    return %c0_i32, %c0_i32_0 : i32, i32
  }
  func.func @transform_7(%arg0: i32) -> (i32, i32, i32) {
    %c0_i32 = arith.constant 0 : i32
    %c0_i32_0 = arith.constant 0 : i32
    %c0_i32_1 = arith.constant 0 : i32
    %c0_i32_2 = arith.constant 0 : i32
    return %c0_i32, %c0_i32_0, %c0_i32_1 : i32, i32, i32
  }
}

module attributes {stable_mosaic.version = 11 : i64} {
  func.func @_dec_layer_kernel(%arg0: i32, %arg1: memref<2x8x128xf32, #tpu.memory_space<vmem>>, %arg2: memref<2x4x128xf32, #tpu.memory_space<vmem>>, %arg3: memref<2x1x8xf32, #tpu.memory_space<vmem>>, %arg4: memref<8x8xf32, #tpu.memory_space<vmem>>, %arg5: memref<128x384xbf16, #tpu.memory_space<vmem>>, %arg6: memref<128x128xbf16, #tpu.memory_space<vmem>>, %arg7: memref<128x128xbf16, #tpu.memory_space<vmem>>, %arg8: memref<128x256xbf16, #tpu.memory_space<vmem>>, %arg9: memref<128x128xbf16, #tpu.memory_space<vmem>>, %arg10: memref<128x128xbf16, #tpu.memory_space<vmem>>, %arg11: memref<128x128xbf16, #tpu.memory_space<vmem>>, %arg12: memref<1x2048xf32, #tpu.memory_space<vmem>>, %arg13: memref<2x8x128xf32, #tpu.memory_space<vmem>>, %arg14: memref<16x128xf32, #tpu.memory_space<vmem>>) attributes {dimension_semantics = [#tpu.dimension_semantics<arbitrary>], iteration_bounds = array<i64: 1>, scalar_prefetch = 0 : i64, scratch_operands = 1 : i64, tpu.core_type = #tpu.core_type<tc>, window_params = [{pipeline_mode = #tpu.pipeline_mode<synchronous>, transform_indices = @transform_0, window_bounds = array<i64: 2, 8, 128>}, {pipeline_mode = #tpu.pipeline_mode<synchronous>, transform_indices = @transform_1, window_bounds = array<i64: 2, 4, 128>}, {pipeline_mode = #tpu.pipeline_mode<synchronous>, transform_indices = @transform_2, window_bounds = array<i64: 2, 1, 8>}, {pipeline_mode = #tpu.pipeline_mode<synchronous>, transform_indices = @transform_3, window_bounds = array<i64: 8, 8>}, {pipeline_mode = #tpu.pipeline_mode<synchronous>, transform_indices = @transform_4, window_bounds = array<i64: 128, 384>}, {pipeline_mode = #tpu.pipeline_mode<synchronous>, transform_indices = @transform_5, window_bounds = array<i64: 128, 128>}, {pipeline_mode = #tpu.pipeline_mode<synchronous>, transform_indices = @transform_6, window_bounds = array<i64: 128, 128>}, {pipeline_mode = #tpu.pipeline_mode<synchronous>, transform_indices = @transform_7, window_bounds = array<i64: 128, 256>}, {pipeline_mode = #tpu.pipeline_mode<synchronous>, transform_indices = @transform_8, window_bounds = array<i64: 128, 128>}, {pipeline_mode = #tpu.pipeline_mode<synchronous>, transform_indices = @transform_9, window_bounds = array<i64: 128, 128>}, {pipeline_mode = #tpu.pipeline_mode<synchronous>, transform_indices = @transform_10, window_bounds = array<i64: 128, 128>}, {pipeline_mode = #tpu.pipeline_mode<synchronous>, transform_indices = @transform_11, window_bounds = array<i64: 1, 2048>}, {pipeline_mode = #tpu.pipeline_mode<synchronous>, transform_indices = @transform_12, window_bounds = array<i64: 2, 8, 128>}]} {
    %0 = tpu.iota {dimensions = array<i32: 1>} : vector<1x128xi32>
    %c32_i32 = arith.constant 32 : i32
    %1 = vector.broadcast %c32_i32 : i32 to vector<1x128xi32>
    %2 = arith.cmpi slt, %0, %1 : vector<1x128xi32>
    %3 = arith.extui %2 : vector<1x128xi1> to vector<1x128xi32>
    %4 = arith.sitofp %3 : vector<1x128xi32> to vector<1x128xf32>
    %c0 = arith.constant 0 : index
    %c0_0 = arith.constant 0 : index
    %5 = vector.load %arg12[%c0, %c0_0] : memref<1x2048xf32, #tpu.memory_space<vmem>>, vector<1x384xf32>
    %c0_1 = arith.constant 0 : index
    %c384 = arith.constant 384 : index
    %6 = vector.load %arg12[%c0_1, %c384] : memref<1x2048xf32, #tpu.memory_space<vmem>>, vector<1x128xf32>
    %c0_2 = arith.constant 0 : index
    %c512 = arith.constant 512 : index
    %7 = vector.load %arg12[%c0_2, %c512] : memref<1x2048xf32, #tpu.memory_space<vmem>>, vector<1x128xf32>
    %c0_3 = arith.constant 0 : index
    %c640 = arith.constant 640 : index
    %8 = vector.load %arg12[%c0_3, %c640] : memref<1x2048xf32, #tpu.memory_space<vmem>>, vector<1x128xf32>
    %c0_4 = arith.constant 0 : index
    %c768 = arith.constant 768 : index
    %9 = vector.load %arg12[%c0_4, %c768] : memref<1x2048xf32, #tpu.memory_space<vmem>>, vector<1x128xf32>
    %c0_5 = arith.constant 0 : index
    %c896 = arith.constant 896 : index
    %10 = vector.load %arg12[%c0_5, %c896] : memref<1x2048xf32, #tpu.memory_space<vmem>>, vector<1x256xf32>
    %c0_6 = arith.constant 0 : index
    %c1152 = arith.constant 1152 : index
    %11 = vector.load %arg12[%c0_6, %c1152] : memref<1x2048xf32, #tpu.memory_space<vmem>>, vector<1x128xf32>
    %c0_7 = arith.constant 0 : index
    %c1280 = arith.constant 1280 : index
    %12 = vector.load %arg12[%c0_7, %c1280] : memref<1x2048xf32, #tpu.memory_space<vmem>>, vector<1x128xf32>
    %c0_8 = arith.constant 0 : index
    %c1408 = arith.constant 1408 : index
    %13 = vector.load %arg12[%c0_8, %c1408] : memref<1x2048xf32, #tpu.memory_space<vmem>>, vector<1x128xf32>
    %c0_9 = arith.constant 0 : index
    %c1536 = arith.constant 1536 : index
    %14 = vector.load %arg12[%c0_9, %c1536] : memref<1x2048xf32, #tpu.memory_space<vmem>>, vector<1x128xf32>
    %c0_10 = arith.constant 0 : index
    %c1664 = arith.constant 1664 : index
    %15 = vector.load %arg12[%c0_10, %c1664] : memref<1x2048xf32, #tpu.memory_space<vmem>>, vector<1x128xf32>
    %c0_11 = arith.constant 0 : index
    %c1792 = arith.constant 1792 : index
    %16 = vector.load %arg12[%c0_11, %c1792] : memref<1x2048xf32, #tpu.memory_space<vmem>>, vector<1x128xf32>
    %c0_12 = arith.constant 0 : index
    %c1920 = arith.constant 1920 : index
    %17 = vector.load %arg12[%c0_12, %c1920] : memref<1x2048xf32, #tpu.memory_space<vmem>>, vector<1x128xf32>
    %c0_13 = arith.constant 0 : index
    %c0_14 = arith.constant 0 : index
    %c0_15 = arith.constant 0 : index
    %18 = vector.load %arg1[%c0_13, %c0_14, %c0_15] : memref<2x8x128xf32, #tpu.memory_space<vmem>>, vector<2x8x128xf32>
    %19 = vector.shape_cast %18 : vector<2x8x128xf32> to vector<16x128xf32>
    %c0_16 = arith.constant 0 : index
    %c0_17 = arith.constant 0 : index
    %20 = vector.load %arg4[%c0_16, %c0_17] : memref<8x8xf32, #tpu.memory_space<vmem>>, vector<8x8xf32>
    %c0_18 = arith.constant 0 : index
    %c0_19 = arith.constant 0 : index
    %21 = vector.load %arg5[%c0_18, %c0_19] : memref<128x384xbf16, #tpu.memory_space<vmem>>, vector<128x384xbf16>
    %22 = arith.truncf %19 : vector<16x128xf32> to vector<16x128xbf16>
    %cst = arith.constant dense<0.000000e+00> : vector<16x384xf32>
    %23 = tpu.matmul %22, %21, %cst {dimension_numbers = #tpu.dot_dimension_numbers<[1], [0], [0], [1], [0, 0, 1, 1], [], []>} : vector<16x128xbf16>, vector<128x384xbf16>, vector<16x384xf32> -> vector<16x384xf32>
    %24 = vector.broadcast %5 : vector<1x384xf32> to vector<16x384xf32>
    %25 = arith.addf %23, %24 : vector<16x384xf32>
    %c0_20 = arith.constant 0 : index
    %c0_21 = arith.constant 0 : index
    %c0_22 = arith.constant 0 : index
    %26 = vector.load %arg3[%c0_20, %c0_21, %c0_22] : memref<2x1x8xf32, #tpu.memory_space<vmem>>, vector<1x1x8xf32>
    %27 = vector.shape_cast %26 : vector<1x1x8xf32> to vector<1x8xf32>
    %28 = vector.broadcast %27 : vector<1x8xf32> to vector<8x8xf32>
    %29 = arith.addf %28, %20 : vector<8x8xf32>
    %30 = vector.extract_strided_slice %25 {offsets = [0, 0], sizes = [8, 128], strides = [1, 1]} : vector<16x384xf32> to vector<8x128xf32>
    %31 = vector.extract_strided_slice %25 {offsets = [0, 128], sizes = [8, 128], strides = [1, 1]} : vector<16x384xf32> to vector<8x128xf32>
    %32 = vector.extract_strided_slice %25 {offsets = [0, 256], sizes = [8, 128], strides = [1, 1]} : vector<16x384xf32> to vector<8x128xf32>
    %33 = vector.extract_strided_slice %30 {offsets = [0, 0], sizes = [8, 32], strides = [1, 1]} : vector<8x128xf32> to vector<8x32xf32>
    %cst_23 = arith.constant 0.353553385 : f32
    %34 = vector.broadcast %cst_23 : f32 to vector<8x32xf32>
    %35 = arith.mulf %33, %34 : vector<8x32xf32>
    %36 = arith.truncf %35 : vector<8x32xf32> to vector<8x32xbf16>
    %37 = vector.extract_strided_slice %31 {offsets = [0, 0], sizes = [8, 32], strides = [1, 1]} : vector<8x128xf32> to vector<8x32xf32>
    %38 = arith.truncf %37 : vector<8x32xf32> to vector<8x32xbf16>
    %39 = vector.extract_strided_slice %32 {offsets = [0, 0], sizes = [8, 32], strides = [1, 1]} : vector<8x128xf32> to vector<8x32xf32>
    %40 = arith.truncf %39 : vector<8x32xf32> to vector<8x32xbf16>
    %cst_24 = arith.constant dense<0.000000e+00> : vector<8x8xf32>
    %41 = tpu.matmul %36, %38, %cst_24 {dimension_numbers = #tpu.dot_dimension_numbers<[1], [1], [0], [0], [0, 0, 1, 0], [], []>} : vector<8x32xbf16>, vector<8x32xbf16>, vector<8x8xf32> -> vector<8x8xf32>
    %42 = arith.addf %41, %29 : vector<8x8xf32>
    %cst_25 = arith.constant dense<0xFF800000> : vector<8xf32>
    %43 = vector.multi_reduction <maximumf>, %42, %cst_25 [1] : vector<8x8xf32> to vector<8xf32>
    %44 = vector.shape_cast %43 : vector<8xf32> to vector<8x1xf32>
    %45 = vector.broadcast %44 : vector<8x1xf32> to vector<8x8xf32>
    %46 = arith.subf %42, %45 : vector<8x8xf32>
    %47 = math.exp %46 : vector<8x8xf32>
    %cst_26 = arith.constant dense<0.000000e+00> : vector<8xf32>
    %48 = vector.multi_reduction <add>, %47, %cst_26 [1] : vector<8x8xf32> to vector<8xf32>
    %49 = vector.shape_cast %48 : vector<8xf32> to vector<8x1xf32>
    %50 = tpu.reciprocal %49 {approx = true} : vector<8x1xf32> -> vector<8x1xf32>
    %51 = vector.broadcast %50 : vector<8x1xf32> to vector<8x8xf32>
    %52 = arith.mulf %47, %51 : vector<8x8xf32>
    %53 = arith.truncf %52 : vector<8x8xf32> to vector<8x8xbf16>
    %cst_27 = arith.constant dense<0.000000e+00> : vector<8x32xf32>
    %54 = tpu.matmul %53, %40, %cst_27 {dimension_numbers = #tpu.dot_dimension_numbers<[1], [0], [0], [1], [0, 0, 1, 1], [], []>} : vector<8x8xbf16>, vector<8x32xbf16>, vector<8x32xf32> -> vector<8x32xf32>
    %c0_28 = arith.constant 0 : index
    %c0_29 = arith.constant 0 : index
    %55 = vector.load %arg14[%c0_28, %c0_29] : memref<16x128xf32, #tpu.memory_space<vmem>>, vector<8x32xf32>
    tpu.vector_store %arg14[%c0_28, %c0_29], %54 {strides = array<i32>} : memref<16x128xf32, #tpu.memory_space<vmem>>, vector<8x32xf32>,
    %56 = vector.extract_strided_slice %30 {offsets = [0, 32], sizes = [8, 32], strides = [1, 1]} : vector<8x128xf32> to vector<8x32xf32>
    %cst_30 = arith.constant 0.353553385 : f32
    %57 = vector.broadcast %cst_30 : f32 to vector<8x32xf32>
    %58 = arith.mulf %56, %57 : vector<8x32xf32>
    %59 = arith.truncf %58 : vector<8x32xf32> to vector<8x32xbf16>
    %60 = vector.extract_strided_slice %31 {offsets = [0, 32], sizes = [8, 32], strides = [1, 1]} : vector<8x128xf32> to vector<8x32xf32>
    %61 = arith.truncf %60 : vector<8x32xf32> to vector<8x32xbf16>
    %62 = vector.extract_strided_slice %32 {offsets = [0, 32], sizes = [8, 32], strides = [1, 1]} : vector<8x128xf32> to vector<8x32xf32>
    %63 = arith.truncf %62 : vector<8x32xf32> to vector<8x32xbf16>
    %cst_31 = arith.constant dense<0.000000e+00> : vector<8x8xf32>
    %64 = tpu.matmul %59, %61, %cst_31 {dimension_numbers = #tpu.dot_dimension_numbers<[1], [1], [0], [0], [0, 0, 1, 0], [], []>} : vector<8x32xbf16>, vector<8x32xbf16>, vector<8x8xf32> -> vector<8x8xf32>
    %65 = arith.addf %64, %29 : vector<8x8xf32>
    %cst_32 = arith.constant dense<0xFF800000> : vector<8xf32>
    %66 = vector.multi_reduction <maximumf>, %65, %cst_32 [1] : vector<8x8xf32> to vector<8xf32>
    %67 = vector.shape_cast %66 : vector<8xf32> to vector<8x1xf32>
    %68 = vector.broadcast %67 : vector<8x1xf32> to vector<8x8xf32>
    %69 = arith.subf %65, %68 : vector<8x8xf32>
    %70 = math.exp %69 : vector<8x8xf32>
    %cst_33 = arith.constant dense<0.000000e+00> : vector<8xf32>
    %71 = vector.multi_reduction <add>, %70, %cst_33 [1] : vector<8x8xf32> to vector<8xf32>
    %72 = vector.shape_cast %71 : vector<8xf32> to vector<8x1xf32>
    %73 = tpu.reciprocal %72 {approx = true} : vector<8x1xf32> -> vector<8x1xf32>
    %74 = vector.broadcast %73 : vector<8x1xf32> to vector<8x8xf32>
    %75 = arith.mulf %70, %74 : vector<8x8xf32>
    %76 = arith.truncf %75 : vector<8x8xf32> to vector<8x8xbf16>
    %cst_34 = arith.constant dense<0.000000e+00> : vector<8x32xf32>
    %77 = tpu.matmul %76, %63, %cst_34 {dimension_numbers = #tpu.dot_dimension_numbers<[1], [0], [0], [1], [0, 0, 1, 1], [], []>} : vector<8x8xbf16>, vector<8x32xbf16>, vector<8x32xf32> -> vector<8x32xf32>
    %c0_35 = arith.constant 0 : index
    %c32 = arith.constant 32 : index
    %78 = vector.load %arg14[%c0_35, %c32] : memref<16x128xf32, #tpu.memory_space<vmem>>, vector<8x32xf32>
    tpu.vector_store %arg14[%c0_35, %c32], %77 {strides = array<i32>} : memref<16x128xf32, #tpu.memory_space<vmem>>, vector<8x32xf32>,
    %79 = vector.extract_strided_slice %30 {offsets = [0, 64], sizes = [8, 32], strides = [1, 1]} : vector<8x128xf32> to vector<8x32xf32>
    %cst_36 = arith.constant 0.353553385 : f32
    %80 = vector.broadcast %cst_36 : f32 to vector<8x32xf32>
    %81 = arith.mulf %79, %80 : vector<8x32xf32>
    %82 = arith.truncf %81 : vector<8x32xf32> to vector<8x32xbf16>
    %83 = vector.extract_strided_slice %31 {offsets = [0, 64], sizes = [8, 32], strides = [1, 1]} : vector<8x128xf32> to vector<8x32xf32>
    %84 = arith.truncf %83 : vector<8x32xf32> to vector<8x32xbf16>
    %85 = vector.extract_strided_slice %32 {offsets = [0, 64], sizes = [8, 32], strides = [1, 1]} : vector<8x128xf32> to vector<8x32xf32>
    %86 = arith.truncf %85 : vector<8x32xf32> to vector<8x32xbf16>
    %cst_37 = arith.constant dense<0.000000e+00> : vector<8x8xf32>
    %87 = tpu.matmul %82, %84, %cst_37 {dimension_numbers = #tpu.dot_dimension_numbers<[1], [1], [0], [0], [0, 0, 1, 0], [], []>} : vector<8x32xbf16>, vector<8x32xbf16>, vector<8x8xf32> -> vector<8x8xf32>
    %88 = arith.addf %87, %29 : vector<8x8xf32>
    %cst_38 = arith.constant dense<0xFF800000> : vector<8xf32>
    %89 = vector.multi_reduction <maximumf>, %88, %cst_38 [1] : vector<8x8xf32> to vector<8xf32>
    %90 = vector.shape_cast %89 : vector<8xf32> to vector<8x1xf32>
    %91 = vector.broadcast %90 : vector<8x1xf32> to vector<8x8xf32>
    %92 = arith.subf %88, %91 : vector<8x8xf32>
    %93 = math.exp %92 : vector<8x8xf32>
    %cst_39 = arith.constant dense<0.000000e+00> : vector<8xf32>
    %94 = vector.multi_reduction <add>, %93, %cst_39 [1] : vector<8x8xf32> to vector<8xf32>
    %95 = vector.shape_cast %94 : vector<8xf32> to vector<8x1xf32>
    %96 = tpu.reciprocal %95 {approx = true} : vector<8x1xf32> -> vector<8x1xf32>
    %97 = vector.broadcast %96 : vector<8x1xf32> to vector<8x8xf32>
    %98 = arith.mulf %93, %97 : vector<8x8xf32>
    %99 = arith.truncf %98 : vector<8x8xf32> to vector<8x8xbf16>
    %cst_40 = arith.constant dense<0.000000e+00> : vector<8x32xf32>
    %100 = tpu.matmul %99, %86, %cst_40 {dimension_numbers = #tpu.dot_dimension_numbers<[1], [0], [0], [1], [0, 0, 1, 1], [], []>} : vector<8x8xbf16>, vector<8x32xbf16>, vector<8x32xf32> -> vector<8x32xf32>
    %c0_41 = arith.constant 0 : index
    %c64 = arith.constant 64 : index
    %101 = vector.load %arg14[%c0_41, %c64] : memref<16x128xf32, #tpu.memory_space<vmem>>, vector<8x32xf32>
    tpu.vector_store %arg14[%c0_41, %c64], %100 {strides = array<i32>} : memref<16x128xf32, #tpu.memory_space<vmem>>, vector<8x32xf32>,
    %102 = vector.extract_strided_slice %30 {offsets = [0, 96], sizes = [8, 32], strides = [1, 1]} : vector<8x128xf32> to vector<8x32xf32>
    %cst_42 = arith.constant 0.353553385 : f32
    %103 = vector.broadcast %cst_42 : f32 to vector<8x32xf32>
    %104 = arith.mulf %102, %103 : vector<8x32xf32>
    %105 = arith.truncf %104 : vector<8x32xf32> to vector<8x32xbf16>
    %106 = vector.extract_strided_slice %31 {offsets = [0, 96], sizes = [8, 32], strides = [1, 1]} : vector<8x128xf32> to vector<8x32xf32>
    %107 = arith.truncf %106 : vector<8x32xf32> to vector<8x32xbf16>
    %108 = vector.extract_strided_slice %32 {offsets = [0, 96], sizes = [8, 32], strides = [1, 1]} : vector<8x128xf32> to vector<8x32xf32>
    %109 = arith.truncf %108 : vector<8x32xf32> to vector<8x32xbf16>
    %cst_43 = arith.constant dense<0.000000e+00> : vector<8x8xf32>
    %110 = tpu.matmul %105, %107, %cst_43 {dimension_numbers = #tpu.dot_dimension_numbers<[1], [1], [0], [0], [0, 0, 1, 0], [], []>} : vector<8x32xbf16>, vector<8x32xbf16>, vector<8x8xf32> -> vector<8x8xf32>
    %111 = arith.addf %110, %29 : vector<8x8xf32>
    %cst_44 = arith.constant dense<0xFF800000> : vector<8xf32>
    %112 = vector.multi_reduction <maximumf>, %111, %cst_44 [1] : vector<8x8xf32> to vector<8xf32>
    %113 = vector.shape_cast %112 : vector<8xf32> to vector<8x1xf32>
    %114 = vector.broadcast %113 : vector<8x1xf32> to vector<8x8xf32>
    %115 = arith.subf %111, %114 : vector<8x8xf32>
    %116 = math.exp %115 : vector<8x8xf32>
    %cst_45 = arith.constant dense<0.000000e+00> : vector<8xf32>
    %117 = vector.multi_reduction <add>, %116, %cst_45 [1] : vector<8x8xf32> to vector<8xf32>
    %118 = vector.shape_cast %117 : vector<8xf32> to vector<8x1xf32>
    %119 = tpu.reciprocal %118 {approx = true} : vector<8x1xf32> -> vector<8x1xf32>
    %120 = vector.broadcast %119 : vector<8x1xf32> to vector<8x8xf32>
    %121 = arith.mulf %116, %120 : vector<8x8xf32>
    %122 = arith.truncf %121 : vector<8x8xf32> to vector<8x8xbf16>
    %cst_46 = arith.constant dense<0.000000e+00> : vector<8x32xf32>
    %123 = tpu.matmul %122, %109, %cst_46 {dimension_numbers = #tpu.dot_dimension_numbers<[1], [0], [0], [1], [0, 0, 1, 1], [], []>} : vector<8x8xbf16>, vector<8x32xbf16>, vector<8x32xf32> -> vector<8x32xf32>
    %c0_47 = arith.constant 0 : index
    %c96 = arith.constant 96 : index
    %124 = vector.load %arg14[%c0_47, %c96] : memref<16x128xf32, #tpu.memory_space<vmem>>, vector<8x32xf32>
    tpu.vector_store %arg14[%c0_47, %c96], %123 {strides = array<i32>} : memref<16x128xf32, #tpu.memory_space<vmem>>, vector<8x32xf32>,
    %c1 = arith.constant 1 : index
    %c0_48 = arith.constant 0 : index
    %c0_49 = arith.constant 0 : index
    %125 = vector.load %arg3[%c1, %c0_48, %c0_49] : memref<2x1x8xf32, #tpu.memory_space<vmem>>, vector<1x1x8xf32>
    %126 = vector.shape_cast %125 : vector<1x1x8xf32> to vector<1x8xf32>
    %127 = vector.broadcast %126 : vector<1x8xf32> to vector<8x8xf32>
    %128 = arith.addf %127, %20 : vector<8x8xf32>
    %129 = vector.extract_strided_slice %25 {offsets = [8, 0], sizes = [8, 128], strides = [1, 1]} : vector<16x384xf32> to vector<8x128xf32>
    %130 = vector.extract_strided_slice %25 {offsets = [8, 128], sizes = [8, 128], strides = [1, 1]} : vector<16x384xf32> to vector<8x128xf32>
    %131 = vector.extract_strided_slice %25 {offsets = [8, 256], sizes = [8, 128], strides = [1, 1]} : vector<16x384xf32> to vector<8x128xf32>
    %132 = vector.extract_strided_slice %129 {offsets = [0, 0], sizes = [8, 32], strides = [1, 1]} : vector<8x128xf32> to vector<8x32xf32>
    %cst_50 = arith.constant 0.353553385 : f32
    %133 = vector.broadcast %cst_50 : f32 to vector<8x32xf32>
    %134 = arith.mulf %132, %133 : vector<8x32xf32>
    %135 = arith.truncf %134 : vector<8x32xf32> to vector<8x32xbf16>
    %136 = vector.extract_strided_slice %130 {offsets = [0, 0], sizes = [8, 32], strides = [1, 1]} : vector<8x128xf32> to vector<8x32xf32>
    %137 = arith.truncf %136 : vector<8x32xf32> to vector<8x32xbf16>
    %138 = vector.extract_strided_slice %131 {offsets = [0, 0], sizes = [8, 32], strides = [1, 1]} : vector<8x128xf32> to vector<8x32xf32>
    %139 = arith.truncf %138 : vector<8x32xf32> to vector<8x32xbf16>
    %cst_51 = arith.constant dense<0.000000e+00> : vector<8x8xf32>
    %140 = tpu.matmul %135, %137, %cst_51 {dimension_numbers = #tpu.dot_dimension_numbers<[1], [1], [0], [0], [0, 0, 1, 0], [], []>} : vector<8x32xbf16>, vector<8x32xbf16>, vector<8x8xf32> -> vector<8x8xf32>
    %141 = arith.addf %140, %128 : vector<8x8xf32>
    %cst_52 = arith.constant dense<0xFF800000> : vector<8xf32>
    %142 = vector.multi_reduction <maximumf>, %141, %cst_52 [1] : vector<8x8xf32> to vector<8xf32>
    %143 = vector.shape_cast %142 : vector<8xf32> to vector<8x1xf32>
    %144 = vector.broadcast %143 : vector<8x1xf32> to vector<8x8xf32>
    %145 = arith.subf %141, %144 : vector<8x8xf32>
    %146 = math.exp %145 : vector<8x8xf32>
    %cst_53 = arith.constant dense<0.000000e+00> : vector<8xf32>
    %147 = vector.multi_reduction <add>, %146, %cst_53 [1] : vector<8x8xf32> to vector<8xf32>
    %148 = vector.shape_cast %147 : vector<8xf32> to vector<8x1xf32>
    %149 = tpu.reciprocal %148 {approx = true} : vector<8x1xf32> -> vector<8x1xf32>
    %150 = vector.broadcast %149 : vector<8x1xf32> to vector<8x8xf32>
    %151 = arith.mulf %146, %150 : vector<8x8xf32>
    %152 = arith.truncf %151 : vector<8x8xf32> to vector<8x8xbf16>
    %cst_54 = arith.constant dense<0.000000e+00> : vector<8x32xf32>
    %153 = tpu.matmul %152, %139, %cst_54 {dimension_numbers = #tpu.dot_dimension_numbers<[1], [0], [0], [1], [0, 0, 1, 1], [], []>} : vector<8x8xbf16>, vector<8x32xbf16>, vector<8x32xf32> -> vector<8x32xf32>
    %c8 = arith.constant 8 : index
    %c0_55 = arith.constant 0 : index
    %154 = vector.load %arg14[%c8, %c0_55] : memref<16x128xf32, #tpu.memory_space<vmem>>, vector<8x32xf32>
    tpu.vector_store %arg14[%c8, %c0_55], %153 {strides = array<i32>} : memref<16x128xf32, #tpu.memory_space<vmem>>, vector<8x32xf32>,
    %155 = vector.extract_strided_slice %129 {offsets = [0, 32], sizes = [8, 32], strides = [1, 1]} : vector<8x128xf32> to vector<8x32xf32>
    %cst_56 = arith.constant 0.353553385 : f32
    %156 = vector.broadcast %cst_56 : f32 to vector<8x32xf32>
    %157 = arith.mulf %155, %156 : vector<8x32xf32>
    %158 = arith.truncf %157 : vector<8x32xf32> to vector<8x32xbf16>
    %159 = vector.extract_strided_slice %130 {offsets = [0, 32], sizes = [8, 32], strides = [1, 1]} : vector<8x128xf32> to vector<8x32xf32>
    %160 = arith.truncf %159 : vector<8x32xf32> to vector<8x32xbf16>
    %161 = vector.extract_strided_slice %131 {offsets = [0, 32], sizes = [8, 32], strides = [1, 1]} : vector<8x128xf32> to vector<8x32xf32>
    %162 = arith.truncf %161 : vector<8x32xf32> to vector<8x32xbf16>
    %cst_57 = arith.constant dense<0.000000e+00> : vector<8x8xf32>
    %163 = tpu.matmul %158, %160, %cst_57 {dimension_numbers = #tpu.dot_dimension_numbers<[1], [1], [0], [0], [0, 0, 1, 0], [], []>} : vector<8x32xbf16>, vector<8x32xbf16>, vector<8x8xf32> -> vector<8x8xf32>
    %164 = arith.addf %163, %128 : vector<8x8xf32>
    %cst_58 = arith.constant dense<0xFF800000> : vector<8xf32>
    %165 = vector.multi_reduction <maximumf>, %164, %cst_58 [1] : vector<8x8xf32> to vector<8xf32>
    %166 = vector.shape_cast %165 : vector<8xf32> to vector<8x1xf32>
    %167 = vector.broadcast %166 : vector<8x1xf32> to vector<8x8xf32>
    %168 = arith.subf %164, %167 : vector<8x8xf32>
    %169 = math.exp %168 : vector<8x8xf32>
    %cst_59 = arith.constant dense<0.000000e+00> : vector<8xf32>
    %170 = vector.multi_reduction <add>, %169, %cst_59 [1] : vector<8x8xf32> to vector<8xf32>
    %171 = vector.shape_cast %170 : vector<8xf32> to vector<8x1xf32>
    %172 = tpu.reciprocal %171 {approx = true} : vector<8x1xf32> -> vector<8x1xf32>
    %173 = vector.broadcast %172 : vector<8x1xf32> to vector<8x8xf32>
    %174 = arith.mulf %169, %173 : vector<8x8xf32>
    %175 = arith.truncf %174 : vector<8x8xf32> to vector<8x8xbf16>
    %cst_60 = arith.constant dense<0.000000e+00> : vector<8x32xf32>
    %176 = tpu.matmul %175, %162, %cst_60 {dimension_numbers = #tpu.dot_dimension_numbers<[1], [0], [0], [1], [0, 0, 1, 1], [], []>} : vector<8x8xbf16>, vector<8x32xbf16>, vector<8x32xf32> -> vector<8x32xf32>
    %c8_61 = arith.constant 8 : index
    %c32_62 = arith.constant 32 : index
    %177 = vector.load %arg14[%c8_61, %c32_62] : memref<16x128xf32, #tpu.memory_space<vmem>>, vector<8x32xf32>
    tpu.vector_store %arg14[%c8_61, %c32_62], %176 {strides = array<i32>} : memref<16x128xf32, #tpu.memory_space<vmem>>, vector<8x32xf32>,
    %178 = vector.extract_strided_slice %129 {offsets = [0, 64], sizes = [8, 32], strides = [1, 1]} : vector<8x128xf32> to vector<8x32xf32>
    %cst_63 = arith.constant 0.353553385 : f32
    %179 = vector.broadcast %cst_63 : f32 to vector<8x32xf32>
    %180 = arith.mulf %178, %179 : vector<8x32xf32>
    %181 = arith.truncf %180 : vector<8x32xf32> to vector<8x32xbf16>
    %182 = vector.extract_strided_slice %130 {offsets = [0, 64], sizes = [8, 32], strides = [1, 1]} : vector<8x128xf32> to vector<8x32xf32>
    %183 = arith.truncf %182 : vector<8x32xf32> to vector<8x32xbf16>
    %184 = vector.extract_strided_slice %131 {offsets = [0, 64], sizes = [8, 32], strides = [1, 1]} : vector<8x128xf32> to vector<8x32xf32>
    %185 = arith.truncf %184 : vector<8x32xf32> to vector<8x32xbf16>
    %cst_64 = arith.constant dense<0.000000e+00> : vector<8x8xf32>
    %186 = tpu.matmul %181, %183, %cst_64 {dimension_numbers = #tpu.dot_dimension_numbers<[1], [1], [0], [0], [0, 0, 1, 0], [], []>} : vector<8x32xbf16>, vector<8x32xbf16>, vector<8x8xf32> -> vector<8x8xf32>
    %187 = arith.addf %186, %128 : vector<8x8xf32>
    %cst_65 = arith.constant dense<0xFF800000> : vector<8xf32>
    %188 = vector.multi_reduction <maximumf>, %187, %cst_65 [1] : vector<8x8xf32> to vector<8xf32>
    %189 = vector.shape_cast %188 : vector<8xf32> to vector<8x1xf32>
    %190 = vector.broadcast %189 : vector<8x1xf32> to vector<8x8xf32>
    %191 = arith.subf %187, %190 : vector<8x8xf32>
    %192 = math.exp %191 : vector<8x8xf32>
    %cst_66 = arith.constant dense<0.000000e+00> : vector<8xf32>
    %193 = vector.multi_reduction <add>, %192, %cst_66 [1] : vector<8x8xf32> to vector<8xf32>
    %194 = vector.shape_cast %193 : vector<8xf32> to vector<8x1xf32>
    %195 = tpu.reciprocal %194 {approx = true} : vector<8x1xf32> -> vector<8x1xf32>
    %196 = vector.broadcast %195 : vector<8x1xf32> to vector<8x8xf32>
    %197 = arith.mulf %192, %196 : vector<8x8xf32>
    %198 = arith.truncf %197 : vector<8x8xf32> to vector<8x8xbf16>
    %cst_67 = arith.constant dense<0.000000e+00> : vector<8x32xf32>
    %199 = tpu.matmul %198, %185, %cst_67 {dimension_numbers = #tpu.dot_dimension_numbers<[1], [0], [0], [1], [0, 0, 1, 1], [], []>} : vector<8x8xbf16>, vector<8x32xbf16>, vector<8x32xf32> -> vector<8x32xf32>
    %c8_68 = arith.constant 8 : index
    %c64_69 = arith.constant 64 : index
    %200 = vector.load %arg14[%c8_68, %c64_69] : memref<16x128xf32, #tpu.memory_space<vmem>>, vector<8x32xf32>
    tpu.vector_store %arg14[%c8_68, %c64_69], %199 {strides = array<i32>} : memref<16x128xf32, #tpu.memory_space<vmem>>, vector<8x32xf32>,
    %201 = vector.extract_strided_slice %129 {offsets = [0, 96], sizes = [8, 32], strides = [1, 1]} : vector<8x128xf32> to vector<8x32xf32>
    %cst_70 = arith.constant 0.353553385 : f32
    %202 = vector.broadcast %cst_70 : f32 to vector<8x32xf32>
    %203 = arith.mulf %201, %202 : vector<8x32xf32>
    %204 = arith.truncf %203 : vector<8x32xf32> to vector<8x32xbf16>
    %205 = vector.extract_strided_slice %130 {offsets = [0, 96], sizes = [8, 32], strides = [1, 1]} : vector<8x128xf32> to vector<8x32xf32>
    %206 = arith.truncf %205 : vector<8x32xf32> to vector<8x32xbf16>
    %207 = vector.extract_strided_slice %131 {offsets = [0, 96], sizes = [8, 32], strides = [1, 1]} : vector<8x128xf32> to vector<8x32xf32>
    %208 = arith.truncf %207 : vector<8x32xf32> to vector<8x32xbf16>
    %cst_71 = arith.constant dense<0.000000e+00> : vector<8x8xf32>
    %209 = tpu.matmul %204, %206, %cst_71 {dimension_numbers = #tpu.dot_dimension_numbers<[1], [1], [0], [0], [0, 0, 1, 0], [], []>} : vector<8x32xbf16>, vector<8x32xbf16>, vector<8x8xf32> -> vector<8x8xf32>
    %210 = arith.addf %209, %128 : vector<8x8xf32>
    %cst_72 = arith.constant dense<0xFF800000> : vector<8xf32>
    %211 = vector.multi_reduction <maximumf>, %210, %cst_72 [1] : vector<8x8xf32> to vector<8xf32>
    %212 = vector.shape_cast %211 : vector<8xf32> to vector<8x1xf32>
    %213 = vector.broadcast %212 : vector<8x1xf32> to vector<8x8xf32>
    %214 = arith.subf %210, %213 : vector<8x8xf32>
    %215 = math.exp %214 : vector<8x8xf32>
    %cst_73 = arith.constant dense<0.000000e+00> : vector<8xf32>
    %216 = vector.multi_reduction <add>, %215, %cst_73 [1] : vector<8x8xf32> to vector<8xf32>
    %217 = vector.shape_cast %216 : vector<8xf32> to vector<8x1xf32>
    %218 = tpu.reciprocal %217 {approx = true} : vector<8x1xf32> -> vector<8x1xf32>
    %219 = vector.broadcast %218 : vector<8x1xf32> to vector<8x8xf32>
    %220 = arith.mulf %215, %219 : vector<8x8xf32>
    %221 = arith.truncf %220 : vector<8x8xf32> to vector<8x8xbf16>
    %cst_74 = arith.constant dense<0.000000e+00> : vector<8x32xf32>
    %222 = tpu.matmul %221, %208, %cst_74 {dimension_numbers = #tpu.dot_dimension_numbers<[1], [0], [0], [1], [0, 0, 1, 1], [], []>} : vector<8x8xbf16>, vector<8x32xbf16>, vector<8x32xf32> -> vector<8x32xf32>
    %c8_75 = arith.constant 8 : index
    %c96_76 = arith.constant 96 : index
    %223 = vector.load %arg14[%c8_75, %c96_76] : memref<16x128xf32, #tpu.memory_space<vmem>>, vector<8x32xf32>
    tpu.vector_store %arg14[%c8_75, %c96_76], %222 {strides = array<i32>} : memref<16x128xf32, #tpu.memory_space<vmem>>, vector<8x32xf32>,
    %c0_77 = arith.constant 0 : index
    %c0_78 = arith.constant 0 : index
    %224 = vector.load %arg14[%c0_77, %c0_78] : memref<16x128xf32, #tpu.memory_space<vmem>>, vector<16x128xf32>
    %c0_79 = arith.constant 0 : index
    %c0_80 = arith.constant 0 : index
    %225 = vector.load %arg6[%c0_79, %c0_80] : memref<128x128xbf16, #tpu.memory_space<vmem>>, vector<128x128xbf16>
    %226 = arith.truncf %224 : vector<16x128xf32> to vector<16x128xbf16>
    %cst_81 = arith.constant dense<0.000000e+00> : vector<16x128xf32>
    %227 = tpu.matmul %226, %225, %cst_81 {dimension_numbers = #tpu.dot_dimension_numbers<[1], [0], [0], [1], [0, 0, 1, 1], [], []>} : vector<16x128xbf16>, vector<128x128xbf16>, vector<16x128xf32> -> vector<16x128xf32>
    %228 = vector.broadcast %6 : vector<1x128xf32> to vector<16x128xf32>
    %229 = arith.addf %227, %228 : vector<16x128xf32>
    %230 = arith.addf %19, %229 : vector<16x128xf32>
    %cst_82 = arith.constant dense<0.000000e+00> : vector<16xf32>
    %231 = vector.multi_reduction <add>, %230, %cst_82 [1] : vector<16x128xf32> to vector<16xf32>
    %232 = vector.shape_cast %231 : vector<16xf32> to vector<16x1xf32>
    %cst_83 = arith.constant 3.125000e-02 : f32
    %233 = vector.broadcast %cst_83 : f32 to vector<16x1xf32>
    %234 = arith.mulf %232, %233 : vector<16x1xf32>
    %235 = vector.broadcast %234 : vector<16x1xf32> to vector<16x128xf32>
    %236 = arith.subf %230, %235 : vector<16x128xf32>
    %237 = vector.broadcast %4 : vector<1x128xf32> to vector<16x128xf32>
    %238 = arith.mulf %236, %237 : vector<16x128xf32>
    %239 = arith.mulf %238, %238 : vector<16x128xf32>
    %cst_84 = arith.constant dense<0.000000e+00> : vector<16xf32>
    %240 = vector.multi_reduction <add>, %239, %cst_84 [1] : vector<16x128xf32> to vector<16xf32>
    %241 = vector.shape_cast %240 : vector<16xf32> to vector<16x1xf32>
    %cst_85 = arith.constant 3.125000e-02 : f32
    %242 = vector.broadcast %cst_85 : f32 to vector<16x1xf32>
    %243 = arith.mulf %241, %242 : vector<16x1xf32>
    %cst_86 = arith.constant 9.99999974E-6 : f32
    %244 = vector.broadcast %cst_86 : f32 to vector<16x1xf32>
    %245 = arith.addf %243, %244 : vector<16x1xf32>
    %246 = math.rsqrt %245 : vector<16x1xf32>
    %247 = vector.broadcast %246 : vector<16x1xf32> to vector<16x128xf32>
    %248 = arith.mulf %238, %247 : vector<16x128xf32>
    %249 = vector.broadcast %7 : vector<1x128xf32> to vector<16x128xf32>
    %250 = arith.mulf %248, %249 : vector<16x128xf32>
    %251 = vector.broadcast %8 : vector<1x128xf32> to vector<16x128xf32>
    %252 = arith.addf %250, %251 : vector<16x128xf32>
    %c0_87 = arith.constant 0 : index
    %c0_88 = arith.constant 0 : index
    %253 = vector.load %arg7[%c0_87, %c0_88] : memref<128x128xbf16, #tpu.memory_space<vmem>>, vector<128x128xbf16>
    %254 = arith.truncf %252 : vector<16x128xf32> to vector<16x128xbf16>
    %cst_89 = arith.constant dense<0.000000e+00> : vector<16x128xf32>
    %255 = tpu.matmul %254, %253, %cst_89 {dimension_numbers = #tpu.dot_dimension_numbers<[1], [0], [0], [1], [0, 0, 1, 1], [], []>} : vector<16x128xbf16>, vector<128x128xbf16>, vector<16x128xf32> -> vector<16x128xf32>
    %256 = vector.broadcast %9 : vector<1x128xf32> to vector<16x128xf32>
    %257 = arith.addf %255, %256 : vector<16x128xf32>
    %c0_90 = arith.constant 0 : index
    %c0_91 = arith.constant 0 : index
    %c0_92 = arith.constant 0 : index
    %258 = vector.load %arg2[%c0_90, %c0_91, %c0_92] : memref<2x4x128xf32, #tpu.memory_space<vmem>>, vector<2x4x128xf32>
    %259 = vector.shape_cast %258 : vector<2x4x128xf32> to vector<8x128xf32>
    %c0_93 = arith.constant 0 : index
    %c0_94 = arith.constant 0 : index
    %260 = vector.load %arg8[%c0_93, %c0_94] : memref<128x256xbf16, #tpu.memory_space<vmem>>, vector<128x256xbf16>
    %261 = arith.truncf %259 : vector<8x128xf32> to vector<8x128xbf16>
    %cst_95 = arith.constant dense<0.000000e+00> : vector<8x256xf32>
    %262 = tpu.matmul %261, %260, %cst_95 {dimension_numbers = #tpu.dot_dimension_numbers<[1], [0], [0], [1], [0, 0, 1, 1], [], []>} : vector<8x128xbf16>, vector<128x256xbf16>, vector<8x256xf32> -> vector<8x256xf32>
    %263 = vector.broadcast %10 : vector<1x256xf32> to vector<8x256xf32>
    %264 = arith.addf %262, %263 : vector<8x256xf32>
    %265 = vector.extract_strided_slice %257 {offsets = [0, 0], sizes = [8, 128], strides = [1, 1]} : vector<16x128xf32> to vector<8x128xf32>
    %266 = vector.extract_strided_slice %264 {offsets = [0, 0], sizes = [4, 128], strides = [1, 1]} : vector<8x256xf32> to vector<4x128xf32>
    %267 = vector.extract_strided_slice %264 {offsets = [0, 128], sizes = [4, 128], strides = [1, 1]} : vector<8x256xf32> to vector<4x128xf32>
    %268 = vector.extract_strided_slice %265 {offsets = [0, 0], sizes = [8, 32], strides = [1, 1]} : vector<8x128xf32> to vector<8x32xf32>
    %cst_96 = arith.constant 0.353553385 : f32
    %269 = vector.broadcast %cst_96 : f32 to vector<8x32xf32>
    %270 = arith.mulf %268, %269 : vector<8x32xf32>
    %271 = arith.truncf %270 : vector<8x32xf32> to vector<8x32xbf16>
    %272 = vector.extract_strided_slice %266 {offsets = [0, 0], sizes = [4, 32], strides = [1, 1]} : vector<4x128xf32> to vector<4x32xf32>
    %273 = arith.truncf %272 : vector<4x32xf32> to vector<4x32xbf16>
    %274 = vector.extract_strided_slice %267 {offsets = [0, 0], sizes = [4, 32], strides = [1, 1]} : vector<4x128xf32> to vector<4x32xf32>
    %275 = arith.truncf %274 : vector<4x32xf32> to vector<4x32xbf16>
    %cst_97 = arith.constant dense<0.000000e+00> : vector<8x4xf32>
    %276 = tpu.matmul %271, %273, %cst_97 {dimension_numbers = #tpu.dot_dimension_numbers<[1], [1], [0], [0], [0, 0, 1, 0], [], []>} : vector<8x32xbf16>, vector<4x32xbf16>, vector<8x4xf32> -> vector<8x4xf32>
    %cst_98 = arith.constant dense<0xFF800000> : vector<8xf32>
    %277 = vector.multi_reduction <maximumf>, %276, %cst_98 [1] : vector<8x4xf32> to vector<8xf32>
    %278 = vector.shape_cast %277 : vector<8xf32> to vector<8x1xf32>
    %279 = vector.broadcast %278 : vector<8x1xf32> to vector<8x4xf32>
    %280 = arith.subf %276, %279 : vector<8x4xf32>
    %281 = math.exp %280 : vector<8x4xf32>
    %cst_99 = arith.constant dense<0.000000e+00> : vector<8xf32>
    %282 = vector.multi_reduction <add>, %281, %cst_99 [1] : vector<8x4xf32> to vector<8xf32>
    %283 = vector.shape_cast %282 : vector<8xf32> to vector<8x1xf32>
    %284 = tpu.reciprocal %283 {approx = true} : vector<8x1xf32> -> vector<8x1xf32>
    %285 = vector.broadcast %284 : vector<8x1xf32> to vector<8x4xf32>
    %286 = arith.mulf %281, %285 : vector<8x4xf32>
    %287 = arith.truncf %286 : vector<8x4xf32> to vector<8x4xbf16>
    %cst_100 = arith.constant dense<0.000000e+00> : vector<8x32xf32>
    %288 = tpu.matmul %287, %275, %cst_100 {dimension_numbers = #tpu.dot_dimension_numbers<[1], [0], [0], [1], [0, 0, 1, 1], [], []>} : vector<8x4xbf16>, vector<4x32xbf16>, vector<8x32xf32> -> vector<8x32xf32>
    %c0_101 = arith.constant 0 : index
    %c0_102 = arith.constant 0 : index
    %289 = vector.load %arg14[%c0_101, %c0_102] : memref<16x128xf32, #tpu.memory_space<vmem>>, vector<8x32xf32>
    tpu.vector_store %arg14[%c0_101, %c0_102], %288 {strides = array<i32>} : memref<16x128xf32, #tpu.memory_space<vmem>>, vector<8x32xf32>,
    %290 = vector.extract_strided_slice %265 {offsets = [0, 32], sizes = [8, 32], strides = [1, 1]} : vector<8x128xf32> to vector<8x32xf32>
    %cst_103 = arith.constant 0.353553385 : f32
    %291 = vector.broadcast %cst_103 : f32 to vector<8x32xf32>
    %292 = arith.mulf %290, %291 : vector<8x32xf32>
    %293 = arith.truncf %292 : vector<8x32xf32> to vector<8x32xbf16>
    %294 = vector.extract_strided_slice %266 {offsets = [0, 32], sizes = [4, 32], strides = [1, 1]} : vector<4x128xf32> to vector<4x32xf32>
    %295 = arith.truncf %294 : vector<4x32xf32> to vector<4x32xbf16>
    %296 = vector.extract_strided_slice %267 {offsets = [0, 32], sizes = [4, 32], strides = [1, 1]} : vector<4x128xf32> to vector<4x32xf32>
    %297 = arith.truncf %296 : vector<4x32xf32> to vector<4x32xbf16>
    %cst_104 = arith.constant dense<0.000000e+00> : vector<8x4xf32>
    %298 = tpu.matmul %293, %295, %cst_104 {dimension_numbers = #tpu.dot_dimension_numbers<[1], [1], [0], [0], [0, 0, 1, 0], [], []>} : vector<8x32xbf16>, vector<4x32xbf16>, vector<8x4xf32> -> vector<8x4xf32>
    %cst_105 = arith.constant dense<0xFF800000> : vector<8xf32>
    %299 = vector.multi_reduction <maximumf>, %298, %cst_105 [1] : vector<8x4xf32> to vector<8xf32>
    %300 = vector.shape_cast %299 : vector<8xf32> to vector<8x1xf32>
    %301 = vector.broadcast %300 : vector<8x1xf32> to vector<8x4xf32>
    %302 = arith.subf %298, %301 : vector<8x4xf32>
    %303 = math.exp %302 : vector<8x4xf32>
    %cst_106 = arith.constant dense<0.000000e+00> : vector<8xf32>
    %304 = vector.multi_reduction <add>, %303, %cst_106 [1] : vector<8x4xf32> to vector<8xf32>
    %305 = vector.shape_cast %304 : vector<8xf32> to vector<8x1xf32>
    %306 = tpu.reciprocal %305 {approx = true} : vector<8x1xf32> -> vector<8x1xf32>
    %307 = vector.broadcast %306 : vector<8x1xf32> to vector<8x4xf32>
    %308 = arith.mulf %303, %307 : vector<8x4xf32>
    %309 = arith.truncf %308 : vector<8x4xf32> to vector<8x4xbf16>
    %cst_107 = arith.constant dense<0.000000e+00> : vector<8x32xf32>
    %310 = tpu.matmul %309, %297, %cst_107 {dimension_numbers = #tpu.dot_dimension_numbers<[1], [0], [0], [1], [0, 0, 1, 1], [], []>} : vector<8x4xbf16>, vector<4x32xbf16>, vector<8x32xf32> -> vector<8x32xf32>
    %c0_108 = arith.constant 0 : index
    %c32_109 = arith.constant 32 : index
    %311 = vector.load %arg14[%c0_108, %c32_109] : memref<16x128xf32, #tpu.memory_space<vmem>>, vector<8x32xf32>
    tpu.vector_store %arg14[%c0_108, %c32_109], %310 {strides = array<i32>} : memref<16x128xf32, #tpu.memory_space<vmem>>, vector<8x32xf32>,
    %312 = vector.extract_strided_slice %265 {offsets = [0, 64], sizes = [8, 32], strides = [1, 1]} : vector<8x128xf32> to vector<8x32xf32>
    %cst_110 = arith.constant 0.353553385 : f32
    %313 = vector.broadcast %cst_110 : f32 to vector<8x32xf32>
    %314 = arith.mulf %312, %313 : vector<8x32xf32>
    %315 = arith.truncf %314 : vector<8x32xf32> to vector<8x32xbf16>
    %316 = vector.extract_strided_slice %266 {offsets = [0, 64], sizes = [4, 32], strides = [1, 1]} : vector<4x128xf32> to vector<4x32xf32>
    %317 = arith.truncf %316 : vector<4x32xf32> to vector<4x32xbf16>
    %318 = vector.extract_strided_slice %267 {offsets = [0, 64], sizes = [4, 32], strides = [1, 1]} : vector<4x128xf32> to vector<4x32xf32>
    %319 = arith.truncf %318 : vector<4x32xf32> to vector<4x32xbf16>
    %cst_111 = arith.constant dense<0.000000e+00> : vector<8x4xf32>
    %320 = tpu.matmul %315, %317, %cst_111 {dimension_numbers = #tpu.dot_dimension_numbers<[1], [1], [0], [0], [0, 0, 1, 0], [], []>} : vector<8x32xbf16>, vector<4x32xbf16>, vector<8x4xf32> -> vector<8x4xf32>
    %cst_112 = arith.constant dense<0xFF800000> : vector<8xf32>
    %321 = vector.multi_reduction <maximumf>, %320, %cst_112 [1] : vector<8x4xf32> to vector<8xf32>
    %322 = vector.shape_cast %321 : vector<8xf32> to vector<8x1xf32>
    %323 = vector.broadcast %322 : vector<8x1xf32> to vector<8x4xf32>
    %324 = arith.subf %320, %323 : vector<8x4xf32>
    %325 = math.exp %324 : vector<8x4xf32>
    %cst_113 = arith.constant dense<0.000000e+00> : vector<8xf32>
    %326 = vector.multi_reduction <add>, %325, %cst_113 [1] : vector<8x4xf32> to vector<8xf32>
    %327 = vector.shape_cast %326 : vector<8xf32> to vector<8x1xf32>
    %328 = tpu.reciprocal %327 {approx = true} : vector<8x1xf32> -> vector<8x1xf32>
    %329 = vector.broadcast %328 : vector<8x1xf32> to vector<8x4xf32>
    %330 = arith.mulf %325, %329 : vector<8x4xf32>
    %331 = arith.truncf %330 : vector<8x4xf32> to vector<8x4xbf16>
    %cst_114 = arith.constant dense<0.000000e+00> : vector<8x32xf32>
    %332 = tpu.matmul %331, %319, %cst_114 {dimension_numbers = #tpu.dot_dimension_numbers<[1], [0], [0], [1], [0, 0, 1, 1], [], []>} : vector<8x4xbf16>, vector<4x32xbf16>, vector<8x32xf32> -> vector<8x32xf32>
    %c0_115 = arith.constant 0 : index
    %c64_116 = arith.constant 64 : index
    %333 = vector.load %arg14[%c0_115, %c64_116] : memref<16x128xf32, #tpu.memory_space<vmem>>, vector<8x32xf32>
    tpu.vector_store %arg14[%c0_115, %c64_116], %332 {strides = array<i32>} : memref<16x128xf32, #tpu.memory_space<vmem>>, vector<8x32xf32>,
    %334 = vector.extract_strided_slice %265 {offsets = [0, 96], sizes = [8, 32], strides = [1, 1]} : vector<8x128xf32> to vector<8x32xf32>
    %cst_117 = arith.constant 0.353553385 : f32
    %335 = vector.broadcast %cst_117 : f32 to vector<8x32xf32>
    %336 = arith.mulf %334, %335 : vector<8x32xf32>
    %337 = arith.truncf %336 : vector<8x32xf32> to vector<8x32xbf16>
    %338 = vector.extract_strided_slice %266 {offsets = [0, 96], sizes = [4, 32], strides = [1, 1]} : vector<4x128xf32> to vector<4x32xf32>
    %339 = arith.truncf %338 : vector<4x32xf32> to vector<4x32xbf16>
    %340 = vector.extract_strided_slice %267 {offsets = [0, 96], sizes = [4, 32], strides = [1, 1]} : vector<4x128xf32> to vector<4x32xf32>
    %341 = arith.truncf %340 : vector<4x32xf32> to vector<4x32xbf16>
    %cst_118 = arith.constant dense<0.000000e+00> : vector<8x4xf32>
    %342 = tpu.matmul %337, %339, %cst_118 {dimension_numbers = #tpu.dot_dimension_numbers<[1], [1], [0], [0], [0, 0, 1, 0], [], []>} : vector<8x32xbf16>, vector<4x32xbf16>, vector<8x4xf32> -> vector<8x4xf32>
    %cst_119 = arith.constant dense<0xFF800000> : vector<8xf32>
    %343 = vector.multi_reduction <maximumf>, %342, %cst_119 [1] : vector<8x4xf32> to vector<8xf32>
    %344 = vector.shape_cast %343 : vector<8xf32> to vector<8x1xf32>
    %345 = vector.broadcast %344 : vector<8x1xf32> to vector<8x4xf32>
    %346 = arith.subf %342, %345 : vector<8x4xf32>
    %347 = math.exp %346 : vector<8x4xf32>
    %cst_120 = arith.constant dense<0.000000e+00> : vector<8xf32>
    %348 = vector.multi_reduction <add>, %347, %cst_120 [1] : vector<8x4xf32> to vector<8xf32>
    %349 = vector.shape_cast %348 : vector<8xf32> to vector<8x1xf32>
    %350 = tpu.reciprocal %349 {approx = true} : vector<8x1xf32> -> vector<8x1xf32>
    %351 = vector.broadcast %350 : vector<8x1xf32> to vector<8x4xf32>
    %352 = arith.mulf %347, %351 : vector<8x4xf32>
    %353 = arith.truncf %352 : vector<8x4xf32> to vector<8x4xbf16>
    %cst_121 = arith.constant dense<0.000000e+00> : vector<8x32xf32>
    %354 = tpu.matmul %353, %341, %cst_121 {dimension_numbers = #tpu.dot_dimension_numbers<[1], [0], [0], [1], [0, 0, 1, 1], [], []>} : vector<8x4xbf16>, vector<4x32xbf16>, vector<8x32xf32> -> vector<8x32xf32>
    %c0_122 = arith.constant 0 : index
    %c96_123 = arith.constant 96 : index
    %355 = vector.load %arg14[%c0_122, %c96_123] : memref<16x128xf32, #tpu.memory_space<vmem>>, vector<8x32xf32>
    tpu.vector_store %arg14[%c0_122, %c96_123], %354 {strides = array<i32>} : memref<16x128xf32, #tpu.memory_space<vmem>>, vector<8x32xf32>,
    %356 = vector.extract_strided_slice %257 {offsets = [8, 0], sizes = [8, 128], strides = [1, 1]} : vector<16x128xf32> to vector<8x128xf32>
    %357 = vector.extract_strided_slice %264 {offsets = [4, 0], sizes = [4, 128], strides = [1, 1]} : vector<8x256xf32> to vector<4x128xf32>
    %358 = vector.extract_strided_slice %264 {offsets = [4, 128], sizes = [4, 128], strides = [1, 1]} : vector<8x256xf32> to vector<4x128xf32>
    %359 = vector.extract_strided_slice %356 {offsets = [0, 0], sizes = [8, 32], strides = [1, 1]} : vector<8x128xf32> to vector<8x32xf32>
    %cst_124 = arith.constant 0.353553385 : f32
    %360 = vector.broadcast %cst_124 : f32 to vector<8x32xf32>
    %361 = arith.mulf %359, %360 : vector<8x32xf32>
    %362 = arith.truncf %361 : vector<8x32xf32> to vector<8x32xbf16>
    %363 = vector.extract_strided_slice %357 {offsets = [0, 0], sizes = [4, 32], strides = [1, 1]} : vector<4x128xf32> to vector<4x32xf32>
    %364 = arith.truncf %363 : vector<4x32xf32> to vector<4x32xbf16>
    %365 = vector.extract_strided_slice %358 {offsets = [0, 0], sizes = [4, 32], strides = [1, 1]} : vector<4x128xf32> to vector<4x32xf32>
    %366 = arith.truncf %365 : vector<4x32xf32> to vector<4x32xbf16>
    %cst_125 = arith.constant dense<0.000000e+00> : vector<8x4xf32>
    %367 = tpu.matmul %362, %364, %cst_125 {dimension_numbers = #tpu.dot_dimension_numbers<[1], [1], [0], [0], [0, 0, 1, 0], [], []>} : vector<8x32xbf16>, vector<4x32xbf16>, vector<8x4xf32> -> vector<8x4xf32>
    %cst_126 = arith.constant dense<0xFF800000> : vector<8xf32>
    %368 = vector.multi_reduction <maximumf>, %367, %cst_126 [1] : vector<8x4xf32> to vector<8xf32>
    %369 = vector.shape_cast %368 : vector<8xf32> to vector<8x1xf32>
    %370 = vector.broadcast %369 : vector<8x1xf32> to vector<8x4xf32>
    %371 = arith.subf %367, %370 : vector<8x4xf32>
    %372 = math.exp %371 : vector<8x4xf32>
    %cst_127 = arith.constant dense<0.000000e+00> : vector<8xf32>
    %373 = vector.multi_reduction <add>, %372, %cst_127 [1] : vector<8x4xf32> to vector<8xf32>
    %374 = vector.shape_cast %373 : vector<8xf32> to vector<8x1xf32>
    %375 = tpu.reciprocal %374 {approx = true} : vector<8x1xf32> -> vector<8x1xf32>
    %376 = vector.broadcast %375 : vector<8x1xf32> to vector<8x4xf32>
    %377 = arith.mulf %372, %376 : vector<8x4xf32>
    %378 = arith.truncf %377 : vector<8x4xf32> to vector<8x4xbf16>
    %cst_128 = arith.constant dense<0.000000e+00> : vector<8x32xf32>
    %379 = tpu.matmul %378, %366, %cst_128 {dimension_numbers = #tpu.dot_dimension_numbers<[1], [0], [0], [1], [0, 0, 1, 1], [], []>} : vector<8x4xbf16>, vector<4x32xbf16>, vector<8x32xf32> -> vector<8x32xf32>
    %c8_129 = arith.constant 8 : index
    %c0_130 = arith.constant 0 : index
    %380 = vector.load %arg14[%c8_129, %c0_130] : memref<16x128xf32, #tpu.memory_space<vmem>>, vector<8x32xf32>
    tpu.vector_store %arg14[%c8_129, %c0_130], %379 {strides = array<i32>} : memref<16x128xf32, #tpu.memory_space<vmem>>, vector<8x32xf32>,
    %381 = vector.extract_strided_slice %356 {offsets = [0, 32], sizes = [8, 32], strides = [1, 1]} : vector<8x128xf32> to vector<8x32xf32>
    %cst_131 = arith.constant 0.353553385 : f32
    %382 = vector.broadcast %cst_131 : f32 to vector<8x32xf32>
    %383 = arith.mulf %381, %382 : vector<8x32xf32>
    %384 = arith.truncf %383 : vector<8x32xf32> to vector<8x32xbf16>
    %385 = vector.extract_strided_slice %357 {offsets = [0, 32], sizes = [4, 32], strides = [1, 1]} : vector<4x128xf32> to vector<4x32xf32>
    %386 = arith.truncf %385 : vector<4x32xf32> to vector<4x32xbf16>
    %387 = vector.extract_strided_slice %358 {offsets = [0, 32], sizes = [4, 32], strides = [1, 1]} : vector<4x128xf32> to vector<4x32xf32>
    %388 = arith.truncf %387 : vector<4x32xf32> to vector<4x32xbf16>
    %cst_132 = arith.constant dense<0.000000e+00> : vector<8x4xf32>
    %389 = tpu.matmul %384, %386, %cst_132 {dimension_numbers = #tpu.dot_dimension_numbers<[1], [1], [0], [0], [0, 0, 1, 0], [], []>} : vector<8x32xbf16>, vector<4x32xbf16>, vector<8x4xf32> -> vector<8x4xf32>
    %cst_133 = arith.constant dense<0xFF800000> : vector<8xf32>
    %390 = vector.multi_reduction <maximumf>, %389, %cst_133 [1] : vector<8x4xf32> to vector<8xf32>
    %391 = vector.shape_cast %390 : vector<8xf32> to vector<8x1xf32>
    %392 = vector.broadcast %391 : vector<8x1xf32> to vector<8x4xf32>
    %393 = arith.subf %389, %392 : vector<8x4xf32>
    %394 = math.exp %393 : vector<8x4xf32>
    %cst_134 = arith.constant dense<0.000000e+00> : vector<8xf32>
    %395 = vector.multi_reduction <add>, %394, %cst_134 [1] : vector<8x4xf32> to vector<8xf32>
    %396 = vector.shape_cast %395 : vector<8xf32> to vector<8x1xf32>
    %397 = tpu.reciprocal %396 {approx = true} : vector<8x1xf32> -> vector<8x1xf32>
    %398 = vector.broadcast %397 : vector<8x1xf32> to vector<8x4xf32>
    %399 = arith.mulf %394, %398 : vector<8x4xf32>
    %400 = arith.truncf %399 : vector<8x4xf32> to vector<8x4xbf16>
    %cst_135 = arith.constant dense<0.000000e+00> : vector<8x32xf32>
    %401 = tpu.matmul %400, %388, %cst_135 {dimension_numbers = #tpu.dot_dimension_numbers<[1], [0], [0], [1], [0, 0, 1, 1], [], []>} : vector<8x4xbf16>, vector<4x32xbf16>, vector<8x32xf32> -> vector<8x32xf32>
    %c8_136 = arith.constant 8 : index
    %c32_137 = arith.constant 32 : index
    %402 = vector.load %arg14[%c8_136, %c32_137] : memref<16x128xf32, #tpu.memory_space<vmem>>, vector<8x32xf32>
    tpu.vector_store %arg14[%c8_136, %c32_137], %401 {strides = array<i32>} : memref<16x128xf32, #tpu.memory_space<vmem>>, vector<8x32xf32>,
    %403 = vector.extract_strided_slice %356 {offsets = [0, 64], sizes = [8, 32], strides = [1, 1]} : vector<8x128xf32> to vector<8x32xf32>
    %cst_138 = arith.constant 0.353553385 : f32
    %404 = vector.broadcast %cst_138 : f32 to vector<8x32xf32>
    %405 = arith.mulf %403, %404 : vector<8x32xf32>
    %406 = arith.truncf %405 : vector<8x32xf32> to vector<8x32xbf16>
    %407 = vector.extract_strided_slice %357 {offsets = [0, 64], sizes = [4, 32], strides = [1, 1]} : vector<4x128xf32> to vector<4x32xf32>
    %408 = arith.truncf %407 : vector<4x32xf32> to vector<4x32xbf16>
    %409 = vector.extract_strided_slice %358 {offsets = [0, 64], sizes = [4, 32], strides = [1, 1]} : vector<4x128xf32> to vector<4x32xf32>
    %410 = arith.truncf %409 : vector<4x32xf32> to vector<4x32xbf16>
    %cst_139 = arith.constant dense<0.000000e+00> : vector<8x4xf32>
    %411 = tpu.matmul %406, %408, %cst_139 {dimension_numbers = #tpu.dot_dimension_numbers<[1], [1], [0], [0], [0, 0, 1, 0], [], []>} : vector<8x32xbf16>, vector<4x32xbf16>, vector<8x4xf32> -> vector<8x4xf32>
    %cst_140 = arith.constant dense<0xFF800000> : vector<8xf32>
    %412 = vector.multi_reduction <maximumf>, %411, %cst_140 [1] : vector<8x4xf32> to vector<8xf32>
    %413 = vector.shape_cast %412 : vector<8xf32> to vector<8x1xf32>
    %414 = vector.broadcast %413 : vector<8x1xf32> to vector<8x4xf32>
    %415 = arith.subf %411, %414 : vector<8x4xf32>
    %416 = math.exp %415 : vector<8x4xf32>
    %cst_141 = arith.constant dense<0.000000e+00> : vector<8xf32>
    %417 = vector.multi_reduction <add>, %416, %cst_141 [1] : vector<8x4xf32> to vector<8xf32>
    %418 = vector.shape_cast %417 : vector<8xf32> to vector<8x1xf32>
    %419 = tpu.reciprocal %418 {approx = true} : vector<8x1xf32> -> vector<8x1xf32>
    %420 = vector.broadcast %419 : vector<8x1xf32> to vector<8x4xf32>
    %421 = arith.mulf %416, %420 : vector<8x4xf32>
    %422 = arith.truncf %421 : vector<8x4xf32> to vector<8x4xbf16>
    %cst_142 = arith.constant dense<0.000000e+00> : vector<8x32xf32>
    %423 = tpu.matmul %422, %410, %cst_142 {dimension_numbers = #tpu.dot_dimension_numbers<[1], [0], [0], [1], [0, 0, 1, 1], [], []>} : vector<8x4xbf16>, vector<4x32xbf16>, vector<8x32xf32> -> vector<8x32xf32>
    %c8_143 = arith.constant 8 : index
    %c64_144 = arith.constant 64 : index
    %424 = vector.load %arg14[%c8_143, %c64_144] : memref<16x128xf32, #tpu.memory_space<vmem>>, vector<8x32xf32>
    tpu.vector_store %arg14[%c8_143, %c64_144], %423 {strides = array<i32>} : memref<16x128xf32, #tpu.memory_space<vmem>>, vector<8x32xf32>,
    %425 = vector.extract_strided_slice %356 {offsets = [0, 96], sizes = [8, 32], strides = [1, 1]} : vector<8x128xf32> to vector<8x32xf32>
    %cst_145 = arith.constant 0.353553385 : f32
    %426 = vector.broadcast %cst_145 : f32 to vector<8x32xf32>
    %427 = arith.mulf %425, %426 : vector<8x32xf32>
    %428 = arith.truncf %427 : vector<8x32xf32> to vector<8x32xbf16>
    %429 = vector.extract_strided_slice %357 {offsets = [0, 96], sizes = [4, 32], strides = [1, 1]} : vector<4x128xf32> to vector<4x32xf32>
    %430 = arith.truncf %429 : vector<4x32xf32> to vector<4x32xbf16>
    %431 = vector.extract_strided_slice %358 {offsets = [0, 96], sizes = [4, 32], strides = [1, 1]} : vector<4x128xf32> to vector<4x32xf32>
    %432 = arith.truncf %431 : vector<4x32xf32> to vector<4x32xbf16>
    %cst_146 = arith.constant dense<0.000000e+00> : vector<8x4xf32>
    %433 = tpu.matmul %428, %430, %cst_146 {dimension_numbers = #tpu.dot_dimension_numbers<[1], [1], [0], [0], [0, 0, 1, 0], [], []>} : vector<8x32xbf16>, vector<4x32xbf16>, vector<8x4xf32> -> vector<8x4xf32>
    %cst_147 = arith.constant dense<0xFF800000> : vector<8xf32>
    %434 = vector.multi_reduction <maximumf>, %433, %cst_147 [1] : vector<8x4xf32> to vector<8xf32>
    %435 = vector.shape_cast %434 : vector<8xf32> to vector<8x1xf32>
    %436 = vector.broadcast %435 : vector<8x1xf32> to vector<8x4xf32>
    %437 = arith.subf %433, %436 : vector<8x4xf32>
    %438 = math.exp %437 : vector<8x4xf32>
    %cst_148 = arith.constant dense<0.000000e+00> : vector<8xf32>
    %439 = vector.multi_reduction <add>, %438, %cst_148 [1] : vector<8x4xf32> to vector<8xf32>
    %440 = vector.shape_cast %439 : vector<8xf32> to vector<8x1xf32>
    %441 = tpu.reciprocal %440 {approx = true} : vector<8x1xf32> -> vector<8x1xf32>
    %442 = vector.broadcast %441 : vector<8x1xf32> to vector<8x4xf32>
    %443 = arith.mulf %438, %442 : vector<8x4xf32>
    %444 = arith.truncf %443 : vector<8x4xf32> to vector<8x4xbf16>
    %cst_149 = arith.constant dense<0.000000e+00> : vector<8x32xf32>
    %445 = tpu.matmul %444, %432, %cst_149 {dimension_numbers = #tpu.dot_dimension_numbers<[1], [0], [0], [1], [0, 0, 1, 1], [], []>} : vector<8x4xbf16>, vector<4x32xbf16>, vector<8x32xf32> -> vector<8x32xf32>
    %c8_150 = arith.constant 8 : index
    %c96_151 = arith.constant 96 : index
    %446 = vector.load %arg14[%c8_150, %c96_151] : memref<16x128xf32, #tpu.memory_space<vmem>>, vector<8x32xf32>
    tpu.vector_store %arg14[%c8_150, %c96_151], %445 {strides = array<i32>} : memref<16x128xf32, #tpu.memory_space<vmem>>, vector<8x32xf32>,
    %c0_152 = arith.constant 0 : index
    %c0_153 = arith.constant 0 : index
    %447 = vector.load %arg14[%c0_152, %c0_153] : memref<16x128xf32, #tpu.memory_space<vmem>>, vector<16x128xf32>
    %c0_154 = arith.constant 0 : index
    %c0_155 = arith.constant 0 : index
    %448 = vector.load %arg9[%c0_154, %c0_155] : memref<128x128xbf16, #tpu.memory_space<vmem>>, vector<128x128xbf16>
    %449 = arith.truncf %447 : vector<16x128xf32> to vector<16x128xbf16>
    %cst_156 = arith.constant dense<0.000000e+00> : vector<16x128xf32>
    %450 = tpu.matmul %449, %448, %cst_156 {dimension_numbers = #tpu.dot_dimension_numbers<[1], [0], [0], [1], [0, 0, 1, 1], [], []>} : vector<16x128xbf16>, vector<128x128xbf16>, vector<16x128xf32> -> vector<16x128xf32>
    %451 = vector.broadcast %11 : vector<1x128xf32> to vector<16x128xf32>
    %452 = arith.addf %450, %451 : vector<16x128xf32>
    %453 = arith.addf %252, %452 : vector<16x128xf32>
    %cst_157 = arith.constant dense<0.000000e+00> : vector<16xf32>
    %454 = vector.multi_reduction <add>, %453, %cst_157 [1] : vector<16x128xf32> to vector<16xf32>
    %455 = vector.shape_cast %454 : vector<16xf32> to vector<16x1xf32>
    %cst_158 = arith.constant 3.125000e-02 : f32
    %456 = vector.broadcast %cst_158 : f32 to vector<16x1xf32>
    %457 = arith.mulf %455, %456 : vector<16x1xf32>
    %458 = vector.broadcast %457 : vector<16x1xf32> to vector<16x128xf32>
    %459 = arith.subf %453, %458 : vector<16x128xf32>
    %460 = vector.broadcast %4 : vector<1x128xf32> to vector<16x128xf32>
    %461 = arith.mulf %459, %460 : vector<16x128xf32>
    %462 = arith.mulf %461, %461 : vector<16x128xf32>
    %cst_159 = arith.constant dense<0.000000e+00> : vector<16xf32>
    %463 = vector.multi_reduction <add>, %462, %cst_159 [1] : vector<16x128xf32> to vector<16xf32>
    %464 = vector.shape_cast %463 : vector<16xf32> to vector<16x1xf32>
    %cst_160 = arith.constant 3.125000e-02 : f32
    %465 = vector.broadcast %cst_160 : f32 to vector<16x1xf32>
    %466 = arith.mulf %464, %465 : vector<16x1xf32>
    %cst_161 = arith.constant 9.99999974E-6 : f32
    %467 = vector.broadcast %cst_161 : f32 to vector<16x1xf32>
    %468 = arith.addf %466, %467 : vector<16x1xf32>
    %469 = math.rsqrt %468 : vector<16x1xf32>
    %470 = vector.broadcast %469 : vector<16x1xf32> to vector<16x128xf32>
    %471 = arith.mulf %461, %470 : vector<16x128xf32>
    %472 = vector.broadcast %12 : vector<1x128xf32> to vector<16x128xf32>
    %473 = arith.mulf %471, %472 : vector<16x128xf32>
    %474 = vector.broadcast %13 : vector<1x128xf32> to vector<16x128xf32>
    %475 = arith.addf %473, %474 : vector<16x128xf32>
    %c0_162 = arith.constant 0 : index
    %c0_163 = arith.constant 0 : index
    %476 = vector.load %arg10[%c0_162, %c0_163] : memref<128x128xbf16, #tpu.memory_space<vmem>>, vector<128x128xbf16>
    %477 = arith.truncf %475 : vector<16x128xf32> to vector<16x128xbf16>
    %cst_164 = arith.constant dense<0.000000e+00> : vector<16x128xf32>
    %478 = tpu.matmul %477, %476, %cst_164 {dimension_numbers = #tpu.dot_dimension_numbers<[1], [0], [0], [1], [0, 0, 1, 1], [], []>} : vector<16x128xbf16>, vector<128x128xbf16>, vector<16x128xf32> -> vector<16x128xf32>
    %479 = vector.broadcast %14 : vector<1x128xf32> to vector<16x128xf32>
    %480 = arith.addf %478, %479 : vector<16x128xf32>
    %cst_165 = arith.constant 0.000000e+00 : f32
    %481 = vector.broadcast %cst_165 : f32 to vector<16x128xf32>
    %482 = arith.maximumf %480, %481 : vector<16x128xf32>
    %c0_166 = arith.constant 0 : index
    %c0_167 = arith.constant 0 : index
    %483 = vector.load %arg11[%c0_166, %c0_167] : memref<128x128xbf16, #tpu.memory_space<vmem>>, vector<128x128xbf16>
    %484 = arith.truncf %482 : vector<16x128xf32> to vector<16x128xbf16>
    %cst_168 = arith.constant dense<0.000000e+00> : vector<16x128xf32>
    %485 = tpu.matmul %484, %483, %cst_168 {dimension_numbers = #tpu.dot_dimension_numbers<[1], [0], [0], [1], [0, 0, 1, 1], [], []>} : vector<16x128xbf16>, vector<128x128xbf16>, vector<16x128xf32> -> vector<16x128xf32>
    %486 = vector.broadcast %15 : vector<1x128xf32> to vector<16x128xf32>
    %487 = arith.addf %485, %486 : vector<16x128xf32>
    %488 = arith.addf %475, %487 : vector<16x128xf32>
    %cst_169 = arith.constant dense<0.000000e+00> : vector<16xf32>
    %489 = vector.multi_reduction <add>, %488, %cst_169 [1] : vector<16x128xf32> to vector<16xf32>
    %490 = vector.shape_cast %489 : vector<16xf32> to vector<16x1xf32>
    %cst_170 = arith.constant 3.125000e-02 : f32
    %491 = vector.broadcast %cst_170 : f32 to vector<16x1xf32>
    %492 = arith.mulf %490, %491 : vector<16x1xf32>
    %493 = vector.broadcast %492 : vector<16x1xf32> to vector<16x128xf32>
    %494 = arith.subf %488, %493 : vector<16x128xf32>
    %495 = vector.broadcast %4 : vector<1x128xf32> to vector<16x128xf32>
    %496 = arith.mulf %494, %495 : vector<16x128xf32>
    %497 = arith.mulf %496, %496 : vector<16x128xf32>
    %cst_171 = arith.constant dense<0.000000e+00> : vector<16xf32>
    %498 = vector.multi_reduction <add>, %497, %cst_171 [1] : vector<16x128xf32> to vector<16xf32>
    %499 = vector.shape_cast %498 : vector<16xf32> to vector<16x1xf32>
    %cst_172 = arith.constant 3.125000e-02 : f32
    %500 = vector.broadcast %cst_172 : f32 to vector<16x1xf32>
    %501 = arith.mulf %499, %500 : vector<16x1xf32>
    %cst_173 = arith.constant 9.99999974E-6 : f32
    %502 = vector.broadcast %cst_173 : f32 to vector<16x1xf32>
    %503 = arith.addf %501, %502 : vector<16x1xf32>
    %504 = math.rsqrt %503 : vector<16x1xf32>
    %505 = vector.broadcast %504 : vector<16x1xf32> to vector<16x128xf32>
    %506 = arith.mulf %496, %505 : vector<16x128xf32>
    %507 = vector.broadcast %16 : vector<1x128xf32> to vector<16x128xf32>
    %508 = arith.mulf %506, %507 : vector<16x128xf32>
    %509 = vector.broadcast %17 : vector<1x128xf32> to vector<16x128xf32>
    %510 = arith.addf %508, %509 : vector<16x128xf32>
    %511 = vector.shape_cast %510 : vector<16x128xf32> to vector<2x8x128xf32>
    %c0_174 = arith.constant 0 : index
    %c0_175 = arith.constant 0 : index
    %c0_176 = arith.constant 0 : index
    %512 = vector.load %arg13[%c0_174, %c0_175, %c0_176] : memref<2x8x128xf32, #tpu.memory_space<vmem>>, vector<2x8x128xf32>
    tpu.vector_store %arg13[%c0_174, %c0_175, %c0_176], %511 {strides = array<i32>} : memref<2x8x128xf32, #tpu.memory_space<vmem>>, vector<2x8x128xf32>,
    return
  }
  func.func @transform_0(%arg0: i32) -> (i32, i32, i32) {
    %c0_i32 = arith.constant 0 : i32
    %c0_i32_0 = arith.constant 0 : i32
    %c0_i32_1 = arith.constant 0 : i32
    %c0_i32_2 = arith.constant 0 : i32
    return %c0_i32, %c0_i32_0, %c0_i32_1 : i32, i32, i32
  }
  func.func @transform_1(%arg0: i32) -> (i32, i32, i32) {
    %c0_i32 = arith.constant 0 : i32
    %c0_i32_0 = arith.constant 0 : i32
    %c0_i32_1 = arith.constant 0 : i32
    %c0_i32_2 = arith.constant 0 : i32
    return %c0_i32, %c0_i32_0, %c0_i32_1 : i32, i32, i32
  }
  func.func @transform_2(%arg0: i32) -> (i32, i32, i32) {
    %c0_i32 = arith.constant 0 : i32
    %c0_i32_0 = arith.constant 0 : i32
    %c0_i32_1 = arith.constant 0 : i32
    %c0_i32_2 = arith.constant 0 : i32
    return %c0_i32, %c0_i32_0, %c0_i32_1 : i32, i32, i32
  }
  func.func @transform_3(%arg0: i32) -> (i32, i32) {
    %c0_i32 = arith.constant 0 : i32
    %c0_i32_0 = arith.constant 0 : i32
    %c0_i32_1 = arith.constant 0 : i32
    return %c0_i32, %c0_i32_0 : i32, i32
  }
  func.func @transform_4(%arg0: i32) -> (i32, i32) {
    %c0_i32 = arith.constant 0 : i32
    %c0_i32_0 = arith.constant 0 : i32
    %c0_i32_1 = arith.constant 0 : i32
    return %c0_i32, %c0_i32_0 : i32, i32
  }
  func.func @transform_5(%arg0: i32) -> (i32, i32) {
    %c0_i32 = arith.constant 0 : i32
    %c0_i32_0 = arith.constant 0 : i32
    %c0_i32_1 = arith.constant 0 : i32
    return %c0_i32, %c0_i32_0 : i32, i32
  }
  func.func @transform_6(%arg0: i32) -> (i32, i32) {
    %c0_i32 = arith.constant 0 : i32
    %c0_i32_0 = arith.constant 0 : i32
    %c0_i32_1 = arith.constant 0 : i32
    return %c0_i32, %c0_i32_0 : i32, i32
  }
  func.func @transform_7(%arg0: i32) -> (i32, i32) {
    %c0_i32 = arith.constant 0 : i32
    %c0_i32_0 = arith.constant 0 : i32
    %c0_i32_1 = arith.constant 0 : i32
    return %c0_i32, %c0_i32_0 : i32, i32
  }
  func.func @transform_8(%arg0: i32) -> (i32, i32) {
    %c0_i32 = arith.constant 0 : i32
    %c0_i32_0 = arith.constant 0 : i32
    %c0_i32_1 = arith.constant 0 : i32
    return %c0_i32, %c0_i32_0 : i32, i32
  }
  func.func @transform_9(%arg0: i32) -> (i32, i32) {
    %c0_i32 = arith.constant 0 : i32
    %c0_i32_0 = arith.constant 0 : i32
    %c0_i32_1 = arith.constant 0 : i32
    return %c0_i32, %c0_i32_0 : i32, i32
  }
  func.func @transform_10(%arg0: i32) -> (i32, i32) {
    %c0_i32 = arith.constant 0 : i32
    %c0_i32_0 = arith.constant 0 : i32
    %c0_i32_1 = arith.constant 0 : i32
    return %c0_i32, %c0_i32_0 : i32, i32
  }
  func.func @transform_11(%arg0: i32) -> (i32, i32) {
    %c0_i32 = arith.constant 0 : i32
    %c0_i32_0 = arith.constant 0 : i32
    %c0_i32_1 = arith.constant 0 : i32
    return %c0_i32, %c0_i32_0 : i32, i32
  }
  func.func @transform_12(%arg0: i32) -> (i32, i32, i32) {
    %c0_i32 = arith.constant 0 : i32
    %c0_i32_0 = arith.constant 0 : i32
    %c0_i32_1 = arith.constant 0 : i32
    %c0_i32_2 = arith.constant 0 : i32
    return %c0_i32, %c0_i32_0, %c0_i32_1 : i32, i32, i32
  }
}

module attributes {stable_mosaic.version = 11 : i64} {
  func.func @_tiled_linear_kernel(%arg0: i32, %arg1: i32, %arg2: i32, %arg3: memref<16x128xbf16, #tpu.memory_space<vmem>>, %arg4: memref<128x128xbf16, #tpu.memory_space<vmem>>, %arg5: memref<1x128xf32, #tpu.memory_space<vmem>>, %arg6: memref<16x128xf32, #tpu.memory_space<vmem>>, %arg7: memref<16x128xf32, #tpu.memory_space<vmem>>) attributes {dimension_semantics = [#tpu.dimension_semantics<parallel>, #tpu.dimension_semantics<parallel>, #tpu.dimension_semantics<arbitrary>], iteration_bounds = array<i64: 1, 1, 1>, scalar_prefetch = 0 : i64, scratch_operands = 1 : i64, tpu.core_type = #tpu.core_type<tc>, window_params = [{transform_indices = @transform_0, window_bounds = array<i64: 16, 128>}, {transform_indices = @transform_1, window_bounds = array<i64: 128, 128>}, {transform_indices = @transform_2, window_bounds = array<i64: 1, 128>}, {transform_indices = @transform_3, window_bounds = array<i64: 16, 128>}]} {
    %c0_i32 = arith.constant 0 : i32
    %0 = arith.cmpi eq, %arg2, %c0_i32 : i32
    %1 = arith.extui %0 : i1 to i32
    %c0_i32_0 = arith.constant 0 : i32
    %2 = arith.cmpi ne, %1, %c0_i32_0 : i32
    scf.if %2 {
      %cst_10 = arith.constant 0.000000e+00 : f32
      %12 = vector.broadcast %cst_10 : f32 to vector<16x128xf32>
      %c0_11 = arith.constant 0 : index
      %c0_12 = arith.constant 0 : index
      %13 = vector.load %arg7[%c0_11, %c0_12] : memref<16x128xf32, #tpu.memory_space<vmem>>, vector<16x128xf32>
      tpu.vector_store %arg7[%c0_11, %c0_12], %12 {strides = array<i32>} : memref<16x128xf32, #tpu.memory_space<vmem>>, vector<16x128xf32>,
    } else {
    }
    %c0 = arith.constant 0 : index
    %c0_1 = arith.constant 0 : index
    %3 = vector.load %arg7[%c0, %c0_1] : memref<16x128xf32, #tpu.memory_space<vmem>>, vector<16x128xf32>
    %c0_2 = arith.constant 0 : index
    %c0_3 = arith.constant 0 : index
    %4 = vector.load %arg3[%c0_2, %c0_3] : memref<16x128xbf16, #tpu.memory_space<vmem>>, vector<16x128xbf16>
    %c0_4 = arith.constant 0 : index
    %c0_5 = arith.constant 0 : index
    %5 = vector.load %arg4[%c0_4, %c0_5] : memref<128x128xbf16, #tpu.memory_space<vmem>>, vector<128x128xbf16>
    %cst = arith.constant dense<0.000000e+00> : vector<16x128xf32>
    %6 = tpu.matmul %4, %5, %cst {dimension_numbers = #tpu.dot_dimension_numbers<[1], [0], [0], [1], [0, 0, 1, 1], [], []>} : vector<16x128xbf16>, vector<128x128xbf16>, vector<16x128xf32> -> vector<16x128xf32>
    %7 = arith.addf %3, %6 : vector<16x128xf32>
    %c0_6 = arith.constant 0 : index
    %c0_7 = arith.constant 0 : index
    %8 = vector.load %arg7[%c0_6, %c0_7] : memref<16x128xf32, #tpu.memory_space<vmem>>, vector<16x128xf32>
    tpu.vector_store %arg7[%c0_6, %c0_7], %7 {strides = array<i32>} : memref<16x128xf32, #tpu.memory_space<vmem>>, vector<16x128xf32>,
    %c0_i32_8 = arith.constant 0 : i32
    %9 = arith.cmpi eq, %arg2, %c0_i32_8 : i32
    %10 = arith.extui %9 : i1 to i32
    %c0_i32_9 = arith.constant 0 : i32
    %11 = arith.cmpi ne, %10, %c0_i32_9 : i32
    scf.if %11 {
      %c0_10 = arith.constant 0 : index
      %c0_11 = arith.constant 0 : index
      %12 = vector.load %arg7[%c0_10, %c0_11] : memref<16x128xf32, #tpu.memory_space<vmem>>, vector<16x128xf32>
      %c0_12 = arith.constant 0 : index
      %c0_13 = arith.constant 0 : index
      %13 = vector.load %arg5[%c0_12, %c0_13] : memref<1x128xf32, #tpu.memory_space<vmem>>, vector<1x128xf32>
      %14 = vector.broadcast %13 : vector<1x128xf32> to vector<16x128xf32>
      %15 = arith.addf %12, %14 : vector<16x128xf32>
      %c0_14 = arith.constant 0 : index
      %c0_15 = arith.constant 0 : index
      %16 = vector.load %arg6[%c0_14, %c0_15] : memref<16x128xf32, #tpu.memory_space<vmem>>, vector<16x128xf32>
      tpu.vector_store %arg6[%c0_14, %c0_15], %15 {strides = array<i32>} : memref<16x128xf32, #tpu.memory_space<vmem>>, vector<16x128xf32>,
    } else {
    }
    return
  }
  func.func @transform_0(%arg0: i32, %arg1: i32, %arg2: i32) -> (i32, i32) {
    %c0_i32 = arith.constant 0 : i32
    return %arg0, %arg2 : i32, i32
  }
  func.func @transform_1(%arg0: i32, %arg1: i32, %arg2: i32) -> (i32, i32) {
    %c0_i32 = arith.constant 0 : i32
    return %arg2, %arg1 : i32, i32
  }
  func.func @transform_2(%arg0: i32, %arg1: i32, %arg2: i32) -> (i32, i32) {
    %c0_i32 = arith.constant 0 : i32
    %c0_i32_0 = arith.constant 0 : i32
    return %c0_i32, %arg1 : i32, i32
  }
  func.func @transform_3(%arg0: i32, %arg1: i32, %arg2: i32) -> (i32, i32) {
    %c0_i32 = arith.constant 0 : i32
    return %arg0, %arg1 : i32, i32
  }
}

</mosaic_0001>

<llo_original>
// kernel: vae_transformer_forward.5
$region0: #{vae_transformer_forward.5}
  #allocation0 [shape = 'u32[]', space=smem, size = 0x4, offset = 0x4, fixed_abs, tag = 'smem constant byte address 0x4 - core index']
  #allocation1 [shape = 'u32[144,128]{1,0:T(1,128)}', space=vmem, size = 0x12000, scoped, tag = 'internal scratch']
  %s0 = inlined_call_operand.vmem [shape: f32[2,128], index: 0, kind: input, shape index: {}]
  %s1 = inlined_call_operand.vmem [shape: f32[2,128], index: 1, kind: input, shape index: {}]
  %s2 = inlined_call_operand.hbm [shape: bf16[128,128], index: 2, kind: input, shape index: {}]
  %s3 = inlined_call_operand.hbm [shape: bf16[128,128], index: 3, kind: input, shape index: {}]
  %s4 = inlined_call_operand.vmem [shape: bf16[128,512], index: 4, kind: input, shape index: {}]
  %s5 = inlined_call_operand.vmem [shape: f32[1,768], index: 5, kind: input, shape index: {}]
  %s6 = inlined_call_operand.hbm [shape: f32[2,128], index: 6, kind: output, shape index: {0}]
  %s7 = inlined_call_operand.hbm [shape: f32[2,128], index: 7, kind: output, shape index: {1}]
  %s8 = inlined_call_operand.vmem [shape: f32[2,512], index: 8, kind: output, shape index: {2}]
  %9 = xla_tuple %s6, %s7, %s8
  %s10 = sld [smem:[#allocation0]]
  $region58: #{vae_transformer_forward.5} parent=0
    _
  %s12 = ssub.s32 1, %s10
  %s13 = scalar_select 0, %s12, %s10
  $region1: #{vae_transformer_forward.5} parent=0
    #allocation2 [shape = 'u8[32768]{0}', space=vmem, size = 0x8000, scoped, tag = 'input window, operand 2, single buffered']
    #allocation3 [shape = 's32[1]{0}', space=sflag, size = 0x4, scoped, tag = 'scoped memory for vae_transformer_forward.5']
    #allocation4 [shape = 's32[1]{0}', space=sflag, size = 0x4, scoped, tag = 'scoped memory for vae_transformer_forward.5']
    #allocation5 [shape = 'u8[32768]{0}', space=vmem, size = 0x8000, scoped, tag = 'input window, operand 3, single buffered']
    #allocation6 [shape = 's32[1]{0}', space=sflag, size = 0x4, scoped, tag = 'scoped memory for vae_transformer_forward.5']
    #allocation7 [shape = 'u8[1024]{0}', space=vmem, size = 0x400, scoped, tag = 'output window, operand 0, single buffered']
    #allocation8 [shape = 'u8[1024]{0}', space=vmem, size = 0x400, scoped, tag = 'output window, operand 1, single buffered']
    #allocation9 [shape = 's32[1]{0}', space=sflag, size = 0x4, scoped, tag = 'scoped memory for vae_transformer_forward.5']
    %14 = vsyncpa [#allocation3], 0
    %15 = vsyncpa [#allocation6], 0
    %16 = vsyncpa [#allocation4], 0
    %17 = vsyncpa [#allocation9], 0
    // Predicated region
    $region2: #{vae_transformer_forward.5} parent=1 // pred_check
      _
    $region3: #{vae_transformer_forward.5} parent=1 // pred_check_branch
      %19 = sbr.rel (0) target = $region5
    $region4: #{vae_transformer_forward.5} parent=1 // pred_region
      _
    $region5: #{vae_transformer_forward.5} parent=1 // pred_fallthru
      _
    // Predicated region
    $region6: #{vae_transformer_forward.5} parent=1 // pred_check
      _
    $region7: #{vae_transformer_forward.5} parent=1 // pred_check_branch
      %21 = sbr.rel (0) target = $region9
    $region8: #{vae_transformer_forward.5} parent=1 // pred_region
      _
    $region9: #{vae_transformer_forward.5} parent=1 // pred_fallthru
      _
    // Predicated region
    $region10: #{vae_transformer_forward.5} parent=1 // pred_check
      _
    $region11: #{vae_transformer_forward.5} parent=1 // pred_check_branch
      %23 = sbr.rel (0) target = $region13
    $region12: #{vae_transformer_forward.5} parent=1 // pred_region
      %s25 = ssub.s32 1024, 1024
      %26 = vsyncadd [#allocation3], %s25
      %s27 = sshll.u32 [#allocation2], 4
      %s28 = int_to_ptr.vmem [resolvable:$true] %s27
      %33 = dma.hbm_to_vmem [thread:$0]  %s2, 1024, %s28, [#allocation3], 64, 64, 4
    $region13: #{vae_transformer_forward.5} parent=1 // pred_fallthru
      _
    // Predicated region
    $region14: #{vae_transformer_forward.5} parent=1 // pred_check
      _
    $region15: #{vae_transformer_forward.5} parent=1 // pred_check_branch
      %35 = sbr.rel (0) target = $region17
    $region16: #{vae_transformer_forward.5} parent=1 // pred_region
      %s37 = ssub.s32 1024, 1024
      %38 = vsyncadd [#allocation6], %s37
      %s39 = sshll.u32 [#allocation5], 4
      %s40 = int_to_ptr.vmem [resolvable:$true] %s39
      %45 = dma.hbm_to_vmem [thread:$0]  %s3, 1024, %s40, [#allocation6], 64, 64, 4
    $region17: #{vae_transformer_forward.5} parent=1 // pred_fallthru
      _
    // Predicated region
    $region18: #{vae_transformer_forward.5} parent=1 // pred_check
      _
    $region19: #{vae_transformer_forward.5} parent=1 // pred_check_branch
      %47 = sbr.rel (0) target = $region21
    $region20: #{vae_transformer_forward.5} parent=1 // pred_region
      _
    $region21: #{vae_transformer_forward.5} parent=1 // pred_fallthru
      _
    // Predicated region
    $region22: #{vae_transformer_forward.5} parent=1 // pred_check
      _
    $region23: #{vae_transformer_forward.5} parent=1 // pred_check_branch
      %49 = sbr.rel (0) target = $region25
    $region24: #{vae_transformer_forward.5} parent=1 // pred_region
      _
    $region25: #{vae_transformer_forward.5} parent=1 // pred_fallthru
      _
    // Predicated region
    $region26: #{vae_transformer_forward.5} parent=1 // pred_check
      _
    $region27: #{vae_transformer_forward.5} parent=1 // pred_check_branch
      %51 = sbr.rel (0) target = $region29
    $region28: #{vae_transformer_forward.5} parent=1 // pred_region
      %52 = dma.done [#allocation3], 1024
    $region29: #{vae_transformer_forward.5} parent=1 // pred_fallthru
      _
    // Predicated region
    $region30: #{vae_transformer_forward.5} parent=1 // pred_check
      _
    $region31: #{vae_transformer_forward.5} parent=1 // pred_check_branch
      %54 = sbr.rel (0) target = $region33
    $region32: #{vae_transformer_forward.5} parent=1 // pred_region
      %55 = dma.done [#allocation6], 1024
    $region33: #{vae_transformer_forward.5} parent=1 // pred_fallthru
      _
    %v57 = vld [vmem:[%s5] sm:$0x1]
    %v58 = vld [vmem:[%s5 + $0x1] sm:$0x1]
    %v59 = vld [vmem:[%s5 + $0x2] sm:$0xf]
    %v60 = vld [vmem:[%s0] sm:$0x3]
    %v61 = vpack.c.bf16 %v60, %v60
    %v62 = vld [vmem:[#allocation2] sm:$0xf]
    %v63 = vld [vmem:[#allocation2 + $0x4] sm:$0xf]
    %v64 = vld [vmem:[#allocation2 + $0x8] sm:$0xf]
    %v65 = vld [vmem:[#allocation2 + $0xc] sm:$0xf]
    %v66 = vld [vmem:[#allocation2 + $0x10] sm:$0xf]
    %v67 = vld [vmem:[#allocation2 + $0x14] sm:$0xf]
    %v68 = vld [vmem:[#allocation2 + $0x18] sm:$0xf]
    %v69 = vld [vmem:[#allocation2 + $0x1c] sm:$0xf]
    %v70 = vld [vmem:[#allocation2 + $0x20] sm:$0xf]
    %v71 = vld [vmem:[#allocation2 + $0x24] sm:$0xf]
    %v72 = vld [vmem:[#allocation2 + $0x28] sm:$0xf]
    %v73 = vld [vmem:[#allocation2 + $0x2c] sm:$0xf]
    %v74 = vld [vmem:[#allocation2 + $0x30] sm:$0xf]
    %v75 = vld [vmem:[#allocation2 + $0x34] sm:$0xf]
    %v76 = vld [vmem:[#allocation2 + $0x38] sm:$0xf]
    %v77 = vld [vmem:[#allocation2 + $0x3c] sm:$0xf]
    %v79 = vlaneseq
    %v80 = vshrl.u32 %v79, 7
    %v81 = vsub.s32 0, %v80
    %v82 = vrot.slane %v57, %v81
    %v100 = vunpack.c.l.b16 %v62
    %v101 = vunpack.c.l.b16 %v63
    %v102 = vunpack.c.l.b16 %v64
    %v103 = vunpack.c.l.b16 %v65
    %v104 = vunpack.c.l.b16 %v66
    %v105 = vunpack.c.l.b16 %v67
    %v106 = vunpack.c.l.b16 %v68
    %v107 = vunpack.c.l.b16 %v69
    %v108 = vunpack.c.l.b16 %v70
    %v109 = vunpack.c.l.b16 %v71
    %v110 = vunpack.c.l.b16 %v72
    %v111 = vunpack.c.l.b16 %v73
    %v112 = vunpack.c.l.b16 %v74
    %v113 = vunpack.c.l.b16 %v75
    %v114 = vunpack.c.l.b16 %v76
    %v115 = vunpack.c.l.b16 %v77
    %v116 = vpack.c.b16 %v101, %v100
    %v117 = vpack.c.b16 %v103, %v102
    %v118 = vpack.c.b16 %v105, %v104
    %v119 = vpack.c.b16 %v107, %v106
    %v120 = vpack.c.b16 %v109, %v108
    %v121 = vpack.c.b16 %v111, %v110
    %v122 = vpack.c.b16 %v113, %v112
    %v123 = vpack.c.b16 %v115, %v114
    %132 = vmatprep.subr.bf16.mxu0 0
    %133 = vmatpush1.bf16.msra.mxu0 %v123
    %134 = vmatprep.subr.bf16.mxu0 0
    %135 = vmatpush1.bf16.msra.mxu0 %v122
    %136 = vmatprep.subr.bf16.mxu0 0
    %137 = vmatpush1.bf16.msra.mxu0 %v121
    %138 = vmatprep.subr.bf16.mxu0 0
    %139 = vmatpush1.bf16.msra.mxu0 %v120
    %140 = vmatprep.subr.bf16.mxu0 0
    %141 = vmatpush1.bf16.msra.mxu0 %v119
    %142 = vmatprep.subr.bf16.mxu0 0
    %143 = vmatpush1.bf16.msra.mxu0 %v118
    %144 = vmatprep.subr.bf16.mxu0 0
    %145 = vmatpush1.bf16.msra.mxu0 %v117
    %146 = vmatprep.subr.bf16.mxu0 0
    %147 = vmatpush1.bf16.msra.mxu0 %v116
    %148 = vmatprep.subr.bf16.mxu0 0
    %149 = vmatpush2.bf16.msra.mxu0 0
    %150 = vmatprep.subr.bf16.mxu0 0
    %151 = vmatpush2.bf16.msra.mxu0 0
    %152 = vmatprep.subr.bf16.mxu0 0
    %153 = vmatpush2.bf16.msra.mxu0 0
    %154 = vmatprep.subr.bf16.mxu0 0
    %155 = vmatpush2.bf16.msra.mxu0 0
    %156 = vmatprep.subr.bf16.mxu0 0
    %157 = vmatpush2.bf16.msra.mxu0 0
    %158 = vmatprep.subr.bf16.mxu0 0
    %159 = vmatpush2.bf16.msra.mxu0 0
    %160 = vmatprep.subr.bf16.mxu0 0
    %161 = vmatpush2.bf16.msra.mxu0 0
    %162 = vmatprep.subr.bf16.mxu0 0
    %163 = vmatpush2.bf16.msra.mxu0 0
    %164 = vmatprep.mubr.bf16.mxu0 0
    %165 = vmatmul.mubr.bf16.gmra.mxu0 %v61
    %v166 = vpop.f32.mrf.mxu0
    %v167 = vadd.f32 %v82, %v166
    %v168 = vpop.f32.mrf.mxu0
    %v169 = vpop.f32.mrf.mxu0
    %v170 = vpop.f32.mrf.mxu0
    %171 = vdwg.mxu0
    %v172 = vld [vmem:[#allocation5] sm:$0xf]
    %v173 = vld [vmem:[#allocation5 + $0x4] sm:$0xf]
    %v174 = vld [vmem:[#allocation5 + $0x8] sm:$0xf]
    %v175 = vld [vmem:[#allocation5 + $0xc] sm:$0xf]
    %v176 = vld [vmem:[#allocation5 + $0x10] sm:$0xf]
    %v177 = vld [vmem:[#allocation5 + $0x14] sm:$0xf]
    %v178 = vld [vmem:[#allocation5 + $0x18] sm:$0xf]
    %v179 = vld [vmem:[#allocation5 + $0x1c] sm:$0xf]
    %v180 = vld [vmem:[#allocation5 + $0x20] sm:$0xf]
    %v181 = vld [vmem:[#allocation5 + $0x24] sm:$0xf]
    %v182 = vld [vmem:[#allocation5 + $0x28] sm:$0xf]
    %v183 = vld [vmem:[#allocation5 + $0x2c] sm:$0xf]
    %v184 = vld [vmem:[#allocation5 + $0x30] sm:$0xf]
    %v185 = vld [vmem:[#allocation5 + $0x34] sm:$0xf]
    %v186 = vld [vmem:[#allocation5 + $0x38] sm:$0xf]
    %v187 = vld [vmem:[#allocation5 + $0x3c] sm:$0xf]
    %v189 = vlaneseq
    %v190 = vshrl.u32 %v189, 7
    %v191 = vsub.s32 0, %v190
    %v192 = vrot.slane %v58, %v191
    %v210 = vunpack.c.l.b16 %v172
    %v211 = vunpack.c.l.b16 %v173
    %v212 = vunpack.c.l.b16 %v174
    %v213 = vunpack.c.l.b16 %v175
    %v214 = vunpack.c.l.b16 %v176
    %v215 = vunpack.c.l.b16 %v177
    %v216 = vunpack.c.l.b16 %v178
    %v217 = vunpack.c.l.b16 %v179
    %v218 = vunpack.c.l.b16 %v180
    %v219 = vunpack.c.l.b16 %v181
    %v220 = vunpack.c.l.b16 %v182
    %v221 = vunpack.c.l.b16 %v183
    %v222 = vunpack.c.l.b16 %v184
    %v223 = vunpack.c.l.b16 %v185
    %v224 = vunpack.c.l.b16 %v186
    %v225 = vunpack.c.l.b16 %v187
    %v226 = vpack.c.b16 %v211, %v210
    %v227 = vpack.c.b16 %v213, %v212
    %v228 = vpack.c.b16 %v215, %v214
    %v229 = vpack.c.b16 %v217, %v216
    %v230 = vpack.c.b16 %v219, %v218
    %v231 = vpack.c.b16 %v221, %v220
    %v232 = vpack.c.b16 %v223, %v222
    %v233 = vpack.c.b16 %v225, %v224
    %242 = vmatprep.subr.bf16.mxu0 0
    %243 = vmatpush1.bf16.msra.mxu0 %v233
    %244 = vmatprep.subr.bf16.mxu0 0
    %245 = vmatpush1.bf16.msra.mxu0 %v232
    %246 = vmatprep.subr.bf16.mxu0 0
    %247 = vmatpush1.bf16.msra.mxu0 %v231
    %248 = vmatprep.subr.bf16.mxu0 0
    %249 = vmatpush1.bf16.msra.mxu0 %v230
    %250 = vmatprep.subr.bf16.mxu0 0
    %251 = vmatpush1.bf16.msra.mxu0 %v229
    %252 = vmatprep.subr.bf16.mxu0 0
    %253 = vmatpush1.bf16.msra.mxu0 %v228
    %254 = vmatprep.subr.bf16.mxu0 0
    %255 = vmatpush1.bf16.msra.mxu0 %v227
    %256 = vmatprep.subr.bf16.mxu0 0
    %257 = vmatpush1.bf16.msra.mxu0 %v226
    %258 = vmatprep.subr.bf16.mxu0 0
    %259 = vmatpush2.bf16.msra.mxu0 0
    %260 = vmatprep.subr.bf16.mxu0 0
    %261 = vmatpush2.bf16.msra.mxu0 0
    %262 = vmatprep.subr.bf16.mxu0 0
    %263 = vmatpush2.bf16.msra.mxu0 0
    %264 = vmatprep.subr.bf16.mxu0 0
    %265 = vmatpush2.bf16.msra.mxu0 0
    %266 = vmatprep.subr.bf16.mxu0 0
    %267 = vmatpush2.bf16.msra.mxu0 0
    %268 = vmatprep.subr.bf16.mxu0 0
    %269 = vmatpush2.bf16.msra.mxu0 0
    %270 = vmatprep.subr.bf16.mxu0 0
    %271 = vmatpush2.bf16.msra.mxu0 0
    %272 = vmatprep.subr.bf16.mxu0 0
    %273 = vmatpush2.bf16.msra.mxu0 0
    %274 = vmatprep.mubr.bf16.mxu0 0
    %275 = vmatmul.mubr.bf16.gmra.mxu0 %v61
    %v276 = vpop.f32.mrf.mxu0
    %v277 = vadd.f32 %v192, %v276
    %v278 = vpop.f32.mrf.mxu0
    %v279 = vpop.f32.mrf.mxu0
    %v280 = vpop.f32.mrf.mxu0
    %281 = vdwg.mxu0
    %v282 = vld [vmem:[%s1] sm:$0x3]
    %v283 = vmul.f32 %v277, 0.5
    %v284 = vmul.f32 %v283, 1.442695
    %v285 = vpow.pop %v284
    %v286 = vmul.f32 %v282, %v285
    %v287 = vadd.f32 %v167, %v286
    %v288 = vpack.c.bf16 %v287, %v287
    %v289 = vld [vmem:[%s4] sm:$0xff]
    %v290 = vld [vmem:[%s4 + $0x8] sm:$0xff]
    %v291 = vld [vmem:[%s4 + $0x10] sm:$0xff]
    %v292 = vld [vmem:[%s4 + $0x18] sm:$0xff]
    %v293 = vld [vmem:[%s4 + $0x20] sm:$0xff]
    %v294 = vld [vmem:[%s4 + $0x28] sm:$0xff]
    %v295 = vld [vmem:[%s4 + $0x30] sm:$0xff]
    %v296 = vld [vmem:[%s4 + $0x38] sm:$0xff]
    %v297 = vld [vmem:[%s4 + $0x40] sm:$0xff]
    %v298 = vld [vmem:[%s4 + $0x48] sm:$0xff]
    %v299 = vld [vmem:[%s4 + $0x50] sm:$0xff]
    %v300 = vld [vmem:[%s4 + $0x58] sm:$0xff]
    %v301 = vld [vmem:[%s4 + $0x60] sm:$0xff]
    %v302 = vld [vmem:[%s4 + $0x68] sm:$0xff]
    %v303 = vld [vmem:[%s4 + $0x70] sm:$0xff]
    %v304 = vld [vmem:[%s4 + $0x78] sm:$0xff]
    %v305 = vld [vmem:[%s4 + $0x80] sm:$0xff]
    %v306 = vld [vmem:[%s4 + $0x88] sm:$0xff]
    %v307 = vld [vmem:[%s4 + $0x90] sm:$0xff]
    %v308 = vld [vmem:[%s4 + $0x98] sm:$0xff]
    %v309 = vld [vmem:[%s4 + $0xa0] sm:$0xff]
    %v310 = vld [vmem:[%s4 + $0xa8] sm:$0xff]
    %v311 = vld [vmem:[%s4 + $0xb0] sm:$0xff]
    %v312 = vld [vmem:[%s4 + $0xb8] sm:$0xff]
    %v313 = vld [vmem:[%s4 + $0xc0] sm:$0xff]
    %v314 = vld [vmem:[%s4 + $0xc8] sm:$0xff]
    %v315 = vld [vmem:[%s4 + $0xd0] sm:$0xff]
    %v316 = vld [vmem:[%s4 + $0xd8] sm:$0xff]
    %v317 = vld [vmem:[%s4 + $0xe0] sm:$0xff]
    %v318 = vld [vmem:[%s4 + $0xe8] sm:$0xff]
    %v319 = vld [vmem:[%s4 + $0xf0] sm:$0xff]
    %v320 = vld [vmem:[%s4 + $0xf8] sm:$0xff]
    %v322 = vlaneseq
    %v323 = vshrl.u32 %v322, 7
    %v324 = vsub.s32 0, %v323
    %v325 = vrot.slane %v59, %v324
    %v326 = vlaneseq
    %v327 = vshrl.u32 %v326, 7
    %v328 = vsub.s32 1, %v327
    %v329 = vrot.slane %v59, %v328
    %v330 = vlaneseq
    %v331 = vshrl.u32 %v330, 7
    %v332 = vsub.s32 2, %v331
    %v333 = vrot.slane %v59, %v332
    %v334 = vlaneseq
    %v335 = vshrl.u32 %v334, 7
    %v336 = vsub.s32 3, %v335
    %v337 = vrot.slane %v59, %v336
    %v374 = vunpack.c.l.b16 %v289
    %v375 = vunpack.c.h.b16 %v289
    %v376 = vunpack.c.l.b16 %v290
    %v377 = vunpack.c.h.b16 %v290
    %v378 = vunpack.c.l.b16 %v291
    %v379 = vunpack.c.h.b16 %v291
    %v380 = vunpack.c.l.b16 %v292
    %v381 = vunpack.c.h.b16 %v292
    %v382 = vunpack.c.l.b16 %v293
    %v383 = vunpack.c.h.b16 %v293
    %v384 = vunpack.c.l.b16 %v294
    %v385 = vunpack.c.h.b16 %v294
    %v386 = vunpack.c.l.b16 %v295
    %v387 = vunpack.c.h.b16 %v295
    %v388 = vunpack.c.l.b16 %v296
    %v389 = vunpack.c.h.b16 %v296
    %v390 = vunpack.c.l.b16 %v297
    %v391 = vunpack.c.h.b16 %v297
    %v392 = vunpack.c.l.b16 %v298
    %v393 = vunpack.c.h.b16 %v298
    %v394 = vunpack.c.l.b16 %v299
    %v395 = vunpack.c.h.b16 %v299
    %v396 = vunpack.c.l.b16 %v300
    %v397 = vunpack.c.h.b16 %v300
    %v398 = vunpack.c.l.b16 %v301
    %v399 = vunpack.c.h.b16 %v301
    %v400 = vunpack.c.l.b16 %v302
    %v401 = vunpack.c.h.b16 %v302
    %v402 = vunpack.c.l.b16 %v303
    %v403 = vunpack.c.h.b16 %v303
    %v404 = vunpack.c.l.b16 %v304
    %v405 = vunpack.c.h.b16 %v304
    %v406 = vunpack.c.l.b16 %v305
    %v407 = vunpack.c.h.b16 %v305
    %v408 = vunpack.c.l.b16 %v306
    %v409 = vunpack.c.h.b16 %v306
    %v410 = vunpack.c.l.b16 %v307
    %v411 = vunpack.c.h.b16 %v307
    %v412 = vunpack.c.l.b16 %v308
    %v413 = vunpack.c.h.b16 %v308
    %v414 = vunpack.c.l.b16 %v309
    %v415 = vunpack.c.h.b16 %v309
    %v416 = vunpack.c.l.b16 %v310
    %v417 = vunpack.c.h.b16 %v310
    %v418 = vunpack.c.l.b16 %v311
    %v419 = vunpack.c.h.b16 %v311
    %v420 = vunpack.c.l.b16 %v312
    %v421 = vunpack.c.h.b16 %v312
    %v422 = vunpack.c.l.b16 %v313
    %v423 = vunpack.c.h.b16 %v313
    %v424 = vunpack.c.l.b16 %v314
    %v425 = vunpack.c.h.b16 %v314
    %v426 = vunpack.c.l.b16 %v315
    %v427 = vunpack.c.h.b16 %v315
    %v428 = vunpack.c.l.b16 %v316
    %v429 = vunpack.c.h.b16 %v316
    %v430 = vunpack.c.l.b16 %v317
    %v431 = vunpack.c.h.b16 %v317
    %v432 = vunpack.c.l.b16 %v318
    %v433 = vunpack.c.h.b16 %v318
    %v434 = vunpack.c.l.b16 %v319
    %v435 = vunpack.c.h.b16 %v319
    %v436 = vunpack.c.l.b16 %v320
    %v437 = vunpack.c.h.b16 %v320
    %v438 = vpack.c.b16 %v378, %v374
    %v439 = vpack.c.b16 %v379, %v375
    %v440 = vpack.c.b16 %v380, %v376
    %v441 = vpack.c.b16 %v381, %v377
    %v442 = vpack.c.b16 %v386, %v382
    %v443 = vpack.c.b16 %v387, %v383
    %v444 = vpack.c.b16 %v388, %v384
    %v445 = vpack.c.b16 %v389, %v385
    %v446 = vpack.c.b16 %v394, %v390
    %v447 = vpack.c.b16 %v395, %v391
    %v448 = vpack.c.b16 %v396, %v392
    %v449 = vpack.c.b16 %v397, %v393
    %v450 = vpack.c.b16 %v402, %v398
    %v451 = vpack.c.b16 %v403, %v399
    %v452 = vpack.c.b16 %v404, %v400
    %v453 = vpack.c.b16 %v405, %v401
    %v454 = vpack.c.b16 %v410, %v406
    %v455 = vpack.c.b16 %v411, %v407
    %v456 = vpack.c.b16 %v412, %v408
    %v457 = vpack.c.b16 %v413, %v409
    %v458 = vpack.c.b16 %v418, %v414
    %v459 = vpack.c.b16 %v419, %v415
    %v460 = vpack.c.b16 %v420, %v416
    %v461 = vpack.c.b16 %v421, %v417
    %v462 = vpack.c.b16 %v426, %v422
    %v463 = vpack.c.b16 %v427, %v423
    %v464 = vpack.c.b16 %v428, %v424
    %v465 = vpack.c.b16 %v429, %v425
    %v466 = vpack.c.b16 %v434, %v430
    %v467 = vpack.c.b16 %v435, %v431
    %v468 = vpack.c.b16 %v436, %v432
    %v469 = vpack.c.b16 %v437, %v433
    %502 = vmatprep.subr.bf16.mxu0 %v467
    %503 = vmatpush1.bf16.msra.mxu0 %v466
    %504 = vmatprep.subr.bf16.mxu0 %v463
    %505 = vmatpush1.bf16.msra.mxu0 %v462
    %506 = vmatprep.subr.bf16.mxu0 %v459
    %507 = vmatpush1.bf16.msra.mxu0 %v458
    %508 = vmatprep.subr.bf16.mxu0 %v455
    %509 = vmatpush1.bf16.msra.mxu0 %v454
    %510 = vmatprep.subr.bf16.mxu0 %v451
    %511 = vmatpush1.bf16.msra.mxu0 %v450
    %512 = vmatprep.subr.bf16.mxu0 %v447
    %513 = vmatpush1.bf16.msra.mxu0 %v446
    %514 = vmatprep.subr.bf16.mxu0 %v443
    %515 = vmatpush1.bf16.msra.mxu0 %v442
    %516 = vmatprep.subr.bf16.mxu0 %v439
    %517 = vmatpush1.bf16.msra.mxu0 %v438
    %518 = vmatprep.subr.bf16.mxu0 0
    %519 = vmatpush2.bf16.msra.mxu0 0
    %520 = vmatprep.subr.bf16.mxu0 0
    %521 = vmatpush2.bf16.msra.mxu0 0
    %522 = vmatprep.subr.bf16.mxu0 0
    %523 = vmatpush2.bf16.msra.mxu0 0
    %524 = vmatprep.subr.bf16.mxu0 0
    %525 = vmatpush2.bf16.msra.mxu0 0
    %526 = vmatprep.subr.bf16.mxu0 0
    %527 = vmatpush2.bf16.msra.mxu0 0
    %528 = vmatprep.subr.bf16.mxu0 0
    %529 = vmatpush2.bf16.msra.mxu0 0
    %530 = vmatprep.subr.bf16.mxu0 0
    %531 = vmatpush2.bf16.msra.mxu0 0
    %532 = vmatprep.subr.bf16.mxu0 0
    %533 = vmatpush2.bf16.msra.mxu0 0
    %534 = vmatprep.mubr.bf16.mxu0 0
    %535 = vmatmul.mubr.bf16.gmra.mxu0 %v288
    %v536 = vpop.f32.mrf.mxu0
    %v537 = vadd.f32 %v325, %v536
    %v538 = vpop.f32.mrf.mxu0
    %v539 = vadd.f32 %v329, %v538
    %v540 = vpop.f32.mrf.mxu0
    %v541 = vpop.f32.mrf.mxu0
    %542 = vdwg.mxu0
    %543 = vmatprep.subr.bf16.mxu0 %v469
    %544 = vmatpush1.bf16.msra.mxu0 %v468
    %545 = vmatprep.subr.bf16.mxu0 %v465
    %546 = vmatpush1.bf16.msra.mxu0 %v464
    %547 = vmatprep.subr.bf16.mxu0 %v461
    %548 = vmatpush1.bf16.msra.mxu0 %v460
    %549 = vmatprep.subr.bf16.mxu0 %v457
    %550 = vmatpush1.bf16.msra.mxu0 %v456
    %551 = vmatprep.subr.bf16.mxu0 %v453
    %552 = vmatpush1.bf16.msra.mxu0 %v452
    %553 = vmatprep.subr.bf16.mxu0 %v449
    %554 = vmatpush1.bf16.msra.mxu0 %v448
    %555 = vmatprep.subr.bf16.mxu0 %v445
    %556 = vmatpush1.bf16.msra.mxu0 %v444
    %557 = vmatprep.subr.bf16.mxu0 %v441
    %558 = vmatpush1.bf16.msra.mxu0 %v440
    %559 = vmatprep.subr.bf16.mxu0 0
    %560 = vmatpush2.bf16.msra.mxu0 0
    %561 = vmatprep.subr.bf16.mxu0 0
    %562 = vmatpush2.bf16.msra.mxu0 0
    %563 = vmatprep.subr.bf16.mxu0 0
    %564 = vmatpush2.bf16.msra.mxu0 0
    %565 = vmatprep.subr.bf16.mxu0 0
    %566 = vmatpush2.bf16.msra.mxu0 0
    %567 = vmatprep.subr.bf16.mxu0 0
    %568 = vmatpush2.bf16.msra.mxu0 0
    %569 = vmatprep.subr.bf16.mxu0 0
    %570 = vmatpush2.bf16.msra.mxu0 0
    %571 = vmatprep.subr.bf16.mxu0 0
    %572 = vmatpush2.bf16.msra.mxu0 0
    %573 = vmatprep.subr.bf16.mxu0 0
    %574 = vmatpush2.bf16.msra.mxu0 0
    %575 = vmatprep.mubr.bf16.mxu0 0
    %576 = vmatmul.mubr.bf16.gmra.mxu0 %v288
    %v577 = vpop.f32.mrf.mxu0
    %v578 = vadd.f32 %v333, %v577
    %v579 = vpop.f32.mrf.mxu0
    %v580 = vadd.f32 %v337, %v579
    %v581 = vpop.f32.mrf.mxu0
    %v582 = vpop.f32.mrf.mxu0
    %583 = vdwg.mxu0
    %584 = vst [vmem:[#allocation7] sm:$0x3] %v167
    %585 = vst [vmem:[#allocation8] sm:$0x3] %v277
    %v590 = vcombine.low %v537, %v539
    %v591 = vcombine.low %v578, %v580
    %v593 = vunpack.c.l.s4 1983009808
    %v594 = vunpack.c.0.s8 %v593
    %v595 = vlaneseq
    %v596 = vshrl.u32 %v595, 7
    %v597 = vsub.s32 %v594, %v596
    %v598 = vrot.slane %v590, %v597
    %v600 = vunpack.c.l.s4 1983009808
    %v601 = vunpack.c.0.s8 %v600
    %v602 = vlaneseq
    %v603 = vshrl.u32 %v602, 7
    %v604 = vsub.s32 %v601, %v603
    %v605 = vrot.slane %v591, %v604
    %v606 = vcombine.low %v598, %v605
    %608 = vst [vmem:[%s8] sm:$0xff] %v606
    // Predicated region
    $region34: #{vae_transformer_forward.5} parent=1 // pred_check
      _
    $region35: #{vae_transformer_forward.5} parent=1 // pred_check_branch
      %610 = sbr.rel (0) target = $region37
    $region36: #{vae_transformer_forward.5} parent=1 // pred_region
      %s612 = ssub.s32 32, 32
      %613 = vsyncadd [#allocation4], %s612
      %s615 = sshll.u32 [#allocation7], 4
      %s616 = int_to_ptr.vmem [resolvable:$true] %s615
      %618 = dma.vmem_to_hbm [thread:$0]  %s616, 32, %s6, [#allocation4]
    $region37: #{vae_transformer_forward.5} parent=1 // pred_fallthru
      _
    // Predicated region
    $region38: #{vae_transformer_forward.5} parent=1 // pred_check
      _
    $region39: #{vae_transformer_forward.5} parent=1 // pred_check_branch
      %620 = sbr.rel (0) target = $region41
    $region40: #{vae_transformer_forward.5} parent=1 // pred_region
      %s622 = ssub.s32 32, 32
      %623 = vsyncadd [#allocation9], %s622
      %s625 = sshll.u32 [#allocation8], 4
      %s626 = int_to_ptr.vmem [resolvable:$true] %s625
      %628 = dma.vmem_to_hbm [thread:$0]  %s626, 32, %s7, [#allocation9]
    $region41: #{vae_transformer_forward.5} parent=1 // pred_fallthru
      _
    // Predicated region
    $region42: #{vae_transformer_forward.5} parent=1 // pred_check
      _
    $region43: #{vae_transformer_forward.5} parent=1 // pred_check_branch
      %630 = sbr.rel (0) target = $region45
    $region44: #{vae_transformer_forward.5} parent=1 // pred_region
      _
    $region45: #{vae_transformer_forward.5} parent=1 // pred_fallthru
      _
    // Predicated region
    $region46: #{vae_transformer_forward.5} parent=1 // pred_check
      _
    $region47: #{vae_transformer_forward.5} parent=1 // pred_check_branch
      %632 = sbr.rel (0) target = $region49
    $region48: #{vae_transformer_forward.5} parent=1 // pred_region
      %633 = dma.done [#allocation4], 32
    $region49: #{vae_transformer_forward.5} parent=1 // pred_fallthru
      _
    // Predicated region
    $region50: #{vae_transformer_forward.5} parent=1 // pred_check
      _
    $region51: #{vae_transformer_forward.5} parent=1 // pred_check_branch
      %635 = sbr.rel (0) target = $region53
    $region52: #{vae_transformer_forward.5} parent=1 // pred_region
      %636 = dma.done [#allocation9], 32
    $region53: #{vae_transformer_forward.5} parent=1 // pred_fallthru
      _
    // Predicated region
    $region54: #{vae_transformer_forward.5} parent=1 // pred_check
      _
    $region55: #{vae_transformer_forward.5} parent=1 // pred_check_branch
      %638 = sbr.rel (0) target = $region57
    $region56: #{vae_transformer_forward.5} parent=1 // pred_region
      _
    $region57: #{vae_transformer_forward.5} parent=1 // pred_fallthru
      _
    %639 = vsyncpa [#allocation3], 1
    %640 = vsyncpa [#allocation6], 1
    %641 = vsyncpa [#allocation4], 1
    %642 = vsyncpa [#allocation9], 1

// kernel: vae_transformer_forward.7
$region0: #{vae_transformer_forward.7}
  #allocation0 [shape = 'u32[]', space=smem, size = 0x4, offset = 0x4, fixed_abs, tag = 'smem constant byte address 0x4 - core index']
  #allocation1 [shape = 'u32[144,128]{1,0:T(1,128)}', space=vmem, size = 0x12000, scoped, tag = 'internal scratch']
  #allocation2 [shape = 'f32[16,128]{1,0:T(8,128)}', space=vmem, size = 0x2000, scoped, tag = 'scratch operand']
  %s0 = inlined_call_operand.vmem [shape: bf16[16,128], index: 0, kind: input, shape index: {}]
  %s1 = inlined_call_operand.vmem [shape: bf16[128,128], index: 1, kind: input, shape index: {}]
  %s2 = inlined_call_operand.vmem [shape: f32[1,128], index: 2, kind: input, shape index: {}]
  %s3 = inlined_call_operand.hbm [shape: f32[16,128], index: 3, kind: output, shape index: {}]
  %s4 = sld [smem:[#allocation0]]
  $region30: #{vae_transformer_forward.7} parent=0
    _
  %s6 = ssub.s32 1, %s4
  %s7 = scalar_select 0, %s6, %s4
  $region1: #{vae_transformer_forward.7} parent=0
    #allocation3 [shape = 'u8[8192]{0}', space=vmem, size = 0x2000, scoped, tag = 'output window, operand 0, single buffered']
    #allocation4 [shape = 's32[1]{0}', space=sflag, size = 0x4, scoped, tag = 'scoped memory for vae_transformer_forward.7']
    %8 = vsyncpa [#allocation4], 0
    // Predicated region
    $region2: #{vae_transformer_forward.7} parent=1 // pred_check
      _
    $region3: #{vae_transformer_forward.7} parent=1 // pred_check_branch
      %10 = sbr.rel (0) target = $region5
    $region4: #{vae_transformer_forward.7} parent=1 // pred_region
      _
    $region5: #{vae_transformer_forward.7} parent=1 // pred_fallthru
      _
    // Predicated region
    $region6: #{vae_transformer_forward.7} parent=1 // pred_check
      _
    $region7: #{vae_transformer_forward.7} parent=1 // pred_check_branch
      %12 = sbr.rel (0) target = $region9
    $region8: #{vae_transformer_forward.7} parent=1 // pred_region
      _
    $region9: #{vae_transformer_forward.7} parent=1 // pred_fallthru
      _
    // Predicated region
    $region10: #{vae_transformer_forward.7} parent=1 // pred_check
      _
    $region11: #{vae_transformer_forward.7} parent=1 // pred_check_branch
      %14 = sbr.rel (0) target = $region13
    $region12: #{vae_transformer_forward.7} parent=1 // pred_region
      _
    $region13: #{vae_transformer_forward.7} parent=1 // pred_fallthru
      _
    %p16 = scmp.eq.s32.totalorder 0, 0
    // Predicated region
    $region14: #{vae_transformer_forward.7} parent=1 // pred_check
      %p17 = pneg %p16
    $region15: #{vae_transformer_forward.7} parent=1 // pred_check_branch
      %19 = sbr.rel (%p17) target = $region17
    $region16: #{vae_transformer_forward.7} parent=1 // pred_region
      %20 = vst [vmem:[#allocation2] sm:$0xff] 0.0
      %21 = vst [vmem:[#allocation2 + $0x8] sm:$0xff] 0.0
    $region17: #{vae_transformer_forward.7} parent=1 // pred_fallthru
      _
    %v22 = vld [vmem:[#allocation2] sm:$0xff]
    %v23 = vld [vmem:[#allocation2 + $0x8] sm:$0xff]
    %v24 = vld [vmem:[%s0] sm:$0xf]
    %v25 = vld [vmem:[%s0 + $0x4] sm:$0xf]
    %v26 = vld [vmem:[%s1] sm:$0xf]
    %v27 = vld [vmem:[%s1 + $0x4] sm:$0xf]
    %v28 = vld [vmem:[%s1 + $0x8] sm:$0xf]
    %v29 = vld [vmem:[%s1 + $0xc] sm:$0xf]
    %v30 = vld [vmem:[%s1 + $0x10] sm:$0xf]
    %v31 = vld [vmem:[%s1 + $0x14] sm:$0xf]
    %v32 = vld [vmem:[%s1 + $0x18] sm:$0xf]
    %v33 = vld [vmem:[%s1 + $0x1c] sm:$0xf]
    %v34 = vld [vmem:[%s1 + $0x20] sm:$0xf]
    %v35 = vld [vmem:[%s1 + $0x24] sm:$0xf]
    %v36 = vld [vmem:[%s1 + $0x28] sm:$0xf]
    %v37 = vld [vmem:[%s1 + $0x2c] sm:$0xf]
    %v38 = vld [vmem:[%s1 + $0x30] sm:$0xf]
    %v39 = vld [vmem:[%s1 + $0x34] sm:$0xf]
    %v40 = vld [vmem:[%s1 + $0x38] sm:$0xf]
    %v41 = vld [vmem:[%s1 + $0x3c] sm:$0xf]
    %v44 = vunpack.c.l.b16 %v24
    %v45 = vunpack.c.l.b16 %v25
    %v46 = vpack.c.b16 %v45, %v44
    %v64 = vunpack.c.l.b16 %v26
    %v65 = vunpack.c.l.b16 %v27
    %v66 = vunpack.c.l.b16 %v28
    %v67 = vunpack.c.l.b16 %v29
    %v68 = vunpack.c.l.b16 %v30
    %v69 = vunpack.c.l.b16 %v31
    %v70 = vunpack.c.l.b16 %v32
    %v71 = vunpack.c.l.b16 %v33
    %v72 = vunpack.c.l.b16 %v34
    %v73 = vunpack.c.l.b16 %v35
    %v74 = vunpack.c.l.b16 %v36
    %v75 = vunpack.c.l.b16 %v37
    %v76 = vunpack.c.l.b16 %v38
    %v77 = vunpack.c.l.b16 %v39
    %v78 = vunpack.c.l.b16 %v40
    %v79 = vunpack.c.l.b16 %v41
    %v80 = vpack.c.b16 %v65, %v64
    %v81 = vpack.c.b16 %v67, %v66
    %v82 = vpack.c.b16 %v69, %v68
    %v83 = vpack.c.b16 %v71, %v70
    %v84 = vpack.c.b16 %v73, %v72
    %v85 = vpack.c.b16 %v75, %v74
    %v86 = vpack.c.b16 %v77, %v76
    %v87 = vpack.c.b16 %v79, %v78
    %96 = vmatprep.subr.bf16.mxu0 0
    %97 = vmatpush1.bf16.msra.mxu0 %v87
    %98 = vmatprep.subr.bf16.mxu0 0
    %99 = vmatpush1.bf16.msra.mxu0 %v86
    %100 = vmatprep.subr.bf16.mxu0 0
    %101 = vmatpush1.bf16.msra.mxu0 %v85
    %102 = vmatprep.subr.bf16.mxu0 0
    %103 = vmatpush1.bf16.msra.mxu0 %v84
    %104 = vmatprep.subr.bf16.mxu0 0
    %105 = vmatpush1.bf16.msra.mxu0 %v83
    %106 = vmatprep.subr.bf16.mxu0 0
    %107 = vmatpush1.bf16.msra.mxu0 %v82
    %108 = vmatprep.subr.bf16.mxu0 0
    %109 = vmatpush1.bf16.msra.mxu0 %v81
    %110 = vmatprep.subr.bf16.mxu0 0
    %111 = vmatpush1.bf16.msra.mxu0 %v80
    %112 = vmatprep.subr.bf16.mxu0 0
    %113 = vmatpush2.bf16.msra.mxu0 0
    %114 = vmatprep.subr.bf16.mxu0 0
    %115 = vmatpush2.bf16.msra.mxu0 0
    %116 = vmatprep.subr.bf16.mxu0 0
    %117 = vmatpush2.bf16.msra.mxu0 0
    %118 = vmatprep.subr.bf16.mxu0 0
    %119 = vmatpush2.bf16.msra.mxu0 0
    %120 = vmatprep.subr.bf16.mxu0 0
    %121 = vmatpush2.bf16.msra.mxu0 0
    %122 = vmatprep.subr.bf16.mxu0 0
    %123 = vmatpush2.bf16.msra.mxu0 0
    %124 = vmatprep.subr.bf16.mxu0 0
    %125 = vmatpush2.bf16.msra.mxu0 0
    %126 = vmatprep.subr.bf16.mxu0 0
    %127 = vmatpush2.bf16.msra.mxu0 0
    %128 = vmatprep.mubr.bf16.mxu0 0
    %129 = vmatmul.mubr.bf16.gmra.mxu0 %v46
    %v130 = vpop.f32.mrf.mxu0
    %v131 = vadd.f32 0.0, %v130
    %v132 = vpop.f32.mrf.mxu0
    %v133 = vpop.f32.mrf.mxu0
    %v134 = vadd.f32 0.0, %v133
    %v135 = vpop.f32.mrf.mxu0
    %136 = vdwg.mxu0
    %v137 = vadd.f32 %v22, %v131
    %v138 = vadd.f32 %v23, %v134
    %139 = vst [vmem:[#allocation2] sm:$0xff] %v137
    %140 = vst [vmem:[#allocation2 + $0x8] sm:$0xff] %v138
    // Predicated region
    $region18: #{vae_transformer_forward.7} parent=1 // pred_check
      %p141 = pneg %p16
    $region19: #{vae_transformer_forward.7} parent=1 // pred_check_branch
      %143 = sbr.rel (%p141) target = $region21
    $region20: #{vae_transformer_forward.7} parent=1 // pred_region
      %v144 = vld [vmem:[#allocation2] sm:$0xff]
      %v145 = vld [vmem:[#allocation2 + $0x8] sm:$0xff]
      %v146 = vld [vmem:[%s2] sm:$0x1]
      %v148 = vlaneseq
      %v149 = vshrl.u32 %v148, 7
      %v150 = vsub.s32 0, %v149
      %v151 = vrot.slane %v146, %v150
      %v153 = vadd.f32 %v144, %v151
      %v154 = vadd.f32 %v145, %v151
      %155 = vst [vmem:[#allocation3] sm:$0xff] %v153
      %156 = vst [vmem:[#allocation3 + $0x8] sm:$0xff] %v154
    $region21: #{vae_transformer_forward.7} parent=1 // pred_fallthru
      _
    // Predicated region
    $region22: #{vae_transformer_forward.7} parent=1 // pred_check
      _
    $region23: #{vae_transformer_forward.7} parent=1 // pred_check_branch
      %158 = sbr.rel (0) target = $region25
    $region24: #{vae_transformer_forward.7} parent=1 // pred_region
      %s160 = ssub.s32 256, 256
      %161 = vsyncadd [#allocation4], %s160
      %s162 = sshll.u32 [#allocation3], 4
      %s163 = int_to_ptr.vmem [resolvable:$true] %s162
      %168 = dma.vmem_to_hbm [thread:$0]  %s163, 256, %s3, [#allocation4], 128, 128, 8
    $region25: #{vae_transformer_forward.7} parent=1 // pred_fallthru
      _
    // Predicated region
    $region26: #{vae_transformer_forward.7} parent=1 // pred_check
      _
    $region27: #{vae_transformer_forward.7} parent=1 // pred_check_branch
      %170 = sbr.rel (0) target = $region29
    $region28: #{vae_transformer_forward.7} parent=1 // pred_region
      %171 = dma.done [#allocation4], 256
    $region29: #{vae_transformer_forward.7} parent=1 // pred_fallthru
      _
    %172 = vsyncpa [#allocation4], 1

// kernel: vae_transformer_forward.4
$region0: #{vae_transformer_forward.4}
  #allocation0 [shape = 'u32[]', space=smem, size = 0x4, offset = 0x4, fixed_abs, tag = 'smem constant byte address 0x4 - core index']
  #allocation1 [shape = 'u32[144,128]{1,0:T(1,128)}', space=vmem, size = 0x12000, scoped, tag = 'internal scratch']
  #allocation2 [shape = 'f32[16,128]{1,0:T(8,128)}', space=vmem, size = 0x2000, scoped, tag = 'scratch operand']
  %s0 = inlined_call_operand.vmem [shape: f32[2,8,128], index: 0, kind: input, shape index: {}]
  %s1 = inlined_call_operand.vmem [shape: f32[2,1,8], index: 1, kind: input, shape index: {}]
  %s2 = inlined_call_operand.vmem [shape: bf16[128,384], index: 2, kind: input, shape index: {}]
  %s3 = inlined_call_operand.vmem [shape: bf16[128,128], index: 3, kind: input, shape index: {}]
  %s4 = inlined_call_operand.vmem [shape: bf16[128,128], index: 4, kind: input, shape index: {}]
  %s5 = inlined_call_operand.hbm [shape: bf16[128,128], index: 5, kind: input, shape index: {}]
  %s6 = inlined_call_operand.vmem [shape: f32[1,1280], index: 6, kind: input, shape index: {}]
  %s7 = inlined_call_operand.vmem [shape: f32[2,8,128], index: 7, kind: output, shape index: {}]
  %s8 = sld [smem:[#allocation0]]
  $region42: #{vae_transformer_forward.4} parent=0
    _
  %s10 = ssub.s32 1, %s8
  %s11 = scalar_select 0, %s10, %s8
  $region1: #{vae_transformer_forward.4} parent=0
    #allocation3 [shape = 'u8[32768]{0}', space=vmem, size = 0x8000, scoped, tag = 'input window, operand 5, single buffered']
    #allocation4 [shape = 's32[1]{0}', space=sflag, size = 0x4, scoped, tag = 'scoped memory for vae_transformer_forward.4']
    %12 = vsyncpa [#allocation4], 0
    // Predicated region
    $region2: #{vae_transformer_forward.4} parent=1 // pred_check
      _
    $region3: #{vae_transformer_forward.4} parent=1 // pred_check_branch
      %14 = sbr.rel (0) target = $region5
    $region4: #{vae_transformer_forward.4} parent=1 // pred_region
      _
    $region5: #{vae_transformer_forward.4} parent=1 // pred_fallthru
      _
    // Predicated region
    $region6: #{vae_transformer_forward.4} parent=1 // pred_check
      _
    $region7: #{vae_transformer_forward.4} parent=1 // pred_check_branch
      %16 = sbr.rel (0) target = $region9
    $region8: #{vae_transformer_forward.4} parent=1 // pred_region
      _
    $region9: #{vae_transformer_forward.4} parent=1 // pred_fallthru
      _
    // Predicated region
    $region10: #{vae_transformer_forward.4} parent=1 // pred_check
      _
    $region11: #{vae_transformer_forward.4} parent=1 // pred_check_branch
      %18 = sbr.rel (0) target = $region13
    $region12: #{vae_transformer_forward.4} parent=1 // pred_region
      _
    $region13: #{vae_transformer_forward.4} parent=1 // pred_fallthru
      _
    // Predicated region
    $region14: #{vae_transformer_forward.4} parent=1 // pred_check
      _
    $region15: #{vae_transformer_forward.4} parent=1 // pred_check_branch
      %20 = sbr.rel (0) target = $region17
    $region16: #{vae_transformer_forward.4} parent=1 // pred_region
      _
    $region17: #{vae_transformer_forward.4} parent=1 // pred_fallthru
      _
    // Predicated region
    $region18: #{vae_transformer_forward.4} parent=1 // pred_check
      _
    $region19: #{vae_transformer_forward.4} parent=1 // pred_check_branch
      %22 = sbr.rel (0) target = $region21
    $region20: #{vae_transformer_forward.4} parent=1 // pred_region
      _
    $region21: #{vae_transformer_forward.4} parent=1 // pred_fallthru
      _
    // Predicated region
    $region22: #{vae_transformer_forward.4} parent=1 // pred_check
      _
    $region23: #{vae_transformer_forward.4} parent=1 // pred_check_branch
      %24 = sbr.rel (0) target = $region25
    $region24: #{vae_transformer_forward.4} parent=1 // pred_region
      %s26 = ssub.s32 1024, 1024
      %27 = vsyncadd [#allocation4], %s26
      %s28 = sshll.u32 [#allocation3], 4
      %s29 = int_to_ptr.vmem [resolvable:$true] %s28
      %34 = dma.hbm_to_vmem [thread:$0]  %s5, 1024, %s29, [#allocation4], 64, 64, 4
    $region25: #{vae_transformer_forward.4} parent=1 // pred_fallthru
      _
    // Predicated region
    $region26: #{vae_transformer_forward.4} parent=1 // pred_check
      _
    $region27: #{vae_transformer_forward.4} parent=1 // pred_check_branch
      %36 = sbr.rel (0) target = $region29
    $region28: #{vae_transformer_forward.4} parent=1 // pred_region
      _
    $region29: #{vae_transformer_forward.4} parent=1 // pred_fallthru
      _
    // Predicated region
    $region30: #{vae_transformer_forward.4} parent=1 // pred_check
      _
    $region31: #{vae_transformer_forward.4} parent=1 // pred_check_branch
      %38 = sbr.rel (0) target = $region33
    $region32: #{vae_transformer_forward.4} parent=1 // pred_region
      %39 = dma.done [#allocation4], 1024
    $region33: #{vae_transformer_forward.4} parent=1 // pred_fallthru
      _
    %v41 = vlaneseq
    %v42 = vand.u32 %v41, 127
    %vm43 = vcmp.lt.s32.totalorder %v42, 32
    %v44 = vsel %vm43, 1, 0
    %v45 = vcvt.s32.f32 %v44
    %v46 = vld [vmem:[%s6] sm:$0x7]
    %v47 = vld [vmem:[%s6 + $0x3] sm:$0x1]
    %v48 = vld [vmem:[%s6 + $0x4] sm:$0x1]
    %v49 = vld [vmem:[%s6 + $0x5] sm:$0x1]
    %v50 = vld [vmem:[%s6 + $0x6] sm:$0x1]
    %v51 = vld [vmem:[%s6 + $0x7] sm:$0x1]
    %v52 = vld [vmem:[%s6 + $0x8] sm:$0x1]
    %v53 = vld [vmem:[%s6 + $0x9] sm:$0x1]
    %v54 = vld [vmem:[%s0] sm:$0xff]
    %v55 = vld [vmem:[%s0 + $0x8] sm:$0xff]
    %v56 = vld [vmem:[%s2] sm:$0xff]
    %v57 = vld [vmem:[%s2 + $0x8] sm:$0xf]
    %v58 = vld [vmem:[%s2 + $0xc] sm:$0xff]
    %v59 = vld [vmem:[%s2 + $0x14] sm:$0xf]
    %v60 = vld [vmem:[%s2 + $0x18] sm:$0xff]
    %v61 = vld [vmem:[%s2 + $0x20] sm:$0xf]
    %v62 = vld [vmem:[%s2 + $0x24] sm:$0xff]
    %v63 = vld [vmem:[%s2 + $0x2c] sm:$0xf]
    %v64 = vld [vmem:[%s2 + $0x30] sm:$0xff]
    %v65 = vld [vmem:[%s2 + $0x38] sm:$0xf]
    %v66 = vld [vmem:[%s2 + $0x3c] sm:$0xff]
    %v67 = vld [vmem:[%s2 + $0x44] sm:$0xf]
    %v68 = vld [vmem:[%s2 + $0x48] sm:$0xff]
    %v69 = vld [vmem:[%s2 + $0x50] sm:$0xf]
    %v70 = vld [vmem:[%s2 + $0x54] sm:$0xff]
    %v71 = vld [vmem:[%s2 + $0x5c] sm:$0xf]
    %v72 = vld [vmem:[%s2 + $0x60] sm:$0xff]
    %v73 = vld [vmem:[%s2 + $0x68] sm:$0xf]
    %v74 = vld [vmem:[%s2 + $0x6c] sm:$0xff]
    %v75 = vld [vmem:[%s2 + $0x74] sm:$0xf]
    %v76 = vld [vmem:[%s2 + $0x78] sm:$0xff]
    %v77 = vld [vmem:[%s2 + $0x80] sm:$0xf]
    %v78 = vld [vmem:[%s2 + $0x84] sm:$0xff]
    %v79 = vld [vmem:[%s2 + $0x8c] sm:$0xf]
    %v80 = vld [vmem:[%s2 + $0x90] sm:$0xff]
    %v81 = vld [vmem:[%s2 + $0x98] sm:$0xf]
    %v82 = vld [vmem:[%s2 + $0x9c] sm:$0xff]
    %v83 = vld [vmem:[%s2 + $0xa4] sm:$0xf]
    %v84 = vld [vmem:[%s2 + $0xa8] sm:$0xff]
    %v85 = vld [vmem:[%s2 + $0xb0] sm:$0xf]
    %v86 = vld [vmem:[%s2 + $0xb4] sm:$0xff]
    %v87 = vld [vmem:[%s2 + $0xbc] sm:$0xf]
    %v88 = vpack.c.bf16 %v55, %v54
    %v90 = vlaneseq
    %v91 = vshrl.u32 %v90, 7
    %v92 = vsub.s32 0, %v91
    %v93 = vrot.slane %v46, %v92
    %v94 = vlaneseq
    %v95 = vshrl.u32 %v94, 7
    %v96 = vsub.s32 1, %v95
    %v97 = vrot.slane %v46, %v96
    %v98 = vlaneseq
    %v99 = vshrl.u32 %v98, 7
    %v100 = vsub.s32 2, %v99
    %v101 = vrot.slane %v46, %v100
    %v137 = vunpack.c.l.b16 %v56
    %v138 = vunpack.c.h.b16 %v56
    %v139 = vunpack.c.l.b16 %v57
    %v140 = vunpack.c.l.b16 %v58
    %v141 = vunpack.c.h.b16 %v58
    %v142 = vunpack.c.l.b16 %v59
    %v143 = vunpack.c.l.b16 %v60
    %v144 = vunpack.c.h.b16 %v60
    %v145 = vunpack.c.l.b16 %v61
    %v146 = vunpack.c.l.b16 %v62
    %v147 = vunpack.c.h.b16 %v62
    %v148 = vunpack.c.l.b16 %v63
    %v149 = vunpack.c.l.b16 %v64
    %v150 = vunpack.c.h.b16 %v64
    %v151 = vunpack.c.l.b16 %v65
    %v152 = vunpack.c.l.b16 %v66
    %v153 = vunpack.c.h.b16 %v66
    %v154 = vunpack.c.l.b16 %v67
    %v155 = vunpack.c.l.b16 %v68
    %v156 = vunpack.c.h.b16 %v68
    %v157 = vunpack.c.l.b16 %v69
    %v158 = vunpack.c.l.b16 %v70
    %v159 = vunpack.c.h.b16 %v70
    %v160 = vunpack.c.l.b16 %v71
    %v161 = vunpack.c.l.b16 %v72
    %v162 = vunpack.c.h.b16 %v72
    %v163 = vunpack.c.l.b16 %v73
    %v164 = vunpack.c.l.b16 %v74
    %v165 = vunpack.c.h.b16 %v74
    %v166 = vunpack.c.l.b16 %v75
    %v167 = vunpack.c.l.b16 %v76
    %v168 = vunpack.c.h.b16 %v76
    %v169 = vunpack.c.l.b16 %v77
    %v170 = vunpack.c.l.b16 %v78
    %v171 = vunpack.c.h.b16 %v78
    %v172 = vunpack.c.l.b16 %v79
    %v173 = vunpack.c.l.b16 %v80
    %v174 = vunpack.c.h.b16 %v80
    %v175 = vunpack.c.l.b16 %v81
    %v176 = vunpack.c.l.b16 %v82
    %v177 = vunpack.c.h.b16 %v82
    %v178 = vunpack.c.l.b16 %v83
    %v179 = vunpack.c.l.b16 %v84
    %v180 = vunpack.c.h.b16 %v84
    %v181 = vunpack.c.l.b16 %v85
    %v182 = vunpack.c.l.b16 %v86
    %v183 = vunpack.c.h.b16 %v86
    %v184 = vunpack.c.l.b16 %v87
    %v185 = vpack.c.b16 %v140, %v137
    %v186 = vpack.c.b16 %v141, %v138
    %v187 = vpack.c.b16 %v142, %v139
    %v188 = vpack.c.b16 %v146, %v143
    %v189 = vpack.c.b16 %v147, %v144
    %v190 = vpack.c.b16 %v148, %v145
    %v191 = vpack.c.b16 %v152, %v149
    %v192 = vpack.c.b16 %v153, %v150
    %v193 = vpack.c.b16 %v154, %v151
    %v194 = vpack.c.b16 %v158, %v155
    %v195 = vpack.c.b16 %v159, %v156
    %v196 = vpack.c.b16 %v160, %v157
    %v197 = vpack.c.b16 %v164, %v161
    %v198 = vpack.c.b16 %v165, %v162
    %v199 = vpack.c.b16 %v166, %v163
    %v200 = vpack.c.b16 %v170, %v167
    %v201 = vpack.c.b16 %v171, %v168
    %v202 = vpack.c.b16 %v172, %v169
    %v203 = vpack.c.b16 %v176, %v173
    %v204 = vpack.c.b16 %v177, %v174
    %v205 = vpack.c.b16 %v178, %v175
    %v206 = vpack.c.b16 %v182, %v179
    %v207 = vpack.c.b16 %v183, %v180
    %v208 = vpack.c.b16 %v184, %v181
    %233 = vmatprep.subr.bf16.mxu0 %v207
    %234 = vmatpush1.bf16.msra.mxu0 %v206
    %235 = vmatprep.subr.bf16.mxu0 %v204
    %236 = vmatpush1.bf16.msra.mxu0 %v203
    %237 = vmatprep.subr.bf16.mxu0 %v201
    %238 = vmatpush1.bf16.msra.mxu0 %v200
    %239 = vmatprep.subr.bf16.mxu0 %v198
    %240 = vmatpush1.bf16.msra.mxu0 %v197
    %241 = vmatprep.subr.bf16.mxu0 %v195
    %242 = vmatpush1.bf16.msra.mxu0 %v194
    %243 = vmatprep.subr.bf16.mxu0 %v192
    %244 = vmatpush1.bf16.msra.mxu0 %v191
    %245 = vmatprep.subr.bf16.mxu0 %v189
    %246 = vmatpush1.bf16.msra.mxu0 %v188
    %247 = vmatprep.subr.bf16.mxu0 %v186
    %248 = vmatpush1.bf16.msra.mxu0 %v185
    %249 = vmatprep.subr.bf16.mxu0 0
    %250 = vmatpush2.bf16.msra.mxu0 0
    %251 = vmatprep.subr.bf16.mxu0 0
    %252 = vmatpush2.bf16.msra.mxu0 0
    %253 = vmatprep.subr.bf16.mxu0 0
    %254 = vmatpush2.bf16.msra.mxu0 0
    %255 = vmatprep.subr.bf16.mxu0 0
    %256 = vmatpush2.bf16.msra.mxu0 0
    %257 = vmatprep.subr.bf16.mxu0 0
    %258 = vmatpush2.bf16.msra.mxu0 0
    %259 = vmatprep.subr.bf16.mxu0 0
    %260 = vmatpush2.bf16.msra.mxu0 0
    %261 = vmatprep.subr.bf16.mxu0 0
    %262 = vmatpush2.bf16.msra.mxu0 0
    %263 = vmatprep.subr.bf16.mxu0 0
    %264 = vmatpush2.bf16.msra.mxu0 0
    %265 = vmatprep.mubr.bf16.mxu0 0
    %266 = vmatmul.mubr.bf16.gmra.mxu0 %v88
    %v267 = vpop.f32.mrf.mxu0
    %v268 = vadd.f32 %v93, %v267
    %v269 = vpop.f32.mrf.mxu0
    %v270 = vadd.f32 %v97, %v269
    %v271 = vpop.f32.mrf.mxu0
    %v272 = vadd.f32 %v93, %v271
    %v273 = vpop.f32.mrf.mxu0
    %v274 = vadd.f32 %v97, %v273
    %275 = vdwg.mxu0
    %276 = vmatprep.subr.bf16.mxu0 0
    %277 = vmatpush1.bf16.msra.mxu0 %v208
    %278 = vmatprep.subr.bf16.mxu0 0
    %279 = vmatpush1.bf16.msra.mxu0 %v205
    %280 = vmatprep.subr.bf16.mxu0 0
    %281 = vmatpush1.bf16.msra.mxu0 %v202
    %282 = vmatprep.subr.bf16.mxu0 0
    %283 = vmatpush1.bf16.msra.mxu0 %v199
    %284 = vmatprep.subr.bf16.mxu0 0
    %285 = vmatpush1.bf16.msra.mxu0 %v196
    %286 = vmatprep.subr.bf16.mxu0 0
    %287 = vmatpush1.bf16.msra.mxu0 %v193
    %288 = vmatprep.subr.bf16.mxu0 0
    %289 = vmatpush1.bf16.msra.mxu0 %v190
    %290 = vmatprep.subr.bf16.mxu0 0
    %291 = vmatpush1.bf16.msra.mxu0 %v187
    %292 = vmatprep.subr.bf16.mxu0 0
    %293 = vmatpush2.bf16.msra.mxu0 0
    %294 = vmatprep.subr.bf16.mxu0 0
    %295 = vmatpush2.bf16.msra.mxu0 0
    %296 = vmatprep.subr.bf16.mxu0 0
    %297 = vmatpush2.bf16.msra.mxu0 0
    %298 = vmatprep.subr.bf16.mxu0 0
    %299 = vmatpush2.bf16.msra.mxu0 0
    %300 = vmatprep.subr.bf16.mxu0 0
    %301 = vmatpush2.bf16.msra.mxu0 0
    %302 = vmatprep.subr.bf16.mxu0 0
    %303 = vmatpush2.bf16.msra.mxu0 0
    %304 = vmatprep.subr.bf16.mxu0 0
    %305 = vmatpush2.bf16.msra.mxu0 0
    %306 = vmatprep.subr.bf16.mxu0 0
    %307 = vmatpush2.bf16.msra.mxu0 0
    %308 = vmatprep.mubr.bf16.mxu0 0
    %309 = vmatmul.mubr.bf16.gmra.mxu0 %v88
    %v310 = vpop.f32.mrf.mxu0
    %v311 = vadd.f32 %v101, %v310
    %v312 = vpop.f32.mrf.mxu0
    %v313 = vpop.f32.mrf.mxu0
    %v314 = vadd.f32 %v101, %v313
    %v315 = vpop.f32.mrf.mxu0
    %316 = vdwg.mxu0
    %v317 = vld [vmem:[%s1] sm:$0x1]
    %v318 = vmul.f32 %v268, 0.35355338
    %v319 = vpack.c.bf16 %v318, %v318
    %v320 = vpack.c.bf16 %v270, %v270
    %v321 = vpack.c.bf16 %v311, %v311
    %v323 = vlaneseq
    %v324 = vshrl.u32 %v323, 7
    %v325 = vsub.s32 0, %v324
    %v326 = vrot.slane %v317, %v325
    %vm328 = vcmask 261120
    %v330 = vsel %vm328, %v319, 0
    %v333 = vsel %vm328, %v320, 0
    %335 = vmatprep.subr.bf16.mxu0 0
    %336 = vmatpush1.bf16.xpose.msra.mxu0 0
    %337 = vmatprep.subr.bf16.mxu0 0
    %338 = vmatpush1.bf16.xpose.msra.mxu0 0
    %339 = vmatprep.subr.bf16.mxu0 0
    %340 = vmatpush1.bf16.xpose.msra.mxu0 0
    %341 = vmatprep.subr.bf16.mxu0 0
    %342 = vmatpush1.bf16.xpose.msra.mxu0 0
    %343 = vmatprep.subr.bf16.mxu0 0
    %344 = vmatpush1.bf16.xpose.msra.mxu0 0
    %345 = vmatprep.subr.bf16.mxu0 0
    %346 = vmatpush1.bf16.xpose.msra.mxu0 0
    %347 = vmatprep.subr.bf16.mxu0 0
    %348 = vmatpush1.bf16.xpose.msra.mxu0 0
    %349 = vmatprep.subr.bf16.mxu0 0
    %350 = vmatpush1.bf16.xpose.msra.mxu0 %v333
    %351 = vmatprep.subr.bf16.mxu0 0
    %352 = vmatpush2.bf16.xpose.msra.mxu0 0
    %353 = vmatprep.subr.bf16.mxu0 0
    %354 = vmatpush2.bf16.xpose.msra.mxu0 0
    %355 = vmatprep.subr.bf16.mxu0 0
    %356 = vmatpush2.bf16.xpose.msra.mxu0 0
    %357 = vmatprep.subr.bf16.mxu0 0
    %358 = vmatpush2.bf16.xpose.msra.mxu0 0
    %359 = vmatprep.subr.bf16.mxu0 0
    %360 = vmatpush2.bf16.xpose.msra.mxu0 0
    %361 = vmatprep.subr.bf16.mxu0 0
    %362 = vmatpush2.bf16.xpose.msra.mxu0 0
    %363 = vmatprep.subr.bf16.mxu0 0
    %364 = vmatpush2.bf16.xpose.msra.mxu0 0
    %365 = vmatprep.subr.bf16.mxu0 0
    %366 = vmatpush2.bf16.xpose.msra.mxu0 0
    %367 = vmatprep.mubr.bf16.mxu0 0
    %368 = vmatmul.mubr.bf16.gmra.mxu0 %v330
    %v369 = vpop.f32.mrf.mxu0
    %v370 = vadd.f32 %v326, %v369
    %v371 = vpop.f32.mrf.mxu0
    %v372 = vpop.f32.mrf.mxu0
    %v373 = vpop.f32.mrf.mxu0
    %374 = vdwg.mxu0
    %vm375 = vcmask 64512
    %v376 = vsel %vm375, %v370, -inf
    %377 = vmax.xlane.f32.xlu0 %v376
    %v378 = vpop.xlane.xlu0 %377
    %v379 = vsub.f32 %v370, %v378
    %v380 = vmul.f32 %v379, 1.442695
    %v381 = vpow.pop %v380
    %v382 = vsel %vm375, %v381, 0.0
    %383 = vadd.xlane.f32.xlu0 %v382
    %v384 = vpop.xlane.xlu0 %383
    %v385 = vrcp.pop %v384
    %v386 = vmul.f32 %v381, %v385
    %v387 = vpack.c.bf16 %v386, %v386
    %v389 = vsel %vm375, %v387, 0
    %vm391 = vcmask 1043456
    %v393 = vsel %vm391, %v321, 0
    %395 = vmatprep.subr.bf16.mxu0 0
    %396 = vmatpush1.bf16.msra.mxu0 0
    %397 = vmatprep.subr.bf16.mxu0 0
    %398 = vmatpush1.bf16.msra.mxu0 0
    %399 = vmatprep.subr.bf16.mxu0 0
    %400 = vmatpush1.bf16.msra.mxu0 0
    %401 = vmatprep.subr.bf16.mxu0 0
    %402 = vmatpush1.bf16.msra.mxu0 0
    %403 = vmatprep.subr.bf16.mxu0 0
    %404 = vmatpush1.bf16.msra.mxu0 0
    %405 = vmatprep.subr.bf16.mxu0 0
    %406 = vmatpush1.bf16.msra.mxu0 0
    %407 = vmatprep.subr.bf16.mxu0 0
    %408 = vmatpush1.bf16.msra.mxu0 0
    %409 = vmatprep.subr.bf16.mxu0 0
    %410 = vmatpush1.bf16.msra.mxu0 %v393
    %411 = vmatprep.subr.bf16.mxu0 0
    %412 = vmatpush2.bf16.msra.mxu0 0
    %413 = vmatprep.subr.bf16.mxu0 0
    %414 = vmatpush2.bf16.msra.mxu0 0
    %415 = vmatprep.subr.bf16.mxu0 0
    %416 = vmatpush2.bf16.msra.mxu0 0
    %417 = vmatprep.subr.bf16.mxu0 0
    %418 = vmatpush2.bf16.msra.mxu0 0
    %419 = vmatprep.subr.bf16.mxu0 0
    %420 = vmatpush2.bf16.msra.mxu0 0
    %421 = vmatprep.subr.bf16.mxu0 0
    %422 = vmatpush2.bf16.msra.mxu0 0
    %423 = vmatprep.subr.bf16.mxu0 0
    %424 = vmatpush2.bf16.msra.mxu0 0
    %425 = vmatprep.subr.bf16.mxu0 0
    %426 = vmatpush2.bf16.msra.mxu0 0
    %427 = vmatprep.mubr.bf16.mxu0 0
    %428 = vmatmul.mubr.bf16.gmra.mxu0 %v389
    %v429 = vpop.f32.mrf.mxu0
    %v430 = vadd.f32 0.0, %v429
    %v431 = vpop.f32.mrf.mxu0
    %v432 = vpop.f32.mrf.mxu0
    %v433 = vpop.f32.mrf.mxu0
    %434 = vdwg.mxu0
    %435 = vst.msk [vmem:[#allocation2] sm:$0xff] %vm328, %v430
    %437 = vrot.lane.b32.xlu0 %v319, 96
    %v438 = vpop.permute.xlu0 %437
    %440 = vrot.lane.b32.xlu0 %v320, 96
    %v441 = vpop.permute.xlu0 %440
    %v443 = vsel %vm328, %v438, 0
    %v446 = vsel %vm328, %v441, 0
    %448 = vmatprep.subr.bf16.mxu0 0
    %449 = vmatpush1.bf16.xpose.msra.mxu0 0
    %450 = vmatprep.subr.bf16.mxu0 0
    %451 = vmatpush1.bf16.xpose.msra.mxu0 0
    %452 = vmatprep.subr.bf16.mxu0 0
    %453 = vmatpush1.bf16.xpose.msra.mxu0 0
    %454 = vmatprep.subr.bf16.mxu0 0
    %455 = vmatpush1.bf16.xpose.msra.mxu0 0
    %456 = vmatprep.subr.bf16.mxu0 0
    %457 = vmatpush1.bf16.xpose.msra.mxu0 0
    %458 = vmatprep.subr.bf16.mxu0 0
    %459 = vmatpush1.bf16.xpose.msra.mxu0 0
    %460 = vmatprep.subr.bf16.mxu0 0
    %461 = vmatpush1.bf16.xpose.msra.mxu0 0
    %462 = vmatprep.subr.bf16.mxu0 0
    %463 = vmatpush1.bf16.xpose.msra.mxu0 %v446
    %464 = vmatprep.subr.bf16.mxu0 0
    %465 = vmatpush2.bf16.xpose.msra.mxu0 0
    %466 = vmatprep.subr.bf16.mxu0 0
    %467 = vmatpush2.bf16.xpose.msra.mxu0 0
    %468 = vmatprep.subr.bf16.mxu0 0
    %469 = vmatpush2.bf16.xpose.msra.mxu0 0
    %470 = vmatprep.subr.bf16.mxu0 0
    %471 = vmatpush2.bf16.xpose.msra.mxu0 0
    %472 = vmatprep.subr.bf16.mxu0 0
    %473 = vmatpush2.bf16.xpose.msra.mxu0 0
    %474 = vmatprep.subr.bf16.mxu0 0
    %475 = vmatpush2.bf16.xpose.msra.mxu0 0
    %476 = vmatprep.subr.bf16.mxu0 0
    %477 = vmatpush2.bf16.xpose.msra.mxu0 0
    %478 = vmatprep.subr.bf16.mxu0 0
    %479 = vmatpush2.bf16.xpose.msra.mxu0 0
    %480 = vmatprep.mubr.bf16.mxu0 0
    %481 = vmatmul.mubr.bf16.gmra.mxu0 %v443
    %v482 = vpop.f32.mrf.mxu0
    %v483 = vadd.f32 %v326, %v482
    %v484 = vpop.f32.mrf.mxu0
    %v485 = vpop.f32.mrf.mxu0
    %v486 = vpop.f32.mrf.mxu0
    %487 = vdwg.mxu0
    %v488 = vsel %vm375, %v483, -inf
    %489 = vmax.xlane.f32.xlu0 %v488
    %v490 = vpop.xlane.xlu0 %489
    %v491 = vsub.f32 %v483, %v490
    %v492 = vmul.f32 %v491, 1.442695
    %v493 = vpow.pop %v492
    %v494 = vsel %vm375, %v493, 0.0
    %495 = vadd.xlane.f32.xlu0 %v494
    %v496 = vpop.xlane.xlu0 %495
    %v497 = vrcp.pop %v496
    %v498 = vmul.f32 %v493, %v497
    %v499 = vpack.c.bf16 %v498, %v498
    %501 = vrot.lane.b32.xlu0 %v321, 96
    %v502 = vpop.permute.xlu0 %501
    %v504 = vsel %vm375, %v499, 0
    %v507 = vsel %vm391, %v502, 0
    %509 = vmatprep.subr.bf16.mxu0 0
    %510 = vmatpush1.bf16.msra.mxu0 0
    %511 = vmatprep.subr.bf16.mxu0 0
    %512 = vmatpush1.bf16.msra.mxu0 0
    %513 = vmatprep.subr.bf16.mxu0 0
    %514 = vmatpush1.bf16.msra.mxu0 0
    %515 = vmatprep.subr.bf16.mxu0 0
    %516 = vmatpush1.bf16.msra.mxu0 0
    %517 = vmatprep.subr.bf16.mxu0 0
    %518 = vmatpush1.bf16.msra.mxu0 0
    %519 = vmatprep.subr.bf16.mxu0 0
    %520 = vmatpush1.bf16.msra.mxu0 0
    %521 = vmatprep.subr.bf16.mxu0 0
    %522 = vmatpush1.bf16.msra.mxu0 0
    %523 = vmatprep.subr.bf16.mxu0 0
    %524 = vmatpush1.bf16.msra.mxu0 %v507
    %525 = vmatprep.subr.bf16.mxu0 0
    %526 = vmatpush2.bf16.msra.mxu0 0
    %527 = vmatprep.subr.bf16.mxu0 0
    %528 = vmatpush2.bf16.msra.mxu0 0
    %529 = vmatprep.subr.bf16.mxu0 0
    %530 = vmatpush2.bf16.msra.mxu0 0
    %531 = vmatprep.subr.bf16.mxu0 0
    %532 = vmatpush2.bf16.msra.mxu0 0
    %533 = vmatprep.subr.bf16.mxu0 0
    %534 = vmatpush2.bf16.msra.mxu0 0
    %535 = vmatprep.subr.bf16.mxu0 0
    %536 = vmatpush2.bf16.msra.mxu0 0
    %537 = vmatprep.subr.bf16.mxu0 0
    %538 = vmatpush2.bf16.msra.mxu0 0
    %539 = vmatprep.subr.bf16.mxu0 0
    %540 = vmatpush2.bf16.msra.mxu0 0
    %541 = vmatprep.mubr.bf16.mxu0 0
    %542 = vmatmul.mubr.bf16.gmra.mxu0 %v504
    %v543 = vpop.f32.mrf.mxu0
    %v544 = vadd.f32 0.0, %v543
    %v545 = vpop.f32.mrf.mxu0
    %v546 = vpop.f32.mrf.mxu0
    %v547 = vpop.f32.mrf.mxu0
    %548 = vdwg.mxu0
    %550 = vrot.lane.b32.xlu0 %v544, 32
    %v551 = vpop.permute.xlu0 %550
    %vm553 = vcmask 523520
    %554 = vst.msk [vmem:[#allocation2] sm:$0xff] %vm553, %v551
    %555 = vrot.lane.b32.xlu0 %v319, 64
    %v556 = vpop.permute.xlu0 %555
    %557 = vrot.lane.b32.xlu0 %v320, 64
    %v558 = vpop.permute.xlu0 %557
    %v560 = vsel %vm328, %v556, 0
    %v563 = vsel %vm328, %v558, 0
    %565 = vmatprep.subr.bf16.mxu0 0
    %566 = vmatpush1.bf16.xpose.msra.mxu0 0
    %567 = vmatprep.subr.bf16.mxu0 0
    %568 = vmatpush1.bf16.xpose.msra.mxu0 0
    %569 = vmatprep.subr.bf16.mxu0 0
    %570 = vmatpush1.bf16.xpose.msra.mxu0 0
    %571 = vmatprep.subr.bf16.mxu0 0
    %572 = vmatpush1.bf16.xpose.msra.mxu0 0
    %573 = vmatprep.subr.bf16.mxu0 0
    %574 = vmatpush1.bf16.xpose.msra.mxu0 0
    %575 = vmatprep.subr.bf16.mxu0 0
    %576 = vmatpush1.bf16.xpose.msra.mxu0 0
    %577 = vmatprep.subr.bf16.mxu0 0
    %578 = vmatpush1.bf16.xpose.msra.mxu0 0
    %579 = vmatprep.subr.bf16.mxu0 0
    %580 = vmatpush1.bf16.xpose.msra.mxu0 %v563
    %581 = vmatprep.subr.bf16.mxu0 0
    %582 = vmatpush2.bf16.xpose.msra.mxu0 0
    %583 = vmatprep.subr.bf16.mxu0 0
    %584 = vmatpush2.bf16.xpose.msra.mxu0 0
    %585 = vmatprep.subr.bf16.mxu0 0
    %586 = vmatpush2.bf16.xpose.msra.mxu0 0
    %587 = vmatprep.subr.bf16.mxu0 0
    %588 = vmatpush2.bf16.xpose.msra.mxu0 0
    %589 = vmatprep.subr.bf16.mxu0 0
    %590 = vmatpush2.bf16.xpose.msra.mxu0 0
    %591 = vmatprep.subr.bf16.mxu0 0
    %592 = vmatpush2.bf16.xpose.msra.mxu0 0
    %593 = vmatprep.subr.bf16.mxu0 0
    %594 = vmatpush2.bf16.xpose.msra.mxu0 0
    %595 = vmatprep.subr.bf16.mxu0 0
    %596 = vmatpush2.bf16.xpose.msra.mxu0 0
    %597 = vmatprep.mubr.bf16.mxu0 0
    %598 = vmatmul.mubr.bf16.gmra.mxu0 %v560
    %v599 = vpop.f32.mrf.mxu0
    %v600 = vadd.f32 %v326, %v599
    %v601 = vpop.f32.mrf.mxu0
    %v602 = vpop.f32.mrf.mxu0
    %v603 = vpop.f32.mrf.mxu0
    %604 = vdwg.mxu0
    %v605 = vsel %vm375, %v600, -inf
    %606 = vmax.xlane.f32.xlu0 %v605
    %v607 = vpop.xlane.xlu0 %606
    %v608 = vsub.f32 %v600, %v607
    %v609 = vmul.f32 %v608, 1.442695
    %v610 = vpow.pop %v609
    %v611 = vsel %vm375, %v610, 0.0
    %612 = vadd.xlane.f32.xlu0 %v611
    %v613 = vpop.xlane.xlu0 %612
    %v614 = vrcp.pop %v613
    %v615 = vmul.f32 %v610, %v614
    %v616 = vpack.c.bf16 %v615, %v615
    %617 = vrot.lane.b32.xlu0 %v321, 64
    %v618 = vpop.permute.xlu0 %617
    %v620 = vsel %vm375, %v616, 0
    %v623 = vsel %vm391, %v618, 0
    %625 = vmatprep.subr.bf16.mxu0 0
    %626 = vmatpush1.bf16.msra.mxu0 0
    %627 = vmatprep.subr.bf16.mxu0 0
    %628 = vmatpush1.bf16.msra.mxu0 0
    %629 = vmatprep.subr.bf16.mxu0 0
    %630 = vmatpush1.bf16.msra.mxu0 0
    %631 = vmatprep.subr.bf16.mxu0 0
    %632 = vmatpush1.bf16.msra.mxu0 0
    %633 = vmatprep.subr.bf16.mxu0 0
    %634 = vmatpush1.bf16.msra.mxu0 0
    %635 = vmatprep.subr.bf16.mxu0 0
    %636 = vmatpush1.bf16.msra.mxu0 0
    %637 = vmatprep.subr.bf16.mxu0 0
    %638 = vmatpush1.bf16.msra.mxu0 0
    %639 = vmatprep.subr.bf16.mxu0 0
    %640 = vmatpush1.bf16.msra.mxu0 %v623
    %641 = vmatprep.subr.bf16.mxu0 0
    %642 = vmatpush2.bf16.msra.mxu0 0
    %643 = vmatprep.subr.bf16.mxu0 0
    %644 = vmatpush2.bf16.msra.mxu0 0
    %645 = vmatprep.subr.bf16.mxu0 0
    %646 = vmatpush2.bf16.msra.mxu0 0
    %647 = vmatprep.subr.bf16.mxu0 0
    %648 = vmatpush2.bf16.msra.mxu0 0
    %649 = vmatprep.subr.bf16.mxu0 0
    %650 = vmatpush2.bf16.msra.mxu0 0
    %651 = vmatprep.subr.bf16.mxu0 0
    %652 = vmatpush2.bf16.msra.mxu0 0
    %653 = vmatprep.subr.bf16.mxu0 0
    %654 = vmatpush2.bf16.msra.mxu0 0
    %655 = vmatprep.subr.bf16.mxu0 0
    %656 = vmatpush2.bf16.msra.mxu0 0
    %657 = vmatprep.mubr.bf16.mxu0 0
    %658 = vmatmul.mubr.bf16.gmra.mxu0 %v620
    %v659 = vpop.f32.mrf.mxu0
    %v660 = vadd.f32 0.0, %v659
    %v661 = vpop.f32.mrf.mxu0
    %v662 = vpop.f32.mrf.mxu0
    %v663 = vpop.f32.mrf.mxu0
    %664 = vdwg.mxu0
    %666 = vrot.lane.b32.xlu0 %v660, 64
    %v667 = vpop.permute.xlu0 %666
    %vm669 = vcmask 785920
    %670 = vst.msk [vmem:[#allocation2] sm:$0xff] %vm669, %v667
    %671 = vrot.lane.b32.xlu0 %v319, 32
    %v672 = vpop.permute.xlu0 %671
    %673 = vrot.lane.b32.xlu0 %v320, 32
    %v674 = vpop.permute.xlu0 %673
    %v676 = vsel %vm328, %v672, 0
    %v679 = vsel %vm328, %v674, 0
    %681 = vmatprep.subr.bf16.mxu0 0
    %682 = vmatpush1.bf16.xpose.msra.mxu0 0
    %683 = vmatprep.subr.bf16.mxu0 0
    %684 = vmatpush1.bf16.xpose.msra.mxu0 0
    %685 = vmatprep.subr.bf16.mxu0 0
    %686 = vmatpush1.bf16.xpose.msra.mxu0 0
    %687 = vmatprep.subr.bf16.mxu0 0
    %688 = vmatpush1.bf16.xpose.msra.mxu0 0
    %689 = vmatprep.subr.bf16.mxu0 0
    %690 = vmatpush1.bf16.xpose.msra.mxu0 0
    %691 = vmatprep.subr.bf16.mxu0 0
    %692 = vmatpush1.bf16.xpose.msra.mxu0 0
    %693 = vmatprep.subr.bf16.mxu0 0
    %694 = vmatpush1.bf16.xpose.msra.mxu0 0
    %695 = vmatprep.subr.bf16.mxu0 0
    %696 = vmatpush1.bf16.xpose.msra.mxu0 %v679
    %697 = vmatprep.subr.bf16.mxu0 0
    %698 = vmatpush2.bf16.xpose.msra.mxu0 0
    %699 = vmatprep.subr.bf16.mxu0 0
    %700 = vmatpush2.bf16.xpose.msra.mxu0 0
    %701 = vmatprep.subr.bf16.mxu0 0
    %702 = vmatpush2.bf16.xpose.msra.mxu0 0
    %703 = vmatprep.subr.bf16.mxu0 0
    %704 = vmatpush2.bf16.xpose.msra.mxu0 0
    %705 = vmatprep.subr.bf16.mxu0 0
    %706 = vmatpush2.bf16.xpose.msra.mxu0 0
    %707 = vmatprep.subr.bf16.mxu0 0
    %708 = vmatpush2.bf16.xpose.msra.mxu0 0
    %709 = vmatprep.subr.bf16.mxu0 0
    %710 = vmatpush2.bf16.xpose.msra.mxu0 0
    %711 = vmatprep.subr.bf16.mxu0 0
    %712 = vmatpush2.bf16.xpose.msra.mxu0 0
    %713 = vmatprep.mubr.bf16.mxu0 0
    %714 = vmatmul.mubr.bf16.gmra.mxu0 %v676
    %v715 = vpop.f32.mrf.mxu0
    %v716 = vadd.f32 %v326, %v715
    %v717 = vpop.f32.mrf.mxu0
    %v718 = vpop.f32.mrf.mxu0
    %v719 = vpop.f32.mrf.mxu0
    %720 = vdwg.mxu0
    %v721 = vsel %vm375, %v716, -inf
    %722 = vmax.xlane.f32.xlu0 %v721
    %v723 = vpop.xlane.xlu0 %722
    %v724 = vsub.f32 %v716, %v723
    %v725 = vmul.f32 %v724, 1.442695
    %v726 = vpow.pop %v725
    %v727 = vsel %vm375, %v726, 0.0
    %728 = vadd.xlane.f32.xlu0 %v727
    %v729 = vpop.xlane.xlu0 %728
    %v730 = vrcp.pop %v729
    %v731 = vmul.f32 %v726, %v730
    %v732 = vpack.c.bf16 %v731, %v731
    %733 = vrot.lane.b32.xlu0 %v321, 32
    %v734 = vpop.permute.xlu0 %733
    %v736 = vsel %vm375, %v732, 0
    %v739 = vsel %vm391, %v734, 0
    %741 = vmatprep.subr.bf16.mxu0 0
    %742 = vmatpush1.bf16.msra.mxu0 0
    %743 = vmatprep.subr.bf16.mxu0 0
    %744 = vmatpush1.bf16.msra.mxu0 0
    %745 = vmatprep.subr.bf16.mxu0 0
    %746 = vmatpush1.bf16.msra.mxu0 0
    %747 = vmatprep.subr.bf16.mxu0 0
    %748 = vmatpush1.bf16.msra.mxu0 0
    %749 = vmatprep.subr.bf16.mxu0 0
    %750 = vmatpush1.bf16.msra.mxu0 0
    %751 = vmatprep.subr.bf16.mxu0 0
    %752 = vmatpush1.bf16.msra.mxu0 0
    %753 = vmatprep.subr.bf16.mxu0 0
    %754 = vmatpush1.bf16.msra.mxu0 0
    %755 = vmatprep.subr.bf16.mxu0 0
    %756 = vmatpush1.bf16.msra.mxu0 %v739
    %757 = vmatprep.subr.bf16.mxu0 0
    %758 = vmatpush2.bf16.msra.mxu0 0
    %759 = vmatprep.subr.bf16.mxu0 0
    %760 = vmatpush2.bf16.msra.mxu0 0
    %761 = vmatprep.subr.bf16.mxu0 0
    %762 = vmatpush2.bf16.msra.mxu0 0
    %763 = vmatprep.subr.bf16.mxu0 0
    %764 = vmatpush2.bf16.msra.mxu0 0
    %765 = vmatprep.subr.bf16.mxu0 0
    %766 = vmatpush2.bf16.msra.mxu0 0
    %767 = vmatprep.subr.bf16.mxu0 0
    %768 = vmatpush2.bf16.msra.mxu0 0
    %769 = vmatprep.subr.bf16.mxu0 0
    %770 = vmatpush2.bf16.msra.mxu0 0
    %771 = vmatprep.subr.bf16.mxu0 0
    %772 = vmatpush2.bf16.msra.mxu0 0
    %773 = vmatprep.mubr.bf16.mxu0 0
    %774 = vmatmul.mubr.bf16.gmra.mxu0 %v736
    %v775 = vpop.f32.mrf.mxu0
    %v776 = vadd.f32 0.0, %v775
    %v777 = vpop.f32.mrf.mxu0
    %v778 = vpop.f32.mrf.mxu0
    %v779 = vpop.f32.mrf.mxu0
    %780 = vdwg.mxu0
    %782 = vrot.lane.b32.xlu0 %v776, 96
    %v783 = vpop.permute.xlu0 %782
    %vm785 = vcmask 1048320
    %786 = vst.msk [vmem:[#allocation2] sm:$0xff] %vm785, %v783
    %s787 = scalar_lea.vmem %s1, 1
    %v788 = vld [vmem:[%s787] sm:$0x1]
    %v789 = vmul.f32 %v272, 0.35355338
    %v790 = vpack.c.bf16 %v789, %v789
    %v791 = vpack.c.bf16 %v274, %v274
    %v792 = vpack.c.bf16 %v314, %v314
    %v794 = vlaneseq
    %v795 = vshrl.u32 %v794, 7
    %v796 = vsub.s32 0, %v795
    %v797 = vrot.slane %v788, %v796
    %v800 = vsel %vm328, %v790, 0
    %v803 = vsel %vm328, %v791, 0
    %805 = vmatprep.subr.bf16.mxu0 0
    %806 = vmatpush1.bf16.xpose.msra.mxu0 0
    %807 = vmatprep.subr.bf16.mxu0 0
    %808 = vmatpush1.bf16.xpose.msra.mxu0 0
    %809 = vmatprep.subr.bf16.mxu0 0
    %810 = vmatpush1.bf16.xpose.msra.mxu0 0
    %811 = vmatprep.subr.bf16.mxu0 0
    %812 = vmatpush1.bf16.xpose.msra.mxu0 0
    %813 = vmatprep.subr.bf16.mxu0 0
    %814 = vmatpush1.bf16.xpose.msra.mxu0 0
    %815 = vmatprep.subr.bf16.mxu0 0
    %816 = vmatpush1.bf16.xpose.msra.mxu0 0
    %817 = vmatprep.subr.bf16.mxu0 0
    %818 = vmatpush1.bf16.xpose.msra.mxu0 0
    %819 = vmatprep.subr.bf16.mxu0 0
    %820 = vmatpush1.bf16.xpose.msra.mxu0 %v803
    %821 = vmatprep.subr.bf16.mxu0 0
    %822 = vmatpush2.bf16.xpose.msra.mxu0 0
    %823 = vmatprep.subr.bf16.mxu0 0
    %824 = vmatpush2.bf16.xpose.msra.mxu0 0
    %825 = vmatprep.subr.bf16.mxu0 0
    %826 = vmatpush2.bf16.xpose.msra.mxu0 0
    %827 = vmatprep.subr.bf16.mxu0 0
    %828 = vmatpush2.bf16.xpose.msra.mxu0 0
    %829 = vmatprep.subr.bf16.mxu0 0
    %830 = vmatpush2.bf16.xpose.msra.mxu0 0
    %831 = vmatprep.subr.bf16.mxu0 0
    %832 = vmatpush2.bf16.xpose.msra.mxu0 0
    %833 = vmatprep.subr.bf16.mxu0 0
    %834 = vmatpush2.bf16.xpose.msra.mxu0 0
    %835 = vmatprep.subr.bf16.mxu0 0
    %836 = vmatpush2.bf16.xpose.msra.mxu0 0
    %837 = vmatprep.mubr.bf16.mxu0 0
    %838 = vmatmul.mubr.bf16.gmra.mxu0 %v800
    %v839 = vpop.f32.mrf.mxu0
    %v840 = vadd.f32 %v797, %v839
    %v841 = vpop.f32.mrf.mxu0
    %v842 = vpop.f32.mrf.mxu0
    %v843 = vpop.f32.mrf.mxu0
    %844 = vdwg.mxu0
    %v845 = vsel %vm375, %v840, -inf
    %846 = vmax.xlane.f32.xlu0 %v845
    %v847 = vpop.xlane.xlu0 %846
    %v848 = vsub.f32 %v840, %v847
    %v849 = vmul.f32 %v848, 1.442695
    %v850 = vpow.pop %v849
    %v851 = vsel %vm375, %v850, 0.0
    %852 = vadd.xlane.f32.xlu0 %v851
    %v853 = vpop.xlane.xlu0 %852
    %v854 = vrcp.pop %v853
    %v855 = vmul.f32 %v850, %v854
    %v856 = vpack.c.bf16 %v855, %v855
    %v858 = vsel %vm375, %v856, 0
    %v861 = vsel %vm391, %v792, 0
    %863 = vmatprep.subr.bf16.mxu0 0
    %864 = vmatpush1.bf16.msra.mxu0 0
    %865 = vmatprep.subr.bf16.mxu0 0
    %866 = vmatpush1.bf16.msra.mxu0 0
    %867 = vmatprep.subr.bf16.mxu0 0
    %868 = vmatpush1.bf16.msra.mxu0 0
    %869 = vmatprep.subr.bf16.mxu0 0
    %870 = vmatpush1.bf16.msra.mxu0 0
    %871 = vmatprep.subr.bf16.mxu0 0
    %872 = vmatpush1.bf16.msra.mxu0 0
    %873 = vmatprep.subr.bf16.mxu0 0
    %874 = vmatpush1.bf16.msra.mxu0 0
    %875 = vmatprep.subr.bf16.mxu0 0
    %876 = vmatpush1.bf16.msra.mxu0 0
    %877 = vmatprep.subr.bf16.mxu0 0
    %878 = vmatpush1.bf16.msra.mxu0 %v861
    %879 = vmatprep.subr.bf16.mxu0 0
    %880 = vmatpush2.bf16.msra.mxu0 0
    %881 = vmatprep.subr.bf16.mxu0 0
    %882 = vmatpush2.bf16.msra.mxu0 0
    %883 = vmatprep.subr.bf16.mxu0 0
    %884 = vmatpush2.bf16.msra.mxu0 0
    %885 = vmatprep.subr.bf16.mxu0 0
    %886 = vmatpush2.bf16.msra.mxu0 0
    %887 = vmatprep.subr.bf16.mxu0 0
    %888 = vmatpush2.bf16.msra.mxu0 0
    %889 = vmatprep.subr.bf16.mxu0 0
    %890 = vmatpush2.bf16.msra.mxu0 0
    %891 = vmatprep.subr.bf16.mxu0 0
    %892 = vmatpush2.bf16.msra.mxu0 0
    %893 = vmatprep.subr.bf16.mxu0 0
    %894 = vmatpush2.bf16.msra.mxu0 0
    %895 = vmatprep.mubr.bf16.mxu0 0
    %896 = vmatmul.mubr.bf16.gmra.mxu0 %v858
    %v897 = vpop.f32.mrf.mxu0
    %v898 = vadd.f32 0.0, %v897
    %v899 = vpop.f32.mrf.mxu0
    %v900 = vpop.f32.mrf.mxu0
    %v901 = vpop.f32.mrf.mxu0
    %902 = vdwg.mxu0
    %903 = vst.msk [vmem:[#allocation2 + $0x8] sm:$0xff] %vm328, %v898
    %905 = vrot.lane.b32.xlu0 %v790, 96
    %v906 = vpop.permute.xlu0 %905
    %908 = vrot.lane.b32.xlu0 %v791, 96
    %v909 = vpop.permute.xlu0 %908
    %v911 = vsel %vm328, %v906, 0
    %v914 = vsel %vm328, %v909, 0
    %916 = vmatprep.subr.bf16.mxu0 0
    %917 = vmatpush1.bf16.xpose.msra.mxu0 0
    %918 = vmatprep.subr.bf16.mxu0 0
    %919 = vmatpush1.bf16.xpose.msra.mxu0 0
    %920 = vmatprep.subr.bf16.mxu0 0
    %921 = vmatpush1.bf16.xpose.msra.mxu0 0
    %922 = vmatprep.subr.bf16.mxu0 0
    %923 = vmatpush1.bf16.xpose.msra.mxu0 0
    %924 = vmatprep.subr.bf16.mxu0 0
    %925 = vmatpush1.bf16.xpose.msra.mxu0 0
    %926 = vmatprep.subr.bf16.mxu0 0
    %927 = vmatpush1.bf16.xpose.msra.mxu0 0
    %928 = vmatprep.subr.bf16.mxu0 0
    %929 = vmatpush1.bf16.xpose.msra.mxu0 0
    %930 = vmatprep.subr.bf16.mxu0 0
    %931 = vmatpush1.bf16.xpose.msra.mxu0 %v914
    %932 = vmatprep.subr.bf16.mxu0 0
    %933 = vmatpush2.bf16.xpose.msra.mxu0 0
    %934 = vmatprep.subr.bf16.mxu0 0
    %935 = vmatpush2.bf16.xpose.msra.mxu0 0
    %936 = vmatprep.subr.bf16.mxu0 0
    %937 = vmatpush2.bf16.xpose.msra.mxu0 0
    %938 = vmatprep.subr.bf16.mxu0 0
    %939 = vmatpush2.bf16.xpose.msra.mxu0 0
    %940 = vmatprep.subr.bf16.mxu0 0
    %941 = vmatpush2.bf16.xpose.msra.mxu0 0
    %942 = vmatprep.subr.bf16.mxu0 0
    %943 = vmatpush2.bf16.xpose.msra.mxu0 0
    %944 = vmatprep.subr.bf16.mxu0 0
    %945 = vmatpush2.bf16.xpose.msra.mxu0 0
    %946 = vmatprep.subr.bf16.mxu0 0
    %947 = vmatpush2.bf16.xpose.msra.mxu0 0
    %948 = vmatprep.mubr.bf16.mxu0 0
    %949 = vmatmul.mubr.bf16.gmra.mxu0 %v911
    %v950 = vpop.f32.mrf.mxu0
    %v951 = vadd.f32 %v797, %v950
    %v952 = vpop.f32.mrf.mxu0
    %v953 = vpop.f32.mrf.mxu0
    %v954 = vpop.f32.mrf.mxu0
    %955 = vdwg.mxu0
    %v956 = vsel %vm375, %v951, -inf
    %957 = vmax.xlane.f32.xlu0 %v956
    %v958 = vpop.xlane.xlu0 %957
    %v959 = vsub.f32 %v951, %v958
    %v960 = vmul.f32 %v959, 1.442695
    %v961 = vpow.pop %v960
    %v962 = vsel %vm375, %v961, 0.0
    %963 = vadd.xlane.f32.xlu0 %v962
    %v964 = vpop.xlane.xlu0 %963
    %v965 = vrcp.pop %v964
    %v966 = vmul.f32 %v961, %v965
    %v967 = vpack.c.bf16 %v966, %v966
    %969 = vrot.lane.b32.xlu0 %v792, 96
    %v970 = vpop.permute.xlu0 %969
    %v972 = vsel %vm375, %v967, 0
    %v975 = vsel %vm391, %v970, 0
    %977 = vmatprep.subr.bf16.mxu0 0
    %978 = vmatpush1.bf16.msra.mxu0 0
    %979 = vmatprep.subr.bf16.mxu0 0
    %980 = vmatpush1.bf16.msra.mxu0 0
    %981 = vmatprep.subr.bf16.mxu0 0
    %982 = vmatpush1.bf16.msra.mxu0 0
    %983 = vmatprep.subr.bf16.mxu0 0
    %984 = vmatpush1.bf16.msra.mxu0 0
    %985 = vmatprep.subr.bf16.mxu0 0
    %986 = vmatpush1.bf16.msra.mxu0 0
    %987 = vmatprep.subr.bf16.mxu0 0
    %988 = vmatpush1.bf16.msra.mxu0 0
    %989 = vmatprep.subr.bf16.mxu0 0
    %990 = vmatpush1.bf16.msra.mxu0 0
    %991 = vmatprep.subr.bf16.mxu0 0
    %992 = vmatpush1.bf16.msra.mxu0 %v975
    %993 = vmatprep.subr.bf16.mxu0 0
    %994 = vmatpush2.bf16.msra.mxu0 0
    %995 = vmatprep.subr.bf16.mxu0 0
    %996 = vmatpush2.bf16.msra.mxu0 0
    %997 = vmatprep.subr.bf16.mxu0 0
    %998 = vmatpush2.bf16.msra.mxu0 0
    %999 = vmatprep.subr.bf16.mxu0 0
    %1000 = vmatpush2.bf16.msra.mxu0 0
    %1001 = vmatprep.subr.bf16.mxu0 0
    %1002 = vmatpush2.bf16.msra.mxu0 0
    %1003 = vmatprep.subr.bf16.mxu0 0
    %1004 = vmatpush2.bf16.msra.mxu0 0
    %1005 = vmatprep.subr.bf16.mxu0 0
    %1006 = vmatpush2.bf16.msra.mxu0 0
    %1007 = vmatprep.subr.bf16.mxu0 0
    %1008 = vmatpush2.bf16.msra.mxu0 0
    %1009 = vmatprep.mubr.bf16.mxu0 0
    %1010 = vmatmul.mubr.bf16.gmra.mxu0 %v972
    %v1011 = vpop.f32.mrf.mxu0
    %v1012 = vadd.f32 0.0, %v1011
    %v1013 = vpop.f32.mrf.mxu0
    %v1014 = vpop.f32.mrf.mxu0
    %v1015 = vpop.f32.mrf.mxu0
    %1016 = vdwg.mxu0
    %1018 = vrot.lane.b32.xlu0 %v1012, 32
    %v1019 = vpop.permute.xlu0 %1018
    %1021 = vst.msk [vmem:[#allocation2 + $0x8] sm:$0xff] %vm553, %v1019
    %1022 = vrot.lane.b32.xlu0 %v790, 64
    %v1023 = vpop.permute.xlu0 %1022
    %1024 = vrot.lane.b32.xlu0 %v791, 64
    %v1025 = vpop.permute.xlu0 %1024
    %v1027 = vsel %vm328, %v1023, 0
    %v1030 = vsel %vm328, %v1025, 0
    %1032 = vmatprep.subr.bf16.mxu0 0
    %1033 = vmatpush1.bf16.xpose.msra.mxu0 0
    %1034 = vmatprep.subr.bf16.mxu0 0
    %1035 = vmatpush1.bf16.xpose.msra.mxu0 0
    %1036 = vmatprep.subr.bf16.mxu0 0
    %1037 = vmatpush1.bf16.xpose.msra.mxu0 0
    %1038 = vmatprep.subr.bf16.mxu0 0
    %1039 = vmatpush1.bf16.xpose.msra.mxu0 0
    %1040 = vmatprep.subr.bf16.mxu0 0
    %1041 = vmatpush1.bf16.xpose.msra.mxu0 0
    %1042 = vmatprep.subr.bf16.mxu0 0
    %1043 = vmatpush1.bf16.xpose.msra.mxu0 0
    %1044 = vmatprep.subr.bf16.mxu0 0
    %1045 = vmatpush1.bf16.xpose.msra.mxu0 0
    %1046 = vmatprep.subr.bf16.mxu0 0
    %1047 = vmatpush1.bf16.xpose.msra.mxu0 %v1030
    %1048 = vmatprep.subr.bf16.mxu0 0
    %1049 = vmatpush2.bf16.xpose.msra.mxu0 0
    %1050 = vmatprep.subr.bf16.mxu0 0
    %1051 = vmatpush2.bf16.xpose.msra.mxu0 0
    %1052 = vmatprep.subr.bf16.mxu0 0
    %1053 = vmatpush2.bf16.xpose.msra.mxu0 0
    %1054 = vmatprep.subr.bf16.mxu0 0
    %1055 = vmatpush2.bf16.xpose.msra.mxu0 0
    %1056 = vmatprep.subr.bf16.mxu0 0
    %1057 = vmatpush2.bf16.xpose.msra.mxu0 0
    %1058 = vmatprep.subr.bf16.mxu0 0
    %1059 = vmatpush2.bf16.xpose.msra.mxu0 0
    %1060 = vmatprep.subr.bf16.mxu0 0
    %1061 = vmatpush2.bf16.xpose.msra.mxu0 0
    %1062 = vmatprep.subr.bf16.mxu0 0
    %1063 = vmatpush2.bf16.xpose.msra.mxu0 0
    %1064 = vmatprep.mubr.bf16.mxu0 0
    %1065 = vmatmul.mubr.bf16.gmra.mxu0 %v1027
    %v1066 = vpop.f32.mrf.mxu0
    %v1067 = vadd.f32 %v797, %v1066
    %v1068 = vpop.f32.mrf.mxu0
    %v1069 = vpop.f32.mrf.mxu0
    %v1070 = vpop.f32.mrf.mxu0
    %1071 = vdwg.mxu0
    %v1072 = vsel %vm375, %v1067, -inf
    %1073 = vmax.xlane.f32.xlu0 %v1072
    %v1074 = vpop.xlane.xlu0 %1073
    %v1075 = vsub.f32 %v1067, %v1074
    %v1076 = vmul.f32 %v1075, 1.442695
    %v1077 = vpow.pop %v1076
    %v1078 = vsel %vm375, %v1077, 0.0
    %1079 = vadd.xlane.f32.xlu0 %v1078
    %v1080 = vpop.xlane.xlu0 %1079
    %v1081 = vrcp.pop %v1080
    %v1082 = vmul.f32 %v1077, %v1081
    %v1083 = vpack.c.bf16 %v1082, %v1082
    %1084 = vrot.lane.b32.xlu0 %v792, 64
    %v1085 = vpop.permute.xlu0 %1084
    %v1087 = vsel %vm375, %v1083, 0
    %v1090 = vsel %vm391, %v1085, 0
    %1092 = vmatprep.subr.bf16.mxu0 0
    %1093 = vmatpush1.bf16.msra.mxu0 0
    %1094 = vmatprep.subr.bf16.mxu0 0
    %1095 = vmatpush1.bf16.msra.mxu0 0
    %1096 = vmatprep.subr.bf16.mxu0 0
    %1097 = vmatpush1.bf16.msra.mxu0 0
    %1098 = vmatprep.subr.bf16.mxu0 0
    %1099 = vmatpush1.bf16.msra.mxu0 0
    %1100 = vmatprep.subr.bf16.mxu0 0
    %1101 = vmatpush1.bf16.msra.mxu0 0
    %1102 = vmatprep.subr.bf16.mxu0 0
    %1103 = vmatpush1.bf16.msra.mxu0 0
    %1104 = vmatprep.subr.bf16.mxu0 0
    %1105 = vmatpush1.bf16.msra.mxu0 0
    %1106 = vmatprep.subr.bf16.mxu0 0
    %1107 = vmatpush1.bf16.msra.mxu0 %v1090
    %1108 = vmatprep.subr.bf16.mxu0 0
    %1109 = vmatpush2.bf16.msra.mxu0 0
    %1110 = vmatprep.subr.bf16.mxu0 0
    %1111 = vmatpush2.bf16.msra.mxu0 0
    %1112 = vmatprep.subr.bf16.mxu0 0
    %1113 = vmatpush2.bf16.msra.mxu0 0
    %1114 = vmatprep.subr.bf16.mxu0 0
    %1115 = vmatpush2.bf16.msra.mxu0 0
    %1116 = vmatprep.subr.bf16.mxu0 0
    %1117 = vmatpush2.bf16.msra.mxu0 0
    %1118 = vmatprep.subr.bf16.mxu0 0
    %1119 = vmatpush2.bf16.msra.mxu0 0
    %1120 = vmatprep.subr.bf16.mxu0 0
    %1121 = vmatpush2.bf16.msra.mxu0 0
    %1122 = vmatprep.subr.bf16.mxu0 0
    %1123 = vmatpush2.bf16.msra.mxu0 0
    %1124 = vmatprep.mubr.bf16.mxu0 0
    %1125 = vmatmul.mubr.bf16.gmra.mxu0 %v1087
    %v1126 = vpop.f32.mrf.mxu0
    %v1127 = vadd.f32 0.0, %v1126
    %v1128 = vpop.f32.mrf.mxu0
    %v1129 = vpop.f32.mrf.mxu0
    %v1130 = vpop.f32.mrf.mxu0
    %1131 = vdwg.mxu0
    %1133 = vrot.lane.b32.xlu0 %v1127, 64
    %v1134 = vpop.permute.xlu0 %1133
    %1136 = vst.msk [vmem:[#allocation2 + $0x8] sm:$0xff] %vm669, %v1134
    %1137 = vrot.lane.b32.xlu0 %v790, 32
    %v1138 = vpop.permute.xlu0 %1137
    %1139 = vrot.lane.b32.xlu0 %v791, 32
    %v1140 = vpop.permute.xlu0 %1139
    %v1142 = vsel %vm328, %v1138, 0
    %v1145 = vsel %vm328, %v1140, 0
    %1147 = vmatprep.subr.bf16.mxu0 0
    %1148 = vmatpush1.bf16.xpose.msra.mxu0 0
    %1149 = vmatprep.subr.bf16.mxu0 0
    %1150 = vmatpush1.bf16.xpose.msra.mxu0 0
    %1151 = vmatprep.subr.bf16.mxu0 0
    %1152 = vmatpush1.bf16.xpose.msra.mxu0 0
    %1153 = vmatprep.subr.bf16.mxu0 0
    %1154 = vmatpush1.bf16.xpose.msra.mxu0 0
    %1155 = vmatprep.subr.bf16.mxu0 0
    %1156 = vmatpush1.bf16.xpose.msra.mxu0 0
    %1157 = vmatprep.subr.bf16.mxu0 0
    %1158 = vmatpush1.bf16.xpose.msra.mxu0 0
    %1159 = vmatprep.subr.bf16.mxu0 0
    %1160 = vmatpush1.bf16.xpose.msra.mxu0 0
    %1161 = vmatprep.subr.bf16.mxu0 0
    %1162 = vmatpush1.bf16.xpose.msra.mxu0 %v1145
    %1163 = vmatprep.subr.bf16.mxu0 0
    %1164 = vmatpush2.bf16.xpose.msra.mxu0 0
    %1165 = vmatprep.subr.bf16.mxu0 0
    %1166 = vmatpush2.bf16.xpose.msra.mxu0 0
    %1167 = vmatprep.subr.bf16.mxu0 0
    %1168 = vmatpush2.bf16.xpose.msra.mxu0 0
    %1169 = vmatprep.subr.bf16.mxu0 0
    %1170 = vmatpush2.bf16.xpose.msra.mxu0 0
    %1171 = vmatprep.subr.bf16.mxu0 0
    %1172 = vmatpush2.bf16.xpose.msra.mxu0 0
    %1173 = vmatprep.subr.bf16.mxu0 0
    %1174 = vmatpush2.bf16.xpose.msra.mxu0 0
    %1175 = vmatprep.subr.bf16.mxu0 0
    %1176 = vmatpush2.bf16.xpose.msra.mxu0 0
    %1177 = vmatprep.subr.bf16.mxu0 0
    %1178 = vmatpush2.bf16.xpose.msra.mxu0 0
    %1179 = vmatprep.mubr.bf16.mxu0 0
    %1180 = vmatmul.mubr.bf16.gmra.mxu0 %v1142
    %v1181 = vpop.f32.mrf.mxu0
    %v1182 = vadd.f32 %v797, %v1181
    %v1183 = vpop.f32.mrf.mxu0
    %v1184 = vpop.f32.mrf.mxu0
    %v1185 = vpop.f32.mrf.mxu0
    %1186 = vdwg.mxu0
    %v1187 = vsel %vm375, %v1182, -inf
    %1188 = vmax.xlane.f32.xlu0 %v1187
    %v1189 = vpop.xlane.xlu0 %1188
    %v1190 = vsub.f32 %v1182, %v1189
    %v1191 = vmul.f32 %v1190, 1.442695
    %v1192 = vpow.pop %v1191
    %v1193 = vsel %vm375, %v1192, 0.0
    %1194 = vadd.xlane.f32.xlu0 %v1193
    %v1195 = vpop.xlane.xlu0 %1194
    %v1196 = vrcp.pop %v1195
    %v1197 = vmul.f32 %v1192, %v1196
    %v1198 = vpack.c.bf16 %v1197, %v1197
    %1199 = vrot.lane.b32.xlu0 %v792, 32
    %v1200 = vpop.permute.xlu0 %1199
    %v1202 = vsel %vm375, %v1198, 0
    %v1205 = vsel %vm391, %v1200, 0
    %1207 = vmatprep.subr.bf16.mxu0 0
    %1208 = vmatpush1.bf16.msra.mxu0 0
    %1209 = vmatprep.subr.bf16.mxu0 0
    %1210 = vmatpush1.bf16.msra.mxu0 0
    %1211 = vmatprep.subr.bf16.mxu0 0
    %1212 = vmatpush1.bf16.msra.mxu0 0
    %1213 = vmatprep.subr.bf16.mxu0 0
    %1214 = vmatpush1.bf16.msra.mxu0 0
    %1215 = vmatprep.subr.bf16.mxu0 0
    %1216 = vmatpush1.bf16.msra.mxu0 0
    %1217 = vmatprep.subr.bf16.mxu0 0
    %1218 = vmatpush1.bf16.msra.mxu0 0
    %1219 = vmatprep.subr.bf16.mxu0 0
    %1220 = vmatpush1.bf16.msra.mxu0 0
    %1221 = vmatprep.subr.bf16.mxu0 0
    %1222 = vmatpush1.bf16.msra.mxu0 %v1205
    %1223 = vmatprep.subr.bf16.mxu0 0
    %1224 = vmatpush2.bf16.msra.mxu0 0
    %1225 = vmatprep.subr.bf16.mxu0 0
    %1226 = vmatpush2.bf16.msra.mxu0 0
    %1227 = vmatprep.subr.bf16.mxu0 0
    %1228 = vmatpush2.bf16.msra.mxu0 0
    %1229 = vmatprep.subr.bf16.mxu0 0
    %1230 = vmatpush2.bf16.msra.mxu0 0
    %1231 = vmatprep.subr.bf16.mxu0 0
    %1232 = vmatpush2.bf16.msra.mxu0 0
    %1233 = vmatprep.subr.bf16.mxu0 0
    %1234 = vmatpush2.bf16.msra.mxu0 0
    %1235 = vmatprep.subr.bf16.mxu0 0
    %1236 = vmatpush2.bf16.msra.mxu0 0
    %1237 = vmatprep.subr.bf16.mxu0 0
    %1238 = vmatpush2.bf16.msra.mxu0 0
    %1239 = vmatprep.mubr.bf16.mxu0 0
    %1240 = vmatmul.mubr.bf16.gmra.mxu0 %v1202
    %v1241 = vpop.f32.mrf.mxu0
    %v1242 = vadd.f32 0.0, %v1241
    %v1243 = vpop.f32.mrf.mxu0
    %v1244 = vpop.f32.mrf.mxu0
    %v1245 = vpop.f32.mrf.mxu0
    %1246 = vdwg.mxu0
    %1248 = vrot.lane.b32.xlu0 %v1242, 96
    %v1249 = vpop.permute.xlu0 %1248
    %1251 = vst.msk [vmem:[#allocation2 + $0x8] sm:$0xff] %vm785, %v1249
    %v1252 = vld [vmem:[#allocation2] sm:$0xff]
    %v1253 = vld [vmem:[#allocation2 + $0x8] sm:$0xff]
    %v1254 = vld [vmem:[%s3] sm:$0xf]
    %v1255 = vld [vmem:[%s3 + $0x4] sm:$0xf]
    %v1256 = vld [vmem:[%s3 + $0x8] sm:$0xf]
    %v1257 = vld [vmem:[%s3 + $0xc] sm:$0xf]
    %v1258 = vld [vmem:[%s3 + $0x10] sm:$0xf]
    %v1259 = vld [vmem:[%s3 + $0x14] sm:$0xf]
    %v1260 = vld [vmem:[%s3 + $0x18] sm:$0xf]
    %v1261 = vld [vmem:[%s3 + $0x1c] sm:$0xf]
    %v1262 = vld [vmem:[%s3 + $0x20] sm:$0xf]
    %v1263 = vld [vmem:[%s3 + $0x24] sm:$0xf]
    %v1264 = vld [vmem:[%s3 + $0x28] sm:$0xf]
    %v1265 = vld [vmem:[%s3 + $0x2c] sm:$0xf]
    %v1266 = vld [vmem:[%s3 + $0x30] sm:$0xf]
    %v1267 = vld [vmem:[%s3 + $0x34] sm:$0xf]
    %v1268 = vld [vmem:[%s3 + $0x38] sm:$0xf]
    %v1269 = vld [vmem:[%s3 + $0x3c] sm:$0xf]
    %v1270 = vpack.c.bf16 %v1253, %v1252
    %v1272 = vlaneseq
    %v1273 = vshrl.u32 %v1272, 7
    %v1274 = vsub.s32 0, %v1273
    %v1275 = vrot.slane %v47, %v1274
    %v1293 = vunpack.c.l.b16 %v1254
    %v1294 = vunpack.c.l.b16 %v1255
    %v1295 = vunpack.c.l.b16 %v1256
    %v1296 = vunpack.c.l.b16 %v1257
    %v1297 = vunpack.c.l.b16 %v1258
    %v1298 = vunpack.c.l.b16 %v1259
    %v1299 = vunpack.c.l.b16 %v1260
    %v1300 = vunpack.c.l.b16 %v1261
    %v1301 = vunpack.c.l.b16 %v1262
    %v1302 = vunpack.c.l.b16 %v1263
    %v1303 = vunpack.c.l.b16 %v1264
    %v1304 = vunpack.c.l.b16 %v1265
    %v1305 = vunpack.c.l.b16 %v1266
    %v1306 = vunpack.c.l.b16 %v1267
    %v1307 = vunpack.c.l.b16 %v1268
    %v1308 = vunpack.c.l.b16 %v1269
    %v1309 = vpack.c.b16 %v1294, %v1293
    %v1310 = vpack.c.b16 %v1296, %v1295
    %v1311 = vpack.c.b16 %v1298, %v1297
    %v1312 = vpack.c.b16 %v1300, %v1299
    %v1313 = vpack.c.b16 %v1302, %v1301
    %v1314 = vpack.c.b16 %v1304, %v1303
    %v1315 = vpack.c.b16 %v1306, %v1305
    %v1316 = vpack.c.b16 %v1308, %v1307
    %1325 = vmatprep.subr.bf16.mxu0 0
    %1326 = vmatpush1.bf16.msra.mxu0 %v1316
    %1327 = vmatprep.subr.bf16.mxu0 0
    %1328 = vmatpush1.bf16.msra.mxu0 %v1315
    %1329 = vmatprep.subr.bf16.mxu0 0
    %1330 = vmatpush1.bf16.msra.mxu0 %v1314
    %1331 = vmatprep.subr.bf16.mxu0 0
    %1332 = vmatpush1.bf16.msra.mxu0 %v1313
    %1333 = vmatprep.subr.bf16.mxu0 0
    %1334 = vmatpush1.bf16.msra.mxu0 %v1312
    %1335 = vmatprep.subr.bf16.mxu0 0
    %1336 = vmatpush1.bf16.msra.mxu0 %v1311
    %1337 = vmatprep.subr.bf16.mxu0 0
    %1338 = vmatpush1.bf16.msra.mxu0 %v1310
    %1339 = vmatprep.subr.bf16.mxu0 0
    %1340 = vmatpush1.bf16.msra.mxu0 %v1309
    %1341 = vmatprep.subr.bf16.mxu0 0
    %1342 = vmatpush2.bf16.msra.mxu0 0
    %1343 = vmatprep.subr.bf16.mxu0 0
    %1344 = vmatpush2.bf16.msra.mxu0 0
    %1345 = vmatprep.subr.bf16.mxu0 0
    %1346 = vmatpush2.bf16.msra.mxu0 0
    %1347 = vmatprep.subr.bf16.mxu0 0
    %1348 = vmatpush2.bf16.msra.mxu0 0
    %1349 = vmatprep.subr.bf16.mxu0 0
    %1350 = vmatpush2.bf16.msra.mxu0 0
    %1351 = vmatprep.subr.bf16.mxu0 0
    %1352 = vmatpush2.bf16.msra.mxu0 0
    %1353 = vmatprep.subr.bf16.mxu0 0
    %1354 = vmatpush2.bf16.msra.mxu0 0
    %1355 = vmatprep.subr.bf16.mxu0 0
    %1356 = vmatpush2.bf16.msra.mxu0 0
    %1357 = vmatprep.mubr.bf16.mxu0 0
    %1358 = vmatmul.mubr.bf16.gmra.mxu0 %v1270
    %v1359 = vpop.f32.mrf.mxu0
    %v1360 = vadd.f32 %v1275, %v1359
    %v1361 = vpop.f32.mrf.mxu0
    %v1362 = vpop.f32.mrf.mxu0
    %v1363 = vadd.f32 %v1275, %v1362
    %v1364 = vpop.f32.mrf.mxu0
    %1365 = vdwg.mxu0
    %v1366 = vadd.f32 %v54, %v1360
    %v1367 = vadd.f32 %v55, %v1363
    %1368 = vadd.xlane.f32.xlu0 %v1366
    %v1369 = vpop.xlane.xlu0 %1368
    %1370 = vadd.xlane.f32.xlu0 %v1367
    %v1371 = vpop.xlane.xlu0 %1370
    %v1372 = vmul.f32 %v1369, 0.03125
    %v1373 = vmul.f32 %v1371, 0.03125
    %v1374 = vsub.f32 %v1366, %v1372
    %v1375 = vsub.f32 %v1367, %v1373
    %v1376 = vmul.f32 %v1374, %v45
    %v1377 = vmul.f32 %v1375, %v45
    %v1378 = vmul.f32 %v1376, %v1376
    %v1379 = vmul.f32 %v1377, %v1377
    %1380 = vadd.xlane.f32.xlu0 %v1378
    %v1381 = vpop.xlane.xlu0 %1380
    %1382 = vadd.xlane.f32.xlu0 %v1379
    %v1383 = vpop.xlane.xlu0 %1382
    %v1384 = vmul.f32 %v1381, 0.03125
    %v1385 = vmul.f32 %v1383, 0.03125
    %v1386 = vadd.f32 %v1384, 1e-05
    %v1387 = vadd.f32 %v1385, 1e-05
    %v1388 = vrsqrt.pop %v1386
    %v1389 = vrsqrt.pop %v1387
    %v1390 = vmul.f32 %v1376, %v1388
    %v1391 = vmul.f32 %v1377, %v1389
    %v1393 = vlaneseq
    %v1394 = vshrl.u32 %v1393, 7
    %v1395 = vsub.s32 0, %v1394
    %v1396 = vrot.slane %v48, %v1395
    %v1398 = vmul.f32 %v1390, %v1396
    %v1399 = vmul.f32 %v1391, %v1396
    %v1401 = vlaneseq
    %v1402 = vshrl.u32 %v1401, 7
    %v1403 = vsub.s32 0, %v1402
    %v1404 = vrot.slane %v49, %v1403
    %v1406 = vadd.f32 %v1398, %v1404
    %v1407 = vadd.f32 %v1399, %v1404
    %v1408 = vld [vmem:[%s4] sm:$0xf]
    %v1409 = vld [vmem:[%s4 + $0x4] sm:$0xf]
    %v1410 = vld [vmem:[%s4 + $0x8] sm:$0xf]
    %v1411 = vld [vmem:[%s4 + $0xc] sm:$0xf]
    %v1412 = vld [vmem:[%s4 + $0x10] sm:$0xf]
    %v1413 = vld [vmem:[%s4 + $0x14] sm:$0xf]
    %v1414 = vld [vmem:[%s4 + $0x18] sm:$0xf]
    %v1415 = vld [vmem:[%s4 + $0x1c] sm:$0xf]
    %v1416 = vld [vmem:[%s4 + $0x20] sm:$0xf]
    %v1417 = vld [vmem:[%s4 + $0x24] sm:$0xf]
    %v1418 = vld [vmem:[%s4 + $0x28] sm:$0xf]
    %v1419 = vld [vmem:[%s4 + $0x2c] sm:$0xf]
    %v1420 = vld [vmem:[%s4 + $0x30] sm:$0xf]
    %v1421 = vld [vmem:[%s4 + $0x34] sm:$0xf]
    %v1422 = vld [vmem:[%s4 + $0x38] sm:$0xf]
    %v1423 = vld [vmem:[%s4 + $0x3c] sm:$0xf]
    %v1424 = vpack.c.bf16 %v1407, %v1406
    %v1426 = vlaneseq
    %v1427 = vshrl.u32 %v1426, 7
    %v1428 = vsub.s32 0, %v1427
    %v1429 = vrot.slane %v50, %v1428
    %v1447 = vunpack.c.l.b16 %v1408
    %v1448 = vunpack.c.l.b16 %v1409
    %v1449 = vunpack.c.l.b16 %v1410
    %v1450 = vunpack.c.l.b16 %v1411
    %v1451 = vunpack.c.l.b16 %v1412
    %v1452 = vunpack.c.l.b16 %v1413
    %v1453 = vunpack.c.l.b16 %v1414
    %v1454 = vunpack.c.l.b16 %v1415
    %v1455 = vunpack.c.l.b16 %v1416
    %v1456 = vunpack.c.l.b16 %v1417
    %v1457 = vunpack.c.l.b16 %v1418
    %v1458 = vunpack.c.l.b16 %v1419
    %v1459 = vunpack.c.l.b16 %v1420
    %v1460 = vunpack.c.l.b16 %v1421
    %v1461 = vunpack.c.l.b16 %v1422
    %v1462 = vunpack.c.l.b16 %v1423
    %v1463 = vpack.c.b16 %v1448, %v1447
    %v1464 = vpack.c.b16 %v1450, %v1449
    %v1465 = vpack.c.b16 %v1452, %v1451
    %v1466 = vpack.c.b16 %v1454, %v1453
    %v1467 = vpack.c.b16 %v1456, %v1455
    %v1468 = vpack.c.b16 %v1458, %v1457
    %v1469 = vpack.c.b16 %v1460, %v1459
    %v1470 = vpack.c.b16 %v1462, %v1461
    %1479 = vmatprep.subr.bf16.mxu0 0
    %1480 = vmatpush1.bf16.msra.mxu0 %v1470
    %1481 = vmatprep.subr.bf16.mxu0 0
    %1482 = vmatpush1.bf16.msra.mxu0 %v1469
    %1483 = vmatprep.subr.bf16.mxu0 0
    %1484 = vmatpush1.bf16.msra.mxu0 %v1468
    %1485 = vmatprep.subr.bf16.mxu0 0
    %1486 = vmatpush1.bf16.msra.mxu0 %v1467
    %1487 = vmatprep.subr.bf16.mxu0 0
    %1488 = vmatpush1.bf16.msra.mxu0 %v1466
    %1489 = vmatprep.subr.bf16.mxu0 0
    %1490 = vmatpush1.bf16.msra.mxu0 %v1465
    %1491 = vmatprep.subr.bf16.mxu0 0
    %1492 = vmatpush1.bf16.msra.mxu0 %v1464
    %1493 = vmatprep.subr.bf16.mxu0 0
    %1494 = vmatpush1.bf16.msra.mxu0 %v1463
    %1495 = vmatprep.subr.bf16.mxu0 0
    %1496 = vmatpush2.bf16.msra.mxu0 0
    %1497 = vmatprep.subr.bf16.mxu0 0
    %1498 = vmatpush2.bf16.msra.mxu0 0
    %1499 = vmatprep.subr.bf16.mxu0 0
    %1500 = vmatpush2.bf16.msra.mxu0 0
    %1501 = vmatprep.subr.bf16.mxu0 0
    %1502 = vmatpush2.bf16.msra.mxu0 0
    %1503 = vmatprep.subr.bf16.mxu0 0
    %1504 = vmatpush2.bf16.msra.mxu0 0
    %1505 = vmatprep.subr.bf16.mxu0 0
    %1506 = vmatpush2.bf16.msra.mxu0 0
    %1507 = vmatprep.subr.bf16.mxu0 0
    %1508 = vmatpush2.bf16.msra.mxu0 0
    %1509 = vmatprep.subr.bf16.mxu0 0
    %1510 = vmatpush2.bf16.msra.mxu0 0
    %1511 = vmatprep.mubr.bf16.mxu0 0
    %1512 = vmatmul.mubr.bf16.gmra.mxu0 %v1424
    %v1513 = vpop.f32.mrf.mxu0
    %v1514 = vadd.f32 %v1429, %v1513
    %v1515 = vpop.f32.mrf.mxu0
    %v1516 = vpop.f32.mrf.mxu0
    %v1517 = vadd.f32 %v1429, %v1516
    %v1518 = vpop.f32.mrf.mxu0
    %1519 = vdwg.mxu0
    %v1520 = vmax.f32 %v1514, 0.0
    %v1521 = vmax.f32 %v1517, 0.0
    %v1522 = vld [vmem:[#allocation3] sm:$0xf]
    %v1523 = vld [vmem:[#allocation3 + $0x4] sm:$0xf]
    %v1524 = vld [vmem:[#allocation3 + $0x8] sm:$0xf]
    %v1525 = vld [vmem:[#allocation3 + $0xc] sm:$0xf]
    %v1526 = vld [vmem:[#allocation3 + $0x10] sm:$0xf]
    %v1527 = vld [vmem:[#allocation3 + $0x14] sm:$0xf]
    %v1528 = vld [vmem:[#allocation3 + $0x18] sm:$0xf]
    %v1529 = vld [vmem:[#allocation3 + $0x1c] sm:$0xf]
    %v1530 = vld [vmem:[#allocation3 + $0x20] sm:$0xf]
    %v1531 = vld [vmem:[#allocation3 + $0x24] sm:$0xf]
    %v1532 = vld [vmem:[#allocation3 + $0x28] sm:$0xf]
    %v1533 = vld [vmem:[#allocation3 + $0x2c] sm:$0xf]
    %v1534 = vld [vmem:[#allocation3 + $0x30] sm:$0xf]
    %v1535 = vld [vmem:[#allocation3 + $0x34] sm:$0xf]
    %v1536 = vld [vmem:[#allocation3 + $0x38] sm:$0xf]
    %v1537 = vld [vmem:[#allocation3 + $0x3c] sm:$0xf]
    %v1538 = vpack.c.bf16 %v1521, %v1520
    %v1540 = vlaneseq
    %v1541 = vshrl.u32 %v1540, 7
    %v1542 = vsub.s32 0, %v1541
    %v1543 = vrot.slane %v51, %v1542
    %v1561 = vunpack.c.l.b16 %v1522
    %v1562 = vunpack.c.l.b16 %v1523
    %v1563 = vunpack.c.l.b16 %v1524
    %v1564 = vunpack.c.l.b16 %v1525
    %v1565 = vunpack.c.l.b16 %v1526
    %v1566 = vunpack.c.l.b16 %v1527
    %v1567 = vunpack.c.l.b16 %v1528
    %v1568 = vunpack.c.l.b16 %v1529
    %v1569 = vunpack.c.l.b16 %v1530
    %v1570 = vunpack.c.l.b16 %v1531
    %v1571 = vunpack.c.l.b16 %v1532
    %v1572 = vunpack.c.l.b16 %v1533
    %v1573 = vunpack.c.l.b16 %v1534
    %v1574 = vunpack.c.l.b16 %v1535
    %v1575 = vunpack.c.l.b16 %v1536
    %v1576 = vunpack.c.l.b16 %v1537
    %v1577 = vpack.c.b16 %v1562, %v1561
    %v1578 = vpack.c.b16 %v1564, %v1563
    %v1579 = vpack.c.b16 %v1566, %v1565
    %v1580 = vpack.c.b16 %v1568, %v1567
    %v1581 = vpack.c.b16 %v1570, %v1569
    %v1582 = vpack.c.b16 %v1572, %v1571
    %v1583 = vpack.c.b16 %v1574, %v1573
    %v1584 = vpack.c.b16 %v1576, %v1575
    %1593 = vmatprep.subr.bf16.mxu0 0
    %1594 = vmatpush1.bf16.msra.mxu0 %v1584
    %1595 = vmatprep.subr.bf16.mxu0 0
    %1596 = vmatpush1.bf16.msra.mxu0 %v1583
    %1597 = vmatprep.subr.bf16.mxu0 0
    %1598 = vmatpush1.bf16.msra.mxu0 %v1582
    %1599 = vmatprep.subr.bf16.mxu0 0
    %1600 = vmatpush1.bf16.msra.mxu0 %v1581
    %1601 = vmatprep.subr.bf16.mxu0 0
    %1602 = vmatpush1.bf16.msra.mxu0 %v1580
    %1603 = vmatprep.subr.bf16.mxu0 0
    %1604 = vmatpush1.bf16.msra.mxu0 %v1579
    %1605 = vmatprep.subr.bf16.mxu0 0
    %1606 = vmatpush1.bf16.msra.mxu0 %v1578
    %1607 = vmatprep.subr.bf16.mxu0 0
    %1608 = vmatpush1.bf16.msra.mxu0 %v1577
    %1609 = vmatprep.subr.bf16.mxu0 0
    %1610 = vmatpush2.bf16.msra.mxu0 0
    %1611 = vmatprep.subr.bf16.mxu0 0
    %1612 = vmatpush2.bf16.msra.mxu0 0
    %1613 = vmatprep.subr.bf16.mxu0 0
    %1614 = vmatpush2.bf16.msra.mxu0 0
    %1615 = vmatprep.subr.bf16.mxu0 0
    %1616 = vmatpush2.bf16.msra.mxu0 0
    %1617 = vmatprep.subr.bf16.mxu0 0
    %1618 = vmatpush2.bf16.msra.mxu0 0
    %1619 = vmatprep.subr.bf16.mxu0 0
    %1620 = vmatpush2.bf16.msra.mxu0 0
    %1621 = vmatprep.subr.bf16.mxu0 0
    %1622 = vmatpush2.bf16.msra.mxu0 0
    %1623 = vmatprep.subr.bf16.mxu0 0
    %1624 = vmatpush2.bf16.msra.mxu0 0
    %1625 = vmatprep.mubr.bf16.mxu0 0
    %1626 = vmatmul.mubr.bf16.gmra.mxu0 %v1538
    %v1627 = vpop.f32.mrf.mxu0
    %v1628 = vadd.f32 %v1543, %v1627
    %v1629 = vpop.f32.mrf.mxu0
    %v1630 = vpop.f32.mrf.mxu0
    %v1631 = vadd.f32 %v1543, %v1630
    %v1632 = vpop.f32.mrf.mxu0
    %1633 = vdwg.mxu0
    %v1634 = vadd.f32 %v1406, %v1628
    %v1635 = vadd.f32 %v1407, %v1631
    %1636 = vadd.xlane.f32.xlu0 %v1634
    %v1637 = vpop.xlane.xlu0 %1636
    %1638 = vadd.xlane.f32.xlu0 %v1635
    %v1639 = vpop.xlane.xlu0 %1638
    %v1640 = vmul.f32 %v1637, 0.03125
    %v1641 = vmul.f32 %v1639, 0.03125
    %v1642 = vsub.f32 %v1634, %v1640
    %v1643 = vsub.f32 %v1635, %v1641
    %v1644 = vmul.f32 %v1642, %v45
    %v1645 = vmul.f32 %v1643, %v45
    %v1646 = vmul.f32 %v1644, %v1644
    %v1647 = vmul.f32 %v1645, %v1645
    %1648 = vadd.xlane.f32.xlu0 %v1646
    %v1649 = vpop.xlane.xlu0 %1648
    %1650 = vadd.xlane.f32.xlu0 %v1647
    %v1651 = vpop.xlane.xlu0 %1650
    %v1652 = vmul.f32 %v1649, 0.03125
    %v1653 = vmul.f32 %v1651, 0.03125
    %v1654 = vadd.f32 %v1652, 1e-05
    %v1655 = vadd.f32 %v1653, 1e-05
    %v1656 = vrsqrt.pop %v1654
    %v1657 = vrsqrt.pop %v1655
    %v1658 = vmul.f32 %v1644, %v1656
    %v1659 = vmul.f32 %v1645, %v1657
    %v1661 = vlaneseq
    %v1662 = vshrl.u32 %v1661, 7
    %v1663 = vsub.s32 0, %v1662
    %v1664 = vrot.slane %v52, %v1663
    %v1666 = vmul.f32 %v1658, %v1664
    %v1667 = vmul.f32 %v1659, %v1664
    %v1669 = vlaneseq
    %v1670 = vshrl.u32 %v1669, 7
    %v1671 = vsub.s32 0, %v1670
    %v1672 = vrot.slane %v53, %v1671
    %v1674 = vadd.f32 %v1666, %v1672
    %v1675 = vadd.f32 %v1667, %v1672
    %1676 = vst [vmem:[%s7] sm:$0xff] %v1674
    %1677 = vst [vmem:[%s7 + $0x8] sm:$0xff] %v1675
    // Predicated region
    $region34: #{vae_transformer_forward.4} parent=1 // pred_check
      _
    $region35: #{vae_transformer_forward.4} parent=1 // pred_check_branch
      %1679 = sbr.rel (0) target = $region37
    $region36: #{vae_transformer_forward.4} parent=1 // pred_region
      _
    $region37: #{vae_transformer_forward.4} parent=1 // pred_fallthru
      _
    // Predicated region
    $region38: #{vae_transformer_forward.4} parent=1 // pred_check
      _
    $region39: #{vae_transformer_forward.4} parent=1 // pred_check_branch
      %1681 = sbr.rel (0) target = $region41
    $region40: #{vae_transformer_forward.4} parent=1 // pred_region
      _
    $region41: #{vae_transformer_forward.4} parent=1 // pred_fallthru
      _
    %1682 = vsyncpa [#allocation4], 1

// kernel: vae_transformer_forward.6
$region0: #{vae_transformer_forward.6}
  #allocation0 [shape = 'u32[]', space=smem, size = 0x4, offset = 0x4, fixed_abs, tag = 'smem constant byte address 0x4 - core index']
  #allocation1 [shape = 'u32[144,128]{1,0:T(1,128)}', space=vmem, size = 0x12000, scoped, tag = 'internal scratch']
  #allocation2 [shape = 'f32[16,128]{1,0:T(8,128)}', space=vmem, size = 0x2000, scoped, tag = 'scratch operand']
  %s0 = inlined_call_operand.vmem [shape: f32[2,8,128], index: 0, kind: input, shape index: {}]
  %s1 = inlined_call_operand.vmem [shape: f32[2,4,128], index: 1, kind: input, shape index: {}]
  %s2 = inlined_call_operand.vmem [shape: f32[2,1,8], index: 2, kind: input, shape index: {}]
  %s3 = inlined_call_operand.vmem [shape: f32[8,8], index: 3, kind: input, shape index: {}]
  %s4 = inlined_call_operand.vmem [shape: bf16[128,384], index: 4, kind: input, shape index: {}]
  %s5 = inlined_call_operand.vmem [shape: bf16[128,128], index: 5, kind: input, shape index: {}]
  %s6 = inlined_call_operand.vmem [shape: bf16[128,128], index: 6, kind: input, shape index: {}]
  %s7 = inlined_call_operand.vmem [shape: bf16[128,256], index: 7, kind: input, shape index: {}]
  %s8 = inlined_call_operand.vmem [shape: bf16[128,128], index: 8, kind: input, shape index: {}]
  %s9 = inlined_call_operand.vmem [shape: bf16[128,128], index: 9, kind: input, shape index: {}]
  %s10 = inlined_call_operand.hbm [shape: bf16[128,128], index: 10, kind: input, shape index: {}]
  %s11 = inlined_call_operand.vmem [shape: f32[1,2048], index: 11, kind: input, shape index: {}]
  %s12 = inlined_call_operand.vmem [shape: f32[2,8,128], index: 12, kind: output, shape index: {}]
  %s13 = sld [smem:[#allocation0]]
  $region62: #{vae_transformer_forward.6} parent=0
    _
  %s15 = ssub.s32 1, %s13
  %s16 = scalar_select 0, %s15, %s13
  $region1: #{vae_transformer_forward.6} parent=0
    #allocation3 [shape = 'u8[32768]{0}', space=vmem, size = 0x8000, scoped, tag = 'input window, operand 10, single buffered']
    #allocation4 [shape = 's32[1]{0}', space=sflag, size = 0x4, scoped, tag = 'scoped memory for vae_transformer_forward.6']
    %17 = vsyncpa [#allocation4], 0
    // Predicated region
    $region2: #{vae_transformer_forward.6} parent=1 // pred_check
      _
    $region3: #{vae_transformer_forward.6} parent=1 // pred_check_branch
      %19 = sbr.rel (0) target = $region5
    $region4: #{vae_transformer_forward.6} parent=1 // pred_region
      _
    $region5: #{vae_transformer_forward.6} parent=1 // pred_fallthru
      _
    // Predicated region
    $region6: #{vae_transformer_forward.6} parent=1 // pred_check
      _
    $region7: #{vae_transformer_forward.6} parent=1 // pred_check_branch
      %21 = sbr.rel (0) target = $region9
    $region8: #{vae_transformer_forward.6} parent=1 // pred_region
      _
    $region9: #{vae_transformer_forward.6} parent=1 // pred_fallthru
      _
    // Predicated region
    $region10: #{vae_transformer_forward.6} parent=1 // pred_check
      _
    $region11: #{vae_transformer_forward.6} parent=1 // pred_check_branch
      %23 = sbr.rel (0) target = $region13
    $region12: #{vae_transformer_forward.6} parent=1 // pred_region
      _
    $region13: #{vae_transformer_forward.6} parent=1 // pred_fallthru
      _
    // Predicated region
    $region14: #{vae_transformer_forward.6} parent=1 // pred_check
      _
    $region15: #{vae_transformer_forward.6} parent=1 // pred_check_branch
      %25 = sbr.rel (0) target = $region17
    $region16: #{vae_transformer_forward.6} parent=1 // pred_region
      _
    $region17: #{vae_transformer_forward.6} parent=1 // pred_fallthru
      _
    // Predicated region
    $region18: #{vae_transformer_forward.6} parent=1 // pred_check
      _
    $region19: #{vae_transformer_forward.6} parent=1 // pred_check_branch
      %27 = sbr.rel (0) target = $region21
    $region20: #{vae_transformer_forward.6} parent=1 // pred_region
      _
    $region21: #{vae_transformer_forward.6} parent=1 // pred_fallthru
      _
    // Predicated region
    $region22: #{vae_transformer_forward.6} parent=1 // pred_check
      _
    $region23: #{vae_transformer_forward.6} parent=1 // pred_check_branch
      %29 = sbr.rel (0) target = $region25
    $region24: #{vae_transformer_forward.6} parent=1 // pred_region
      _
    $region25: #{vae_transformer_forward.6} parent=1 // pred_fallthru
      _
    // Predicated region
    $region26: #{vae_transformer_forward.6} parent=1 // pred_check
      _
    $region27: #{vae_transformer_forward.6} parent=1 // pred_check_branch
      %31 = sbr.rel (0) target = $region29
    $region28: #{vae_transformer_forward.6} parent=1 // pred_region
      _
    $region29: #{vae_transformer_forward.6} parent=1 // pred_fallthru
      _
    // Predicated region
    $region30: #{vae_transformer_forward.6} parent=1 // pred_check
      _
    $region31: #{vae_transformer_forward.6} parent=1 // pred_check_branch
      %33 = sbr.rel (0) target = $region33
    $region32: #{vae_transformer_forward.6} parent=1 // pred_region
      _
    $region33: #{vae_transformer_forward.6} parent=1 // pred_fallthru
      _
    // Predicated region
    $region34: #{vae_transformer_forward.6} parent=1 // pred_check
      _
    $region35: #{vae_transformer_forward.6} parent=1 // pred_check_branch
      %35 = sbr.rel (0) target = $region37
    $region36: #{vae_transformer_forward.6} parent=1 // pred_region
      _
    $region37: #{vae_transformer_forward.6} parent=1 // pred_fallthru
      _
    // Predicated region
    $region38: #{vae_transformer_forward.6} parent=1 // pred_check
      _
    $region39: #{vae_transformer_forward.6} parent=1 // pred_check_branch
      %37 = sbr.rel (0) target = $region41
    $region40: #{vae_transformer_forward.6} parent=1 // pred_region
      _
    $region41: #{vae_transformer_forward.6} parent=1 // pred_fallthru
      _
    // Predicated region
    $region42: #{vae_transformer_forward.6} parent=1 // pred_check
      _
    $region43: #{vae_transformer_forward.6} parent=1 // pred_check_branch
      %39 = sbr.rel (0) target = $region45
    $region44: #{vae_transformer_forward.6} parent=1 // pred_region
      %s41 = ssub.s32 1024, 1024
      %42 = vsyncadd [#allocation4], %s41
      %s43 = sshll.u32 [#allocation3], 4
      %s44 = int_to_ptr.vmem [resolvable:$true] %s43
      %49 = dma.hbm_to_vmem [thread:$0]  %s10, 1024, %s44, [#allocation4], 64, 64, 4
    $region45: #{vae_transformer_forward.6} parent=1 // pred_fallthru
      _
    // Predicated region
    $region46: #{vae_transformer_forward.6} parent=1 // pred_check
      _
    $region47: #{vae_transformer_forward.6} parent=1 // pred_check_branch
      %51 = sbr.rel (0) target = $region49
    $region48: #{vae_transformer_forward.6} parent=1 // pred_region
      _
    $region49: #{vae_transformer_forward.6} parent=1 // pred_fallthru
      _
    // Predicated region
    $region50: #{vae_transformer_forward.6} parent=1 // pred_check
      _
    $region51: #{vae_transformer_forward.6} parent=1 // pred_check_branch
      %53 = sbr.rel (0) target = $region53
    $region52: #{vae_transformer_forward.6} parent=1 // pred_region
      %54 = dma.done [#allocation4], 1024
    $region53: #{vae_transformer_forward.6} parent=1 // pred_fallthru
      _
    %v56 = vlaneseq
    %v57 = vand.u32 %v56, 127
    %vm58 = vcmp.lt.s32.totalorder %v57, 32
    %v59 = vsel %vm58, 1, 0
    %v60 = vcvt.s32.f32 %v59
    %v61 = vld [vmem:[%s11] sm:$0x7]
    %v62 = vld [vmem:[%s11 + $0x3] sm:$0x1]
    %v63 = vld [vmem:[%s11 + $0x4] sm:$0x1]
    %v64 = vld [vmem:[%s11 + $0x5] sm:$0x1]
    %v65 = vld [vmem:[%s11 + $0x6] sm:$0x1]
    %v66 = vld [vmem:[%s11 + $0x7] sm:$0x3]
    %v67 = vld [vmem:[%s11 + $0x9] sm:$0x1]
    %v68 = vld [vmem:[%s11 + $0xa] sm:$0x1]
    %v69 = vld [vmem:[%s11 + $0xb] sm:$0x1]
    %v70 = vld [vmem:[%s11 + $0xc] sm:$0x1]
    %v71 = vld [vmem:[%s11 + $0xd] sm:$0x1]
    %v72 = vld [vmem:[%s11 + $0xe] sm:$0x1]
    %v73 = vld [vmem:[%s11 + $0xf] sm:$0x1]
    %v74 = vld [vmem:[%s0] sm:$0xff]
    %v75 = vld [vmem:[%s0 + $0x8] sm:$0xff]
    %v76 = vld [vmem:[%s3] sm:$0xff]
    %v77 = vld [vmem:[%s4] sm:$0xff]
    %v78 = vld [vmem:[%s4 + $0x8] sm:$0xf]
    %v79 = vld [vmem:[%s4 + $0xc] sm:$0xff]
    %v80 = vld [vmem:[%s4 + $0x14] sm:$0xf]
    %v81 = vld [vmem:[%s4 + $0x18] sm:$0xff]
    %v82 = vld [vmem:[%s4 + $0x20] sm:$0xf]
    %v83 = vld [vmem:[%s4 + $0x24] sm:$0xff]
    %v84 = vld [vmem:[%s4 + $0x2c] sm:$0xf]
    %v85 = vld [vmem:[%s4 + $0x30] sm:$0xff]
    %v86 = vld [vmem:[%s4 + $0x38] sm:$0xf]
    %v87 = vld [vmem:[%s4 + $0x3c] sm:$0xff]
    %v88 = vld [vmem:[%s4 + $0x44] sm:$0xf]
    %v89 = vld [vmem:[%s4 + $0x48] sm:$0xff]
    %v90 = vld [vmem:[%s4 + $0x50] sm:$0xf]
    %v91 = vld [vmem:[%s4 + $0x54] sm:$0xff]
    %v92 = vld [vmem:[%s4 + $0x5c] sm:$0xf]
    %v93 = vld [vmem:[%s4 + $0x60] sm:$0xff]
    %v94 = vld [vmem:[%s4 + $0x68] sm:$0xf]
    %v95 = vld [vmem:[%s4 + $0x6c] sm:$0xff]
    %v96 = vld [vmem:[%s4 + $0x74] sm:$0xf]
    %v97 = vld [vmem:[%s4 + $0x78] sm:$0xff]
    %v98 = vld [vmem:[%s4 + $0x80] sm:$0xf]
    %v99 = vld [vmem:[%s4 + $0x84] sm:$0xff]
    %v100 = vld [vmem:[%s4 + $0x8c] sm:$0xf]
    %v101 = vld [vmem:[%s4 + $0x90] sm:$0xff]
    %v102 = vld [vmem:[%s4 + $0x98] sm:$0xf]
    %v103 = vld [vmem:[%s4 + $0x9c] sm:$0xff]
    %v104 = vld [vmem:[%s4 + $0xa4] sm:$0xf]
    %v105 = vld [vmem:[%s4 + $0xa8] sm:$0xff]
    %v106 = vld [vmem:[%s4 + $0xb0] sm:$0xf]
    %v107 = vld [vmem:[%s4 + $0xb4] sm:$0xff]
    %v108 = vld [vmem:[%s4 + $0xbc] sm:$0xf]
    %v109 = vpack.c.bf16 %v75, %v74
    %v111 = vlaneseq
    %v112 = vshrl.u32 %v111, 7
    %v113 = vsub.s32 0, %v112
    %v114 = vrot.slane %v61, %v113
    %v115 = vlaneseq
    %v116 = vshrl.u32 %v115, 7
    %v117 = vsub.s32 1, %v116
    %v118 = vrot.slane %v61, %v117
    %v119 = vlaneseq
    %v120 = vshrl.u32 %v119, 7
    %v121 = vsub.s32 2, %v120
    %v122 = vrot.slane %v61, %v121
    %v158 = vunpack.c.l.b16 %v77
    %v159 = vunpack.c.h.b16 %v77
    %v160 = vunpack.c.l.b16 %v78
    %v161 = vunpack.c.l.b16 %v79
    %v162 = vunpack.c.h.b16 %v79
    %v163 = vunpack.c.l.b16 %v80
    %v164 = vunpack.c.l.b16 %v81
    %v165 = vunpack.c.h.b16 %v81
    %v166 = vunpack.c.l.b16 %v82
    %v167 = vunpack.c.l.b16 %v83
    %v168 = vunpack.c.h.b16 %v83
    %v169 = vunpack.c.l.b16 %v84
    %v170 = vunpack.c.l.b16 %v85
    %v171 = vunpack.c.h.b16 %v85
    %v172 = vunpack.c.l.b16 %v86
    %v173 = vunpack.c.l.b16 %v87
    %v174 = vunpack.c.h.b16 %v87
    %v175 = vunpack.c.l.b16 %v88
    %v176 = vunpack.c.l.b16 %v89
    %v177 = vunpack.c.h.b16 %v89
    %v178 = vunpack.c.l.b16 %v90
    %v179 = vunpack.c.l.b16 %v91
    %v180 = vunpack.c.h.b16 %v91
    %v181 = vunpack.c.l.b16 %v92
    %v182 = vunpack.c.l.b16 %v93
    %v183 = vunpack.c.h.b16 %v93
    %v184 = vunpack.c.l.b16 %v94
    %v185 = vunpack.c.l.b16 %v95
    %v186 = vunpack.c.h.b16 %v95
    %v187 = vunpack.c.l.b16 %v96
    %v188 = vunpack.c.l.b16 %v97
    %v189 = vunpack.c.h.b16 %v97
    %v190 = vunpack.c.l.b16 %v98
    %v191 = vunpack.c.l.b16 %v99
    %v192 = vunpack.c.h.b16 %v99
    %v193 = vunpack.c.l.b16 %v100
    %v194 = vunpack.c.l.b16 %v101
    %v195 = vunpack.c.h.b16 %v101
    %v196 = vunpack.c.l.b16 %v102
    %v197 = vunpack.c.l.b16 %v103
    %v198 = vunpack.c.h.b16 %v103
    %v199 = vunpack.c.l.b16 %v104
    %v200 = vunpack.c.l.b16 %v105
    %v201 = vunpack.c.h.b16 %v105
    %v202 = vunpack.c.l.b16 %v106
    %v203 = vunpack.c.l.b16 %v107
    %v204 = vunpack.c.h.b16 %v107
    %v205 = vunpack.c.l.b16 %v108
    %v206 = vpack.c.b16 %v161, %v158
    %v207 = vpack.c.b16 %v162, %v159
    %v208 = vpack.c.b16 %v163, %v160
    %v209 = vpack.c.b16 %v167, %v164
    %v210 = vpack.c.b16 %v168, %v165
    %v211 = vpack.c.b16 %v169, %v166
    %v212 = vpack.c.b16 %v173, %v170
    %v213 = vpack.c.b16 %v174, %v171
    %v214 = vpack.c.b16 %v175, %v172
    %v215 = vpack.c.b16 %v179, %v176
    %v216 = vpack.c.b16 %v180, %v177
    %v217 = vpack.c.b16 %v181, %v178
    %v218 = vpack.c.b16 %v185, %v182
    %v219 = vpack.c.b16 %v186, %v183
    %v220 = vpack.c.b16 %v187, %v184
    %v221 = vpack.c.b16 %v191, %v188
    %v222 = vpack.c.b16 %v192, %v189
    %v223 = vpack.c.b16 %v193, %v190
    %v224 = vpack.c.b16 %v197, %v194
    %v225 = vpack.c.b16 %v198, %v195
    %v226 = vpack.c.b16 %v199, %v196
    %v227 = vpack.c.b16 %v203, %v200
    %v228 = vpack.c.b16 %v204, %v201
    %v229 = vpack.c.b16 %v205, %v202
    %254 = vmatprep.subr.bf16.mxu0 %v228
    %255 = vmatpush1.bf16.msra.mxu0 %v227
    %256 = vmatprep.subr.bf16.mxu0 %v225
    %257 = vmatpush1.bf16.msra.mxu0 %v224
    %258 = vmatprep.subr.bf16.mxu0 %v222
    %259 = vmatpush1.bf16.msra.mxu0 %v221
    %260 = vmatprep.subr.bf16.mxu0 %v219
    %261 = vmatpush1.bf16.msra.mxu0 %v218
    %262 = vmatprep.subr.bf16.mxu0 %v216
    %263 = vmatpush1.bf16.msra.mxu0 %v215
    %264 = vmatprep.subr.bf16.mxu0 %v213
    %265 = vmatpush1.bf16.msra.mxu0 %v212
    %266 = vmatprep.subr.bf16.mxu0 %v210
    %267 = vmatpush1.bf16.msra.mxu0 %v209
    %268 = vmatprep.subr.bf16.mxu0 %v207
    %269 = vmatpush1.bf16.msra.mxu0 %v206
    %270 = vmatprep.subr.bf16.mxu0 0
    %271 = vmatpush2.bf16.msra.mxu0 0
    %272 = vmatprep.subr.bf16.mxu0 0
    %273 = vmatpush2.bf16.msra.mxu0 0
    %274 = vmatprep.subr.bf16.mxu0 0
    %275 = vmatpush2.bf16.msra.mxu0 0
    %276 = vmatprep.subr.bf16.mxu0 0
    %277 = vmatpush2.bf16.msra.mxu0 0
    %278 = vmatprep.subr.bf16.mxu0 0
    %279 = vmatpush2.bf16.msra.mxu0 0
    %280 = vmatprep.subr.bf16.mxu0 0
    %281 = vmatpush2.bf16.msra.mxu0 0
    %282 = vmatprep.subr.bf16.mxu0 0
    %283 = vmatpush2.bf16.msra.mxu0 0
    %284 = vmatprep.subr.bf16.mxu0 0
    %285 = vmatpush2.bf16.msra.mxu0 0
    %286 = vmatprep.mubr.bf16.mxu0 0
    %287 = vmatmul.mubr.bf16.gmra.mxu0 %v109
    %v288 = vpop.f32.mrf.mxu0
    %v289 = vadd.f32 %v114, %v288
    %v290 = vpop.f32.mrf.mxu0
    %v291 = vadd.f32 %v118, %v290
    %v292 = vpop.f32.mrf.mxu0
    %v293 = vadd.f32 %v114, %v292
    %v294 = vpop.f32.mrf.mxu0
    %v295 = vadd.f32 %v118, %v294
    %296 = vdwg.mxu0
    %297 = vmatprep.subr.bf16.mxu0 0
    %298 = vmatpush1.bf16.msra.mxu0 %v229
    %299 = vmatprep.subr.bf16.mxu0 0
    %300 = vmatpush1.bf16.msra.mxu0 %v226
    %301 = vmatprep.subr.bf16.mxu0 0
    %302 = vmatpush1.bf16.msra.mxu0 %v223
    %303 = vmatprep.subr.bf16.mxu0 0
    %304 = vmatpush1.bf16.msra.mxu0 %v220
    %305 = vmatprep.subr.bf16.mxu0 0
    %306 = vmatpush1.bf16.msra.mxu0 %v217
    %307 = vmatprep.subr.bf16.mxu0 0
    %308 = vmatpush1.bf16.msra.mxu0 %v214
    %309 = vmatprep.subr.bf16.mxu0 0
    %310 = vmatpush1.bf16.msra.mxu0 %v211
    %311 = vmatprep.subr.bf16.mxu0 0
    %312 = vmatpush1.bf16.msra.mxu0 %v208
    %313 = vmatprep.subr.bf16.mxu0 0
    %314 = vmatpush2.bf16.msra.mxu0 0
    %315 = vmatprep.subr.bf16.mxu0 0
    %316 = vmatpush2.bf16.msra.mxu0 0
    %317 = vmatprep.subr.bf16.mxu0 0
    %318 = vmatpush2.bf16.msra.mxu0 0
    %319 = vmatprep.subr.bf16.mxu0 0
    %320 = vmatpush2.bf16.msra.mxu0 0
    %321 = vmatprep.subr.bf16.mxu0 0
    %322 = vmatpush2.bf16.msra.mxu0 0
    %323 = vmatprep.subr.bf16.mxu0 0
    %324 = vmatpush2.bf16.msra.mxu0 0
    %325 = vmatprep.subr.bf16.mxu0 0
    %326 = vmatpush2.bf16.msra.mxu0 0
    %327 = vmatprep.subr.bf16.mxu0 0
    %328 = vmatpush2.bf16.msra.mxu0 0
    %329 = vmatprep.mubr.bf16.mxu0 0
    %330 = vmatmul.mubr.bf16.gmra.mxu0 %v109
    %v331 = vpop.f32.mrf.mxu0
    %v332 = vadd.f32 %v122, %v331
    %v333 = vpop.f32.mrf.mxu0
    %v334 = vpop.f32.mrf.mxu0
    %v335 = vadd.f32 %v122, %v334
    %v336 = vpop.f32.mrf.mxu0
    %337 = vdwg.mxu0
    %v338 = vld [vmem:[%s2] sm:$0x1]
    %v340 = vlaneseq
    %v341 = vshrl.u32 %v340, 7
    %v342 = vsub.s32 0, %v341
    %v343 = vrot.slane %v338, %v342
    %v345 = vadd.f32 %v343, %v76
    %v346 = vmul.f32 %v289, 0.35355338
    %v347 = vpack.c.bf16 %v346, %v346
    %v348 = vpack.c.bf16 %v291, %v291
    %v349 = vpack.c.bf16 %v332, %v332
    %vm350 = vcmask 261120
    %v352 = vsel %vm350, %v347, 0
    %v355 = vsel %vm350, %v348, 0
    %357 = vmatprep.subr.bf16.mxu0 0
    %358 = vmatpush1.bf16.xpose.msra.mxu0 0
    %359 = vmatprep.subr.bf16.mxu0 0
    %360 = vmatpush1.bf16.xpose.msra.mxu0 0
    %361 = vmatprep.subr.bf16.mxu0 0
    %362 = vmatpush1.bf16.xpose.msra.mxu0 0
    %363 = vmatprep.subr.bf16.mxu0 0
    %364 = vmatpush1.bf16.xpose.msra.mxu0 0
    %365 = vmatprep.subr.bf16.mxu0 0
    %366 = vmatpush1.bf16.xpose.msra.mxu0 0
    %367 = vmatprep.subr.bf16.mxu0 0
    %368 = vmatpush1.bf16.xpose.msra.mxu0 0
    %369 = vmatprep.subr.bf16.mxu0 0
    %370 = vmatpush1.bf16.xpose.msra.mxu0 0
    %371 = vmatprep.subr.bf16.mxu0 0
    %372 = vmatpush1.bf16.xpose.msra.mxu0 %v355
    %373 = vmatprep.subr.bf16.mxu0 0
    %374 = vmatpush2.bf16.xpose.msra.mxu0 0
    %375 = vmatprep.subr.bf16.mxu0 0
    %376 = vmatpush2.bf16.xpose.msra.mxu0 0
    %377 = vmatprep.subr.bf16.mxu0 0
    %378 = vmatpush2.bf16.xpose.msra.mxu0 0
    %379 = vmatprep.subr.bf16.mxu0 0
    %380 = vmatpush2.bf16.xpose.msra.mxu0 0
    %381 = vmatprep.subr.bf16.mxu0 0
    %382 = vmatpush2.bf16.xpose.msra.mxu0 0
    %383 = vmatprep.subr.bf16.mxu0 0
    %384 = vmatpush2.bf16.xpose.msra.mxu0 0
    %385 = vmatprep.subr.bf16.mxu0 0
    %386 = vmatpush2.bf16.xpose.msra.mxu0 0
    %387 = vmatprep.subr.bf16.mxu0 0
    %388 = vmatpush2.bf16.xpose.msra.mxu0 0
    %389 = vmatprep.mubr.bf16.mxu0 0
    %390 = vmatmul.mubr.bf16.gmra.mxu0 %v352
    %v391 = vpop.f32.mrf.mxu0
    %v392 = vadd.f32 %v345, %v391
    %v393 = vpop.f32.mrf.mxu0
    %v394 = vpop.f32.mrf.mxu0
    %v395 = vpop.f32.mrf.mxu0
    %396 = vdwg.mxu0
    %vm397 = vcmask 64512
    %v398 = vsel %vm397, %v392, -inf
    %399 = vmax.xlane.f32.xlu0 %v398
    %v400 = vpop.xlane.xlu0 %399
    %v401 = vsub.f32 %v392, %v400
    %v402 = vmul.f32 %v401, 1.442695
    %v403 = vpow.pop %v402
    %v404 = vsel %vm397, %v403, 0.0
    %405 = vadd.xlane.f32.xlu0 %v404
    %v406 = vpop.xlane.xlu0 %405
    %v407 = vrcp.pop %v406
    %v408 = vmul.f32 %v403, %v407
    %v409 = vpack.c.bf16 %v408, %v408
    %v411 = vsel %vm397, %v409, 0
    %vm413 = vcmask 1043456
    %v415 = vsel %vm413, %v349, 0
    %417 = vmatprep.subr.bf16.mxu0 0
    %418 = vmatpush1.bf16.msra.mxu0 0
    %419 = vmatprep.subr.bf16.mxu0 0
    %420 = vmatpush1.bf16.msra.mxu0 0
    %421 = vmatprep.subr.bf16.mxu0 0
    %422 = vmatpush1.bf16.msra.mxu0 0
    %423 = vmatprep.subr.bf16.mxu0 0
    %424 = vmatpush1.bf16.msra.mxu0 0
    %425 = vmatprep.subr.bf16.mxu0 0
    %426 = vmatpush1.bf16.msra.mxu0 0
    %427 = vmatprep.subr.bf16.mxu0 0
    %428 = vmatpush1.bf16.msra.mxu0 0
    %429 = vmatprep.subr.bf16.mxu0 0
    %430 = vmatpush1.bf16.msra.mxu0 0
    %431 = vmatprep.subr.bf16.mxu0 0
    %432 = vmatpush1.bf16.msra.mxu0 %v415
    %433 = vmatprep.subr.bf16.mxu0 0
    %434 = vmatpush2.bf16.msra.mxu0 0
    %435 = vmatprep.subr.bf16.mxu0 0
    %436 = vmatpush2.bf16.msra.mxu0 0
    %437 = vmatprep.subr.bf16.mxu0 0
    %438 = vmatpush2.bf16.msra.mxu0 0
    %439 = vmatprep.subr.bf16.mxu0 0
    %440 = vmatpush2.bf16.msra.mxu0 0
    %441 = vmatprep.subr.bf16.mxu0 0
    %442 = vmatpush2.bf16.msra.mxu0 0
    %443 = vmatprep.subr.bf16.mxu0 0
    %444 = vmatpush2.bf16.msra.mxu0 0
    %445 = vmatprep.subr.bf16.mxu0 0
    %446 = vmatpush2.bf16.msra.mxu0 0
    %447 = vmatprep.subr.bf16.mxu0 0
    %448 = vmatpush2.bf16.msra.mxu0 0
    %449 = vmatprep.mubr.bf16.mxu0 0
    %450 = vmatmul.mubr.bf16.gmra.mxu0 %v411
    %v451 = vpop.f32.mrf.mxu0
    %v452 = vadd.f32 0.0, %v451
    %v453 = vpop.f32.mrf.mxu0
    %v454 = vpop.f32.mrf.mxu0
    %v455 = vpop.f32.mrf.mxu0
    %456 = vdwg.mxu0
    %457 = vst.msk [vmem:[#allocation2] sm:$0xff] %vm350, %v452
    %459 = vrot.lane.b32.xlu0 %v347, 96
    %v460 = vpop.permute.xlu0 %459
    %462 = vrot.lane.b32.xlu0 %v348, 96
    %v463 = vpop.permute.xlu0 %462
    %v465 = vsel %vm350, %v460, 0
    %v468 = vsel %vm350, %v463, 0
    %470 = vmatprep.subr.bf16.mxu0 0
    %471 = vmatpush1.bf16.xpose.msra.mxu0 0
    %472 = vmatprep.subr.bf16.mxu0 0
    %473 = vmatpush1.bf16.xpose.msra.mxu0 0
    %474 = vmatprep.subr.bf16.mxu0 0
    %475 = vmatpush1.bf16.xpose.msra.mxu0 0
    %476 = vmatprep.subr.bf16.mxu0 0
    %477 = vmatpush1.bf16.xpose.msra.mxu0 0
    %478 = vmatprep.subr.bf16.mxu0 0
    %479 = vmatpush1.bf16.xpose.msra.mxu0 0
    %480 = vmatprep.subr.bf16.mxu0 0
    %481 = vmatpush1.bf16.xpose.msra.mxu0 0
    %482 = vmatprep.subr.bf16.mxu0 0
    %483 = vmatpush1.bf16.xpose.msra.mxu0 0
    %484 = vmatprep.subr.bf16.mxu0 0
    %485 = vmatpush1.bf16.xpose.msra.mxu0 %v468
    %486 = vmatprep.subr.bf16.mxu0 0
    %487 = vmatpush2.bf16.xpose.msra.mxu0 0
    %488 = vmatprep.subr.bf16.mxu0 0
    %489 = vmatpush2.bf16.xpose.msra.mxu0 0
    %490 = vmatprep.subr.bf16.mxu0 0
    %491 = vmatpush2.bf16.xpose.msra.mxu0 0
    %492 = vmatprep.subr.bf16.mxu0 0
    %493 = vmatpush2.bf16.xpose.msra.mxu0 0
    %494 = vmatprep.subr.bf16.mxu0 0
    %495 = vmatpush2.bf16.xpose.msra.mxu0 0
    %496 = vmatprep.subr.bf16.mxu0 0
    %497 = vmatpush2.bf16.xpose.msra.mxu0 0
    %498 = vmatprep.subr.bf16.mxu0 0
    %499 = vmatpush2.bf16.xpose.msra.mxu0 0
    %500 = vmatprep.subr.bf16.mxu0 0
    %501 = vmatpush2.bf16.xpose.msra.mxu0 0
    %502 = vmatprep.mubr.bf16.mxu0 0
    %503 = vmatmul.mubr.bf16.gmra.mxu0 %v465
    %v504 = vpop.f32.mrf.mxu0
    %v505 = vadd.f32 %v345, %v504
    %v506 = vpop.f32.mrf.mxu0
    %v507 = vpop.f32.mrf.mxu0
    %v508 = vpop.f32.mrf.mxu0
    %509 = vdwg.mxu0
    %v510 = vsel %vm397, %v505, -inf
    %511 = vmax.xlane.f32.xlu0 %v510
    %v512 = vpop.xlane.xlu0 %511
    %v513 = vsub.f32 %v505, %v512
    %v514 = vmul.f32 %v513, 1.442695
    %v515 = vpow.pop %v514
    %v516 = vsel %vm397, %v515, 0.0
    %517 = vadd.xlane.f32.xlu0 %v516
    %v518 = vpop.xlane.xlu0 %517
    %v519 = vrcp.pop %v518
    %v520 = vmul.f32 %v515, %v519
    %v521 = vpack.c.bf16 %v520, %v520
    %523 = vrot.lane.b32.xlu0 %v349, 96
    %v524 = vpop.permute.xlu0 %523
    %v526 = vsel %vm397, %v521, 0
    %v529 = vsel %vm413, %v524, 0
    %531 = vmatprep.subr.bf16.mxu0 0
    %532 = vmatpush1.bf16.msra.mxu0 0
    %533 = vmatprep.subr.bf16.mxu0 0
    %534 = vmatpush1.bf16.msra.mxu0 0
    %535 = vmatprep.subr.bf16.mxu0 0
    %536 = vmatpush1.bf16.msra.mxu0 0
    %537 = vmatprep.subr.bf16.mxu0 0
    %538 = vmatpush1.bf16.msra.mxu0 0
    %539 = vmatprep.subr.bf16.mxu0 0
    %540 = vmatpush1.bf16.msra.mxu0 0
    %541 = vmatprep.subr.bf16.mxu0 0
    %542 = vmatpush1.bf16.msra.mxu0 0
    %543 = vmatprep.subr.bf16.mxu0 0
    %544 = vmatpush1.bf16.msra.mxu0 0
    %545 = vmatprep.subr.bf16.mxu0 0
    %546 = vmatpush1.bf16.msra.mxu0 %v529
    %547 = vmatprep.subr.bf16.mxu0 0
    %548 = vmatpush2.bf16.msra.mxu0 0
    %549 = vmatprep.subr.bf16.mxu0 0
    %550 = vmatpush2.bf16.msra.mxu0 0
    %551 = vmatprep.subr.bf16.mxu0 0
    %552 = vmatpush2.bf16.msra.mxu0 0
    %553 = vmatprep.subr.bf16.mxu0 0
    %554 = vmatpush2.bf16.msra.mxu0 0
    %555 = vmatprep.subr.bf16.mxu0 0
    %556 = vmatpush2.bf16.msra.mxu0 0
    %557 = vmatprep.subr.bf16.mxu0 0
    %558 = vmatpush2.bf16.msra.mxu0 0
    %559 = vmatprep.subr.bf16.mxu0 0
    %560 = vmatpush2.bf16.msra.mxu0 0
    %561 = vmatprep.subr.bf16.mxu0 0
    %562 = vmatpush2.bf16.msra.mxu0 0
    %563 = vmatprep.mubr.bf16.mxu0 0
    %564 = vmatmul.mubr.bf16.gmra.mxu0 %v526
    %v565 = vpop.f32.mrf.mxu0
    %v566 = vadd.f32 0.0, %v565
    %v567 = vpop.f32.mrf.mxu0
    %v568 = vpop.f32.mrf.mxu0
    %v569 = vpop.f32.mrf.mxu0
    %570 = vdwg.mxu0
    %572 = vrot.lane.b32.xlu0 %v566, 32
    %v573 = vpop.permute.xlu0 %572
    %vm575 = vcmask 523520
    %576 = vst.msk [vmem:[#allocation2] sm:$0xff] %vm575, %v573
    %577 = vrot.lane.b32.xlu0 %v347, 64
    %v578 = vpop.permute.xlu0 %577
    %579 = vrot.lane.b32.xlu0 %v348, 64
    %v580 = vpop.permute.xlu0 %579
    %v582 = vsel %vm350, %v578, 0
    %v585 = vsel %vm350, %v580, 0
    %587 = vmatprep.subr.bf16.mxu0 0
    %588 = vmatpush1.bf16.xpose.msra.mxu0 0
    %589 = vmatprep.subr.bf16.mxu0 0
    %590 = vmatpush1.bf16.xpose.msra.mxu0 0
    %591 = vmatprep.subr.bf16.mxu0 0
    %592 = vmatpush1.bf16.xpose.msra.mxu0 0
    %593 = vmatprep.subr.bf16.mxu0 0
    %594 = vmatpush1.bf16.xpose.msra.mxu0 0
    %595 = vmatprep.subr.bf16.mxu0 0
    %596 = vmatpush1.bf16.xpose.msra.mxu0 0
    %597 = vmatprep.subr.bf16.mxu0 0
    %598 = vmatpush1.bf16.xpose.msra.mxu0 0
    %599 = vmatprep.subr.bf16.mxu0 0
    %600 = vmatpush1.bf16.xpose.msra.mxu0 0
    %601 = vmatprep.subr.bf16.mxu0 0
    %602 = vmatpush1.bf16.xpose.msra.mxu0 %v585
    %603 = vmatprep.subr.bf16.mxu0 0
    %604 = vmatpush2.bf16.xpose.msra.mxu0 0
    %605 = vmatprep.subr.bf16.mxu0 0
    %606 = vmatpush2.bf16.xpose.msra.mxu0 0
    %607 = vmatprep.subr.bf16.mxu0 0
    %608 = vmatpush2.bf16.xpose.msra.mxu0 0
    %609 = vmatprep.subr.bf16.mxu0 0
    %610 = vmatpush2.bf16.xpose.msra.mxu0 0
    %611 = vmatprep.subr.bf16.mxu0 0
    %612 = vmatpush2.bf16.xpose.msra.mxu0 0
    %613 = vmatprep.subr.bf16.mxu0 0
    %614 = vmatpush2.bf16.xpose.msra.mxu0 0
    %615 = vmatprep.subr.bf16.mxu0 0
    %616 = vmatpush2.bf16.xpose.msra.mxu0 0
    %617 = vmatprep.subr.bf16.mxu0 0
    %618 = vmatpush2.bf16.xpose.msra.mxu0 0
    %619 = vmatprep.mubr.bf16.mxu0 0
    %620 = vmatmul.mubr.bf16.gmra.mxu0 %v582
    %v621 = vpop.f32.mrf.mxu0
    %v622 = vadd.f32 %v345, %v621
    %v623 = vpop.f32.mrf.mxu0
    %v624 = vpop.f32.mrf.mxu0
    %v625 = vpop.f32.mrf.mxu0
    %626 = vdwg.mxu0
    %v627 = vsel %vm397, %v622, -inf
    %628 = vmax.xlane.f32.xlu0 %v627
    %v629 = vpop.xlane.xlu0 %628
    %v630 = vsub.f32 %v622, %v629
    %v631 = vmul.f32 %v630, 1.442695
    %v632 = vpow.pop %v631
    %v633 = vsel %vm397, %v632, 0.0
    %634 = vadd.xlane.f32.xlu0 %v633
    %v635 = vpop.xlane.xlu0 %634
    %v636 = vrcp.pop %v635
    %v637 = vmul.f32 %v632, %v636
    %v638 = vpack.c.bf16 %v637, %v637
    %639 = vrot.lane.b32.xlu0 %v349, 64
    %v640 = vpop.permute.xlu0 %639
    %v642 = vsel %vm397, %v638, 0
    %v645 = vsel %vm413, %v640, 0
    %647 = vmatprep.subr.bf16.mxu0 0
    %648 = vmatpush1.bf16.msra.mxu0 0
    %649 = vmatprep.subr.bf16.mxu0 0
    %650 = vmatpush1.bf16.msra.mxu0 0
    %651 = vmatprep.subr.bf16.mxu0 0
    %652 = vmatpush1.bf16.msra.mxu0 0
    %653 = vmatprep.subr.bf16.mxu0 0
    %654 = vmatpush1.bf16.msra.mxu0 0
    %655 = vmatprep.subr.bf16.mxu0 0
    %656 = vmatpush1.bf16.msra.mxu0 0
    %657 = vmatprep.subr.bf16.mxu0 0
    %658 = vmatpush1.bf16.msra.mxu0 0
    %659 = vmatprep.subr.bf16.mxu0 0
    %660 = vmatpush1.bf16.msra.mxu0 0
    %661 = vmatprep.subr.bf16.mxu0 0
    %662 = vmatpush1.bf16.msra.mxu0 %v645
    %663 = vmatprep.subr.bf16.mxu0 0
    %664 = vmatpush2.bf16.msra.mxu0 0
    %665 = vmatprep.subr.bf16.mxu0 0
    %666 = vmatpush2.bf16.msra.mxu0 0
    %667 = vmatprep.subr.bf16.mxu0 0
    %668 = vmatpush2.bf16.msra.mxu0 0
    %669 = vmatprep.subr.bf16.mxu0 0
    %670 = vmatpush2.bf16.msra.mxu0 0
    %671 = vmatprep.subr.bf16.mxu0 0
    %672 = vmatpush2.bf16.msra.mxu0 0
    %673 = vmatprep.subr.bf16.mxu0 0
    %674 = vmatpush2.bf16.msra.mxu0 0
    %675 = vmatprep.subr.bf16.mxu0 0
    %676 = vmatpush2.bf16.msra.mxu0 0
    %677 = vmatprep.subr.bf16.mxu0 0
    %678 = vmatpush2.bf16.msra.mxu0 0
    %679 = vmatprep.mubr.bf16.mxu0 0
    %680 = vmatmul.mubr.bf16.gmra.mxu0 %v642
    %v681 = vpop.f32.mrf.mxu0
    %v682 = vadd.f32 0.0, %v681
    %v683 = vpop.f32.mrf.mxu0
    %v684 = vpop.f32.mrf.mxu0
    %v685 = vpop.f32.mrf.mxu0
    %686 = vdwg.mxu0
    %688 = vrot.lane.b32.xlu0 %v682, 64
    %v689 = vpop.permute.xlu0 %688
    %vm691 = vcmask 785920
    %692 = vst.msk [vmem:[#allocation2] sm:$0xff] %vm691, %v689
    %693 = vrot.lane.b32.xlu0 %v347, 32
    %v694 = vpop.permute.xlu0 %693
    %695 = vrot.lane.b32.xlu0 %v348, 32
    %v696 = vpop.permute.xlu0 %695
    %v698 = vsel %vm350, %v694, 0
    %v701 = vsel %vm350, %v696, 0
    %703 = vmatprep.subr.bf16.mxu0 0
    %704 = vmatpush1.bf16.xpose.msra.mxu0 0
    %705 = vmatprep.subr.bf16.mxu0 0
    %706 = vmatpush1.bf16.xpose.msra.mxu0 0
    %707 = vmatprep.subr.bf16.mxu0 0
    %708 = vmatpush1.bf16.xpose.msra.mxu0 0
    %709 = vmatprep.subr.bf16.mxu0 0
    %710 = vmatpush1.bf16.xpose.msra.mxu0 0
    %711 = vmatprep.subr.bf16.mxu0 0
    %712 = vmatpush1.bf16.xpose.msra.mxu0 0
    %713 = vmatprep.subr.bf16.mxu0 0
    %714 = vmatpush1.bf16.xpose.msra.mxu0 0
    %715 = vmatprep.subr.bf16.mxu0 0
    %716 = vmatpush1.bf16.xpose.msra.mxu0 0
    %717 = vmatprep.subr.bf16.mxu0 0
    %718 = vmatpush1.bf16.xpose.msra.mxu0 %v701
    %719 = vmatprep.subr.bf16.mxu0 0
    %720 = vmatpush2.bf16.xpose.msra.mxu0 0
    %721 = vmatprep.subr.bf16.mxu0 0
    %722 = vmatpush2.bf16.xpose.msra.mxu0 0
    %723 = vmatprep.subr.bf16.mxu0 0
    %724 = vmatpush2.bf16.xpose.msra.mxu0 0
    %725 = vmatprep.subr.bf16.mxu0 0
    %726 = vmatpush2.bf16.xpose.msra.mxu0 0
    %727 = vmatprep.subr.bf16.mxu0 0
    %728 = vmatpush2.bf16.xpose.msra.mxu0 0
    %729 = vmatprep.subr.bf16.mxu0 0
    %730 = vmatpush2.bf16.xpose.msra.mxu0 0
    %731 = vmatprep.subr.bf16.mxu0 0
    %732 = vmatpush2.bf16.xpose.msra.mxu0 0
    %733 = vmatprep.subr.bf16.mxu0 0
    %734 = vmatpush2.bf16.xpose.msra.mxu0 0
    %735 = vmatprep.mubr.bf16.mxu0 0
    %736 = vmatmul.mubr.bf16.gmra.mxu0 %v698
    %v737 = vpop.f32.mrf.mxu0
    %v738 = vadd.f32 %v345, %v737
    %v739 = vpop.f32.mrf.mxu0
    %v740 = vpop.f32.mrf.mxu0
    %v741 = vpop.f32.mrf.mxu0
    %742 = vdwg.mxu0
    %v743 = vsel %vm397, %v738, -inf
    %744 = vmax.xlane.f32.xlu0 %v743
    %v745 = vpop.xlane.xlu0 %744
    %v746 = vsub.f32 %v738, %v745
    %v747 = vmul.f32 %v746, 1.442695
    %v748 = vpow.pop %v747
    %v749 = vsel %vm397, %v748, 0.0
    %750 = vadd.xlane.f32.xlu0 %v749
    %v751 = vpop.xlane.xlu0 %750
    %v752 = vrcp.pop %v751
    %v753 = vmul.f32 %v748, %v752
    %v754 = vpack.c.bf16 %v753, %v753
    %755 = vrot.lane.b32.xlu0 %v349, 32
    %v756 = vpop.permute.xlu0 %755
    %v758 = vsel %vm397, %v754, 0
    %v761 = vsel %vm413, %v756, 0
    %763 = vmatprep.subr.bf16.mxu0 0
    %764 = vmatpush1.bf16.msra.mxu0 0
    %765 = vmatprep.subr.bf16.mxu0 0
    %766 = vmatpush1.bf16.msra.mxu0 0
    %767 = vmatprep.subr.bf16.mxu0 0
    %768 = vmatpush1.bf16.msra.mxu0 0
    %769 = vmatprep.subr.bf16.mxu0 0
    %770 = vmatpush1.bf16.msra.mxu0 0
    %771 = vmatprep.subr.bf16.mxu0 0
    %772 = vmatpush1.bf16.msra.mxu0 0
    %773 = vmatprep.subr.bf16.mxu0 0
    %774 = vmatpush1.bf16.msra.mxu0 0
    %775 = vmatprep.subr.bf16.mxu0 0
    %776 = vmatpush1.bf16.msra.mxu0 0
    %777 = vmatprep.subr.bf16.mxu0 0
    %778 = vmatpush1.bf16.msra.mxu0 %v761
    %779 = vmatprep.subr.bf16.mxu0 0
    %780 = vmatpush2.bf16.msra.mxu0 0
    %781 = vmatprep.subr.bf16.mxu0 0
    %782 = vmatpush2.bf16.msra.mxu0 0
    %783 = vmatprep.subr.bf16.mxu0 0
    %784 = vmatpush2.bf16.msra.mxu0 0
    %785 = vmatprep.subr.bf16.mxu0 0
    %786 = vmatpush2.bf16.msra.mxu0 0
    %787 = vmatprep.subr.bf16.mxu0 0
    %788 = vmatpush2.bf16.msra.mxu0 0
    %789 = vmatprep.subr.bf16.mxu0 0
    %790 = vmatpush2.bf16.msra.mxu0 0
    %791 = vmatprep.subr.bf16.mxu0 0
    %792 = vmatpush2.bf16.msra.mxu0 0
    %793 = vmatprep.subr.bf16.mxu0 0
    %794 = vmatpush2.bf16.msra.mxu0 0
    %795 = vmatprep.mubr.bf16.mxu0 0
    %796 = vmatmul.mubr.bf16.gmra.mxu0 %v758
    %v797 = vpop.f32.mrf.mxu0
    %v798 = vadd.f32 0.0, %v797
    %v799 = vpop.f32.mrf.mxu0
    %v800 = vpop.f32.mrf.mxu0
    %v801 = vpop.f32.mrf.mxu0
    %802 = vdwg.mxu0
    %804 = vrot.lane.b32.xlu0 %v798, 96
    %v805 = vpop.permute.xlu0 %804
    %vm807 = vcmask 1048320
    %808 = vst.msk [vmem:[#allocation2] sm:$0xff] %vm807, %v805
    %s809 = scalar_lea.vmem %s2, 1
    %v810 = vld [vmem:[%s809] sm:$0x1]
    %v812 = vlaneseq
    %v813 = vshrl.u32 %v812, 7
    %v814 = vsub.s32 0, %v813
    %v815 = vrot.slane %v810, %v814
    %v817 = vadd.f32 %v815, %v76
    %v818 = vmul.f32 %v293, 0.35355338
    %v819 = vpack.c.bf16 %v818, %v818
    %v820 = vpack.c.bf16 %v295, %v295
    %v821 = vpack.c.bf16 %v335, %v335
    %v823 = vsel %vm350, %v819, 0
    %v826 = vsel %vm350, %v820, 0
    %828 = vmatprep.subr.bf16.mxu0 0
    %829 = vmatpush1.bf16.xpose.msra.mxu0 0
    %830 = vmatprep.subr.bf16.mxu0 0
    %831 = vmatpush1.bf16.xpose.msra.mxu0 0
    %832 = vmatprep.subr.bf16.mxu0 0
    %833 = vmatpush1.bf16.xpose.msra.mxu0 0
    %834 = vmatprep.subr.bf16.mxu0 0
    %835 = vmatpush1.bf16.xpose.msra.mxu0 0
    %836 = vmatprep.subr.bf16.mxu0 0
    %837 = vmatpush1.bf16.xpose.msra.mxu0 0
    %838 = vmatprep.subr.bf16.mxu0 0
    %839 = vmatpush1.bf16.xpose.msra.mxu0 0
    %840 = vmatprep.subr.bf16.mxu0 0
    %841 = vmatpush1.bf16.xpose.msra.mxu0 0
    %842 = vmatprep.subr.bf16.mxu0 0
    %843 = vmatpush1.bf16.xpose.msra.mxu0 %v826
    %844 = vmatprep.subr.bf16.mxu0 0
    %845 = vmatpush2.bf16.xpose.msra.mxu0 0
    %846 = vmatprep.subr.bf16.mxu0 0
    %847 = vmatpush2.bf16.xpose.msra.mxu0 0
    %848 = vmatprep.subr.bf16.mxu0 0
    %849 = vmatpush2.bf16.xpose.msra.mxu0 0
    %850 = vmatprep.subr.bf16.mxu0 0
    %851 = vmatpush2.bf16.xpose.msra.mxu0 0
    %852 = vmatprep.subr.bf16.mxu0 0
    %853 = vmatpush2.bf16.xpose.msra.mxu0 0
    %854 = vmatprep.subr.bf16.mxu0 0
    %855 = vmatpush2.bf16.xpose.msra.mxu0 0
    %856 = vmatprep.subr.bf16.mxu0 0
    %857 = vmatpush2.bf16.xpose.msra.mxu0 0
    %858 = vmatprep.subr.bf16.mxu0 0
    %859 = vmatpush2.bf16.xpose.msra.mxu0 0
    %860 = vmatprep.mubr.bf16.mxu0 0
    %861 = vmatmul.mubr.bf16.gmra.mxu0 %v823
    %v862 = vpop.f32.mrf.mxu0
    %v863 = vadd.f32 %v817, %v862
    %v864 = vpop.f32.mrf.mxu0
    %v865 = vpop.f32.mrf.mxu0
    %v866 = vpop.f32.mrf.mxu0
    %867 = vdwg.mxu0
    %v868 = vsel %vm397, %v863, -inf
    %869 = vmax.xlane.f32.xlu0 %v868
    %v870 = vpop.xlane.xlu0 %869
    %v871 = vsub.f32 %v863, %v870
    %v872 = vmul.f32 %v871, 1.442695
    %v873 = vpow.pop %v872
    %v874 = vsel %vm397, %v873, 0.0
    %875 = vadd.xlane.f32.xlu0 %v874
    %v876 = vpop.xlane.xlu0 %875
    %v877 = vrcp.pop %v876
    %v878 = vmul.f32 %v873, %v877
    %v879 = vpack.c.bf16 %v878, %v878
    %v881 = vsel %vm397, %v879, 0
    %v884 = vsel %vm413, %v821, 0
    %886 = vmatprep.subr.bf16.mxu0 0
    %887 = vmatpush1.bf16.msra.mxu0 0
    %888 = vmatprep.subr.bf16.mxu0 0
    %889 = vmatpush1.bf16.msra.mxu0 0
    %890 = vmatprep.subr.bf16.mxu0 0
    %891 = vmatpush1.bf16.msra.mxu0 0
    %892 = vmatprep.subr.bf16.mxu0 0
    %893 = vmatpush1.bf16.msra.mxu0 0
    %894 = vmatprep.subr.bf16.mxu0 0
    %895 = vmatpush1.bf16.msra.mxu0 0
    %896 = vmatprep.subr.bf16.mxu0 0
    %897 = vmatpush1.bf16.msra.mxu0 0
    %898 = vmatprep.subr.bf16.mxu0 0
    %899 = vmatpush1.bf16.msra.mxu0 0
    %900 = vmatprep.subr.bf16.mxu0 0
    %901 = vmatpush1.bf16.msra.mxu0 %v884
    %902 = vmatprep.subr.bf16.mxu0 0
    %903 = vmatpush2.bf16.msra.mxu0 0
    %904 = vmatprep.subr.bf16.mxu0 0
    %905 = vmatpush2.bf16.msra.mxu0 0
    %906 = vmatprep.subr.bf16.mxu0 0
    %907 = vmatpush2.bf16.msra.mxu0 0
    %908 = vmatprep.subr.bf16.mxu0 0
    %909 = vmatpush2.bf16.msra.mxu0 0
    %910 = vmatprep.subr.bf16.mxu0 0
    %911 = vmatpush2.bf16.msra.mxu0 0
    %912 = vmatprep.subr.bf16.mxu0 0
    %913 = vmatpush2.bf16.msra.mxu0 0
    %914 = vmatprep.subr.bf16.mxu0 0
    %915 = vmatpush2.bf16.msra.mxu0 0
    %916 = vmatprep.subr.bf16.mxu0 0
    %917 = vmatpush2.bf16.msra.mxu0 0
    %918 = vmatprep.mubr.bf16.mxu0 0
    %919 = vmatmul.mubr.bf16.gmra.mxu0 %v881
    %v920 = vpop.f32.mrf.mxu0
    %v921 = vadd.f32 0.0, %v920
    %v922 = vpop.f32.mrf.mxu0
    %v923 = vpop.f32.mrf.mxu0
    %v924 = vpop.f32.mrf.mxu0
    %925 = vdwg.mxu0
    %926 = vst.msk [vmem:[#allocation2 + $0x8] sm:$0xff] %vm350, %v921
    %928 = vrot.lane.b32.xlu0 %v819, 96
    %v929 = vpop.permute.xlu0 %928
    %931 = vrot.lane.b32.xlu0 %v820, 96
    %v932 = vpop.permute.xlu0 %931
    %v934 = vsel %vm350, %v929, 0
    %v937 = vsel %vm350, %v932, 0
    %939 = vmatprep.subr.bf16.mxu0 0
    %940 = vmatpush1.bf16.xpose.msra.mxu0 0
    %941 = vmatprep.subr.bf16.mxu0 0
    %942 = vmatpush1.bf16.xpose.msra.mxu0 0
    %943 = vmatprep.subr.bf16.mxu0 0
    %944 = vmatpush1.bf16.xpose.msra.mxu0 0
    %945 = vmatprep.subr.bf16.mxu0 0
    %946 = vmatpush1.bf16.xpose.msra.mxu0 0
    %947 = vmatprep.subr.bf16.mxu0 0
    %948 = vmatpush1.bf16.xpose.msra.mxu0 0
    %949 = vmatprep.subr.bf16.mxu0 0
    %950 = vmatpush1.bf16.xpose.msra.mxu0 0
    %951 = vmatprep.subr.bf16.mxu0 0
    %952 = vmatpush1.bf16.xpose.msra.mxu0 0
    %953 = vmatprep.subr.bf16.mxu0 0
    %954 = vmatpush1.bf16.xpose.msra.mxu0 %v937
    %955 = vmatprep.subr.bf16.mxu0 0
    %956 = vmatpush2.bf16.xpose.msra.mxu0 0
    %957 = vmatprep.subr.bf16.mxu0 0
    %958 = vmatpush2.bf16.xpose.msra.mxu0 0
    %959 = vmatprep.subr.bf16.mxu0 0
    %960 = vmatpush2.bf16.xpose.msra.mxu0 0
    %961 = vmatprep.subr.bf16.mxu0 0
    %962 = vmatpush2.bf16.xpose.msra.mxu0 0
    %963 = vmatprep.subr.bf16.mxu0 0
    %964 = vmatpush2.bf16.xpose.msra.mxu0 0
    %965 = vmatprep.subr.bf16.mxu0 0
    %966 = vmatpush2.bf16.xpose.msra.mxu0 0
    %967 = vmatprep.subr.bf16.mxu0 0
    %968 = vmatpush2.bf16.xpose.msra.mxu0 0
    %969 = vmatprep.subr.bf16.mxu0 0
    %970 = vmatpush2.bf16.xpose.msra.mxu0 0
    %971 = vmatprep.mubr.bf16.mxu0 0
    %972 = vmatmul.mubr.bf16.gmra.mxu0 %v934
    %v973 = vpop.f32.mrf.mxu0
    %v974 = vadd.f32 %v817, %v973
    %v975 = vpop.f32.mrf.mxu0
    %v976 = vpop.f32.mrf.mxu0
    %v977 = vpop.f32.mrf.mxu0
    %978 = vdwg.mxu0
    %v979 = vsel %vm397, %v974, -inf
    %980 = vmax.xlane.f32.xlu0 %v979
    %v981 = vpop.xlane.xlu0 %980
    %v982 = vsub.f32 %v974, %v981
    %v983 = vmul.f32 %v982, 1.442695
    %v984 = vpow.pop %v983
    %v985 = vsel %vm397, %v984, 0.0
    %986 = vadd.xlane.f32.xlu0 %v985
    %v987 = vpop.xlane.xlu0 %986
    %v988 = vrcp.pop %v987
    %v989 = vmul.f32 %v984, %v988
    %v990 = vpack.c.bf16 %v989, %v989
    %992 = vrot.lane.b32.xlu0 %v821, 96
    %v993 = vpop.permute.xlu0 %992
    %v995 = vsel %vm397, %v990, 0
    %v998 = vsel %vm413, %v993, 0
    %1000 = vmatprep.subr.bf16.mxu0 0
    %1001 = vmatpush1.bf16.msra.mxu0 0
    %1002 = vmatprep.subr.bf16.mxu0 0
    %1003 = vmatpush1.bf16.msra.mxu0 0
    %1004 = vmatprep.subr.bf16.mxu0 0
    %1005 = vmatpush1.bf16.msra.mxu0 0
    %1006 = vmatprep.subr.bf16.mxu0 0
    %1007 = vmatpush1.bf16.msra.mxu0 0
    %1008 = vmatprep.subr.bf16.mxu0 0
    %1009 = vmatpush1.bf16.msra.mxu0 0
    %1010 = vmatprep.subr.bf16.mxu0 0
    %1011 = vmatpush1.bf16.msra.mxu0 0
    %1012 = vmatprep.subr.bf16.mxu0 0
    %1013 = vmatpush1.bf16.msra.mxu0 0
    %1014 = vmatprep.subr.bf16.mxu0 0
    %1015 = vmatpush1.bf16.msra.mxu0 %v998
    %1016 = vmatprep.subr.bf16.mxu0 0
    %1017 = vmatpush2.bf16.msra.mxu0 0
    %1018 = vmatprep.subr.bf16.mxu0 0
    %1019 = vmatpush2.bf16.msra.mxu0 0
    %1020 = vmatprep.subr.bf16.mxu0 0
    %1021 = vmatpush2.bf16.msra.mxu0 0
    %1022 = vmatprep.subr.bf16.mxu0 0
    %1023 = vmatpush2.bf16.msra.mxu0 0
    %1024 = vmatprep.subr.bf16.mxu0 0
    %1025 = vmatpush2.bf16.msra.mxu0 0
    %1026 = vmatprep.subr.bf16.mxu0 0
    %1027 = vmatpush2.bf16.msra.mxu0 0
    %1028 = vmatprep.subr.bf16.mxu0 0
    %1029 = vmatpush2.bf16.msra.mxu0 0
    %1030 = vmatprep.subr.bf16.mxu0 0
    %1031 = vmatpush2.bf16.msra.mxu0 0
    %1032 = vmatprep.mubr.bf16.mxu0 0
    %1033 = vmatmul.mubr.bf16.gmra.mxu0 %v995
    %v1034 = vpop.f32.mrf.mxu0
    %v1035 = vadd.f32 0.0, %v1034
    %v1036 = vpop.f32.mrf.mxu0
    %v1037 = vpop.f32.mrf.mxu0
    %v1038 = vpop.f32.mrf.mxu0
    %1039 = vdwg.mxu0
    %1041 = vrot.lane.b32.xlu0 %v1035, 32
    %v1042 = vpop.permute.xlu0 %1041
    %1044 = vst.msk [vmem:[#allocation2 + $0x8] sm:$0xff] %vm575, %v1042
    %1045 = vrot.lane.b32.xlu0 %v819, 64
    %v1046 = vpop.permute.xlu0 %1045
    %1047 = vrot.lane.b32.xlu0 %v820, 64
    %v1048 = vpop.permute.xlu0 %1047
    %v1050 = vsel %vm350, %v1046, 0
    %v1053 = vsel %vm350, %v1048, 0
    %1055 = vmatprep.subr.bf16.mxu0 0
    %1056 = vmatpush1.bf16.xpose.msra.mxu0 0
    %1057 = vmatprep.subr.bf16.mxu0 0
    %1058 = vmatpush1.bf16.xpose.msra.mxu0 0
    %1059 = vmatprep.subr.bf16.mxu0 0
    %1060 = vmatpush1.bf16.xpose.msra.mxu0 0
    %1061 = vmatprep.subr.bf16.mxu0 0
    %1062 = vmatpush1.bf16.xpose.msra.mxu0 0
    %1063 = vmatprep.subr.bf16.mxu0 0
    %1064 = vmatpush1.bf16.xpose.msra.mxu0 0
    %1065 = vmatprep.subr.bf16.mxu0 0
    %1066 = vmatpush1.bf16.xpose.msra.mxu0 0
    %1067 = vmatprep.subr.bf16.mxu0 0
    %1068 = vmatpush1.bf16.xpose.msra.mxu0 0
    %1069 = vmatprep.subr.bf16.mxu0 0
    %1070 = vmatpush1.bf16.xpose.msra.mxu0 %v1053
    %1071 = vmatprep.subr.bf16.mxu0 0
    %1072 = vmatpush2.bf16.xpose.msra.mxu0 0
    %1073 = vmatprep.subr.bf16.mxu0 0
    %1074 = vmatpush2.bf16.xpose.msra.mxu0 0
    %1075 = vmatprep.subr.bf16.mxu0 0
    %1076 = vmatpush2.bf16.xpose.msra.mxu0 0
    %1077 = vmatprep.subr.bf16.mxu0 0
    %1078 = vmatpush2.bf16.xpose.msra.mxu0 0
    %1079 = vmatprep.subr.bf16.mxu0 0
    %1080 = vmatpush2.bf16.xpose.msra.mxu0 0
    %1081 = vmatprep.subr.bf16.mxu0 0
    %1082 = vmatpush2.bf16.xpose.msra.mxu0 0
    %1083 = vmatprep.subr.bf16.mxu0 0
    %1084 = vmatpush2.bf16.xpose.msra.mxu0 0
    %1085 = vmatprep.subr.bf16.mxu0 0
    %1086 = vmatpush2.bf16.xpose.msra.mxu0 0
    %1087 = vmatprep.mubr.bf16.mxu0 0
    %1088 = vmatmul.mubr.bf16.gmra.mxu0 %v1050
    %v1089 = vpop.f32.mrf.mxu0
    %v1090 = vadd.f32 %v817, %v1089
    %v1091 = vpop.f32.mrf.mxu0
    %v1092 = vpop.f32.mrf.mxu0
    %v1093 = vpop.f32.mrf.mxu0
    %1094 = vdwg.mxu0
    %v1095 = vsel %vm397, %v1090, -inf
    %1096 = vmax.xlane.f32.xlu0 %v1095
    %v1097 = vpop.xlane.xlu0 %1096
    %v1098 = vsub.f32 %v1090, %v1097
    %v1099 = vmul.f32 %v1098, 1.442695
    %v1100 = vpow.pop %v1099
    %v1101 = vsel %vm397, %v1100, 0.0
    %1102 = vadd.xlane.f32.xlu0 %v1101
    %v1103 = vpop.xlane.xlu0 %1102
    %v1104 = vrcp.pop %v1103
    %v1105 = vmul.f32 %v1100, %v1104
    %v1106 = vpack.c.bf16 %v1105, %v1105
    %1107 = vrot.lane.b32.xlu0 %v821, 64
    %v1108 = vpop.permute.xlu0 %1107
    %v1110 = vsel %vm397, %v1106, 0
    %v1113 = vsel %vm413, %v1108, 0
    %1115 = vmatprep.subr.bf16.mxu0 0
    %1116 = vmatpush1.bf16.msra.mxu0 0
    %1117 = vmatprep.subr.bf16.mxu0 0
    %1118 = vmatpush1.bf16.msra.mxu0 0
    %1119 = vmatprep.subr.bf16.mxu0 0
    %1120 = vmatpush1.bf16.msra.mxu0 0
    %1121 = vmatprep.subr.bf16.mxu0 0
    %1122 = vmatpush1.bf16.msra.mxu0 0
    %1123 = vmatprep.subr.bf16.mxu0 0
    %1124 = vmatpush1.bf16.msra.mxu0 0
    %1125 = vmatprep.subr.bf16.mxu0 0
    %1126 = vmatpush1.bf16.msra.mxu0 0
    %1127 = vmatprep.subr.bf16.mxu0 0
    %1128 = vmatpush1.bf16.msra.mxu0 0
    %1129 = vmatprep.subr.bf16.mxu0 0
    %1130 = vmatpush1.bf16.msra.mxu0 %v1113
    %1131 = vmatprep.subr.bf16.mxu0 0
    %1132 = vmatpush2.bf16.msra.mxu0 0
    %1133 = vmatprep.subr.bf16.mxu0 0
    %1134 = vmatpush2.bf16.msra.mxu0 0
    %1135 = vmatprep.subr.bf16.mxu0 0
    %1136 = vmatpush2.bf16.msra.mxu0 0
    %1137 = vmatprep.subr.bf16.mxu0 0
    %1138 = vmatpush2.bf16.msra.mxu0 0
    %1139 = vmatprep.subr.bf16.mxu0 0
    %1140 = vmatpush2.bf16.msra.mxu0 0
    %1141 = vmatprep.subr.bf16.mxu0 0
    %1142 = vmatpush2.bf16.msra.mxu0 0
    %1143 = vmatprep.subr.bf16.mxu0 0
    %1144 = vmatpush2.bf16.msra.mxu0 0
    %1145 = vmatprep.subr.bf16.mxu0 0
    %1146 = vmatpush2.bf16.msra.mxu0 0
    %1147 = vmatprep.mubr.bf16.mxu0 0
    %1148 = vmatmul.mubr.bf16.gmra.mxu0 %v1110
    %v1149 = vpop.f32.mrf.mxu0
    %v1150 = vadd.f32 0.0, %v1149
    %v1151 = vpop.f32.mrf.mxu0
    %v1152 = vpop.f32.mrf.mxu0
    %v1153 = vpop.f32.mrf.mxu0
    %1154 = vdwg.mxu0
    %1156 = vrot.lane.b32.xlu0 %v1150, 64
    %v1157 = vpop.permute.xlu0 %1156
    %1159 = vst.msk [vmem:[#allocation2 + $0x8] sm:$0xff] %vm691, %v1157
    %1160 = vrot.lane.b32.xlu0 %v819, 32
    %v1161 = vpop.permute.xlu0 %1160
    %1162 = vrot.lane.b32.xlu0 %v820, 32
    %v1163 = vpop.permute.xlu0 %1162
    %v1165 = vsel %vm350, %v1161, 0
    %v1168 = vsel %vm350, %v1163, 0
    %1170 = vmatprep.subr.bf16.mxu0 0
    %1171 = vmatpush1.bf16.xpose.msra.mxu0 0
    %1172 = vmatprep.subr.bf16.mxu0 0
    %1173 = vmatpush1.bf16.xpose.msra.mxu0 0
    %1174 = vmatprep.subr.bf16.mxu0 0
    %1175 = vmatpush1.bf16.xpose.msra.mxu0 0
    %1176 = vmatprep.subr.bf16.mxu0 0
    %1177 = vmatpush1.bf16.xpose.msra.mxu0 0
    %1178 = vmatprep.subr.bf16.mxu0 0
    %1179 = vmatpush1.bf16.xpose.msra.mxu0 0
    %1180 = vmatprep.subr.bf16.mxu0 0
    %1181 = vmatpush1.bf16.xpose.msra.mxu0 0
    %1182 = vmatprep.subr.bf16.mxu0 0
    %1183 = vmatpush1.bf16.xpose.msra.mxu0 0
    %1184 = vmatprep.subr.bf16.mxu0 0
    %1185 = vmatpush1.bf16.xpose.msra.mxu0 %v1168
    %1186 = vmatprep.subr.bf16.mxu0 0
    %1187 = vmatpush2.bf16.xpose.msra.mxu0 0
    %1188 = vmatprep.subr.bf16.mxu0 0
    %1189 = vmatpush2.bf16.xpose.msra.mxu0 0
    %1190 = vmatprep.subr.bf16.mxu0 0
    %1191 = vmatpush2.bf16.xpose.msra.mxu0 0
    %1192 = vmatprep.subr.bf16.mxu0 0
    %1193 = vmatpush2.bf16.xpose.msra.mxu0 0
    %1194 = vmatprep.subr.bf16.mxu0 0
    %1195 = vmatpush2.bf16.xpose.msra.mxu0 0
    %1196 = vmatprep.subr.bf16.mxu0 0
    %1197 = vmatpush2.bf16.xpose.msra.mxu0 0
    %1198 = vmatprep.subr.bf16.mxu0 0
    %1199 = vmatpush2.bf16.xpose.msra.mxu0 0
    %1200 = vmatprep.subr.bf16.mxu0 0
    %1201 = vmatpush2.bf16.xpose.msra.mxu0 0
    %1202 = vmatprep.mubr.bf16.mxu0 0
    %1203 = vmatmul.mubr.bf16.gmra.mxu0 %v1165
    %v1204 = vpop.f32.mrf.mxu0
    %v1205 = vadd.f32 %v817, %v1204
    %v1206 = vpop.f32.mrf.mxu0
    %v1207 = vpop.f32.mrf.mxu0
    %v1208 = vpop.f32.mrf.mxu0
    %1209 = vdwg.mxu0
    %v1210 = vsel %vm397, %v1205, -inf
    %1211 = vmax.xlane.f32.xlu0 %v1210
    %v1212 = vpop.xlane.xlu0 %1211
    %v1213 = vsub.f32 %v1205, %v1212
    %v1214 = vmul.f32 %v1213, 1.442695
    %v1215 = vpow.pop %v1214
    %v1216 = vsel %vm397, %v1215, 0.0
    %1217 = vadd.xlane.f32.xlu0 %v1216
    %v1218 = vpop.xlane.xlu0 %1217
    %v1219 = vrcp.pop %v1218
    %v1220 = vmul.f32 %v1215, %v1219
    %v1221 = vpack.c.bf16 %v1220, %v1220
    %1222 = vrot.lane.b32.xlu0 %v821, 32
    %v1223 = vpop.permute.xlu0 %1222
    %v1225 = vsel %vm397, %v1221, 0
    %v1228 = vsel %vm413, %v1223, 0
    %1230 = vmatprep.subr.bf16.mxu0 0
    %1231 = vmatpush1.bf16.msra.mxu0 0
    %1232 = vmatprep.subr.bf16.mxu0 0
    %1233 = vmatpush1.bf16.msra.mxu0 0
    %1234 = vmatprep.subr.bf16.mxu0 0
    %1235 = vmatpush1.bf16.msra.mxu0 0
    %1236 = vmatprep.subr.bf16.mxu0 0
    %1237 = vmatpush1.bf16.msra.mxu0 0
    %1238 = vmatprep.subr.bf16.mxu0 0
    %1239 = vmatpush1.bf16.msra.mxu0 0
    %1240 = vmatprep.subr.bf16.mxu0 0
    %1241 = vmatpush1.bf16.msra.mxu0 0
    %1242 = vmatprep.subr.bf16.mxu0 0
    %1243 = vmatpush1.bf16.msra.mxu0 0
    %1244 = vmatprep.subr.bf16.mxu0 0
    %1245 = vmatpush1.bf16.msra.mxu0 %v1228
    %1246 = vmatprep.subr.bf16.mxu0 0
    %1247 = vmatpush2.bf16.msra.mxu0 0
    %1248 = vmatprep.subr.bf16.mxu0 0
    %1249 = vmatpush2.bf16.msra.mxu0 0
    %1250 = vmatprep.subr.bf16.mxu0 0
    %1251 = vmatpush2.bf16.msra.mxu0 0
    %1252 = vmatprep.subr.bf16.mxu0 0
    %1253 = vmatpush2.bf16.msra.mxu0 0
    %1254 = vmatprep.subr.bf16.mxu0 0
    %1255 = vmatpush2.bf16.msra.mxu0 0
    %1256 = vmatprep.subr.bf16.mxu0 0
    %1257 = vmatpush2.bf16.msra.mxu0 0
    %1258 = vmatprep.subr.bf16.mxu0 0
    %1259 = vmatpush2.bf16.msra.mxu0 0
    %1260 = vmatprep.subr.bf16.mxu0 0
    %1261 = vmatpush2.bf16.msra.mxu0 0
    %1262 = vmatprep.mubr.bf16.mxu0 0
    %1263 = vmatmul.mubr.bf16.gmra.mxu0 %v1225
    %v1264 = vpop.f32.mrf.mxu0
    %v1265 = vadd.f32 0.0, %v1264
    %v1266 = vpop.f32.mrf.mxu0
    %v1267 = vpop.f32.mrf.mxu0
    %v1268 = vpop.f32.mrf.mxu0
    %1269 = vdwg.mxu0
    %1271 = vrot.lane.b32.xlu0 %v1265, 96
    %v1272 = vpop.permute.xlu0 %1271
    %1274 = vst.msk [vmem:[#allocation2 + $0x8] sm:$0xff] %vm807, %v1272
    %v1275 = vld [vmem:[#allocation2] sm:$0xff]
    %v1276 = vld [vmem:[#allocation2 + $0x8] sm:$0xff]
    %v1277 = vld [vmem:[%s5] sm:$0xf]
    %v1278 = vld [vmem:[%s5 + $0x4] sm:$0xf]
    %v1279 = vld [vmem:[%s5 + $0x8] sm:$0xf]
    %v1280 = vld [vmem:[%s5 + $0xc] sm:$0xf]
    %v1281 = vld [vmem:[%s5 + $0x10] sm:$0xf]
    %v1282 = vld [vmem:[%s5 + $0x14] sm:$0xf]
    %v1283 = vld [vmem:[%s5 + $0x18] sm:$0xf]
    %v1284 = vld [vmem:[%s5 + $0x1c] sm:$0xf]
    %v1285 = vld [vmem:[%s5 + $0x20] sm:$0xf]
    %v1286 = vld [vmem:[%s5 + $0x24] sm:$0xf]
    %v1287 = vld [vmem:[%s5 + $0x28] sm:$0xf]
    %v1288 = vld [vmem:[%s5 + $0x2c] sm:$0xf]
    %v1289 = vld [vmem:[%s5 + $0x30] sm:$0xf]
    %v1290 = vld [vmem:[%s5 + $0x34] sm:$0xf]
    %v1291 = vld [vmem:[%s5 + $0x38] sm:$0xf]
    %v1292 = vld [vmem:[%s5 + $0x3c] sm:$0xf]
    %v1293 = vpack.c.bf16 %v1276, %v1275
    %v1295 = vlaneseq
    %v1296 = vshrl.u32 %v1295, 7
    %v1297 = vsub.s32 0, %v1296
    %v1298 = vrot.slane %v62, %v1297
    %v1316 = vunpack.c.l.b16 %v1277
    %v1317 = vunpack.c.l.b16 %v1278
    %v1318 = vunpack.c.l.b16 %v1279
    %v1319 = vunpack.c.l.b16 %v1280
    %v1320 = vunpack.c.l.b16 %v1281
    %v1321 = vunpack.c.l.b16 %v1282
    %v1322 = vunpack.c.l.b16 %v1283
    %v1323 = vunpack.c.l.b16 %v1284
    %v1324 = vunpack.c.l.b16 %v1285
    %v1325 = vunpack.c.l.b16 %v1286
    %v1326 = vunpack.c.l.b16 %v1287
    %v1327 = vunpack.c.l.b16 %v1288
    %v1328 = vunpack.c.l.b16 %v1289
    %v1329 = vunpack.c.l.b16 %v1290
    %v1330 = vunpack.c.l.b16 %v1291
    %v1331 = vunpack.c.l.b16 %v1292
    %v1332 = vpack.c.b16 %v1317, %v1316
    %v1333 = vpack.c.b16 %v1319, %v1318
    %v1334 = vpack.c.b16 %v1321, %v1320
    %v1335 = vpack.c.b16 %v1323, %v1322
    %v1336 = vpack.c.b16 %v1325, %v1324
    %v1337 = vpack.c.b16 %v1327, %v1326
    %v1338 = vpack.c.b16 %v1329, %v1328
    %v1339 = vpack.c.b16 %v1331, %v1330
    %1348 = vmatprep.subr.bf16.mxu0 0
    %1349 = vmatpush1.bf16.msra.mxu0 %v1339
    %1350 = vmatprep.subr.bf16.mxu0 0
    %1351 = vmatpush1.bf16.msra.mxu0 %v1338
    %1352 = vmatprep.subr.bf16.mxu0 0
    %1353 = vmatpush1.bf16.msra.mxu0 %v1337
    %1354 = vmatprep.subr.bf16.mxu0 0
    %1355 = vmatpush1.bf16.msra.mxu0 %v1336
    %1356 = vmatprep.subr.bf16.mxu0 0
    %1357 = vmatpush1.bf16.msra.mxu0 %v1335
    %1358 = vmatprep.subr.bf16.mxu0 0
    %1359 = vmatpush1.bf16.msra.mxu0 %v1334
    %1360 = vmatprep.subr.bf16.mxu0 0
    %1361 = vmatpush1.bf16.msra.mxu0 %v1333
    %1362 = vmatprep.subr.bf16.mxu0 0
    %1363 = vmatpush1.bf16.msra.mxu0 %v1332
    %1364 = vmatprep.subr.bf16.mxu0 0
    %1365 = vmatpush2.bf16.msra.mxu0 0
    %1366 = vmatprep.subr.bf16.mxu0 0
    %1367 = vmatpush2.bf16.msra.mxu0 0
    %1368 = vmatprep.subr.bf16.mxu0 0
    %1369 = vmatpush2.bf16.msra.mxu0 0
    %1370 = vmatprep.subr.bf16.mxu0 0
    %1371 = vmatpush2.bf16.msra.mxu0 0
    %1372 = vmatprep.subr.bf16.mxu0 0
    %1373 = vmatpush2.bf16.msra.mxu0 0
    %1374 = vmatprep.subr.bf16.mxu0 0
    %1375 = vmatpush2.bf16.msra.mxu0 0
    %1376 = vmatprep.subr.bf16.mxu0 0
    %1377 = vmatpush2.bf16.msra.mxu0 0
    %1378 = vmatprep.subr.bf16.mxu0 0
    %1379 = vmatpush2.bf16.msra.mxu0 0
    %1380 = vmatprep.mubr.bf16.mxu0 0
    %1381 = vmatmul.mubr.bf16.gmra.mxu0 %v1293
    %v1382 = vpop.f32.mrf.mxu0
    %v1383 = vadd.f32 %v1298, %v1382
    %v1384 = vpop.f32.mrf.mxu0
    %v1385 = vpop.f32.mrf.mxu0
    %v1386 = vadd.f32 %v1298, %v1385
    %v1387 = vpop.f32.mrf.mxu0
    %1388 = vdwg.mxu0
    %v1389 = vadd.f32 %v74, %v1383
    %v1390 = vadd.f32 %v75, %v1386
    %1391 = vadd.xlane.f32.xlu0 %v1389
    %v1392 = vpop.xlane.xlu0 %1391
    %1393 = vadd.xlane.f32.xlu0 %v1390
    %v1394 = vpop.xlane.xlu0 %1393
    %v1395 = vmul.f32 %v1392, 0.03125
    %v1396 = vmul.f32 %v1394, 0.03125
    %v1397 = vsub.f32 %v1389, %v1395
    %v1398 = vsub.f32 %v1390, %v1396
    %v1399 = vmul.f32 %v1397, %v60
    %v1400 = vmul.f32 %v1398, %v60
    %v1401 = vmul.f32 %v1399, %v1399
    %v1402 = vmul.f32 %v1400, %v1400
    %1403 = vadd.xlane.f32.xlu0 %v1401
    %v1404 = vpop.xlane.xlu0 %1403
    %1405 = vadd.xlane.f32.xlu0 %v1402
    %v1406 = vpop.xlane.xlu0 %1405
    %v1407 = vmul.f32 %v1404, 0.03125
    %v1408 = vmul.f32 %v1406, 0.03125
    %v1409 = vadd.f32 %v1407, 1e-05
    %v1410 = vadd.f32 %v1408, 1e-05
    %v1411 = vrsqrt.pop %v1409
    %v1412 = vrsqrt.pop %v1410
    %v1413 = vmul.f32 %v1399, %v1411
    %v1414 = vmul.f32 %v1400, %v1412
    %v1416 = vlaneseq
    %v1417 = vshrl.u32 %v1416, 7
    %v1418 = vsub.s32 0, %v1417
    %v1419 = vrot.slane %v63, %v1418
    %v1421 = vmul.f32 %v1413, %v1419
    %v1422 = vmul.f32 %v1414, %v1419
    %v1424 = vlaneseq
    %v1425 = vshrl.u32 %v1424, 7
    %v1426 = vsub.s32 0, %v1425
    %v1427 = vrot.slane %v64, %v1426
    %v1429 = vadd.f32 %v1421, %v1427
    %v1430 = vadd.f32 %v1422, %v1427
    %v1431 = vld [vmem:[%s6] sm:$0xf]
    %v1432 = vld [vmem:[%s6 + $0x4] sm:$0xf]
    %v1433 = vld [vmem:[%s6 + $0x8] sm:$0xf]
    %v1434 = vld [vmem:[%s6 + $0xc] sm:$0xf]
    %v1435 = vld [vmem:[%s6 + $0x10] sm:$0xf]
    %v1436 = vld [vmem:[%s6 + $0x14] sm:$0xf]
    %v1437 = vld [vmem:[%s6 + $0x18] sm:$0xf]
    %v1438 = vld [vmem:[%s6 + $0x1c] sm:$0xf]
    %v1439 = vld [vmem:[%s6 + $0x20] sm:$0xf]
    %v1440 = vld [vmem:[%s6 + $0x24] sm:$0xf]
    %v1441 = vld [vmem:[%s6 + $0x28] sm:$0xf]
    %v1442 = vld [vmem:[%s6 + $0x2c] sm:$0xf]
    %v1443 = vld [vmem:[%s6 + $0x30] sm:$0xf]
    %v1444 = vld [vmem:[%s6 + $0x34] sm:$0xf]
    %v1445 = vld [vmem:[%s6 + $0x38] sm:$0xf]
    %v1446 = vld [vmem:[%s6 + $0x3c] sm:$0xf]
    %v1447 = vpack.c.bf16 %v1430, %v1429
    %v1449 = vlaneseq
    %v1450 = vshrl.u32 %v1449, 7
    %v1451 = vsub.s32 0, %v1450
    %v1452 = vrot.slane %v65, %v1451
    %v1470 = vunpack.c.l.b16 %v1431
    %v1471 = vunpack.c.l.b16 %v1432
    %v1472 = vunpack.c.l.b16 %v1433
    %v1473 = vunpack.c.l.b16 %v1434
    %v1474 = vunpack.c.l.b16 %v1435
    %v1475 = vunpack.c.l.b16 %v1436
    %v1476 = vunpack.c.l.b16 %v1437
    %v1477 = vunpack.c.l.b16 %v1438
    %v1478 = vunpack.c.l.b16 %v1439
    %v1479 = vunpack.c.l.b16 %v1440
    %v1480 = vunpack.c.l.b16 %v1441
    %v1481 = vunpack.c.l.b16 %v1442
    %v1482 = vunpack.c.l.b16 %v1443
    %v1483 = vunpack.c.l.b16 %v1444
    %v1484 = vunpack.c.l.b16 %v1445
    %v1485 = vunpack.c.l.b16 %v1446
    %v1486 = vpack.c.b16 %v1471, %v1470
    %v1487 = vpack.c.b16 %v1473, %v1472
    %v1488 = vpack.c.b16 %v1475, %v1474
    %v1489 = vpack.c.b16 %v1477, %v1476
    %v1490 = vpack.c.b16 %v1479, %v1478
    %v1491 = vpack.c.b16 %v1481, %v1480
    %v1492 = vpack.c.b16 %v1483, %v1482
    %v1493 = vpack.c.b16 %v1485, %v1484
    %1502 = vmatprep.subr.bf16.mxu0 0
    %1503 = vmatpush1.bf16.msra.mxu0 %v1493
    %1504 = vmatprep.subr.bf16.mxu0 0
    %1505 = vmatpush1.bf16.msra.mxu0 %v1492
    %1506 = vmatprep.subr.bf16.mxu0 0
    %1507 = vmatpush1.bf16.msra.mxu0 %v1491
    %1508 = vmatprep.subr.bf16.mxu0 0
    %1509 = vmatpush1.bf16.msra.mxu0 %v1490
    %1510 = vmatprep.subr.bf16.mxu0 0
    %1511 = vmatpush1.bf16.msra.mxu0 %v1489
    %1512 = vmatprep.subr.bf16.mxu0 0
    %1513 = vmatpush1.bf16.msra.mxu0 %v1488
    %1514 = vmatprep.subr.bf16.mxu0 0
    %1515 = vmatpush1.bf16.msra.mxu0 %v1487
    %1516 = vmatprep.subr.bf16.mxu0 0
    %1517 = vmatpush1.bf16.msra.mxu0 %v1486
    %1518 = vmatprep.subr.bf16.mxu0 0
    %1519 = vmatpush2.bf16.msra.mxu0 0
    %1520 = vmatprep.subr.bf16.mxu0 0
    %1521 = vmatpush2.bf16.msra.mxu0 0
    %1522 = vmatprep.subr.bf16.mxu0 0
    %1523 = vmatpush2.bf16.msra.mxu0 0
    %1524 = vmatprep.subr.bf16.mxu0 0
    %1525 = vmatpush2.bf16.msra.mxu0 0
    %1526 = vmatprep.subr.bf16.mxu0 0
    %1527 = vmatpush2.bf16.msra.mxu0 0
    %1528 = vmatprep.subr.bf16.mxu0 0
    %1529 = vmatpush2.bf16.msra.mxu0 0
    %1530 = vmatprep.subr.bf16.mxu0 0
    %1531 = vmatpush2.bf16.msra.mxu0 0
    %1532 = vmatprep.subr.bf16.mxu0 0
    %1533 = vmatpush2.bf16.msra.mxu0 0
    %1534 = vmatprep.mubr.bf16.mxu0 0
    %1535 = vmatmul.mubr.bf16.gmra.mxu0 %v1447
    %v1536 = vpop.f32.mrf.mxu0
    %v1537 = vadd.f32 %v1452, %v1536
    %v1538 = vpop.f32.mrf.mxu0
    %v1539 = vpop.f32.mrf.mxu0
    %v1540 = vadd.f32 %v1452, %v1539
    %v1541 = vpop.f32.mrf.mxu0
    %1542 = vdwg.mxu0
    %v1543 = vld [vmem:[%s1] sm:$0xf]
    %v1544 = vld [vmem:[%s1 + $0x4] sm:$0xf]
    %v1545 = vld [vmem:[%s7] sm:$0xff]
    %v1546 = vld [vmem:[%s7 + $0x8] sm:$0xff]
    %v1547 = vld [vmem:[%s7 + $0x10] sm:$0xff]
    %v1548 = vld [vmem:[%s7 + $0x18] sm:$0xff]
    %v1549 = vld [vmem:[%s7 + $0x20] sm:$0xff]
    %v1550 = vld [vmem:[%s7 + $0x28] sm:$0xff]
    %v1551 = vld [vmem:[%s7 + $0x30] sm:$0xff]
    %v1552 = vld [vmem:[%s7 + $0x38] sm:$0xff]
    %v1553 = vld [vmem:[%s7 + $0x40] sm:$0xff]
    %v1554 = vld [vmem:[%s7 + $0x48] sm:$0xff]
    %v1555 = vld [vmem:[%s7 + $0x50] sm:$0xff]
    %v1556 = vld [vmem:[%s7 + $0x58] sm:$0xff]
    %v1557 = vld [vmem:[%s7 + $0x60] sm:$0xff]
    %v1558 = vld [vmem:[%s7 + $0x68] sm:$0xff]
    %v1559 = vld [vmem:[%s7 + $0x70] sm:$0xff]
    %v1560 = vld [vmem:[%s7 + $0x78] sm:$0xff]
    %v1563 = vcombine.low %v1543, %v1544
    %v1565 = vpack.c.bf16 %v1563, %v1563
    %v1567 = vlaneseq
    %v1568 = vshrl.u32 %v1567, 7
    %v1569 = vsub.s32 0, %v1568
    %v1570 = vrot.slane %v66, %v1569
    %v1571 = vlaneseq
    %v1572 = vshrl.u32 %v1571, 7
    %v1573 = vsub.s32 1, %v1572
    %v1574 = vrot.slane %v66, %v1573
    %v1593 = vunpack.c.l.b16 %v1545
    %v1594 = vunpack.c.h.b16 %v1545
    %v1595 = vunpack.c.l.b16 %v1546
    %v1596 = vunpack.c.h.b16 %v1546
    %v1597 = vunpack.c.l.b16 %v1547
    %v1598 = vunpack.c.h.b16 %v1547
    %v1599 = vunpack.c.l.b16 %v1548
    %v1600 = vunpack.c.h.b16 %v1548
    %v1601 = vunpack.c.l.b16 %v1549
    %v1602 = vunpack.c.h.b16 %v1549
    %v1603 = vunpack.c.l.b16 %v1550
    %v1604 = vunpack.c.h.b16 %v1550
    %v1605 = vunpack.c.l.b16 %v1551
    %v1606 = vunpack.c.h.b16 %v1551
    %v1607 = vunpack.c.l.b16 %v1552
    %v1608 = vunpack.c.h.b16 %v1552
    %v1609 = vunpack.c.l.b16 %v1553
    %v1610 = vunpack.c.h.b16 %v1553
    %v1611 = vunpack.c.l.b16 %v1554
    %v1612 = vunpack.c.h.b16 %v1554
    %v1613 = vunpack.c.l.b16 %v1555
    %v1614 = vunpack.c.h.b16 %v1555
    %v1615 = vunpack.c.l.b16 %v1556
    %v1616 = vunpack.c.h.b16 %v1556
    %v1617 = vunpack.c.l.b16 %v1557
    %v1618 = vunpack.c.h.b16 %v1557
    %v1619 = vunpack.c.l.b16 %v1558
    %v1620 = vunpack.c.h.b16 %v1558
    %v1621 = vunpack.c.l.b16 %v1559
    %v1622 = vunpack.c.h.b16 %v1559
    %v1623 = vunpack.c.l.b16 %v1560
    %v1624 = vunpack.c.h.b16 %v1560
    %v1625 = vpack.c.b16 %v1595, %v1593
    %v1626 = vpack.c.b16 %v1596, %v1594
    %v1627 = vpack.c.b16 %v1599, %v1597
    %v1628 = vpack.c.b16 %v1600, %v1598
    %v1629 = vpack.c.b16 %v1603, %v1601
    %v1630 = vpack.c.b16 %v1604, %v1602
    %v1631 = vpack.c.b16 %v1607, %v1605
    %v1632 = vpack.c.b16 %v1608, %v1606
    %v1633 = vpack.c.b16 %v1611, %v1609
    %v1634 = vpack.c.b16 %v1612, %v1610
    %v1635 = vpack.c.b16 %v1615, %v1613
    %v1636 = vpack.c.b16 %v1616, %v1614
    %v1637 = vpack.c.b16 %v1619, %v1617
    %v1638 = vpack.c.b16 %v1620, %v1618
    %v1639 = vpack.c.b16 %v1623, %v1621
    %v1640 = vpack.c.b16 %v1624, %v1622
    %1657 = vmatprep.subr.bf16.mxu0 %v1640
    %1658 = vmatpush1.bf16.msra.mxu0 %v1639
    %1659 = vmatprep.subr.bf16.mxu0 %v1638
    %1660 = vmatpush1.bf16.msra.mxu0 %v1637
    %1661 = vmatprep.subr.bf16.mxu0 %v1636
    %1662 = vmatpush1.bf16.msra.mxu0 %v1635
    %1663 = vmatprep.subr.bf16.mxu0 %v1634
    %1664 = vmatpush1.bf16.msra.mxu0 %v1633
    %1665 = vmatprep.subr.bf16.mxu0 %v1632
    %1666 = vmatpush1.bf16.msra.mxu0 %v1631
    %1667 = vmatprep.subr.bf16.mxu0 %v1630
    %1668 = vmatpush1.bf16.msra.mxu0 %v1629
    %1669 = vmatprep.subr.bf16.mxu0 %v1628
    %1670 = vmatpush1.bf16.msra.mxu0 %v1627
    %1671 = vmatprep.subr.bf16.mxu0 %v1626
    %1672 = vmatpush1.bf16.msra.mxu0 %v1625
    %1673 = vmatprep.subr.bf16.mxu0 0
    %1674 = vmatpush2.bf16.msra.mxu0 0
    %1675 = vmatprep.subr.bf16.mxu0 0
    %1676 = vmatpush2.bf16.msra.mxu0 0
    %1677 = vmatprep.subr.bf16.mxu0 0
    %1678 = vmatpush2.bf16.msra.mxu0 0
    %1679 = vmatprep.subr.bf16.mxu0 0
    %1680 = vmatpush2.bf16.msra.mxu0 0
    %1681 = vmatprep.subr.bf16.mxu0 0
    %1682 = vmatpush2.bf16.msra.mxu0 0
    %1683 = vmatprep.subr.bf16.mxu0 0
    %1684 = vmatpush2.bf16.msra.mxu0 0
    %1685 = vmatprep.subr.bf16.mxu0 0
    %1686 = vmatpush2.bf16.msra.mxu0 0
    %1687 = vmatprep.subr.bf16.mxu0 0
    %1688 = vmatpush2.bf16.msra.mxu0 0
    %1689 = vmatprep.mubr.bf16.mxu0 0
    %1690 = vmatmul.mubr.bf16.gmra.mxu0 %v1565
    %v1691 = vpop.f32.mrf.mxu0
    %v1692 = vadd.f32 %v1570, %v1691
    %v1693 = vpop.f32.mrf.mxu0
    %v1694 = vadd.f32 %v1574, %v1693
    %v1695 = vpop.f32.mrf.mxu0
    %v1696 = vpop.f32.mrf.mxu0
    %1697 = vdwg.mxu0
    %v1698 = vmul.f32 %v1537, 0.35355338
    %v1699 = vpack.c.bf16 %v1698, %v1698
    %v1700 = vpack.c.bf16 %v1692, %v1692
    %v1701 = vpack.c.bf16 %v1694, %v1694
    %v1703 = vsel %vm350, %v1699, 0
    %v1706 = vsel %vm350, %v1700, 0
    %1708 = vmatprep.subr.bf16.mxu0 0
    %1709 = vmatpush1.bf16.xpose.msra.mxu0 0
    %1710 = vmatprep.subr.bf16.mxu0 0
    %1711 = vmatpush1.bf16.xpose.msra.mxu0 0
    %1712 = vmatprep.subr.bf16.mxu0 0
    %1713 = vmatpush1.bf16.xpose.msra.mxu0 0
    %1714 = vmatprep.subr.bf16.mxu0 0
    %1715 = vmatpush1.bf16.xpose.msra.mxu0 0
    %1716 = vmatprep.subr.bf16.mxu0 0
    %1717 = vmatpush1.bf16.xpose.msra.mxu0 0
    %1718 = vmatprep.subr.bf16.mxu0 0
    %1719 = vmatpush1.bf16.xpose.msra.mxu0 0
    %1720 = vmatprep.subr.bf16.mxu0 0
    %1721 = vmatpush1.bf16.xpose.msra.mxu0 0
    %1722 = vmatprep.subr.bf16.mxu0 0
    %1723 = vmatpush1.bf16.xpose.msra.mxu0 %v1706
    %1724 = vmatprep.subr.bf16.mxu0 0
    %1725 = vmatpush2.bf16.xpose.msra.mxu0 0
    %1726 = vmatprep.subr.bf16.mxu0 0
    %1727 = vmatpush2.bf16.xpose.msra.mxu0 0
    %1728 = vmatprep.subr.bf16.mxu0 0
    %1729 = vmatpush2.bf16.xpose.msra.mxu0 0
    %1730 = vmatprep.subr.bf16.mxu0 0
    %1731 = vmatpush2.bf16.xpose.msra.mxu0 0
    %1732 = vmatprep.subr.bf16.mxu0 0
    %1733 = vmatpush2.bf16.xpose.msra.mxu0 0
    %1734 = vmatprep.subr.bf16.mxu0 0
    %1735 = vmatpush2.bf16.xpose.msra.mxu0 0
    %1736 = vmatprep.subr.bf16.mxu0 0
    %1737 = vmatpush2.bf16.xpose.msra.mxu0 0
    %1738 = vmatprep.subr.bf16.mxu0 0
    %1739 = vmatpush2.bf16.xpose.msra.mxu0 0
    %1740 = vmatprep.mubr.bf16.mxu0 0
    %1741 = vmatmul.mubr.bf16.gmra.mxu0 %v1703
    %v1742 = vpop.f32.mrf.mxu0
    %v1743 = vadd.f32 0.0, %v1742
    %v1744 = vpop.f32.mrf.mxu0
    %v1745 = vpop.f32.mrf.mxu0
    %v1746 = vpop.f32.mrf.mxu0
    %1747 = vdwg.mxu0
    %vm1748 = vcmask 31744
    %v1749 = vsel %vm1748, %v1743, -inf
    %1750 = vmax.xlane.f32.xlu0 %v1749
    %v1751 = vpop.xlane.xlu0 %1750
    %v1752 = vsub.f32 %v1743, %v1751
    %v1753 = vmul.f32 %v1752, 1.442695
    %v1754 = vpow.pop %v1753
    %v1755 = vsel %vm1748, %v1754, 0.0
    %1756 = vadd.xlane.f32.xlu0 %v1755
    %v1757 = vpop.xlane.xlu0 %1756
    %v1758 = vrcp.pop %v1757
    %v1759 = vmul.f32 %v1754, %v1758
    %v1760 = vpack.c.bf16 %v1759, %v1759
    %v1762 = vsel %vm1748, %v1760, 0
    %vm1764 = vcmask 1041408
    %v1766 = vsel %vm1764, %v1701, 0
    %1768 = vmatprep.subr.bf16.mxu0 0
    %1769 = vmatpush1.bf16.msra.mxu0 0
    %1770 = vmatprep.subr.bf16.mxu0 0
    %1771 = vmatpush1.bf16.msra.mxu0 0
    %1772 = vmatprep.subr.bf16.mxu0 0
    %1773 = vmatpush1.bf16.msra.mxu0 0
    %1774 = vmatprep.subr.bf16.mxu0 0
    %1775 = vmatpush1.bf16.msra.mxu0 0
    %1776 = vmatprep.subr.bf16.mxu0 0
    %1777 = vmatpush1.bf16.msra.mxu0 0
    %1778 = vmatprep.subr.bf16.mxu0 0
    %1779 = vmatpush1.bf16.msra.mxu0 0
    %1780 = vmatprep.subr.bf16.mxu0 0
    %1781 = vmatpush1.bf16.msra.mxu0 0
    %1782 = vmatprep.subr.bf16.mxu0 0
    %1783 = vmatpush1.bf16.msra.mxu0 %v1766
    %1784 = vmatprep.subr.bf16.mxu0 0
    %1785 = vmatpush2.bf16.msra.mxu0 0
    %1786 = vmatprep.subr.bf16.mxu0 0
    %1787 = vmatpush2.bf16.msra.mxu0 0
    %1788 = vmatprep.subr.bf16.mxu0 0
    %1789 = vmatpush2.bf16.msra.mxu0 0
    %1790 = vmatprep.subr.bf16.mxu0 0
    %1791 = vmatpush2.bf16.msra.mxu0 0
    %1792 = vmatprep.subr.bf16.mxu0 0
    %1793 = vmatpush2.bf16.msra.mxu0 0
    %1794 = vmatprep.subr.bf16.mxu0 0
    %1795 = vmatpush2.bf16.msra.mxu0 0
    %1796 = vmatprep.subr.bf16.mxu0 0
    %1797 = vmatpush2.bf16.msra.mxu0 0
    %1798 = vmatprep.subr.bf16.mxu0 0
    %1799 = vmatpush2.bf16.msra.mxu0 0
    %1800 = vmatprep.mubr.bf16.mxu0 0
    %1801 = vmatmul.mubr.bf16.gmra.mxu0 %v1762
    %v1802 = vpop.f32.mrf.mxu0
    %v1803 = vadd.f32 0.0, %v1802
    %v1804 = vpop.f32.mrf.mxu0
    %v1805 = vpop.f32.mrf.mxu0
    %v1806 = vpop.f32.mrf.mxu0
    %1807 = vdwg.mxu0
    %1808 = vst.msk [vmem:[#allocation2] sm:$0xff] %vm350, %v1803
    %1810 = vrot.lane.b32.xlu0 %v1699, 96
    %v1811 = vpop.permute.xlu0 %1810
    %1813 = vrot.lane.b32.xlu0 %v1700, 96
    %v1814 = vpop.permute.xlu0 %1813
    %v1816 = vsel %vm350, %v1811, 0
    %v1819 = vsel %vm350, %v1814, 0
    %1821 = vmatprep.subr.bf16.mxu0 0
    %1822 = vmatpush1.bf16.xpose.msra.mxu0 0
    %1823 = vmatprep.subr.bf16.mxu0 0
    %1824 = vmatpush1.bf16.xpose.msra.mxu0 0
    %1825 = vmatprep.subr.bf16.mxu0 0
    %1826 = vmatpush1.bf16.xpose.msra.mxu0 0
    %1827 = vmatprep.subr.bf16.mxu0 0
    %1828 = vmatpush1.bf16.xpose.msra.mxu0 0
    %1829 = vmatprep.subr.bf16.mxu0 0
    %1830 = vmatpush1.bf16.xpose.msra.mxu0 0
    %1831 = vmatprep.subr.bf16.mxu0 0
    %1832 = vmatpush1.bf16.xpose.msra.mxu0 0
    %1833 = vmatprep.subr.bf16.mxu0 0
    %1834 = vmatpush1.bf16.xpose.msra.mxu0 0
    %1835 = vmatprep.subr.bf16.mxu0 0
    %1836 = vmatpush1.bf16.xpose.msra.mxu0 %v1819
    %1837 = vmatprep.subr.bf16.mxu0 0
    %1838 = vmatpush2.bf16.xpose.msra.mxu0 0
    %1839 = vmatprep.subr.bf16.mxu0 0
    %1840 = vmatpush2.bf16.xpose.msra.mxu0 0
    %1841 = vmatprep.subr.bf16.mxu0 0
    %1842 = vmatpush2.bf16.xpose.msra.mxu0 0
    %1843 = vmatprep.subr.bf16.mxu0 0
    %1844 = vmatpush2.bf16.xpose.msra.mxu0 0
    %1845 = vmatprep.subr.bf16.mxu0 0
    %1846 = vmatpush2.bf16.xpose.msra.mxu0 0
    %1847 = vmatprep.subr.bf16.mxu0 0
    %1848 = vmatpush2.bf16.xpose.msra.mxu0 0
    %1849 = vmatprep.subr.bf16.mxu0 0
    %1850 = vmatpush2.bf16.xpose.msra.mxu0 0
    %1851 = vmatprep.subr.bf16.mxu0 0
    %1852 = vmatpush2.bf16.xpose.msra.mxu0 0
    %1853 = vmatprep.mubr.bf16.mxu0 0
    %1854 = vmatmul.mubr.bf16.gmra.mxu0 %v1816
    %v1855 = vpop.f32.mrf.mxu0
    %v1856 = vadd.f32 0.0, %v1855
    %v1857 = vpop.f32.mrf.mxu0
    %v1858 = vpop.f32.mrf.mxu0
    %v1859 = vpop.f32.mrf.mxu0
    %1860 = vdwg.mxu0
    %v1861 = vsel %vm1748, %v1856, -inf
    %1862 = vmax.xlane.f32.xlu0 %v1861
    %v1863 = vpop.xlane.xlu0 %1862
    %v1864 = vsub.f32 %v1856, %v1863
    %v1865 = vmul.f32 %v1864, 1.442695
    %v1866 = vpow.pop %v1865
    %v1867 = vsel %vm1748, %v1866, 0.0
    %1868 = vadd.xlane.f32.xlu0 %v1867
    %v1869 = vpop.xlane.xlu0 %1868
    %v1870 = vrcp.pop %v1869
    %v1871 = vmul.f32 %v1866, %v1870
    %v1872 = vpack.c.bf16 %v1871, %v1871
    %1874 = vrot.lane.b32.xlu0 %v1701, 96
    %v1875 = vpop.permute.xlu0 %1874
    %v1877 = vsel %vm1748, %v1872, 0
    %v1880 = vsel %vm1764, %v1875, 0
    %1882 = vmatprep.subr.bf16.mxu0 0
    %1883 = vmatpush1.bf16.msra.mxu0 0
    %1884 = vmatprep.subr.bf16.mxu0 0
    %1885 = vmatpush1.bf16.msra.mxu0 0
    %1886 = vmatprep.subr.bf16.mxu0 0
    %1887 = vmatpush1.bf16.msra.mxu0 0
    %1888 = vmatprep.subr.bf16.mxu0 0
    %1889 = vmatpush1.bf16.msra.mxu0 0
    %1890 = vmatprep.subr.bf16.mxu0 0
    %1891 = vmatpush1.bf16.msra.mxu0 0
    %1892 = vmatprep.subr.bf16.mxu0 0
    %1893 = vmatpush1.bf16.msra.mxu0 0
    %1894 = vmatprep.subr.bf16.mxu0 0
    %1895 = vmatpush1.bf16.msra.mxu0 0
    %1896 = vmatprep.subr.bf16.mxu0 0
    %1897 = vmatpush1.bf16.msra.mxu0 %v1880
    %1898 = vmatprep.subr.bf16.mxu0 0
    %1899 = vmatpush2.bf16.msra.mxu0 0
    %1900 = vmatprep.subr.bf16.mxu0 0
    %1901 = vmatpush2.bf16.msra.mxu0 0
    %1902 = vmatprep.subr.bf16.mxu0 0
    %1903 = vmatpush2.bf16.msra.mxu0 0
    %1904 = vmatprep.subr.bf16.mxu0 0
    %1905 = vmatpush2.bf16.msra.mxu0 0
    %1906 = vmatprep.subr.bf16.mxu0 0
    %1907 = vmatpush2.bf16.msra.mxu0 0
    %1908 = vmatprep.subr.bf16.mxu0 0
    %1909 = vmatpush2.bf16.msra.mxu0 0
    %1910 = vmatprep.subr.bf16.mxu0 0
    %1911 = vmatpush2.bf16.msra.mxu0 0
    %1912 = vmatprep.subr.bf16.mxu0 0
    %1913 = vmatpush2.bf16.msra.mxu0 0
    %1914 = vmatprep.mubr.bf16.mxu0 0
    %1915 = vmatmul.mubr.bf16.gmra.mxu0 %v1877
    %v1916 = vpop.f32.mrf.mxu0
    %v1917 = vadd.f32 0.0, %v1916
    %v1918 = vpop.f32.mrf.mxu0
    %v1919 = vpop.f32.mrf.mxu0
    %v1920 = vpop.f32.mrf.mxu0
    %1921 = vdwg.mxu0
    %1923 = vrot.lane.b32.xlu0 %v1917, 32
    %v1924 = vpop.permute.xlu0 %1923
    %1926 = vst.msk [vmem:[#allocation2] sm:$0xff] %vm575, %v1924
    %1927 = vrot.lane.b32.xlu0 %v1699, 64
    %v1928 = vpop.permute.xlu0 %1927
    %1929 = vrot.lane.b32.xlu0 %v1700, 64
    %v1930 = vpop.permute.xlu0 %1929
    %v1932 = vsel %vm350, %v1928, 0
    %v1935 = vsel %vm350, %v1930, 0
    %1937 = vmatprep.subr.bf16.mxu0 0
    %1938 = vmatpush1.bf16.xpose.msra.mxu0 0
    %1939 = vmatprep.subr.bf16.mxu0 0
    %1940 = vmatpush1.bf16.xpose.msra.mxu0 0
    %1941 = vmatprep.subr.bf16.mxu0 0
    %1942 = vmatpush1.bf16.xpose.msra.mxu0 0
    %1943 = vmatprep.subr.bf16.mxu0 0
    %1944 = vmatpush1.bf16.xpose.msra.mxu0 0
    %1945 = vmatprep.subr.bf16.mxu0 0
    %1946 = vmatpush1.bf16.xpose.msra.mxu0 0
    %1947 = vmatprep.subr.bf16.mxu0 0
    %1948 = vmatpush1.bf16.xpose.msra.mxu0 0
    %1949 = vmatprep.subr.bf16.mxu0 0
    %1950 = vmatpush1.bf16.xpose.msra.mxu0 0
    %1951 = vmatprep.subr.bf16.mxu0 0
    %1952 = vmatpush1.bf16.xpose.msra.mxu0 %v1935
    %1953 = vmatprep.subr.bf16.mxu0 0
    %1954 = vmatpush2.bf16.xpose.msra.mxu0 0
    %1955 = vmatprep.subr.bf16.mxu0 0
    %1956 = vmatpush2.bf16.xpose.msra.mxu0 0
    %1957 = vmatprep.subr.bf16.mxu0 0
    %1958 = vmatpush2.bf16.xpose.msra.mxu0 0
    %1959 = vmatprep.subr.bf16.mxu0 0
    %1960 = vmatpush2.bf16.xpose.msra.mxu0 0
    %1961 = vmatprep.subr.bf16.mxu0 0
    %1962 = vmatpush2.bf16.xpose.msra.mxu0 0
    %1963 = vmatprep.subr.bf16.mxu0 0
    %1964 = vmatpush2.bf16.xpose.msra.mxu0 0
    %1965 = vmatprep.subr.bf16.mxu0 0
    %1966 = vmatpush2.bf16.xpose.msra.mxu0 0
    %1967 = vmatprep.subr.bf16.mxu0 0
    %1968 = vmatpush2.bf16.xpose.msra.mxu0 0
    %1969 = vmatprep.mubr.bf16.mxu0 0
    %1970 = vmatmul.mubr.bf16.gmra.mxu0 %v1932
    %v1971 = vpop.f32.mrf.mxu0
    %v1972 = vadd.f32 0.0, %v1971
    %v1973 = vpop.f32.mrf.mxu0
    %v1974 = vpop.f32.mrf.mxu0
    %v1975 = vpop.f32.mrf.mxu0
    %1976 = vdwg.mxu0
    %v1977 = vsel %vm1748, %v1972, -inf
    %1978 = vmax.xlane.f32.xlu0 %v1977
    %v1979 = vpop.xlane.xlu0 %1978
    %v1980 = vsub.f32 %v1972, %v1979
    %v1981 = vmul.f32 %v1980, 1.442695
    %v1982 = vpow.pop %v1981
    %v1983 = vsel %vm1748, %v1982, 0.0
    %1984 = vadd.xlane.f32.xlu0 %v1983
    %v1985 = vpop.xlane.xlu0 %1984
    %v1986 = vrcp.pop %v1985
    %v1987 = vmul.f32 %v1982, %v1986
    %v1988 = vpack.c.bf16 %v1987, %v1987
    %1989 = vrot.lane.b32.xlu0 %v1701, 64
    %v1990 = vpop.permute.xlu0 %1989
    %v1992 = vsel %vm1748, %v1988, 0
    %v1995 = vsel %vm1764, %v1990, 0
    %1997 = vmatprep.subr.bf16.mxu0 0
    %1998 = vmatpush1.bf16.msra.mxu0 0
    %1999 = vmatprep.subr.bf16.mxu0 0
    %2000 = vmatpush1.bf16.msra.mxu0 0
    %2001 = vmatprep.subr.bf16.mxu0 0
    %2002 = vmatpush1.bf16.msra.mxu0 0
    %2003 = vmatprep.subr.bf16.mxu0 0
    %2004 = vmatpush1.bf16.msra.mxu0 0
    %2005 = vmatprep.subr.bf16.mxu0 0
    %2006 = vmatpush1.bf16.msra.mxu0 0
    %2007 = vmatprep.subr.bf16.mxu0 0
    %2008 = vmatpush1.bf16.msra.mxu0 0
    %2009 = vmatprep.subr.bf16.mxu0 0
    %2010 = vmatpush1.bf16.msra.mxu0 0
    %2011 = vmatprep.subr.bf16.mxu0 0
    %2012 = vmatpush1.bf16.msra.mxu0 %v1995
    %2013 = vmatprep.subr.bf16.mxu0 0
    %2014 = vmatpush2.bf16.msra.mxu0 0
    %2015 = vmatprep.subr.bf16.mxu0 0
    %2016 = vmatpush2.bf16.msra.mxu0 0
    %2017 = vmatprep.subr.bf16.mxu0 0
    %2018 = vmatpush2.bf16.msra.mxu0 0
    %2019 = vmatprep.subr.bf16.mxu0 0
    %2020 = vmatpush2.bf16.msra.mxu0 0
    %2021 = vmatprep.subr.bf16.mxu0 0
    %2022 = vmatpush2.bf16.msra.mxu0 0
    %2023 = vmatprep.subr.bf16.mxu0 0
    %2024 = vmatpush2.bf16.msra.mxu0 0
    %2025 = vmatprep.subr.bf16.mxu0 0
    %2026 = vmatpush2.bf16.msra.mxu0 0
    %2027 = vmatprep.subr.bf16.mxu0 0
    %2028 = vmatpush2.bf16.msra.mxu0 0
    %2029 = vmatprep.mubr.bf16.mxu0 0
    %2030 = vmatmul.mubr.bf16.gmra.mxu0 %v1992
    %v2031 = vpop.f32.mrf.mxu0
    %v2032 = vadd.f32 0.0, %v2031
    %v2033 = vpop.f32.mrf.mxu0
    %v2034 = vpop.f32.mrf.mxu0
    %v2035 = vpop.f32.mrf.mxu0
    %2036 = vdwg.mxu0
    %2038 = vrot.lane.b32.xlu0 %v2032, 64
    %v2039 = vpop.permute.xlu0 %2038
    %2041 = vst.msk [vmem:[#allocation2] sm:$0xff] %vm691, %v2039
    %2042 = vrot.lane.b32.xlu0 %v1699, 32
    %v2043 = vpop.permute.xlu0 %2042
    %2044 = vrot.lane.b32.xlu0 %v1700, 32
    %v2045 = vpop.permute.xlu0 %2044
    %v2047 = vsel %vm350, %v2043, 0
    %v2050 = vsel %vm350, %v2045, 0
    %2052 = vmatprep.subr.bf16.mxu0 0
    %2053 = vmatpush1.bf16.xpose.msra.mxu0 0
    %2054 = vmatprep.subr.bf16.mxu0 0
    %2055 = vmatpush1.bf16.xpose.msra.mxu0 0
    %2056 = vmatprep.subr.bf16.mxu0 0
    %2057 = vmatpush1.bf16.xpose.msra.mxu0 0
    %2058 = vmatprep.subr.bf16.mxu0 0
    %2059 = vmatpush1.bf16.xpose.msra.mxu0 0
    %2060 = vmatprep.subr.bf16.mxu0 0
    %2061 = vmatpush1.bf16.xpose.msra.mxu0 0
    %2062 = vmatprep.subr.bf16.mxu0 0
    %2063 = vmatpush1.bf16.xpose.msra.mxu0 0
    %2064 = vmatprep.subr.bf16.mxu0 0
    %2065 = vmatpush1.bf16.xpose.msra.mxu0 0
    %2066 = vmatprep.subr.bf16.mxu0 0
    %2067 = vmatpush1.bf16.xpose.msra.mxu0 %v2050
    %2068 = vmatprep.subr.bf16.mxu0 0
    %2069 = vmatpush2.bf16.xpose.msra.mxu0 0
    %2070 = vmatprep.subr.bf16.mxu0 0
    %2071 = vmatpush2.bf16.xpose.msra.mxu0 0
    %2072 = vmatprep.subr.bf16.mxu0 0
    %2073 = vmatpush2.bf16.xpose.msra.mxu0 0
    %2074 = vmatprep.subr.bf16.mxu0 0
    %2075 = vmatpush2.bf16.xpose.msra.mxu0 0
    %2076 = vmatprep.subr.bf16.mxu0 0
    %2077 = vmatpush2.bf16.xpose.msra.mxu0 0
    %2078 = vmatprep.subr.bf16.mxu0 0
    %2079 = vmatpush2.bf16.xpose.msra.mxu0 0
    %2080 = vmatprep.subr.bf16.mxu0 0
    %2081 = vmatpush2.bf16.xpose.msra.mxu0 0
    %2082 = vmatprep.subr.bf16.mxu0 0
    %2083 = vmatpush2.bf16.xpose.msra.mxu0 0
    %2084 = vmatprep.mubr.bf16.mxu0 0
    %2085 = vmatmul.mubr.bf16.gmra.mxu0 %v2047
    %v2086 = vpop.f32.mrf.mxu0
    %v2087 = vadd.f32 0.0, %v2086
    %v2088 = vpop.f32.mrf.mxu0
    %v2089 = vpop.f32.mrf.mxu0
    %v2090 = vpop.f32.mrf.mxu0
    %2091 = vdwg.mxu0
    %v2092 = vsel %vm1748, %v2087, -inf
    %2093 = vmax.xlane.f32.xlu0 %v2092
    %v2094 = vpop.xlane.xlu0 %2093
    %v2095 = vsub.f32 %v2087, %v2094
    %v2096 = vmul.f32 %v2095, 1.442695
    %v2097 = vpow.pop %v2096
    %v2098 = vsel %vm1748, %v2097, 0.0
    %2099 = vadd.xlane.f32.xlu0 %v2098
    %v2100 = vpop.xlane.xlu0 %2099
    %v2101 = vrcp.pop %v2100
    %v2102 = vmul.f32 %v2097, %v2101
    %v2103 = vpack.c.bf16 %v2102, %v2102
    %2104 = vrot.lane.b32.xlu0 %v1701, 32
    %v2105 = vpop.permute.xlu0 %2104
    %v2107 = vsel %vm1748, %v2103, 0
    %v2110 = vsel %vm1764, %v2105, 0
    %2112 = vmatprep.subr.bf16.mxu0 0
    %2113 = vmatpush1.bf16.msra.mxu0 0
    %2114 = vmatprep.subr.bf16.mxu0 0
    %2115 = vmatpush1.bf16.msra.mxu0 0
    %2116 = vmatprep.subr.bf16.mxu0 0
    %2117 = vmatpush1.bf16.msra.mxu0 0
    %2118 = vmatprep.subr.bf16.mxu0 0
    %2119 = vmatpush1.bf16.msra.mxu0 0
    %2120 = vmatprep.subr.bf16.mxu0 0
    %2121 = vmatpush1.bf16.msra.mxu0 0
    %2122 = vmatprep.subr.bf16.mxu0 0
    %2123 = vmatpush1.bf16.msra.mxu0 0
    %2124 = vmatprep.subr.bf16.mxu0 0
    %2125 = vmatpush1.bf16.msra.mxu0 0
    %2126 = vmatprep.subr.bf16.mxu0 0
    %2127 = vmatpush1.bf16.msra.mxu0 %v2110
    %2128 = vmatprep.subr.bf16.mxu0 0
    %2129 = vmatpush2.bf16.msra.mxu0 0
    %2130 = vmatprep.subr.bf16.mxu0 0
    %2131 = vmatpush2.bf16.msra.mxu0 0
    %2132 = vmatprep.subr.bf16.mxu0 0
    %2133 = vmatpush2.bf16.msra.mxu0 0
    %2134 = vmatprep.subr.bf16.mxu0 0
    %2135 = vmatpush2.bf16.msra.mxu0 0
    %2136 = vmatprep.subr.bf16.mxu0 0
    %2137 = vmatpush2.bf16.msra.mxu0 0
    %2138 = vmatprep.subr.bf16.mxu0 0
    %2139 = vmatpush2.bf16.msra.mxu0 0
    %2140 = vmatprep.subr.bf16.mxu0 0
    %2141 = vmatpush2.bf16.msra.mxu0 0
    %2142 = vmatprep.subr.bf16.mxu0 0
    %2143 = vmatpush2.bf16.msra.mxu0 0
    %2144 = vmatprep.mubr.bf16.mxu0 0
    %2145 = vmatmul.mubr.bf16.gmra.mxu0 %v2107
    %v2146 = vpop.f32.mrf.mxu0
    %v2147 = vadd.f32 0.0, %v2146
    %v2148 = vpop.f32.mrf.mxu0
    %v2149 = vpop.f32.mrf.mxu0
    %v2150 = vpop.f32.mrf.mxu0
    %2151 = vdwg.mxu0
    %2153 = vrot.lane.b32.xlu0 %v2147, 96
    %v2154 = vpop.permute.xlu0 %2153
    %2156 = vst.msk [vmem:[#allocation2] sm:$0xff] %vm807, %v2154
    %v2157 = vmul.f32 %v1540, 0.35355338
    %v2158 = vpack.c.bf16 %v2157, %v2157
    %v2159 = vrot.slane %v1700, 2
    %v2161 = vsel %vm350, %v2158, 0
    %v2164 = vsel %vm350, %v2159, 0
    %2166 = vmatprep.subr.bf16.mxu0 0
    %2167 = vmatpush1.bf16.xpose.msra.mxu0 0
    %2168 = vmatprep.subr.bf16.mxu0 0
    %2169 = vmatpush1.bf16.xpose.msra.mxu0 0
    %2170 = vmatprep.subr.bf16.mxu0 0
    %2171 = vmatpush1.bf16.xpose.msra.mxu0 0
    %2172 = vmatprep.subr.bf16.mxu0 0
    %2173 = vmatpush1.bf16.xpose.msra.mxu0 0
    %2174 = vmatprep.subr.bf16.mxu0 0
    %2175 = vmatpush1.bf16.xpose.msra.mxu0 0
    %2176 = vmatprep.subr.bf16.mxu0 0
    %2177 = vmatpush1.bf16.xpose.msra.mxu0 0
    %2178 = vmatprep.subr.bf16.mxu0 0
    %2179 = vmatpush1.bf16.xpose.msra.mxu0 0
    %2180 = vmatprep.subr.bf16.mxu0 0
    %2181 = vmatpush1.bf16.xpose.msra.mxu0 %v2164
    %2182 = vmatprep.subr.bf16.mxu0 0
    %2183 = vmatpush2.bf16.xpose.msra.mxu0 0
    %2184 = vmatprep.subr.bf16.mxu0 0
    %2185 = vmatpush2.bf16.xpose.msra.mxu0 0
    %2186 = vmatprep.subr.bf16.mxu0 0
    %2187 = vmatpush2.bf16.xpose.msra.mxu0 0
    %2188 = vmatprep.subr.bf16.mxu0 0
    %2189 = vmatpush2.bf16.xpose.msra.mxu0 0
    %2190 = vmatprep.subr.bf16.mxu0 0
    %2191 = vmatpush2.bf16.xpose.msra.mxu0 0
    %2192 = vmatprep.subr.bf16.mxu0 0
    %2193 = vmatpush2.bf16.xpose.msra.mxu0 0
    %2194 = vmatprep.subr.bf16.mxu0 0
    %2195 = vmatpush2.bf16.xpose.msra.mxu0 0
    %2196 = vmatprep.subr.bf16.mxu0 0
    %2197 = vmatpush2.bf16.xpose.msra.mxu0 0
    %2198 = vmatprep.mubr.bf16.mxu0 0
    %2199 = vmatmul.mubr.bf16.gmra.mxu0 %v2161
    %v2200 = vpop.f32.mrf.mxu0
    %v2201 = vadd.f32 0.0, %v2200
    %v2202 = vpop.f32.mrf.mxu0
    %v2203 = vpop.f32.mrf.mxu0
    %v2204 = vpop.f32.mrf.mxu0
    %2205 = vdwg.mxu0
    %v2206 = vsel %vm1748, %v2201, -inf
    %2207 = vmax.xlane.f32.xlu0 %v2206
    %v2208 = vpop.xlane.xlu0 %2207
    %v2209 = vsub.f32 %v2201, %v2208
    %v2210 = vmul.f32 %v2209, 1.442695
    %v2211 = vpow.pop %v2210
    %v2212 = vsel %vm1748, %v2211, 0.0
    %2213 = vadd.xlane.f32.xlu0 %v2212
    %v2214 = vpop.xlane.xlu0 %2213
    %v2215 = vrcp.pop %v2214
    %v2216 = vmul.f32 %v2211, %v2215
    %v2217 = vpack.c.bf16 %v2216, %v2216
    %v2218 = vrot.slane %v1701, 2
    %v2220 = vsel %vm1748, %v2217, 0
    %v2223 = vsel %vm1764, %v2218, 0
    %2225 = vmatprep.subr.bf16.mxu0 0
    %2226 = vmatpush1.bf16.msra.mxu0 0
    %2227 = vmatprep.subr.bf16.mxu0 0
    %2228 = vmatpush1.bf16.msra.mxu0 0
    %2229 = vmatprep.subr.bf16.mxu0 0
    %2230 = vmatpush1.bf16.msra.mxu0 0
    %2231 = vmatprep.subr.bf16.mxu0 0
    %2232 = vmatpush1.bf16.msra.mxu0 0
    %2233 = vmatprep.subr.bf16.mxu0 0
    %2234 = vmatpush1.bf16.msra.mxu0 0
    %2235 = vmatprep.subr.bf16.mxu0 0
    %2236 = vmatpush1.bf16.msra.mxu0 0
    %2237 = vmatprep.subr.bf16.mxu0 0
    %2238 = vmatpush1.bf16.msra.mxu0 0
    %2239 = vmatprep.subr.bf16.mxu0 0
    %2240 = vmatpush1.bf16.msra.mxu0 %v2223
    %2241 = vmatprep.subr.bf16.mxu0 0
    %2242 = vmatpush2.bf16.msra.mxu0 0
    %2243 = vmatprep.subr.bf16.mxu0 0
    %2244 = vmatpush2.bf16.msra.mxu0 0
    %2245 = vmatprep.subr.bf16.mxu0 0
    %2246 = vmatpush2.bf16.msra.mxu0 0
    %2247 = vmatprep.subr.bf16.mxu0 0
    %2248 = vmatpush2.bf16.msra.mxu0 0
    %2249 = vmatprep.subr.bf16.mxu0 0
    %2250 = vmatpush2.bf16.msra.mxu0 0
    %2251 = vmatprep.subr.bf16.mxu0 0
    %2252 = vmatpush2.bf16.msra.mxu0 0
    %2253 = vmatprep.subr.bf16.mxu0 0
    %2254 = vmatpush2.bf16.msra.mxu0 0
    %2255 = vmatprep.subr.bf16.mxu0 0
    %2256 = vmatpush2.bf16.msra.mxu0 0
    %2257 = vmatprep.mubr.bf16.mxu0 0
    %2258 = vmatmul.mubr.bf16.gmra.mxu0 %v2220
    %v2259 = vpop.f32.mrf.mxu0
    %v2260 = vadd.f32 0.0, %v2259
    %v2261 = vpop.f32.mrf.mxu0
    %v2262 = vpop.f32.mrf.mxu0
    %v2263 = vpop.f32.mrf.mxu0
    %2264 = vdwg.mxu0
    %2265 = vst.msk [vmem:[#allocation2 + $0x8] sm:$0xff] %vm350, %v2260
    %2267 = vrot.lane.b32.xlu0 %v2158, 96
    %v2268 = vpop.permute.xlu0 %2267
    %2269 = vrot.lane.b32.xlu0 %v2159, 96
    %v2270 = vpop.permute.xlu0 %2269
    %v2272 = vsel %vm350, %v2268, 0
    %v2275 = vsel %vm350, %v2270, 0
    %2277 = vmatprep.subr.bf16.mxu0 0
    %2278 = vmatpush1.bf16.xpose.msra.mxu0 0
    %2279 = vmatprep.subr.bf16.mxu0 0
    %2280 = vmatpush1.bf16.xpose.msra.mxu0 0
    %2281 = vmatprep.subr.bf16.mxu0 0
    %2282 = vmatpush1.bf16.xpose.msra.mxu0 0
    %2283 = vmatprep.subr.bf16.mxu0 0
    %2284 = vmatpush1.bf16.xpose.msra.mxu0 0
    %2285 = vmatprep.subr.bf16.mxu0 0
    %2286 = vmatpush1.bf16.xpose.msra.mxu0 0
    %2287 = vmatprep.subr.bf16.mxu0 0
    %2288 = vmatpush1.bf16.xpose.msra.mxu0 0
    %2289 = vmatprep.subr.bf16.mxu0 0
    %2290 = vmatpush1.bf16.xpose.msra.mxu0 0
    %2291 = vmatprep.subr.bf16.mxu0 0
    %2292 = vmatpush1.bf16.xpose.msra.mxu0 %v2275
    %2293 = vmatprep.subr.bf16.mxu0 0
    %2294 = vmatpush2.bf16.xpose.msra.mxu0 0
    %2295 = vmatprep.subr.bf16.mxu0 0
    %2296 = vmatpush2.bf16.xpose.msra.mxu0 0
    %2297 = vmatprep.subr.bf16.mxu0 0
    %2298 = vmatpush2.bf16.xpose.msra.mxu0 0
    %2299 = vmatprep.subr.bf16.mxu0 0
    %2300 = vmatpush2.bf16.xpose.msra.mxu0 0
    %2301 = vmatprep.subr.bf16.mxu0 0
    %2302 = vmatpush2.bf16.xpose.msra.mxu0 0
    %2303 = vmatprep.subr.bf16.mxu0 0
    %2304 = vmatpush2.bf16.xpose.msra.mxu0 0
    %2305 = vmatprep.subr.bf16.mxu0 0
    %2306 = vmatpush2.bf16.xpose.msra.mxu0 0
    %2307 = vmatprep.subr.bf16.mxu0 0
    %2308 = vmatpush2.bf16.xpose.msra.mxu0 0
    %2309 = vmatprep.mubr.bf16.mxu0 0
    %2310 = vmatmul.mubr.bf16.gmra.mxu0 %v2272
    %v2311 = vpop.f32.mrf.mxu0
    %v2312 = vadd.f32 0.0, %v2311
    %v2313 = vpop.f32.mrf.mxu0
    %v2314 = vpop.f32.mrf.mxu0
    %v2315 = vpop.f32.mrf.mxu0
    %2316 = vdwg.mxu0
    %v2317 = vsel %vm1748, %v2312, -inf
    %2318 = vmax.xlane.f32.xlu0 %v2317
    %v2319 = vpop.xlane.xlu0 %2318
    %v2320 = vsub.f32 %v2312, %v2319
    %v2321 = vmul.f32 %v2320, 1.442695
    %v2322 = vpow.pop %v2321
    %v2323 = vsel %vm1748, %v2322, 0.0
    %2324 = vadd.xlane.f32.xlu0 %v2323
    %v2325 = vpop.xlane.xlu0 %2324
    %v2326 = vrcp.pop %v2325
    %v2327 = vmul.f32 %v2322, %v2326
    %v2328 = vpack.c.bf16 %v2327, %v2327
    %2329 = vrot.lane.b32.xlu0 %v2218, 96
    %v2330 = vpop.permute.xlu0 %2329
    %v2332 = vsel %vm1748, %v2328, 0
    %v2335 = vsel %vm1764, %v2330, 0
    %2337 = vmatprep.subr.bf16.mxu0 0
    %2338 = vmatpush1.bf16.msra.mxu0 0
    %2339 = vmatprep.subr.bf16.mxu0 0
    %2340 = vmatpush1.bf16.msra.mxu0 0
    %2341 = vmatprep.subr.bf16.mxu0 0
    %2342 = vmatpush1.bf16.msra.mxu0 0
    %2343 = vmatprep.subr.bf16.mxu0 0
    %2344 = vmatpush1.bf16.msra.mxu0 0
    %2345 = vmatprep.subr.bf16.mxu0 0
    %2346 = vmatpush1.bf16.msra.mxu0 0
    %2347 = vmatprep.subr.bf16.mxu0 0
    %2348 = vmatpush1.bf16.msra.mxu0 0
    %2349 = vmatprep.subr.bf16.mxu0 0
    %2350 = vmatpush1.bf16.msra.mxu0 0
    %2351 = vmatprep.subr.bf16.mxu0 0
    %2352 = vmatpush1.bf16.msra.mxu0 %v2335
    %2353 = vmatprep.subr.bf16.mxu0 0
    %2354 = vmatpush2.bf16.msra.mxu0 0
    %2355 = vmatprep.subr.bf16.mxu0 0
    %2356 = vmatpush2.bf16.msra.mxu0 0
    %2357 = vmatprep.subr.bf16.mxu0 0
    %2358 = vmatpush2.bf16.msra.mxu0 0
    %2359 = vmatprep.subr.bf16.mxu0 0
    %2360 = vmatpush2.bf16.msra.mxu0 0
    %2361 = vmatprep.subr.bf16.mxu0 0
    %2362 = vmatpush2.bf16.msra.mxu0 0
    %2363 = vmatprep.subr.bf16.mxu0 0
    %2364 = vmatpush2.bf16.msra.mxu0 0
    %2365 = vmatprep.subr.bf16.mxu0 0
    %2366 = vmatpush2.bf16.msra.mxu0 0
    %2367 = vmatprep.subr.bf16.mxu0 0
    %2368 = vmatpush2.bf16.msra.mxu0 0
    %2369 = vmatprep.mubr.bf16.mxu0 0
    %2370 = vmatmul.mubr.bf16.gmra.mxu0 %v2332
    %v2371 = vpop.f32.mrf.mxu0
    %v2372 = vadd.f32 0.0, %v2371
    %v2373 = vpop.f32.mrf.mxu0
    %v2374 = vpop.f32.mrf.mxu0
    %v2375 = vpop.f32.mrf.mxu0
    %2376 = vdwg.mxu0
    %2378 = vrot.lane.b32.xlu0 %v2372, 32
    %v2379 = vpop.permute.xlu0 %2378
    %2381 = vst.msk [vmem:[#allocation2 + $0x8] sm:$0xff] %vm575, %v2379
    %2382 = vrot.lane.b32.xlu0 %v2158, 64
    %v2383 = vpop.permute.xlu0 %2382
    %2384 = vrot.lane.b32.xlu0 %v2159, 64
    %v2385 = vpop.permute.xlu0 %2384
    %v2387 = vsel %vm350, %v2383, 0
    %v2390 = vsel %vm350, %v2385, 0
    %2392 = vmatprep.subr.bf16.mxu0 0
    %2393 = vmatpush1.bf16.xpose.msra.mxu0 0
    %2394 = vmatprep.subr.bf16.mxu0 0
    %2395 = vmatpush1.bf16.xpose.msra.mxu0 0
    %2396 = vmatprep.subr.bf16.mxu0 0
    %2397 = vmatpush1.bf16.xpose.msra.mxu0 0
    %2398 = vmatprep.subr.bf16.mxu0 0
    %2399 = vmatpush1.bf16.xpose.msra.mxu0 0
    %2400 = vmatprep.subr.bf16.mxu0 0
    %2401 = vmatpush1.bf16.xpose.msra.mxu0 0
    %2402 = vmatprep.subr.bf16.mxu0 0
    %2403 = vmatpush1.bf16.xpose.msra.mxu0 0
    %2404 = vmatprep.subr.bf16.mxu0 0
    %2405 = vmatpush1.bf16.xpose.msra.mxu0 0
    %2406 = vmatprep.subr.bf16.mxu0 0
    %2407 = vmatpush1.bf16.xpose.msra.mxu0 %v2390
    %2408 = vmatprep.subr.bf16.mxu0 0
    %2409 = vmatpush2.bf16.xpose.msra.mxu0 0
    %2410 = vmatprep.subr.bf16.mxu0 0
    %2411 = vmatpush2.bf16.xpose.msra.mxu0 0
    %2412 = vmatprep.subr.bf16.mxu0 0
    %2413 = vmatpush2.bf16.xpose.msra.mxu0 0
    %2414 = vmatprep.subr.bf16.mxu0 0
    %2415 = vmatpush2.bf16.xpose.msra.mxu0 0
    %2416 = vmatprep.subr.bf16.mxu0 0
    %2417 = vmatpush2.bf16.xpose.msra.mxu0 0
    %2418 = vmatprep.subr.bf16.mxu0 0
    %2419 = vmatpush2.bf16.xpose.msra.mxu0 0
    %2420 = vmatprep.subr.bf16.mxu0 0
    %2421 = vmatpush2.bf16.xpose.msra.mxu0 0
    %2422 = vmatprep.subr.bf16.mxu0 0
    %2423 = vmatpush2.bf16.xpose.msra.mxu0 0
    %2424 = vmatprep.mubr.bf16.mxu0 0
    %2425 = vmatmul.mubr.bf16.gmra.mxu0 %v2387
    %v2426 = vpop.f32.mrf.mxu0
    %v2427 = vadd.f32 0.0, %v2426
    %v2428 = vpop.f32.mrf.mxu0
    %v2429 = vpop.f32.mrf.mxu0
    %v2430 = vpop.f32.mrf.mxu0
    %2431 = vdwg.mxu0
    %v2432 = vsel %vm1748, %v2427, -inf
    %2433 = vmax.xlane.f32.xlu0 %v2432
    %v2434 = vpop.xlane.xlu0 %2433
    %v2435 = vsub.f32 %v2427, %v2434
    %v2436 = vmul.f32 %v2435, 1.442695
    %v2437 = vpow.pop %v2436
    %v2438 = vsel %vm1748, %v2437, 0.0
    %2439 = vadd.xlane.f32.xlu0 %v2438
    %v2440 = vpop.xlane.xlu0 %2439
    %v2441 = vrcp.pop %v2440
    %v2442 = vmul.f32 %v2437, %v2441
    %v2443 = vpack.c.bf16 %v2442, %v2442
    %2444 = vrot.lane.b32.xlu0 %v2218, 64
    %v2445 = vpop.permute.xlu0 %2444
    %v2447 = vsel %vm1748, %v2443, 0
    %v2450 = vsel %vm1764, %v2445, 0
    %2452 = vmatprep.subr.bf16.mxu0 0
    %2453 = vmatpush1.bf16.msra.mxu0 0
    %2454 = vmatprep.subr.bf16.mxu0 0
    %2455 = vmatpush1.bf16.msra.mxu0 0
    %2456 = vmatprep.subr.bf16.mxu0 0
    %2457 = vmatpush1.bf16.msra.mxu0 0
    %2458 = vmatprep.subr.bf16.mxu0 0
    %2459 = vmatpush1.bf16.msra.mxu0 0
    %2460 = vmatprep.subr.bf16.mxu0 0
    %2461 = vmatpush1.bf16.msra.mxu0 0
    %2462 = vmatprep.subr.bf16.mxu0 0
    %2463 = vmatpush1.bf16.msra.mxu0 0
    %2464 = vmatprep.subr.bf16.mxu0 0
    %2465 = vmatpush1.bf16.msra.mxu0 0
    %2466 = vmatprep.subr.bf16.mxu0 0
    %2467 = vmatpush1.bf16.msra.mxu0 %v2450
    %2468 = vmatprep.subr.bf16.mxu0 0
    %2469 = vmatpush2.bf16.msra.mxu0 0
    %2470 = vmatprep.subr.bf16.mxu0 0
    %2471 = vmatpush2.bf16.msra.mxu0 0
    %2472 = vmatprep.subr.bf16.mxu0 0
    %2473 = vmatpush2.bf16.msra.mxu0 0
    %2474 = vmatprep.subr.bf16.mxu0 0
    %2475 = vmatpush2.bf16.msra.mxu0 0
    %2476 = vmatprep.subr.bf16.mxu0 0
    %2477 = vmatpush2.bf16.msra.mxu0 0
    %2478 = vmatprep.subr.bf16.mxu0 0
    %2479 = vmatpush2.bf16.msra.mxu0 0
    %2480 = vmatprep.subr.bf16.mxu0 0
    %2481 = vmatpush2.bf16.msra.mxu0 0
    %2482 = vmatprep.subr.bf16.mxu0 0
    %2483 = vmatpush2.bf16.msra.mxu0 0
    %2484 = vmatprep.mubr.bf16.mxu0 0
    %2485 = vmatmul.mubr.bf16.gmra.mxu0 %v2447
    %v2486 = vpop.f32.mrf.mxu0
    %v2487 = vadd.f32 0.0, %v2486
    %v2488 = vpop.f32.mrf.mxu0
    %v2489 = vpop.f32.mrf.mxu0
    %v2490 = vpop.f32.mrf.mxu0
    %2491 = vdwg.mxu0
    %2493 = vrot.lane.b32.xlu0 %v2487, 64
    %v2494 = vpop.permute.xlu0 %2493
    %2496 = vst.msk [vmem:[#allocation2 + $0x8] sm:$0xff] %vm691, %v2494
    %2497 = vrot.lane.b32.xlu0 %v2158, 32
    %v2498 = vpop.permute.xlu0 %2497
    %2499 = vrot.lane.b32.xlu0 %v2159, 32
    %v2500 = vpop.permute.xlu0 %2499
    %v2502 = vsel %vm350, %v2498, 0
    %v2505 = vsel %vm350, %v2500, 0
    %2507 = vmatprep.subr.bf16.mxu0 0
    %2508 = vmatpush1.bf16.xpose.msra.mxu0 0
    %2509 = vmatprep.subr.bf16.mxu0 0
    %2510 = vmatpush1.bf16.xpose.msra.mxu0 0
    %2511 = vmatprep.subr.bf16.mxu0 0
    %2512 = vmatpush1.bf16.xpose.msra.mxu0 0
    %2513 = vmatprep.subr.bf16.mxu0 0
    %2514 = vmatpush1.bf16.xpose.msra.mxu0 0
    %2515 = vmatprep.subr.bf16.mxu0 0
    %2516 = vmatpush1.bf16.xpose.msra.mxu0 0
    %2517 = vmatprep.subr.bf16.mxu0 0
    %2518 = vmatpush1.bf16.xpose.msra.mxu0 0
    %2519 = vmatprep.subr.bf16.mxu0 0
    %2520 = vmatpush1.bf16.xpose.msra.mxu0 0
    %2521 = vmatprep.subr.bf16.mxu0 0
    %2522 = vmatpush1.bf16.xpose.msra.mxu0 %v2505
    %2523 = vmatprep.subr.bf16.mxu0 0
    %2524 = vmatpush2.bf16.xpose.msra.mxu0 0
    %2525 = vmatprep.subr.bf16.mxu0 0
    %2526 = vmatpush2.bf16.xpose.msra.mxu0 0
    %2527 = vmatprep.subr.bf16.mxu0 0
    %2528 = vmatpush2.bf16.xpose.msra.mxu0 0
    %2529 = vmatprep.subr.bf16.mxu0 0
    %2530 = vmatpush2.bf16.xpose.msra.mxu0 0
    %2531 = vmatprep.subr.bf16.mxu0 0
    %2532 = vmatpush2.bf16.xpose.msra.mxu0 0
    %2533 = vmatprep.subr.bf16.mxu0 0
    %2534 = vmatpush2.bf16.xpose.msra.mxu0 0
    %2535 = vmatprep.subr.bf16.mxu0 0
    %2536 = vmatpush2.bf16.xpose.msra.mxu0 0
    %2537 = vmatprep.subr.bf16.mxu0 0
    %2538 = vmatpush2.bf16.xpose.msra.mxu0 0
    %2539 = vmatprep.mubr.bf16.mxu0 0
    %2540 = vmatmul.mubr.bf16.gmra.mxu0 %v2502
    %v2541 = vpop.f32.mrf.mxu0
    %v2542 = vadd.f32 0.0, %v2541
    %v2543 = vpop.f32.mrf.mxu0
    %v2544 = vpop.f32.mrf.mxu0
    %v2545 = vpop.f32.mrf.mxu0
    %2546 = vdwg.mxu0
    %v2547 = vsel %vm1748, %v2542, -inf
    %2548 = vmax.xlane.f32.xlu0 %v2547
    %v2549 = vpop.xlane.xlu0 %2548
    %v2550 = vsub.f32 %v2542, %v2549
    %v2551 = vmul.f32 %v2550, 1.442695
    %v2552 = vpow.pop %v2551
    %v2553 = vsel %vm1748, %v2552, 0.0
    %2554 = vadd.xlane.f32.xlu0 %v2553
    %v2555 = vpop.xlane.xlu0 %2554
    %v2556 = vrcp.pop %v2555
    %v2557 = vmul.f32 %v2552, %v2556
    %v2558 = vpack.c.bf16 %v2557, %v2557
    %2559 = vrot.lane.b32.xlu0 %v2218, 32
    %v2560 = vpop.permute.xlu0 %2559
    %v2562 = vsel %vm1748, %v2558, 0
    %v2565 = vsel %vm1764, %v2560, 0
    %2567 = vmatprep.subr.bf16.mxu0 0
    %2568 = vmatpush1.bf16.msra.mxu0 0
    %2569 = vmatprep.subr.bf16.mxu0 0
    %2570 = vmatpush1.bf16.msra.mxu0 0
    %2571 = vmatprep.subr.bf16.mxu0 0
    %2572 = vmatpush1.bf16.msra.mxu0 0
    %2573 = vmatprep.subr.bf16.mxu0 0
    %2574 = vmatpush1.bf16.msra.mxu0 0
    %2575 = vmatprep.subr.bf16.mxu0 0
    %2576 = vmatpush1.bf16.msra.mxu0 0
    %2577 = vmatprep.subr.bf16.mxu0 0
    %2578 = vmatpush1.bf16.msra.mxu0 0
    %2579 = vmatprep.subr.bf16.mxu0 0
    %2580 = vmatpush1.bf16.msra.mxu0 0
    %2581 = vmatprep.subr.bf16.mxu0 0
    %2582 = vmatpush1.bf16.msra.mxu0 %v2565
    %2583 = vmatprep.subr.bf16.mxu0 0
    %2584 = vmatpush2.bf16.msra.mxu0 0
    %2585 = vmatprep.subr.bf16.mxu0 0
    %2586 = vmatpush2.bf16.msra.mxu0 0
    %2587 = vmatprep.subr.bf16.mxu0 0
    %2588 = vmatpush2.bf16.msra.mxu0 0
    %2589 = vmatprep.subr.bf16.mxu0 0
    %2590 = vmatpush2.bf16.msra.mxu0 0
    %2591 = vmatprep.subr.bf16.mxu0 0
    %2592 = vmatpush2.bf16.msra.mxu0 0
    %2593 = vmatprep.subr.bf16.mxu0 0
    %2594 = vmatpush2.bf16.msra.mxu0 0
    %2595 = vmatprep.subr.bf16.mxu0 0
    %2596 = vmatpush2.bf16.msra.mxu0 0
    %2597 = vmatprep.subr.bf16.mxu0 0
    %2598 = vmatpush2.bf16.msra.mxu0 0
    %2599 = vmatprep.mubr.bf16.mxu0 0
    %2600 = vmatmul.mubr.bf16.gmra.mxu0 %v2562
    %v2601 = vpop.f32.mrf.mxu0
    %v2602 = vadd.f32 0.0, %v2601
    %v2603 = vpop.f32.mrf.mxu0
    %v2604 = vpop.f32.mrf.mxu0
    %v2605 = vpop.f32.mrf.mxu0
    %2606 = vdwg.mxu0
    %2608 = vrot.lane.b32.xlu0 %v2602, 96
    %v2609 = vpop.permute.xlu0 %2608
    %2611 = vst.msk [vmem:[#allocation2 + $0x8] sm:$0xff] %vm807, %v2609
    %v2612 = vld [vmem:[#allocation2] sm:$0xff]
    %v2613 = vld [vmem:[#allocation2 + $0x8] sm:$0xff]
    %v2614 = vld [vmem:[%s8] sm:$0xf]
    %v2615 = vld [vmem:[%s8 + $0x4] sm:$0xf]
    %v2616 = vld [vmem:[%s8 + $0x8] sm:$0xf]
    %v2617 = vld [vmem:[%s8 + $0xc] sm:$0xf]
    %v2618 = vld [vmem:[%s8 + $0x10] sm:$0xf]
    %v2619 = vld [vmem:[%s8 + $0x14] sm:$0xf]
    %v2620 = vld [vmem:[%s8 + $0x18] sm:$0xf]
    %v2621 = vld [vmem:[%s8 + $0x1c] sm:$0xf]
    %v2622 = vld [vmem:[%s8 + $0x20] sm:$0xf]
    %v2623 = vld [vmem:[%s8 + $0x24] sm:$0xf]
    %v2624 = vld [vmem:[%s8 + $0x28] sm:$0xf]
    %v2625 = vld [vmem:[%s8 + $0x2c] sm:$0xf]
    %v2626 = vld [vmem:[%s8 + $0x30] sm:$0xf]
    %v2627 = vld [vmem:[%s8 + $0x34] sm:$0xf]
    %v2628 = vld [vmem:[%s8 + $0x38] sm:$0xf]
    %v2629 = vld [vmem:[%s8 + $0x3c] sm:$0xf]
    %v2630 = vpack.c.bf16 %v2613, %v2612
    %v2632 = vlaneseq
    %v2633 = vshrl.u32 %v2632, 7
    %v2634 = vsub.s32 0, %v2633
    %v2635 = vrot.slane %v67, %v2634
    %v2653 = vunpack.c.l.b16 %v2614
    %v2654 = vunpack.c.l.b16 %v2615
    %v2655 = vunpack.c.l.b16 %v2616
    %v2656 = vunpack.c.l.b16 %v2617
    %v2657 = vunpack.c.l.b16 %v2618
    %v2658 = vunpack.c.l.b16 %v2619
    %v2659 = vunpack.c.l.b16 %v2620
    %v2660 = vunpack.c.l.b16 %v2621
    %v2661 = vunpack.c.l.b16 %v2622
    %v2662 = vunpack.c.l.b16 %v2623
    %v2663 = vunpack.c.l.b16 %v2624
    %v2664 = vunpack.c.l.b16 %v2625
    %v2665 = vunpack.c.l.b16 %v2626
    %v2666 = vunpack.c.l.b16 %v2627
    %v2667 = vunpack.c.l.b16 %v2628
    %v2668 = vunpack.c.l.b16 %v2629
    %v2669 = vpack.c.b16 %v2654, %v2653
    %v2670 = vpack.c.b16 %v2656, %v2655
    %v2671 = vpack.c.b16 %v2658, %v2657
    %v2672 = vpack.c.b16 %v2660, %v2659
    %v2673 = vpack.c.b16 %v2662, %v2661
    %v2674 = vpack.c.b16 %v2664, %v2663
    %v2675 = vpack.c.b16 %v2666, %v2665
    %v2676 = vpack.c.b16 %v2668, %v2667
    %2685 = vmatprep.subr.bf16.mxu0 0
    %2686 = vmatpush1.bf16.msra.mxu0 %v2676
    %2687 = vmatprep.subr.bf16.mxu0 0
    %2688 = vmatpush1.bf16.msra.mxu0 %v2675
    %2689 = vmatprep.subr.bf16.mxu0 0
    %2690 = vmatpush1.bf16.msra.mxu0 %v2674
    %2691 = vmatprep.subr.bf16.mxu0 0
    %2692 = vmatpush1.bf16.msra.mxu0 %v2673
    %2693 = vmatprep.subr.bf16.mxu0 0
    %2694 = vmatpush1.bf16.msra.mxu0 %v2672
    %2695 = vmatprep.subr.bf16.mxu0 0
    %2696 = vmatpush1.bf16.msra.mxu0 %v2671
    %2697 = vmatprep.subr.bf16.mxu0 0
    %2698 = vmatpush1.bf16.msra.mxu0 %v2670
    %2699 = vmatprep.subr.bf16.mxu0 0
    %2700 = vmatpush1.bf16.msra.mxu0 %v2669
    %2701 = vmatprep.subr.bf16.mxu0 0
    %2702 = vmatpush2.bf16.msra.mxu0 0
    %2703 = vmatprep.subr.bf16.mxu0 0
    %2704 = vmatpush2.bf16.msra.mxu0 0
    %2705 = vmatprep.subr.bf16.mxu0 0
    %2706 = vmatpush2.bf16.msra.mxu0 0
    %2707 = vmatprep.subr.bf16.mxu0 0
    %2708 = vmatpush2.bf16.msra.mxu0 0
    %2709 = vmatprep.subr.bf16.mxu0 0
    %2710 = vmatpush2.bf16.msra.mxu0 0
    %2711 = vmatprep.subr.bf16.mxu0 0
    %2712 = vmatpush2.bf16.msra.mxu0 0
    %2713 = vmatprep.subr.bf16.mxu0 0
    %2714 = vmatpush2.bf16.msra.mxu0 0
    %2715 = vmatprep.subr.bf16.mxu0 0
    %2716 = vmatpush2.bf16.msra.mxu0 0
    %2717 = vmatprep.mubr.bf16.mxu0 0
    %2718 = vmatmul.mubr.bf16.gmra.mxu0 %v2630
    %v2719 = vpop.f32.mrf.mxu0
    %v2720 = vadd.f32 %v2635, %v2719
    %v2721 = vpop.f32.mrf.mxu0
    %v2722 = vpop.f32.mrf.mxu0
    %v2723 = vadd.f32 %v2635, %v2722
    %v2724 = vpop.f32.mrf.mxu0
    %2725 = vdwg.mxu0
    %v2726 = vadd.f32 %v1429, %v2720
    %v2727 = vadd.f32 %v1430, %v2723
    %2728 = vadd.xlane.f32.xlu0 %v2726
    %v2729 = vpop.xlane.xlu0 %2728
    %2730 = vadd.xlane.f32.xlu0 %v2727
    %v2731 = vpop.xlane.xlu0 %2730
    %v2732 = vmul.f32 %v2729, 0.03125
    %v2733 = vmul.f32 %v2731, 0.03125
    %v2734 = vsub.f32 %v2726, %v2732
    %v2735 = vsub.f32 %v2727, %v2733
    %v2736 = vmul.f32 %v2734, %v60
    %v2737 = vmul.f32 %v2735, %v60
    %v2738 = vmul.f32 %v2736, %v2736
    %v2739 = vmul.f32 %v2737, %v2737
    %2740 = vadd.xlane.f32.xlu0 %v2738
    %v2741 = vpop.xlane.xlu0 %2740
    %2742 = vadd.xlane.f32.xlu0 %v2739
    %v2743 = vpop.xlane.xlu0 %2742
    %v2744 = vmul.f32 %v2741, 0.03125
    %v2745 = vmul.f32 %v2743, 0.03125
    %v2746 = vadd.f32 %v2744, 1e-05
    %v2747 = vadd.f32 %v2745, 1e-05
    %v2748 = vrsqrt.pop %v2746
    %v2749 = vrsqrt.pop %v2747
    %v2750 = vmul.f32 %v2736, %v2748
    %v2751 = vmul.f32 %v2737, %v2749
    %v2753 = vlaneseq
    %v2754 = vshrl.u32 %v2753, 7
    %v2755 = vsub.s32 0, %v2754
    %v2756 = vrot.slane %v68, %v2755
    %v2758 = vmul.f32 %v2750, %v2756
    %v2759 = vmul.f32 %v2751, %v2756
    %v2761 = vlaneseq
    %v2762 = vshrl.u32 %v2761, 7
    %v2763 = vsub.s32 0, %v2762
    %v2764 = vrot.slane %v69, %v2763
    %v2766 = vadd.f32 %v2758, %v2764
    %v2767 = vadd.f32 %v2759, %v2764
    %v2768 = vld [vmem:[%s9] sm:$0xf]
    %v2769 = vld [vmem:[%s9 + $0x4] sm:$0xf]
    %v2770 = vld [vmem:[%s9 + $0x8] sm:$0xf]
    %v2771 = vld [vmem:[%s9 + $0xc] sm:$0xf]
    %v2772 = vld [vmem:[%s9 + $0x10] sm:$0xf]
    %v2773 = vld [vmem:[%s9 + $0x14] sm:$0xf]
    %v2774 = vld [vmem:[%s9 + $0x18] sm:$0xf]
    %v2775 = vld [vmem:[%s9 + $0x1c] sm:$0xf]
    %v2776 = vld [vmem:[%s9 + $0x20] sm:$0xf]
    %v2777 = vld [vmem:[%s9 + $0x24] sm:$0xf]
    %v2778 = vld [vmem:[%s9 + $0x28] sm:$0xf]
    %v2779 = vld [vmem:[%s9 + $0x2c] sm:$0xf]
    %v2780 = vld [vmem:[%s9 + $0x30] sm:$0xf]
    %v2781 = vld [vmem:[%s9 + $0x34] sm:$0xf]
    %v2782 = vld [vmem:[%s9 + $0x38] sm:$0xf]
    %v2783 = vld [vmem:[%s9 + $0x3c] sm:$0xf]
    %v2784 = vpack.c.bf16 %v2767, %v2766
    %v2786 = vlaneseq
    %v2787 = vshrl.u32 %v2786, 7
    %v2788 = vsub.s32 0, %v2787
    %v2789 = vrot.slane %v70, %v2788
    %v2807 = vunpack.c.l.b16 %v2768
    %v2808 = vunpack.c.l.b16 %v2769
    %v2809 = vunpack.c.l.b16 %v2770
    %v2810 = vunpack.c.l.b16 %v2771
    %v2811 = vunpack.c.l.b16 %v2772
    %v2812 = vunpack.c.l.b16 %v2773
    %v2813 = vunpack.c.l.b16 %v2774
    %v2814 = vunpack.c.l.b16 %v2775
    %v2815 = vunpack.c.l.b16 %v2776
    %v2816 = vunpack.c.l.b16 %v2777
    %v2817 = vunpack.c.l.b16 %v2778
    %v2818 = vunpack.c.l.b16 %v2779
    %v2819 = vunpack.c.l.b16 %v2780
    %v2820 = vunpack.c.l.b16 %v2781
    %v2821 = vunpack.c.l.b16 %v2782
    %v2822 = vunpack.c.l.b16 %v2783
    %v2823 = vpack.c.b16 %v2808, %v2807
    %v2824 = vpack.c.b16 %v2810, %v2809
    %v2825 = vpack.c.b16 %v2812, %v2811
    %v2826 = vpack.c.b16 %v2814, %v2813
    %v2827 = vpack.c.b16 %v2816, %v2815
    %v2828 = vpack.c.b16 %v2818, %v2817
    %v2829 = vpack.c.b16 %v2820, %v2819
    %v2830 = vpack.c.b16 %v2822, %v2821
    %2839 = vmatprep.subr.bf16.mxu0 0
    %2840 = vmatpush1.bf16.msra.mxu0 %v2830
    %2841 = vmatprep.subr.bf16.mxu0 0
    %2842 = vmatpush1.bf16.msra.mxu0 %v2829
    %2843 = vmatprep.subr.bf16.mxu0 0
    %2844 = vmatpush1.bf16.msra.mxu0 %v2828
    %2845 = vmatprep.subr.bf16.mxu0 0
    %2846 = vmatpush1.bf16.msra.mxu0 %v2827
    %2847 = vmatprep.subr.bf16.mxu0 0
    %2848 = vmatpush1.bf16.msra.mxu0 %v2826
    %2849 = vmatprep.subr.bf16.mxu0 0
    %2850 = vmatpush1.bf16.msra.mxu0 %v2825
    %2851 = vmatprep.subr.bf16.mxu0 0
    %2852 = vmatpush1.bf16.msra.mxu0 %v2824
    %2853 = vmatprep.subr.bf16.mxu0 0
    %2854 = vmatpush1.bf16.msra.mxu0 %v2823
    %2855 = vmatprep.subr.bf16.mxu0 0
    %2856 = vmatpush2.bf16.msra.mxu0 0
    %2857 = vmatprep.subr.bf16.mxu0 0
    %2858 = vmatpush2.bf16.msra.mxu0 0
    %2859 = vmatprep.subr.bf16.mxu0 0
    %2860 = vmatpush2.bf16.msra.mxu0 0
    %2861 = vmatprep.subr.bf16.mxu0 0
    %2862 = vmatpush2.bf16.msra.mxu0 0
    %2863 = vmatprep.subr.bf16.mxu0 0
    %2864 = vmatpush2.bf16.msra.mxu0 0
    %2865 = vmatprep.subr.bf16.mxu0 0
    %2866 = vmatpush2.bf16.msra.mxu0 0
    %2867 = vmatprep.subr.bf16.mxu0 0
    %2868 = vmatpush2.bf16.msra.mxu0 0
    %2869 = vmatprep.subr.bf16.mxu0 0
    %2870 = vmatpush2.bf16.msra.mxu0 0
    %2871 = vmatprep.mubr.bf16.mxu0 0
    %2872 = vmatmul.mubr.bf16.gmra.mxu0 %v2784
    %v2873 = vpop.f32.mrf.mxu0
    %v2874 = vadd.f32 %v2789, %v2873
    %v2875 = vpop.f32.mrf.mxu0
    %v2876 = vpop.f32.mrf.mxu0
    %v2877 = vadd.f32 %v2789, %v2876
    %v2878 = vpop.f32.mrf.mxu0
    %2879 = vdwg.mxu0
    %v2880 = vmax.f32 %v2874, 0.0
    %v2881 = vmax.f32 %v2877, 0.0
    %v2882 = vld [vmem:[#allocation3] sm:$0xf]
    %v2883 = vld [vmem:[#allocation3 + $0x4] sm:$0xf]
    %v2884 = vld [vmem:[#allocation3 + $0x8] sm:$0xf]
    %v2885 = vld [vmem:[#allocation3 + $0xc] sm:$0xf]
    %v2886 = vld [vmem:[#allocation3 + $0x10] sm:$0xf]
    %v2887 = vld [vmem:[#allocation3 + $0x14] sm:$0xf]
    %v2888 = vld [vmem:[#allocation3 + $0x18] sm:$0xf]
    %v2889 = vld [vmem:[#allocation3 + $0x1c] sm:$0xf]
    %v2890 = vld [vmem:[#allocation3 + $0x20] sm:$0xf]
    %v2891 = vld [vmem:[#allocation3 + $0x24] sm:$0xf]
    %v2892 = vld [vmem:[#allocation3 + $0x28] sm:$0xf]
    %v2893 = vld [vmem:[#allocation3 + $0x2c] sm:$0xf]
    %v2894 = vld [vmem:[#allocation3 + $0x30] sm:$0xf]
    %v2895 = vld [vmem:[#allocation3 + $0x34] sm:$0xf]
    %v2896 = vld [vmem:[#allocation3 + $0x38] sm:$0xf]
    %v2897 = vld [vmem:[#allocation3 + $0x3c] sm:$0xf]
    %v2898 = vpack.c.bf16 %v2881, %v2880
    %v2900 = vlaneseq
    %v2901 = vshrl.u32 %v2900, 7
    %v2902 = vsub.s32 0, %v2901
    %v2903 = vrot.slane %v71, %v2902
    %v2921 = vunpack.c.l.b16 %v2882
    %v2922 = vunpack.c.l.b16 %v2883
    %v2923 = vunpack.c.l.b16 %v2884
    %v2924 = vunpack.c.l.b16 %v2885
    %v2925 = vunpack.c.l.b16 %v2886
    %v2926 = vunpack.c.l.b16 %v2887
    %v2927 = vunpack.c.l.b16 %v2888
    %v2928 = vunpack.c.l.b16 %v2889
    %v2929 = vunpack.c.l.b16 %v2890
    %v2930 = vunpack.c.l.b16 %v2891
    %v2931 = vunpack.c.l.b16 %v2892
    %v2932 = vunpack.c.l.b16 %v2893
    %v2933 = vunpack.c.l.b16 %v2894
    %v2934 = vunpack.c.l.b16 %v2895
    %v2935 = vunpack.c.l.b16 %v2896
    %v2936 = vunpack.c.l.b16 %v2897
    %v2937 = vpack.c.b16 %v2922, %v2921
    %v2938 = vpack.c.b16 %v2924, %v2923
    %v2939 = vpack.c.b16 %v2926, %v2925
    %v2940 = vpack.c.b16 %v2928, %v2927
    %v2941 = vpack.c.b16 %v2930, %v2929
    %v2942 = vpack.c.b16 %v2932, %v2931
    %v2943 = vpack.c.b16 %v2934, %v2933
    %v2944 = vpack.c.b16 %v2936, %v2935
    %2953 = vmatprep.subr.bf16.mxu0 0
    %2954 = vmatpush1.bf16.msra.mxu0 %v2944
    %2955 = vmatprep.subr.bf16.mxu0 0
    %2956 = vmatpush1.bf16.msra.mxu0 %v2943
    %2957 = vmatprep.subr.bf16.mxu0 0
    %2958 = vmatpush1.bf16.msra.mxu0 %v2942
    %2959 = vmatprep.subr.bf16.mxu0 0
    %2960 = vmatpush1.bf16.msra.mxu0 %v2941
    %2961 = vmatprep.subr.bf16.mxu0 0
    %2962 = vmatpush1.bf16.msra.mxu0 %v2940
    %2963 = vmatprep.subr.bf16.mxu0 0
    %2964 = vmatpush1.bf16.msra.mxu0 %v2939
    %2965 = vmatprep.subr.bf16.mxu0 0
    %2966 = vmatpush1.bf16.msra.mxu0 %v2938
    %2967 = vmatprep.subr.bf16.mxu0 0
    %2968 = vmatpush1.bf16.msra.mxu0 %v2937
    %2969 = vmatprep.subr.bf16.mxu0 0
    %2970 = vmatpush2.bf16.msra.mxu0 0
    %2971 = vmatprep.subr.bf16.mxu0 0
    %2972 = vmatpush2.bf16.msra.mxu0 0
    %2973 = vmatprep.subr.bf16.mxu0 0
    %2974 = vmatpush2.bf16.msra.mxu0 0
    %2975 = vmatprep.subr.bf16.mxu0 0
    %2976 = vmatpush2.bf16.msra.mxu0 0
    %2977 = vmatprep.subr.bf16.mxu0 0
    %2978 = vmatpush2.bf16.msra.mxu0 0
    %2979 = vmatprep.subr.bf16.mxu0 0
    %2980 = vmatpush2.bf16.msra.mxu0 0
    %2981 = vmatprep.subr.bf16.mxu0 0
    %2982 = vmatpush2.bf16.msra.mxu0 0
    %2983 = vmatprep.subr.bf16.mxu0 0
    %2984 = vmatpush2.bf16.msra.mxu0 0
    %2985 = vmatprep.mubr.bf16.mxu0 0
    %2986 = vmatmul.mubr.bf16.gmra.mxu0 %v2898
    %v2987 = vpop.f32.mrf.mxu0
    %v2988 = vadd.f32 %v2903, %v2987
    %v2989 = vpop.f32.mrf.mxu0
    %v2990 = vpop.f32.mrf.mxu0
    %v2991 = vadd.f32 %v2903, %v2990
    %v2992 = vpop.f32.mrf.mxu0
    %2993 = vdwg.mxu0
    %v2994 = vadd.f32 %v2766, %v2988
    %v2995 = vadd.f32 %v2767, %v2991
    %2996 = vadd.xlane.f32.xlu0 %v2994
    %v2997 = vpop.xlane.xlu0 %2996
    %2998 = vadd.xlane.f32.xlu0 %v2995
    %v2999 = vpop.xlane.xlu0 %2998
    %v3000 = vmul.f32 %v2997, 0.03125
    %v3001 = vmul.f32 %v2999, 0.03125
    %v3002 = vsub.f32 %v2994, %v3000
    %v3003 = vsub.f32 %v2995, %v3001
    %v3004 = vmul.f32 %v3002, %v60
    %v3005 = vmul.f32 %v3003, %v60
    %v3006 = vmul.f32 %v3004, %v3004
    %v3007 = vmul.f32 %v3005, %v3005
    %3008 = vadd.xlane.f32.xlu0 %v3006
    %v3009 = vpop.xlane.xlu0 %3008
    %3010 = vadd.xlane.f32.xlu0 %v3007
    %v3011 = vpop.xlane.xlu0 %3010
    %v3012 = vmul.f32 %v3009, 0.03125
    %v3013 = vmul.f32 %v3011, 0.03125
    %v3014 = vadd.f32 %v3012, 1e-05
    %v3015 = vadd.f32 %v3013, 1e-05
    %v3016 = vrsqrt.pop %v3014
    %v3017 = vrsqrt.pop %v3015
    %v3018 = vmul.f32 %v3004, %v3016
    %v3019 = vmul.f32 %v3005, %v3017
    %v3021 = vlaneseq
    %v3022 = vshrl.u32 %v3021, 7
    %v3023 = vsub.s32 0, %v3022
    %v3024 = vrot.slane %v72, %v3023
    %v3026 = vmul.f32 %v3018, %v3024
    %v3027 = vmul.f32 %v3019, %v3024
    %v3029 = vlaneseq
    %v3030 = vshrl.u32 %v3029, 7
    %v3031 = vsub.s32 0, %v3030
    %v3032 = vrot.slane %v73, %v3031
    %v3034 = vadd.f32 %v3026, %v3032
    %v3035 = vadd.f32 %v3027, %v3032
    %3036 = vst [vmem:[%s12] sm:$0xff] %v3034
    %3037 = vst [vmem:[%s12 + $0x8] sm:$0xff] %v3035
    // Predicated region
    $region54: #{vae_transformer_forward.6} parent=1 // pred_check
      _
    $region55: #{vae_transformer_forward.6} parent=1 // pred_check_branch
      %3039 = sbr.rel (0) target = $region57
    $region56: #{vae_transformer_forward.6} parent=1 // pred_region
      _
    $region57: #{vae_transformer_forward.6} parent=1 // pred_fallthru
      _
    // Predicated region
    $region58: #{vae_transformer_forward.6} parent=1 // pred_check
      _
    $region59: #{vae_transformer_forward.6} parent=1 // pred_check_branch
      %3041 = sbr.rel (0) target = $region61
    $region60: #{vae_transformer_forward.6} parent=1 // pred_region
      _
    $region61: #{vae_transformer_forward.6} parent=1 // pred_fallthru
      _
    %3042 = vsyncpa [#allocation4], 1

</llo_original>
